<compile_context>
chip_gen: v7x
topology: tpu7x:2x2x1
jax: 0.10.0
libtpu: 0.0.40
codegen_flags: <defaults>
</compile_context>

<pallas_src>
import jax
import jax.numpy as jnp
from jax.experimental import pallas as pl
from jax.experimental.pallas import tpu as pltpu

NEG_SLOPE = 0.2      # PyG GATConv default LeakyReLU slope
NEG_INF = -1e9       # additive mask for non-edges / padded classes
HEAD_PAD = 128       # per-head feature block padded to one full 128-lane vreg
CLASS_PAD = 128      # class dim padded to 128 lanes for a dense output store


def fused_gat_forward(x, adj_bias, w_feat, e1_src, e1_dst, b1, rhs2, bias_mask2, *, heads):
    """Whole Net forward (both GAT layers + ELU + log_softmax) in one pallas_call."""
    N, Fin = x.shape
    HF = heads * HEAD_PAD

    def kernel(x_ref, adjb_ref, wf_ref, e1s_ref, e1d_ref, b1_ref, rhs2_ref, bm2_ref, out_ref):
        x_v = x_ref[...]                                           # [N, Fin]
        adjb = adjb_ref[...]                                       # [N, N] additive edge mask

        # ---------------- layer 1: GATConv(64 -> 64, heads=8) ----------------
        # feature projection for all heads; head h occupies lanes [h*128, h*128+64)
        h_all = jnp.dot(x_v, wf_ref[...], preferred_element_type=jnp.float32)   # [N, HF]

        # batched attention softmax over all heads: [H, N(target), N(source)]
        logits = e1d_ref[...] + e1s_ref[...]                       # [H,N,1] + [H,1,N]
        logits = jnp.where(logits > 0, logits, NEG_SLOPE * logits) + adjb[None, :, :]
        m1 = jnp.max(logits, axis=-1, keepdims=True)
        p1 = jnp.exp(logits - m1)
        alpha1 = p1 / jnp.sum(p1, axis=-1, keepdims=True)          # [H, N, N]

        # per-head neighbourhood aggregation (8 small MXU dots, all 128-lane aligned)
        aggs = [
            jnp.dot(alpha1[h], h_all[:, h * HEAD_PAD:(h + 1) * HEAD_PAD],
                    preferred_element_type=jnp.float32)
            for h in range(heads)
        ]
        h1 = jnp.concatenate(aggs, axis=-1) + b1_ref[...]          # [N, HF]
        # ELU; exp argument clamped to <= 0 so the unselected branch cannot overflow
        h1 = jnp.where(h1 > 0, h1, jnp.exp(jnp.minimum(h1, 0.0)) - 1.0)

        # ---------------- layer 2: GATConv(512 -> 17, heads=1, concat=False) ----------------
        # one matmul: class logits (cols :CLASS_PAD) + folded attention scores (cols CLASS_PAD:)
        r2 = jnp.dot(h1, rhs2_ref[...], preferred_element_type=jnp.float32)   # [N, 2*CLASS_PAD]
        z2 = r2[:, :CLASS_PAD]                                     # [N, CLASS_PAD]
        e2 = r2[:, CLASS_PAD:]                                     # [N, CLASS_PAD]
        e2_dst = e2[:, 0:1]                                        # [N, 1] target scores
        e2_src = jnp.transpose(e2)[1:2, :]                         # [1, N] source scores (1 XLU transpose)

        l2 = e2_dst + e2_src
        l2 = jnp.where(l2 > 0, l2, NEG_SLOPE * l2) + adjb
        m2 = jnp.max(l2, axis=-1, keepdims=True)
        p2 = jnp.exp(l2 - m2)
        alpha2 = p2 / jnp.sum(p2, axis=-1, keepdims=True)          # [N, N]

        out = jnp.dot(alpha2, z2, preferred_element_type=jnp.float32) + bm2_ref[...]  # [N, CLASS_PAD]

        # fused log_softmax over the (padded, -1e9 masked) class dimension
        mm = jnp.max(out, axis=-1, keepdims=True)
        s = out - mm
        lse = jnp.log(jnp.sum(jnp.exp(s), axis=-1, keepdims=True))
        out_ref[...] = s - lse

    return pl.pallas_call(
        kernel,
        out_shape=jax.ShapeDtypeStruct((N, CLASS_PAD), jnp.float32),
        grid=(1,),
        in_specs=[
            pl.BlockSpec((N, Fin), lambda i: (0, 0)),              # x
            pl.BlockSpec((N, N), lambda i: (0, 0)),                # additive edge mask
            pl.BlockSpec((Fin, HF), lambda i: (0, 0)),             # head-padded W1
            pl.BlockSpec((heads, 1, N), lambda i: (0, 0, 0)),      # layer-1 src scores
            pl.BlockSpec((heads, N, 1), lambda i: (0, 0, 0)),      # layer-1 dst scores
            pl.BlockSpec((1, HF), lambda i: (0, 0)),               # bias 1 (head-padded)
            pl.BlockSpec((HF, 2 * CLASS_PAD), lambda i: (0, 0)),   # [W2 | folded a2] RHS
            pl.BlockSpec((1, CLASS_PAD), lambda i: (0, 0)),        # bias2 + class pad mask
        ],
        out_specs=pl.BlockSpec((N, CLASS_PAD), lambda i: (0, 0)),
        compiler_params=pltpu.CompilerParams(
            dimension_semantics=("arbitrary",),
            vmem_limit_bytes=32 * 1024 * 1024,
        ),
    )(x, adj_bias, w_feat, e1_src, e1_dst, b1, rhs2, bias_mask2)


def net_forward(x, adj, params):
    # additive edge mask (0 for edges incl. self-loops, -1e9 otherwise), shared by both layers
    adj_bias = (adj - 1.0) * 1e9

    # ---- layer 1 repack: head-padded feature weights + folded attention scores ----
    w1 = params["w1"]                                              # [H, Fin, Fout]
    H, Fin, Fout = w1.shape
    w1p = jnp.pad(w1, ((0, 0), (0, 0), (0, HEAD_PAD - Fout)))      # [H, Fin, 128]
    w_feat = jnp.transpose(w1p, (1, 0, 2)).reshape(Fin, H * HEAD_PAD)

    wa_src = jnp.einsum("hif,hf->ih", w1, params["a_src1"][:, 0, :])   # [Fin, H]
    wa_dst = jnp.einsum("hif,hf->ih", w1, params["a_dst1"][:, 0, :])   # [Fin, H]
    # per-node attention scores, precomputed in the exact layouts the kernel consumes
    e1_src = (x @ wa_src).T[:, None, :]                            # [H, 1, N] (source on lanes)
    e1_dst = (x @ wa_dst).T[:, :, None]                            # [H, N, 1] (target on sublanes)

    b1 = jnp.pad(params["b1"].reshape(H, Fout),
                 ((0, 0), (0, HEAD_PAD - Fout))).reshape(1, H * HEAD_PAD)

    # ---- layer 2 repack: re-embed into the head-padded feature space, pad classes ----
    w2 = params["w2"][0]                                           # [H*Fout, C]
    C = w2.shape[1]
    w2p = jnp.pad(w2.reshape(H, Fout, C),
                  ((0, 0), (0, HEAD_PAD - Fout), (0, CLASS_PAD - C))
                  ).reshape(H * HEAD_PAD, CLASS_PAD)
    a2_dst = jnp.pad((w2 @ params["a_dst2"][0, 0]).reshape(H, Fout),
                     ((0, 0), (0, HEAD_PAD - Fout))).reshape(H * HEAD_PAD)
    a2_src = jnp.pad((w2 @ params["a_src2"][0, 0]).reshape(H, Fout),
                     ((0, 0), (0, HEAD_PAD - Fout))).reshape(H * HEAD_PAD)
    wa2 = jnp.zeros((H * HEAD_PAD, CLASS_PAD), jnp.float32)
    wa2 = wa2.at[:, 0].set(a2_dst).at[:, 1].set(a2_src)            # col0 = dst, col1 = src
    rhs2 = jnp.concatenate([w2p, wa2], axis=1)                     # [H*128, 2*CLASS_PAD]

    bias_mask2 = jnp.full((1, CLASS_PAD), NEG_INF, jnp.float32).at[0, :C].set(params["b2"])

    logp = fused_gat_forward(x, adj_bias, w_feat, e1_src, e1_dst, b1, rhs2, bias_mask2, heads=H)
    return logp[:, :C]


if __name__ == "__main__":
    N = 128          # number of graph nodes (small synthetic graph)
    F_IN = 64        # input feature dim (matches GATConv(64, ...))
    HEADS = 8
    HID = 64
    CLASSES = 17

    key = jax.random.PRNGKey(0)
    keys = iter(jax.random.split(key, 16))

    # node features
    x = jax.random.normal(next(keys), (N, F_IN), jnp.float32)

    # deterministic synthetic undirected graph + self loops, dense adjacency
    probs = jax.random.uniform(next(keys), (N, N))
    adj = (probs < 0.05).astype(jnp.float32)
    adj = jnp.maximum(adj, adj.T)
    adj = jnp.maximum(adj, jnp.eye(N, dtype=jnp.float32))

    def glorot(k, shape):
        fan_in, fan_out = shape[-2], shape[-1]
        lim = jnp.sqrt(6.0 / (fan_in + fan_out))
        return jax.random.uniform(k, shape, jnp.float32, -lim, lim)

    params = {
        # GATConv(64, 64, heads=8)
        "w1": glorot(next(keys), (HEADS, F_IN, HID)),
        "a_src1": glorot(next(keys), (HEADS, 1, HID)),
        "a_dst1": glorot(next(keys), (HEADS, 1, HID)),
        "b1": jnp.zeros((HEADS * HID,), jnp.float32),
        # GATConv(512, 17, heads=1, concat=False)
        "w2": glorot(next(keys), (1, HEADS * HID, CLASSES)),
        "a_src2": glorot(next(keys), (1, 1, CLASSES)),
        "a_dst2": glorot(next(keys), (1, 1, CLASSES)),
        "b2": jnp.zeros((CLASSES,), jnp.float32),
    }

    fwd = jax.jit(net_forward)
    out = fwd(x, adj, params)
    jax.block_until_ready(out)

    assert out.shape == (N, CLASSES)
    assert bool(jnp.all(jnp.isfinite(out)))
    # rows of log_softmax must sum to ~1 after exp
    assert bool(jnp.allclose(jnp.sum(jnp.exp(out), axis=1), 1.0, atol=1e-4))
    print("KERNEL_OK")
</pallas_src>

<mosaic_0001>
module attributes {stable_mosaic.version = 11 : i64} {
  func.func @kernel(%arg0: i32, %arg1: memref<128x64xf32, #tpu.memory_space<vmem>>, %arg2: memref<128x128xf32, #tpu.memory_space<vmem>>, %arg3: memref<64x1024xf32, #tpu.memory_space<vmem>>, %arg4: memref<8x1x128xf32, #tpu.memory_space<vmem>>, %arg5: memref<8x128x1xf32, #tpu.memory_space<vmem>>, %arg6: memref<1x1024xf32, #tpu.memory_space<vmem>>, %arg7: memref<1024x256xf32, #tpu.memory_space<vmem>>, %arg8: memref<1x128xf32, #tpu.memory_space<vmem>>, %arg9: memref<128x128xf32, #tpu.memory_space<vmem>>) attributes {dimension_semantics = [#tpu.dimension_semantics<arbitrary>], iteration_bounds = array<i64: 1>, scalar_prefetch = 0 : i64, scratch_operands = 0 : i64, tpu.core_type = #tpu.core_type<tc>, window_params = [{pipeline_mode = #tpu.pipeline_mode<synchronous>, transform_indices = @transform_0, window_bounds = array<i64: 128, 64>}, {pipeline_mode = #tpu.pipeline_mode<synchronous>, transform_indices = @transform_1, window_bounds = array<i64: 128, 128>}, {pipeline_mode = #tpu.pipeline_mode<synchronous>, transform_indices = @transform_2, window_bounds = array<i64: 64, 1024>}, {pipeline_mode = #tpu.pipeline_mode<synchronous>, transform_indices = @transform_3, window_bounds = array<i64: 8, 1, 128>}, {pipeline_mode = #tpu.pipeline_mode<synchronous>, transform_indices = @transform_4, window_bounds = array<i64: 8, 128, 1>}, {pipeline_mode = #tpu.pipeline_mode<synchronous>, transform_indices = @transform_5, window_bounds = array<i64: 1, 1024>}, {pipeline_mode = #tpu.pipeline_mode<synchronous>, transform_indices = @transform_6, window_bounds = array<i64: 1024, 256>}, {pipeline_mode = #tpu.pipeline_mode<synchronous>, transform_indices = @transform_7, window_bounds = array<i64: 1, 128>}, {pipeline_mode = #tpu.pipeline_mode<synchronous>, transform_indices = @transform_8, window_bounds = array<i64: 128, 128>}]} {
    %c0 = arith.constant 0 : index
    %c0_0 = arith.constant 0 : index
    %0 = vector.load %arg1[%c0, %c0_0] : memref<128x64xf32, #tpu.memory_space<vmem>>, vector<128x64xf32>
    %c0_1 = arith.constant 0 : index
    %c0_2 = arith.constant 0 : index
    %1 = vector.load %arg2[%c0_1, %c0_2] : memref<128x128xf32, #tpu.memory_space<vmem>>, vector<128x128xf32>
    %c0_3 = arith.constant 0 : index
    %c0_4 = arith.constant 0 : index
    %2 = vector.load %arg3[%c0_3, %c0_4] : memref<64x1024xf32, #tpu.memory_space<vmem>>, vector<64x1024xf32>
    %cst = arith.constant dense<0.000000e+00> : vector<128x1024xf32>
    %3 = tpu.matmul %0, %2, %cst {dimension_numbers = #tpu.dot_dimension_numbers<[1], [0], [0], [1], [0, 0, 1, 1], [], []>} : vector<128x64xf32>, vector<64x1024xf32>, vector<128x1024xf32> -> vector<128x1024xf32>
    %c0_5 = arith.constant 0 : index
    %c0_6 = arith.constant 0 : index
    %c0_7 = arith.constant 0 : index
    %4 = vector.load %arg5[%c0_5, %c0_6, %c0_7] : memref<8x128x1xf32, #tpu.memory_space<vmem>>, vector<8x128x1xf32>
    %c0_8 = arith.constant 0 : index
    %c0_9 = arith.constant 0 : index
    %c0_10 = arith.constant 0 : index
    %5 = vector.load %arg4[%c0_8, %c0_9, %c0_10] : memref<8x1x128xf32, #tpu.memory_space<vmem>>, vector<8x1x128xf32>
    %6 = vector.broadcast %4 : vector<8x128x1xf32> to vector<8x128x128xf32>
    %7 = vector.broadcast %5 : vector<8x1x128xf32> to vector<8x128x128xf32>
    %8 = arith.addf %6, %7 : vector<8x128x128xf32>
    %cst_11 = arith.constant 0.000000e+00 : f32
    %9 = vector.broadcast %cst_11 : f32 to vector<8x128x128xf32>
    %10 = arith.cmpf ogt, %8, %9 : vector<8x128x128xf32>
    %cst_12 = arith.constant 2.000000e-01 : f32
    %11 = vector.broadcast %cst_12 : f32 to vector<8x128x128xf32>
    %12 = arith.mulf %11, %8 : vector<8x128x128xf32>
    %13 = arith.select %10, %8, %12 : vector<8x128x128xi1>, vector<8x128x128xf32>
    %14 = vector.shape_cast %1 : vector<128x128xf32> to vector<1x128x128xf32>
    %15 = vector.broadcast %14 : vector<1x128x128xf32> to vector<8x128x128xf32>
    %16 = arith.addf %13, %15 : vector<8x128x128xf32>
    %cst_13 = arith.constant dense<0xFF800000> : vector<8x128xf32>
    %17 = vector.multi_reduction <maximumf>, %16, %cst_13 [2] : vector<8x128x128xf32> to vector<8x128xf32>
    %18 = vector.shape_cast %17 : vector<8x128xf32> to vector<8x128x1xf32>
    %19 = vector.broadcast %18 : vector<8x128x1xf32> to vector<8x128x128xf32>
    %20 = arith.subf %16, %19 : vector<8x128x128xf32>
    %21 = math.exp %20 : vector<8x128x128xf32>
    %cst_14 = arith.constant dense<0.000000e+00> : vector<8x128xf32>
    %22 = vector.multi_reduction <add>, %21, %cst_14 [2] : vector<8x128x128xf32> to vector<8x128xf32>
    %23 = vector.shape_cast %22 : vector<8x128xf32> to vector<8x128x1xf32>
    %24 = vector.broadcast %23 : vector<8x128x1xf32> to vector<8x128x128xf32>
    %25 = arith.divf %21, %24 : vector<8x128x128xf32>
    %26 = vector.extract_strided_slice %25 {offsets = [0, 0, 0], sizes = [1, 128, 128], strides = [1, 1, 1]} : vector<8x128x128xf32> to vector<1x128x128xf32>
    %27 = vector.shape_cast %26 : vector<1x128x128xf32> to vector<128x128xf32>
    %28 = vector.extract_strided_slice %3 {offsets = [0, 0], sizes = [128, 128], strides = [1, 1]} : vector<128x1024xf32> to vector<128x128xf32>
    %cst_15 = arith.constant dense<0.000000e+00> : vector<128x128xf32>
    %29 = tpu.matmul %27, %28, %cst_15 {dimension_numbers = #tpu.dot_dimension_numbers<[1], [0], [0], [1], [0, 0, 1, 1], [], []>} : vector<128x128xf32>, vector<128x128xf32>, vector<128x128xf32> -> vector<128x128xf32>
    %30 = vector.extract_strided_slice %25 {offsets = [1, 0, 0], sizes = [1, 128, 128], strides = [1, 1, 1]} : vector<8x128x128xf32> to vector<1x128x128xf32>
    %31 = vector.shape_cast %30 : vector<1x128x128xf32> to vector<128x128xf32>
    %32 = vector.extract_strided_slice %3 {offsets = [0, 128], sizes = [128, 128], strides = [1, 1]} : vector<128x1024xf32> to vector<128x128xf32>
    %cst_16 = arith.constant dense<0.000000e+00> : vector<128x128xf32>
    %33 = tpu.matmul %31, %32, %cst_16 {dimension_numbers = #tpu.dot_dimension_numbers<[1], [0], [0], [1], [0, 0, 1, 1], [], []>} : vector<128x128xf32>, vector<128x128xf32>, vector<128x128xf32> -> vector<128x128xf32>
    %34 = vector.extract_strided_slice %25 {offsets = [2, 0, 0], sizes = [1, 128, 128], strides = [1, 1, 1]} : vector<8x128x128xf32> to vector<1x128x128xf32>
    %35 = vector.shape_cast %34 : vector<1x128x128xf32> to vector<128x128xf32>
    %36 = vector.extract_strided_slice %3 {offsets = [0, 256], sizes = [128, 128], strides = [1, 1]} : vector<128x1024xf32> to vector<128x128xf32>
    %cst_17 = arith.constant dense<0.000000e+00> : vector<128x128xf32>
    %37 = tpu.matmul %35, %36, %cst_17 {dimension_numbers = #tpu.dot_dimension_numbers<[1], [0], [0], [1], [0, 0, 1, 1], [], []>} : vector<128x128xf32>, vector<128x128xf32>, vector<128x128xf32> -> vector<128x128xf32>
    %38 = vector.extract_strided_slice %25 {offsets = [3, 0, 0], sizes = [1, 128, 128], strides = [1, 1, 1]} : vector<8x128x128xf32> to vector<1x128x128xf32>
    %39 = vector.shape_cast %38 : vector<1x128x128xf32> to vector<128x128xf32>
    %40 = vector.extract_strided_slice %3 {offsets = [0, 384], sizes = [128, 128], strides = [1, 1]} : vector<128x1024xf32> to vector<128x128xf32>
    %cst_18 = arith.constant dense<0.000000e+00> : vector<128x128xf32>
    %41 = tpu.matmul %39, %40, %cst_18 {dimension_numbers = #tpu.dot_dimension_numbers<[1], [0], [0], [1], [0, 0, 1, 1], [], []>} : vector<128x128xf32>, vector<128x128xf32>, vector<128x128xf32> -> vector<128x128xf32>
    %42 = vector.extract_strided_slice %25 {offsets = [4, 0, 0], sizes = [1, 128, 128], strides = [1, 1, 1]} : vector<8x128x128xf32> to vector<1x128x128xf32>
    %43 = vector.shape_cast %42 : vector<1x128x128xf32> to vector<128x128xf32>
    %44 = vector.extract_strided_slice %3 {offsets = [0, 512], sizes = [128, 128], strides = [1, 1]} : vector<128x1024xf32> to vector<128x128xf32>
    %cst_19 = arith.constant dense<0.000000e+00> : vector<128x128xf32>
    %45 = tpu.matmul %43, %44, %cst_19 {dimension_numbers = #tpu.dot_dimension_numbers<[1], [0], [0], [1], [0, 0, 1, 1], [], []>} : vector<128x128xf32>, vector<128x128xf32>, vector<128x128xf32> -> vector<128x128xf32>
    %46 = vector.extract_strided_slice %25 {offsets = [5, 0, 0], sizes = [1, 128, 128], strides = [1, 1, 1]} : vector<8x128x128xf32> to vector<1x128x128xf32>
    %47 = vector.shape_cast %46 : vector<1x128x128xf32> to vector<128x128xf32>
    %48 = vector.extract_strided_slice %3 {offsets = [0, 640], sizes = [128, 128], strides = [1, 1]} : vector<128x1024xf32> to vector<128x128xf32>
    %cst_20 = arith.constant dense<0.000000e+00> : vector<128x128xf32>
    %49 = tpu.matmul %47, %48, %cst_20 {dimension_numbers = #tpu.dot_dimension_numbers<[1], [0], [0], [1], [0, 0, 1, 1], [], []>} : vector<128x128xf32>, vector<128x128xf32>, vector<128x128xf32> -> vector<128x128xf32>
    %50 = vector.extract_strided_slice %25 {offsets = [6, 0, 0], sizes = [1, 128, 128], strides = [1, 1, 1]} : vector<8x128x128xf32> to vector<1x128x128xf32>
    %51 = vector.shape_cast %50 : vector<1x128x128xf32> to vector<128x128xf32>
    %52 = vector.extract_strided_slice %3 {offsets = [0, 768], sizes = [128, 128], strides = [1, 1]} : vector<128x1024xf32> to vector<128x128xf32>
    %cst_21 = arith.constant dense<0.000000e+00> : vector<128x128xf32>
    %53 = tpu.matmul %51, %52, %cst_21 {dimension_numbers = #tpu.dot_dimension_numbers<[1], [0], [0], [1], [0, 0, 1, 1], [], []>} : vector<128x128xf32>, vector<128x128xf32>, vector<128x128xf32> -> vector<128x128xf32>
    %54 = vector.extract_strided_slice %25 {offsets = [7, 0, 0], sizes = [1, 128, 128], strides = [1, 1, 1]} : vector<8x128x128xf32> to vector<1x128x128xf32>
    %55 = vector.shape_cast %54 : vector<1x128x128xf32> to vector<128x128xf32>
    %56 = vector.extract_strided_slice %3 {offsets = [0, 896], sizes = [128, 128], strides = [1, 1]} : vector<128x1024xf32> to vector<128x128xf32>
    %cst_22 = arith.constant dense<0.000000e+00> : vector<128x128xf32>
    %57 = tpu.matmul %55, %56, %cst_22 {dimension_numbers = #tpu.dot_dimension_numbers<[1], [0], [0], [1], [0, 0, 1, 1], [], []>} : vector<128x128xf32>, vector<128x128xf32>, vector<128x128xf32> -> vector<128x128xf32>
    %58 = tpu.concatenate %29, %33, %37, %41, %45, %49, %53, %57 in 1 : vector<128x128xf32>, vector<128x128xf32>, vector<128x128xf32>, vector<128x128xf32>, vector<128x128xf32>, vector<128x128xf32>, vector<128x128xf32>, vector<128x128xf32> -> vector<128x1024xf32>
    %c0_23 = arith.constant 0 : index
    %c0_24 = arith.constant 0 : index
    %59 = vector.load %arg6[%c0_23, %c0_24] : memref<1x1024xf32, #tpu.memory_space<vmem>>, vector<1x1024xf32>
    %60 = vector.broadcast %59 : vector<1x1024xf32> to vector<128x1024xf32>
    %61 = arith.addf %58, %60 : vector<128x1024xf32>
    %cst_25 = arith.constant 0.000000e+00 : f32
    %62 = vector.broadcast %cst_25 : f32 to vector<128x1024xf32>
    %63 = arith.cmpf ogt, %61, %62 : vector<128x1024xf32>
    %cst_26 = arith.constant 0.000000e+00 : f32
    %64 = vector.broadcast %cst_26 : f32 to vector<128x1024xf32>
    %65 = arith.minimumf %61, %64 : vector<128x1024xf32>
    %66 = math.exp %65 : vector<128x1024xf32>
    %cst_27 = arith.constant 1.000000e+00 : f32
    %67 = vector.broadcast %cst_27 : f32 to vector<128x1024xf32>
    %68 = arith.subf %66, %67 : vector<128x1024xf32>
    %69 = arith.select %63, %61, %68 : vector<128x1024xi1>, vector<128x1024xf32>
    %c0_28 = arith.constant 0 : index
    %c0_29 = arith.constant 0 : index
    %70 = vector.load %arg7[%c0_28, %c0_29] : memref<1024x256xf32, #tpu.memory_space<vmem>>, vector<1024x256xf32>
    %cst_30 = arith.constant dense<0.000000e+00> : vector<128x256xf32>
    %71 = tpu.matmul %69, %70, %cst_30 {dimension_numbers = #tpu.dot_dimension_numbers<[1], [0], [0], [1], [0, 0, 1, 1], [], []>} : vector<128x1024xf32>, vector<1024x256xf32>, vector<128x256xf32> -> vector<128x256xf32>
    %72 = vector.extract_strided_slice %71 {offsets = [0, 0], sizes = [128, 128], strides = [1, 1]} : vector<128x256xf32> to vector<128x128xf32>
    %73 = vector.extract_strided_slice %71 {offsets = [0, 128], sizes = [128, 128], strides = [1, 1]} : vector<128x256xf32> to vector<128x128xf32>
    %74 = vector.extract_strided_slice %73 {offsets = [0, 0], sizes = [128, 1], strides = [1, 1]} : vector<128x128xf32> to vector<128x1xf32>
    %75 = tpu.transpose %73, [1, 0] : vector<128x128xf32> -> vector<128x128xf32>
    %76 = vector.extract_strided_slice %75 {offsets = [1, 0], sizes = [1, 128], strides = [1, 1]} : vector<128x128xf32> to vector<1x128xf32>
    %77 = vector.broadcast %74 : vector<128x1xf32> to vector<128x128xf32>
    %78 = vector.broadcast %76 : vector<1x128xf32> to vector<128x128xf32>
    %79 = arith.addf %77, %78 : vector<128x128xf32>
    %cst_31 = arith.constant 0.000000e+00 : f32
    %80 = vector.broadcast %cst_31 : f32 to vector<128x128xf32>
    %81 = arith.cmpf ogt, %79, %80 : vector<128x128xf32>
    %cst_32 = arith.constant 2.000000e-01 : f32
    %82 = vector.broadcast %cst_32 : f32 to vector<128x128xf32>
    %83 = arith.mulf %82, %79 : vector<128x128xf32>
    %84 = arith.select %81, %79, %83 : vector<128x128xi1>, vector<128x128xf32>
    %85 = arith.addf %84, %1 : vector<128x128xf32>
    %cst_33 = arith.constant dense<0xFF800000> : vector<128xf32>
    %86 = vector.multi_reduction <maximumf>, %85, %cst_33 [1] : vector<128x128xf32> to vector<128xf32>
    %87 = vector.shape_cast %86 : vector<128xf32> to vector<128x1xf32>
    %88 = vector.broadcast %87 : vector<128x1xf32> to vector<128x128xf32>
    %89 = arith.subf %85, %88 : vector<128x128xf32>
    %90 = math.exp %89 : vector<128x128xf32>
    %cst_34 = arith.constant dense<0.000000e+00> : vector<128xf32>
    %91 = vector.multi_reduction <add>, %90, %cst_34 [1] : vector<128x128xf32> to vector<128xf32>
    %92 = vector.shape_cast %91 : vector<128xf32> to vector<128x1xf32>
    %93 = vector.broadcast %92 : vector<128x1xf32> to vector<128x128xf32>
    %94 = arith.divf %90, %93 : vector<128x128xf32>
    %cst_35 = arith.constant dense<0.000000e+00> : vector<128x128xf32>
    %95 = tpu.matmul %94, %72, %cst_35 {dimension_numbers = #tpu.dot_dimension_numbers<[1], [0], [0], [1], [0, 0, 1, 1], [], []>} : vector<128x128xf32>, vector<128x128xf32>, vector<128x128xf32> -> vector<128x128xf32>
    %c0_36 = arith.constant 0 : index
    %c0_37 = arith.constant 0 : index
    %96 = vector.load %arg8[%c0_36, %c0_37] : memref<1x128xf32, #tpu.memory_space<vmem>>, vector<1x128xf32>
    %97 = vector.broadcast %96 : vector<1x128xf32> to vector<128x128xf32>
    %98 = arith.addf %95, %97 : vector<128x128xf32>
    %cst_38 = arith.constant dense<0xFF800000> : vector<128xf32>
    %99 = vector.multi_reduction <maximumf>, %98, %cst_38 [1] : vector<128x128xf32> to vector<128xf32>
    %100 = vector.shape_cast %99 : vector<128xf32> to vector<128x1xf32>
    %101 = vector.broadcast %100 : vector<128x1xf32> to vector<128x128xf32>
    %102 = arith.subf %98, %101 : vector<128x128xf32>
    %103 = math.exp %102 : vector<128x128xf32>
    %cst_39 = arith.constant dense<0.000000e+00> : vector<128xf32>
    %104 = vector.multi_reduction <add>, %103, %cst_39 [1] : vector<128x128xf32> to vector<128xf32>
    %105 = vector.shape_cast %104 : vector<128xf32> to vector<128x1xf32>
    %106 = math.log %105 : vector<128x1xf32>
    %107 = vector.broadcast %106 : vector<128x1xf32> to vector<128x128xf32>
    %108 = arith.subf %102, %107 : vector<128x128xf32>
    %c0_40 = arith.constant 0 : index
    %c0_41 = arith.constant 0 : index
    %109 = vector.load %arg9[%c0_40, %c0_41] : memref<128x128xf32, #tpu.memory_space<vmem>>, vector<128x128xf32>
    tpu.vector_store %arg9[%c0_40, %c0_41], %108 {strides = array<i32>} : memref<128x128xf32, #tpu.memory_space<vmem>>, vector<128x128xf32>,
    return
  }
  func.func @transform_0(%arg0: i32) -> (i32, i32) {
    %c0_i32 = arith.constant 0 : i32
    %c0_i32_0 = arith.constant 0 : i32
    %c0_i32_1 = arith.constant 0 : i32
    return %c0_i32, %c0_i32_0 : i32, i32
  }
  func.func @transform_1(%arg0: i32) -> (i32, i32) {
    %c0_i32 = arith.constant 0 : i32
    %c0_i32_0 = arith.constant 0 : i32
    %c0_i32_1 = arith.constant 0 : i32
    return %c0_i32, %c0_i32_0 : i32, i32
  }
  func.func @transform_2(%arg0: i32) -> (i32, i32) {
    %c0_i32 = arith.constant 0 : i32
    %c0_i32_0 = arith.constant 0 : i32
    %c0_i32_1 = arith.constant 0 : i32
    return %c0_i32, %c0_i32_0 : i32, i32
  }
  func.func @transform_3(%arg0: i32) -> (i32, i32, i32) {
    %c0_i32 = arith.constant 0 : i32
    %c0_i32_0 = arith.constant 0 : i32
    %c0_i32_1 = arith.constant 0 : i32
    %c0_i32_2 = arith.constant 0 : i32
    return %c0_i32, %c0_i32_0, %c0_i32_1 : i32, i32, i32
  }
  func.func @transform_4(%arg0: i32) -> (i32, i32, i32) {
    %c0_i32 = arith.constant 0 : i32
    %c0_i32_0 = arith.constant 0 : i32
    %c0_i32_1 = arith.constant 0 : i32
    %c0_i32_2 = arith.constant 0 : i32
    return %c0_i32, %c0_i32_0, %c0_i32_1 : i32, i32, i32
  }
  func.func @transform_5(%arg0: i32) -> (i32, i32) {
    %c0_i32 = arith.constant 0 : i32
    %c0_i32_0 = arith.constant 0 : i32
    %c0_i32_1 = arith.constant 0 : i32
    return %c0_i32, %c0_i32_0 : i32, i32
  }
  func.func @transform_6(%arg0: i32) -> (i32, i32) {
    %c0_i32 = arith.constant 0 : i32
    %c0_i32_0 = arith.constant 0 : i32
    %c0_i32_1 = arith.constant 0 : i32
    return %c0_i32, %c0_i32_0 : i32, i32
  }
  func.func @transform_7(%arg0: i32) -> (i32, i32) {
    %c0_i32 = arith.constant 0 : i32
    %c0_i32_0 = arith.constant 0 : i32
    %c0_i32_1 = arith.constant 0 : i32
    return %c0_i32, %c0_i32_0 : i32, i32
  }
  func.func @transform_8(%arg0: i32) -> (i32, i32) {
    %c0_i32 = arith.constant 0 : i32
    %c0_i32_0 = arith.constant 0 : i32
    %c0_i32_1 = arith.constant 0 : i32
    return %c0_i32, %c0_i32_0 : i32, i32
  }
}

</mosaic_0001>

<llo_original>
// kernel: net_forward.1
$region0: #{net_forward.1}
  #allocation0 [shape = 'u32[]', space=smem, size = 0x4, offset = 0x4, fixed_abs, tag = 'smem constant byte address 0x4 - core index']
  #allocation1 [shape = 'u32[144,128]{1,0:T(1,128)}', space=vmem, size = 0x12000, scoped, tag = 'internal scratch']
  %s0 = inlined_call_operand.vmem [shape: f32[128,64], index: 0, kind: input, shape index: {}]
  %s1 = inlined_call_operand.vmem [shape: f32[128,128], index: 1, kind: input, shape index: {}]
  %s2 = inlined_call_operand.vmem [shape: f32[64,1024], index: 2, kind: input, shape index: {}]
  %s3 = inlined_call_operand.vmem [shape: f32[8,1,128], index: 3, kind: input, shape index: {}]
  %s4 = inlined_call_operand.vmem [shape: f32[8,128,1], index: 4, kind: input, shape index: {}]
  %s5 = inlined_call_operand.vmem [shape: f32[1,1024], index: 5, kind: input, shape index: {}]
  %s6 = inlined_call_operand.vmem [shape: f32[1024,256], index: 6, kind: input, shape index: {}]
  %s7 = inlined_call_operand.vmem [shape: f32[1,128], index: 7, kind: input, shape index: {}]
  %s8 = inlined_call_operand.vmem [shape: f32[128,128], index: 8, kind: output, shape index: {}]
  %s9 = sld [smem:[#allocation0]]
  $region42: #{net_forward.1} parent=0
    _
  %s11 = ssub.s32 1, %s9
  %s12 = scalar_select 0, %s11, %s9
  // Predicated region
  $region2: #{net_forward.1} parent=0 // pred_check
    _
  $region3: #{net_forward.1} parent=0 // pred_check_branch
    %14 = sbr.rel (0) target = $region5
  $region4: #{net_forward.1} parent=0 // pred_region
    _
  $region5: #{net_forward.1} parent=0 // pred_fallthru
    _
  // Predicated region
  $region6: #{net_forward.1} parent=0 // pred_check
    _
  $region7: #{net_forward.1} parent=0 // pred_check_branch
    %16 = sbr.rel (0) target = $region9
  $region8: #{net_forward.1} parent=0 // pred_region
    _
  $region9: #{net_forward.1} parent=0 // pred_fallthru
    _
  // Predicated region
  $region10: #{net_forward.1} parent=0 // pred_check
    _
  $region11: #{net_forward.1} parent=0 // pred_check_branch
    %18 = sbr.rel (0) target = $region13
  $region12: #{net_forward.1} parent=0 // pred_region
    _
  $region13: #{net_forward.1} parent=0 // pred_fallthru
    _
  // Predicated region
  $region14: #{net_forward.1} parent=0 // pred_check
    _
  $region15: #{net_forward.1} parent=0 // pred_check_branch
    %20 = sbr.rel (0) target = $region17
  $region16: #{net_forward.1} parent=0 // pred_region
    _
  $region17: #{net_forward.1} parent=0 // pred_fallthru
    _
  // Predicated region
  $region18: #{net_forward.1} parent=0 // pred_check
    _
  $region19: #{net_forward.1} parent=0 // pred_check_branch
    %22 = sbr.rel (0) target = $region21
  $region20: #{net_forward.1} parent=0 // pred_region
    _
  $region21: #{net_forward.1} parent=0 // pred_fallthru
    _
  // Predicated region
  $region22: #{net_forward.1} parent=0 // pred_check
    _
  $region23: #{net_forward.1} parent=0 // pred_check_branch
    %24 = sbr.rel (0) target = $region25
  $region24: #{net_forward.1} parent=0 // pred_region
    _
  $region25: #{net_forward.1} parent=0 // pred_fallthru
    _
  // Predicated region
  $region26: #{net_forward.1} parent=0 // pred_check
    _
  $region27: #{net_forward.1} parent=0 // pred_check_branch
    %26 = sbr.rel (0) target = $region29
  $region28: #{net_forward.1} parent=0 // pred_region
    _
  $region29: #{net_forward.1} parent=0 // pred_fallthru
    _
  // Predicated region
  $region30: #{net_forward.1} parent=0 // pred_check
    _
  $region31: #{net_forward.1} parent=0 // pred_check_branch
    %28 = sbr.rel (0) target = $region33
  $region32: #{net_forward.1} parent=0 // pred_region
    _
  $region33: #{net_forward.1} parent=0 // pred_fallthru
    _
  %v29 = vld [vmem:[%s0] sm:$0xff]
  %v30 = vld [vmem:[%s0 + $0x8] sm:$0xff]
  %v31 = vld [vmem:[%s0 + $0x10] sm:$0xff]
  %v32 = vld [vmem:[%s0 + $0x18] sm:$0xff]
  %v33 = vld [vmem:[%s0 + $0x20] sm:$0xff]
  %v34 = vld [vmem:[%s0 + $0x28] sm:$0xff]
  %v35 = vld [vmem:[%s0 + $0x30] sm:$0xff]
  %v36 = vld [vmem:[%s0 + $0x38] sm:$0xff]
  %v37 = vld [vmem:[%s0 + $0x40] sm:$0xff]
  %v38 = vld [vmem:[%s0 + $0x48] sm:$0xff]
  %v39 = vld [vmem:[%s0 + $0x50] sm:$0xff]
  %v40 = vld [vmem:[%s0 + $0x58] sm:$0xff]
  %v41 = vld [vmem:[%s0 + $0x60] sm:$0xff]
  %v42 = vld [vmem:[%s0 + $0x68] sm:$0xff]
  %v43 = vld [vmem:[%s0 + $0x70] sm:$0xff]
  %v44 = vld [vmem:[%s0 + $0x78] sm:$0xff]
  %v45 = vld [vmem:[%s1] sm:$0xff]
  %v46 = vld [vmem:[%s1 + $0x8] sm:$0xff]
  %v47 = vld [vmem:[%s1 + $0x10] sm:$0xff]
  %v48 = vld [vmem:[%s1 + $0x18] sm:$0xff]
  %v49 = vld [vmem:[%s1 + $0x20] sm:$0xff]
  %v50 = vld [vmem:[%s1 + $0x28] sm:$0xff]
  %v51 = vld [vmem:[%s1 + $0x30] sm:$0xff]
  %v52 = vld [vmem:[%s1 + $0x38] sm:$0xff]
  %v53 = vld [vmem:[%s1 + $0x40] sm:$0xff]
  %v54 = vld [vmem:[%s1 + $0x48] sm:$0xff]
  %v55 = vld [vmem:[%s1 + $0x50] sm:$0xff]
  %v56 = vld [vmem:[%s1 + $0x58] sm:$0xff]
  %v57 = vld [vmem:[%s1 + $0x60] sm:$0xff]
  %v58 = vld [vmem:[%s1 + $0x68] sm:$0xff]
  %v59 = vld [vmem:[%s1 + $0x70] sm:$0xff]
  %v60 = vld [vmem:[%s1 + $0x78] sm:$0xff]
  %v61 = vld [vmem:[%s2] sm:$0xff]
  %v62 = vld [vmem:[%s2 + $0x8] sm:$0xff]
  %v63 = vld [vmem:[%s2 + $0x10] sm:$0xff]
  %v64 = vld [vmem:[%s2 + $0x18] sm:$0xff]
  %v65 = vld [vmem:[%s2 + $0x20] sm:$0xff]
  %v66 = vld [vmem:[%s2 + $0x28] sm:$0xff]
  %v67 = vld [vmem:[%s2 + $0x30] sm:$0xff]
  %v68 = vld [vmem:[%s2 + $0x38] sm:$0xff]
  %v69 = vld [vmem:[%s2 + $0x40] sm:$0xff]
  %v70 = vld [vmem:[%s2 + $0x48] sm:$0xff]
  %v71 = vld [vmem:[%s2 + $0x50] sm:$0xff]
  %v72 = vld [vmem:[%s2 + $0x58] sm:$0xff]
  %v73 = vld [vmem:[%s2 + $0x60] sm:$0xff]
  %v74 = vld [vmem:[%s2 + $0x68] sm:$0xff]
  %v75 = vld [vmem:[%s2 + $0x70] sm:$0xff]
  %v76 = vld [vmem:[%s2 + $0x78] sm:$0xff]
  %v77 = vld [vmem:[%s2 + $0x80] sm:$0xff]
  %v78 = vld [vmem:[%s2 + $0x88] sm:$0xff]
  %v79 = vld [vmem:[%s2 + $0x90] sm:$0xff]
  %v80 = vld [vmem:[%s2 + $0x98] sm:$0xff]
  %v81 = vld [vmem:[%s2 + $0xa0] sm:$0xff]
  %v82 = vld [vmem:[%s2 + $0xa8] sm:$0xff]
  %v83 = vld [vmem:[%s2 + $0xb0] sm:$0xff]
  %v84 = vld [vmem:[%s2 + $0xb8] sm:$0xff]
  %v85 = vld [vmem:[%s2 + $0xc0] sm:$0xff]
  %v86 = vld [vmem:[%s2 + $0xc8] sm:$0xff]
  %v87 = vld [vmem:[%s2 + $0xd0] sm:$0xff]
  %v88 = vld [vmem:[%s2 + $0xd8] sm:$0xff]
  %v89 = vld [vmem:[%s2 + $0xe0] sm:$0xff]
  %v90 = vld [vmem:[%s2 + $0xe8] sm:$0xff]
  %v91 = vld [vmem:[%s2 + $0xf0] sm:$0xff]
  %v92 = vld [vmem:[%s2 + $0xf8] sm:$0xff]
  %v93 = vld [vmem:[%s2 + $0x100] sm:$0xff]
  %v94 = vld [vmem:[%s2 + $0x108] sm:$0xff]
  %v95 = vld [vmem:[%s2 + $0x110] sm:$0xff]
  %v96 = vld [vmem:[%s2 + $0x118] sm:$0xff]
  %v97 = vld [vmem:[%s2 + $0x120] sm:$0xff]
  %v98 = vld [vmem:[%s2 + $0x128] sm:$0xff]
  %v99 = vld [vmem:[%s2 + $0x130] sm:$0xff]
  %v100 = vld [vmem:[%s2 + $0x138] sm:$0xff]
  %v101 = vld [vmem:[%s2 + $0x140] sm:$0xff]
  %v102 = vld [vmem:[%s2 + $0x148] sm:$0xff]
  %v103 = vld [vmem:[%s2 + $0x150] sm:$0xff]
  %v104 = vld [vmem:[%s2 + $0x158] sm:$0xff]
  %v105 = vld [vmem:[%s2 + $0x160] sm:$0xff]
  %v106 = vld [vmem:[%s2 + $0x168] sm:$0xff]
  %v107 = vld [vmem:[%s2 + $0x170] sm:$0xff]
  %v108 = vld [vmem:[%s2 + $0x178] sm:$0xff]
  %v109 = vld [vmem:[%s2 + $0x180] sm:$0xff]
  %v110 = vld [vmem:[%s2 + $0x188] sm:$0xff]
  %v111 = vld [vmem:[%s2 + $0x190] sm:$0xff]
  %v112 = vld [vmem:[%s2 + $0x198] sm:$0xff]
  %v113 = vld [vmem:[%s2 + $0x1a0] sm:$0xff]
  %v114 = vld [vmem:[%s2 + $0x1a8] sm:$0xff]
  %v115 = vld [vmem:[%s2 + $0x1b0] sm:$0xff]
  %v116 = vld [vmem:[%s2 + $0x1b8] sm:$0xff]
  %v117 = vld [vmem:[%s2 + $0x1c0] sm:$0xff]
  %v118 = vld [vmem:[%s2 + $0x1c8] sm:$0xff]
  %v119 = vld [vmem:[%s2 + $0x1d0] sm:$0xff]
  %v120 = vld [vmem:[%s2 + $0x1d8] sm:$0xff]
  %v121 = vld [vmem:[%s2 + $0x1e0] sm:$0xff]
  %v122 = vld [vmem:[%s2 + $0x1e8] sm:$0xff]
  %v123 = vld [vmem:[%s2 + $0x1f0] sm:$0xff]
  %v124 = vld [vmem:[%s2 + $0x1f8] sm:$0xff]
  %vm125 = vcmask 523264
  %v127 = vsel %vm125, %v29, 0
  %v130 = vsel %vm125, %v30, 0
  %v133 = vsel %vm125, %v31, 0
  %v136 = vsel %vm125, %v32, 0
  %v139 = vsel %vm125, %v33, 0
  %v142 = vsel %vm125, %v34, 0
  %v145 = vsel %vm125, %v35, 0
  %v148 = vsel %vm125, %v36, 0
  %v151 = vsel %vm125, %v37, 0
  %v154 = vsel %vm125, %v38, 0
  %v157 = vsel %vm125, %v39, 0
  %v160 = vsel %vm125, %v40, 0
  %v163 = vsel %vm125, %v41, 0
  %v166 = vsel %vm125, %v42, 0
  %v169 = vsel %vm125, %v43, 0
  %v172 = vsel %vm125, %v44, 0
  %174 = vmatprep.subr.mxu0 %v62
  %175 = vmatpush1.msra.mxu0 %v61
  %176 = vmatprep.subr.mxu0 %v70
  %177 = vmatpush1.msra.mxu0 %v69
  %178 = vmatprep.subr.mxu0 %v78
  %179 = vmatpush1.msra.mxu0 %v77
  %180 = vmatprep.subr.mxu0 %v86
  %181 = vmatpush1.msra.mxu0 %v85
  %182 = vmatprep.subr.mxu0 %v94
  %183 = vmatpush1.msra.mxu0 %v93
  %184 = vmatprep.subr.mxu0 %v102
  %185 = vmatpush1.msra.mxu0 %v101
  %186 = vmatprep.subr.mxu0 %v110
  %187 = vmatpush1.msra.mxu0 %v109
  %188 = vmatprep.subr.mxu0 %v118
  %189 = vmatpush1.msra.mxu0 %v117
  %190 = vmatprep.subr.mxu0 0.0
  %191 = vmatpush1.msra.mxu0 0.0
  %192 = vmatprep.subr.mxu0 0.0
  %193 = vmatpush1.msra.mxu0 0.0
  %194 = vmatprep.subr.mxu0 0.0
  %195 = vmatpush1.msra.mxu0 0.0
  %196 = vmatprep.subr.mxu0 0.0
  %197 = vmatpush1.msra.mxu0 0.0
  %198 = vmatprep.subr.mxu0 0.0
  %199 = vmatpush1.msra.mxu0 0.0
  %200 = vmatprep.subr.mxu0 0.0
  %201 = vmatpush1.msra.mxu0 0.0
  %202 = vmatprep.subr.mxu0 0.0
  %203 = vmatpush1.msra.mxu0 0.0
  %204 = vmatprep.subr.mxu0 0.0
  %205 = vmatpush1.msra.mxu0 0.0
  %206 = vmatprep.subr.mxu0 0.0
  %207 = vmatpush1.msra.mxu0 0.0
  %208 = vmatprep.subr.mxu0 0.0
  %209 = vmatpush1.msra.mxu0 0.0
  %210 = vmatprep.subr.mxu0 0.0
  %211 = vmatpush1.msra.mxu0 0.0
  %212 = vmatprep.subr.mxu0 0.0
  %213 = vmatpush1.msra.mxu0 0.0
  %214 = vmatprep.subr.mxu0 0.0
  %215 = vmatpush1.msra.mxu0 0.0
  %216 = vmatprep.subr.mxu0 0.0
  %217 = vmatpush1.msra.mxu0 0.0
  %218 = vmatprep.subr.mxu0 0.0
  %219 = vmatpush1.msra.mxu0 0.0
  %220 = vmatprep.subr.mxu0 0.0
  %221 = vmatpush1.msra.mxu0 0.0
  %222 = vmatprep.subr.mxu0 0.0
  %223 = vmatpush1.msra.mxu0 0.0
  %224 = vmatprep.subr.mxu0 0.0
  %225 = vmatpush1.msra.mxu0 0.0
  %226 = vmatprep.subr.mxu0 0.0
  %227 = vmatpush1.msra.mxu0 0.0
  %228 = vmatprep.subr.mxu0 0.0
  %229 = vmatpush1.msra.mxu0 0.0
  %230 = vmatprep.subr.mxu0 0.0
  %231 = vmatpush1.msra.mxu0 0.0
  %232 = vmatprep.subr.mxu0 0.0
  %233 = vmatpush1.msra.mxu0 0.0
  %234 = vmatprep.subr.mxu0 0.0
  %235 = vmatpush1.msra.mxu0 0.0
  %236 = vmatprep.subr.mxu0 0.0
  %237 = vmatpush1.msra.mxu0 0.0
  %238 = vmatprep.mubr.f32.mxu0 0.0
  %239 = vmatmul.mubr.f32.gmra.mrb[0].mxu0 %v127
  %v240 = vpop.f32.mrb[0].mxu0
  %v241 = vadd.f32 0.0, %v240
  %v242 = vpop.f32.mrb[0].mxu0
  %v243 = vadd.f32 0.0, %v242
  %244 = vmatprep.mubr.f32.mxu0 0.0
  %245 = vmatmul.mubr.f32.gmra.mrb[0].mxu0 %v130
  %v246 = vpop.f32.mrb[0].mxu0
  %v247 = vadd.f32 0.0, %v246
  %v248 = vpop.f32.mrb[0].mxu0
  %v249 = vadd.f32 0.0, %v248
  %250 = vmatprep.mubr.f32.mxu0 0.0
  %251 = vmatmul.mubr.f32.gmra.mrb[0].mxu0 %v133
  %v252 = vpop.f32.mrb[0].mxu0
  %v253 = vadd.f32 0.0, %v252
  %v254 = vpop.f32.mrb[0].mxu0
  %v255 = vadd.f32 0.0, %v254
  %256 = vmatprep.mubr.f32.mxu0 0.0
  %257 = vmatmul.mubr.f32.gmra.mrb[0].mxu0 %v136
  %v258 = vpop.f32.mrb[0].mxu0
  %v259 = vadd.f32 0.0, %v258
  %v260 = vpop.f32.mrb[0].mxu0
  %v261 = vadd.f32 0.0, %v260
  %262 = vmatprep.mubr.f32.mxu0 0.0
  %263 = vmatmul.mubr.f32.gmra.mrb[0].mxu0 %v139
  %v264 = vpop.f32.mrb[0].mxu0
  %v265 = vadd.f32 0.0, %v264
  %v266 = vpop.f32.mrb[0].mxu0
  %v267 = vadd.f32 0.0, %v266
  %268 = vmatprep.mubr.f32.mxu0 0.0
  %269 = vmatmul.mubr.f32.gmra.mrb[0].mxu0 %v142
  %v270 = vpop.f32.mrb[0].mxu0
  %v271 = vadd.f32 0.0, %v270
  %v272 = vpop.f32.mrb[0].mxu0
  %v273 = vadd.f32 0.0, %v272
  %274 = vmatprep.mubr.f32.mxu0 0.0
  %275 = vmatmul.mubr.f32.gmra.mrb[0].mxu0 %v145
  %v276 = vpop.f32.mrb[0].mxu0
  %v277 = vadd.f32 0.0, %v276
  %v278 = vpop.f32.mrb[0].mxu0
  %v279 = vadd.f32 0.0, %v278
  %280 = vmatprep.mubr.f32.mxu0 0.0
  %281 = vmatmul.mubr.f32.gmra.mrb[0].mxu0 %v148
  %v282 = vpop.f32.mrb[0].mxu0
  %v283 = vadd.f32 0.0, %v282
  %v284 = vpop.f32.mrb[0].mxu0
  %v285 = vadd.f32 0.0, %v284
  %286 = vmatprep.mubr.f32.mxu0 0.0
  %287 = vmatmul.mubr.f32.gmra.mrb[0].mxu0 %v151
  %v288 = vpop.f32.mrb[0].mxu0
  %v289 = vadd.f32 0.0, %v288
  %v290 = vpop.f32.mrb[0].mxu0
  %v291 = vadd.f32 0.0, %v290
  %292 = vmatprep.mubr.f32.mxu0 0.0
  %293 = vmatmul.mubr.f32.gmra.mrb[0].mxu0 %v154
  %v294 = vpop.f32.mrb[0].mxu0
  %v295 = vadd.f32 0.0, %v294
  %v296 = vpop.f32.mrb[0].mxu0
  %v297 = vadd.f32 0.0, %v296
  %298 = vmatprep.mubr.f32.mxu0 0.0
  %299 = vmatmul.mubr.f32.gmra.mrb[0].mxu0 %v157
  %v300 = vpop.f32.mrb[0].mxu0
  %v301 = vadd.f32 0.0, %v300
  %v302 = vpop.f32.mrb[0].mxu0
  %v303 = vadd.f32 0.0, %v302
  %304 = vmatprep.mubr.f32.mxu0 0.0
  %305 = vmatmul.mubr.f32.gmra.mrb[0].mxu0 %v160
  %v306 = vpop.f32.mrb[0].mxu0
  %v307 = vadd.f32 0.0, %v306
  %v308 = vpop.f32.mrb[0].mxu0
  %v309 = vadd.f32 0.0, %v308
  %310 = vmatprep.mubr.f32.mxu0 0.0
  %311 = vmatmul.mubr.f32.gmra.mrb[0].mxu0 %v163
  %v312 = vpop.f32.mrb[0].mxu0
  %v313 = vadd.f32 0.0, %v312
  %v314 = vpop.f32.mrb[0].mxu0
  %v315 = vadd.f32 0.0, %v314
  %316 = vmatprep.mubr.f32.mxu0 0.0
  %317 = vmatmul.mubr.f32.gmra.mrb[0].mxu0 %v166
  %v318 = vpop.f32.mrb[0].mxu0
  %v319 = vadd.f32 0.0, %v318
  %v320 = vpop.f32.mrb[0].mxu0
  %v321 = vadd.f32 0.0, %v320
  %322 = vmatprep.mubr.f32.mxu0 0.0
  %323 = vmatmul.mubr.f32.gmra.mrb[0].mxu0 %v169
  %v324 = vpop.f32.mrb[0].mxu0
  %v325 = vadd.f32 0.0, %v324
  %v326 = vpop.f32.mrb[0].mxu0
  %v327 = vadd.f32 0.0, %v326
  %328 = vmatprep.mubr.f32.mxu0 0.0
  %329 = vmatmul.mubr.f32.gmra.mrb[0].mxu0 %v172
  %v330 = vpop.f32.mrb[0].mxu0
  %v331 = vadd.f32 0.0, %v330
  %v332 = vpop.f32.mrb[0].mxu0
  %v333 = vadd.f32 0.0, %v332
  %334 = vdwg.mxu0
  %335 = vmatprep.subr.mxu0 %v64
  %336 = vmatpush1.msra.mxu0 %v63
  %337 = vmatprep.subr.mxu0 %v72
  %338 = vmatpush1.msra.mxu0 %v71
  %339 = vmatprep.subr.mxu0 %v80
  %340 = vmatpush1.msra.mxu0 %v79
  %341 = vmatprep.subr.mxu0 %v88
  %342 = vmatpush1.msra.mxu0 %v87
  %343 = vmatprep.subr.mxu0 %v96
  %344 = vmatpush1.msra.mxu0 %v95
  %345 = vmatprep.subr.mxu0 %v104
  %346 = vmatpush1.msra.mxu0 %v103
  %347 = vmatprep.subr.mxu0 %v112
  %348 = vmatpush1.msra.mxu0 %v111
  %349 = vmatprep.subr.mxu0 %v120
  %350 = vmatpush1.msra.mxu0 %v119
  %351 = vmatprep.subr.mxu0 0.0
  %352 = vmatpush1.msra.mxu0 0.0
  %353 = vmatprep.subr.mxu0 0.0
  %354 = vmatpush1.msra.mxu0 0.0
  %355 = vmatprep.subr.mxu0 0.0
  %356 = vmatpush1.msra.mxu0 0.0
  %357 = vmatprep.subr.mxu0 0.0
  %358 = vmatpush1.msra.mxu0 0.0
  %359 = vmatprep.subr.mxu0 0.0
  %360 = vmatpush1.msra.mxu0 0.0
  %361 = vmatprep.subr.mxu0 0.0
  %362 = vmatpush1.msra.mxu0 0.0
  %363 = vmatprep.subr.mxu0 0.0
  %364 = vmatpush1.msra.mxu0 0.0
  %365 = vmatprep.subr.mxu0 0.0
  %366 = vmatpush1.msra.mxu0 0.0
  %367 = vmatprep.subr.mxu0 0.0
  %368 = vmatpush1.msra.mxu0 0.0
  %369 = vmatprep.subr.mxu0 0.0
  %370 = vmatpush1.msra.mxu0 0.0
  %371 = vmatprep.subr.mxu0 0.0
  %372 = vmatpush1.msra.mxu0 0.0
  %373 = vmatprep.subr.mxu0 0.0
  %374 = vmatpush1.msra.mxu0 0.0
  %375 = vmatprep.subr.mxu0 0.0
  %376 = vmatpush1.msra.mxu0 0.0
  %377 = vmatprep.subr.mxu0 0.0
  %378 = vmatpush1.msra.mxu0 0.0
  %379 = vmatprep.subr.mxu0 0.0
  %380 = vmatpush1.msra.mxu0 0.0
  %381 = vmatprep.subr.mxu0 0.0
  %382 = vmatpush1.msra.mxu0 0.0
  %383 = vmatprep.subr.mxu0 0.0
  %384 = vmatpush1.msra.mxu0 0.0
  %385 = vmatprep.subr.mxu0 0.0
  %386 = vmatpush1.msra.mxu0 0.0
  %387 = vmatprep.subr.mxu0 0.0
  %388 = vmatpush1.msra.mxu0 0.0
  %389 = vmatprep.subr.mxu0 0.0
  %390 = vmatpush1.msra.mxu0 0.0
  %391 = vmatprep.subr.mxu0 0.0
  %392 = vmatpush1.msra.mxu0 0.0
  %393 = vmatprep.subr.mxu0 0.0
  %394 = vmatpush1.msra.mxu0 0.0
  %395 = vmatprep.subr.mxu0 0.0
  %396 = vmatpush1.msra.mxu0 0.0
  %397 = vmatprep.subr.mxu0 0.0
  %398 = vmatpush1.msra.mxu0 0.0
  %399 = vmatprep.mubr.f32.mxu0 0.0
  %400 = vmatmul.mubr.f32.gmra.mrb[0].mxu0 %v127
  %v401 = vpop.f32.mrb[0].mxu0
  %v402 = vadd.f32 0.0, %v401
  %v403 = vpop.f32.mrb[0].mxu0
  %v404 = vadd.f32 0.0, %v403
  %405 = vmatprep.mubr.f32.mxu0 0.0
  %406 = vmatmul.mubr.f32.gmra.mrb[0].mxu0 %v130
  %v407 = vpop.f32.mrb[0].mxu0
  %v408 = vadd.f32 0.0, %v407
  %v409 = vpop.f32.mrb[0].mxu0
  %v410 = vadd.f32 0.0, %v409
  %411 = vmatprep.mubr.f32.mxu0 0.0
  %412 = vmatmul.mubr.f32.gmra.mrb[0].mxu0 %v133
  %v413 = vpop.f32.mrb[0].mxu0
  %v414 = vadd.f32 0.0, %v413
  %v415 = vpop.f32.mrb[0].mxu0
  %v416 = vadd.f32 0.0, %v415
  %417 = vmatprep.mubr.f32.mxu0 0.0
  %418 = vmatmul.mubr.f32.gmra.mrb[0].mxu0 %v136
  %v419 = vpop.f32.mrb[0].mxu0
  %v420 = vadd.f32 0.0, %v419
  %v421 = vpop.f32.mrb[0].mxu0
  %v422 = vadd.f32 0.0, %v421
  %423 = vmatprep.mubr.f32.mxu0 0.0
  %424 = vmatmul.mubr.f32.gmra.mrb[0].mxu0 %v139
  %v425 = vpop.f32.mrb[0].mxu0
  %v426 = vadd.f32 0.0, %v425
  %v427 = vpop.f32.mrb[0].mxu0
  %v428 = vadd.f32 0.0, %v427
  %429 = vmatprep.mubr.f32.mxu0 0.0
  %430 = vmatmul.mubr.f32.gmra.mrb[0].mxu0 %v142
  %v431 = vpop.f32.mrb[0].mxu0
  %v432 = vadd.f32 0.0, %v431
  %v433 = vpop.f32.mrb[0].mxu0
  %v434 = vadd.f32 0.0, %v433
  %435 = vmatprep.mubr.f32.mxu0 0.0
  %436 = vmatmul.mubr.f32.gmra.mrb[0].mxu0 %v145
  %v437 = vpop.f32.mrb[0].mxu0
  %v438 = vadd.f32 0.0, %v437
  %v439 = vpop.f32.mrb[0].mxu0
  %v440 = vadd.f32 0.0, %v439
  %441 = vmatprep.mubr.f32.mxu0 0.0
  %442 = vmatmul.mubr.f32.gmra.mrb[0].mxu0 %v148
  %v443 = vpop.f32.mrb[0].mxu0
  %v444 = vadd.f32 0.0, %v443
  %v445 = vpop.f32.mrb[0].mxu0
  %v446 = vadd.f32 0.0, %v445
  %447 = vmatprep.mubr.f32.mxu0 0.0
  %448 = vmatmul.mubr.f32.gmra.mrb[0].mxu0 %v151
  %v449 = vpop.f32.mrb[0].mxu0
  %v450 = vadd.f32 0.0, %v449
  %v451 = vpop.f32.mrb[0].mxu0
  %v452 = vadd.f32 0.0, %v451
  %453 = vmatprep.mubr.f32.mxu0 0.0
  %454 = vmatmul.mubr.f32.gmra.mrb[0].mxu0 %v154
  %v455 = vpop.f32.mrb[0].mxu0
  %v456 = vadd.f32 0.0, %v455
  %v457 = vpop.f32.mrb[0].mxu0
  %v458 = vadd.f32 0.0, %v457
  %459 = vmatprep.mubr.f32.mxu0 0.0
  %460 = vmatmul.mubr.f32.gmra.mrb[0].mxu0 %v157
  %v461 = vpop.f32.mrb[0].mxu0
  %v462 = vadd.f32 0.0, %v461
  %v463 = vpop.f32.mrb[0].mxu0
  %v464 = vadd.f32 0.0, %v463
  %465 = vmatprep.mubr.f32.mxu0 0.0
  %466 = vmatmul.mubr.f32.gmra.mrb[0].mxu0 %v160
  %v467 = vpop.f32.mrb[0].mxu0
  %v468 = vadd.f32 0.0, %v467
  %v469 = vpop.f32.mrb[0].mxu0
  %v470 = vadd.f32 0.0, %v469
  %471 = vmatprep.mubr.f32.mxu0 0.0
  %472 = vmatmul.mubr.f32.gmra.mrb[0].mxu0 %v163
  %v473 = vpop.f32.mrb[0].mxu0
  %v474 = vadd.f32 0.0, %v473
  %v475 = vpop.f32.mrb[0].mxu0
  %v476 = vadd.f32 0.0, %v475
  %477 = vmatprep.mubr.f32.mxu0 0.0
  %478 = vmatmul.mubr.f32.gmra.mrb[0].mxu0 %v166
  %v479 = vpop.f32.mrb[0].mxu0
  %v480 = vadd.f32 0.0, %v479
  %v481 = vpop.f32.mrb[0].mxu0
  %v482 = vadd.f32 0.0, %v481
  %483 = vmatprep.mubr.f32.mxu0 0.0
  %484 = vmatmul.mubr.f32.gmra.mrb[0].mxu0 %v169
  %v485 = vpop.f32.mrb[0].mxu0
  %v486 = vadd.f32 0.0, %v485
  %v487 = vpop.f32.mrb[0].mxu0
  %v488 = vadd.f32 0.0, %v487
  %489 = vmatprep.mubr.f32.mxu0 0.0
  %490 = vmatmul.mubr.f32.gmra.mrb[0].mxu0 %v172
  %v491 = vpop.f32.mrb[0].mxu0
  %v492 = vadd.f32 0.0, %v491
  %v493 = vpop.f32.mrb[0].mxu0
  %v494 = vadd.f32 0.0, %v493
  %495 = vdwg.mxu0
  %496 = vmatprep.subr.mxu0 %v66
  %497 = vmatpush1.msra.mxu0 %v65
  %498 = vmatprep.subr.mxu0 %v74
  %499 = vmatpush1.msra.mxu0 %v73
  %500 = vmatprep.subr.mxu0 %v82
  %501 = vmatpush1.msra.mxu0 %v81
  %502 = vmatprep.subr.mxu0 %v90
  %503 = vmatpush1.msra.mxu0 %v89
  %504 = vmatprep.subr.mxu0 %v98
  %505 = vmatpush1.msra.mxu0 %v97
  %506 = vmatprep.subr.mxu0 %v106
  %507 = vmatpush1.msra.mxu0 %v105
  %508 = vmatprep.subr.mxu0 %v114
  %509 = vmatpush1.msra.mxu0 %v113
  %510 = vmatprep.subr.mxu0 %v122
  %511 = vmatpush1.msra.mxu0 %v121
  %512 = vmatprep.subr.mxu0 0.0
  %513 = vmatpush1.msra.mxu0 0.0
  %514 = vmatprep.subr.mxu0 0.0
  %515 = vmatpush1.msra.mxu0 0.0
  %516 = vmatprep.subr.mxu0 0.0
  %517 = vmatpush1.msra.mxu0 0.0
  %518 = vmatprep.subr.mxu0 0.0
  %519 = vmatpush1.msra.mxu0 0.0
  %520 = vmatprep.subr.mxu0 0.0
  %521 = vmatpush1.msra.mxu0 0.0
  %522 = vmatprep.subr.mxu0 0.0
  %523 = vmatpush1.msra.mxu0 0.0
  %524 = vmatprep.subr.mxu0 0.0
  %525 = vmatpush1.msra.mxu0 0.0
  %526 = vmatprep.subr.mxu0 0.0
  %527 = vmatpush1.msra.mxu0 0.0
  %528 = vmatprep.subr.mxu0 0.0
  %529 = vmatpush1.msra.mxu0 0.0
  %530 = vmatprep.subr.mxu0 0.0
  %531 = vmatpush1.msra.mxu0 0.0
  %532 = vmatprep.subr.mxu0 0.0
  %533 = vmatpush1.msra.mxu0 0.0
  %534 = vmatprep.subr.mxu0 0.0
  %535 = vmatpush1.msra.mxu0 0.0
  %536 = vmatprep.subr.mxu0 0.0
  %537 = vmatpush1.msra.mxu0 0.0
  %538 = vmatprep.subr.mxu0 0.0
  %539 = vmatpush1.msra.mxu0 0.0
  %540 = vmatprep.subr.mxu0 0.0
  %541 = vmatpush1.msra.mxu0 0.0
  %542 = vmatprep.subr.mxu0 0.0
  %543 = vmatpush1.msra.mxu0 0.0
  %544 = vmatprep.subr.mxu0 0.0
  %545 = vmatpush1.msra.mxu0 0.0
  %546 = vmatprep.subr.mxu0 0.0
  %547 = vmatpush1.msra.mxu0 0.0
  %548 = vmatprep.subr.mxu0 0.0
  %549 = vmatpush1.msra.mxu0 0.0
  %550 = vmatprep.subr.mxu0 0.0
  %551 = vmatpush1.msra.mxu0 0.0
  %552 = vmatprep.subr.mxu0 0.0
  %553 = vmatpush1.msra.mxu0 0.0
  %554 = vmatprep.subr.mxu0 0.0
  %555 = vmatpush1.msra.mxu0 0.0
  %556 = vmatprep.subr.mxu0 0.0
  %557 = vmatpush1.msra.mxu0 0.0
  %558 = vmatprep.subr.mxu0 0.0
  %559 = vmatpush1.msra.mxu0 0.0
  %560 = vmatprep.mubr.f32.mxu0 0.0
  %561 = vmatmul.mubr.f32.gmra.mrb[0].mxu0 %v127
  %v562 = vpop.f32.mrb[0].mxu0
  %v563 = vadd.f32 0.0, %v562
  %v564 = vpop.f32.mrb[0].mxu0
  %v565 = vadd.f32 0.0, %v564
  %566 = vmatprep.mubr.f32.mxu0 0.0
  %567 = vmatmul.mubr.f32.gmra.mrb[0].mxu0 %v130
  %v568 = vpop.f32.mrb[0].mxu0
  %v569 = vadd.f32 0.0, %v568
  %v570 = vpop.f32.mrb[0].mxu0
  %v571 = vadd.f32 0.0, %v570
  %572 = vmatprep.mubr.f32.mxu0 0.0
  %573 = vmatmul.mubr.f32.gmra.mrb[0].mxu0 %v133
  %v574 = vpop.f32.mrb[0].mxu0
  %v575 = vadd.f32 0.0, %v574
  %v576 = vpop.f32.mrb[0].mxu0
  %v577 = vadd.f32 0.0, %v576
  %578 = vmatprep.mubr.f32.mxu0 0.0
  %579 = vmatmul.mubr.f32.gmra.mrb[0].mxu0 %v136
  %v580 = vpop.f32.mrb[0].mxu0
  %v581 = vadd.f32 0.0, %v580
  %v582 = vpop.f32.mrb[0].mxu0
  %v583 = vadd.f32 0.0, %v582
  %584 = vmatprep.mubr.f32.mxu0 0.0
  %585 = vmatmul.mubr.f32.gmra.mrb[0].mxu0 %v139
  %v586 = vpop.f32.mrb[0].mxu0
  %v587 = vadd.f32 0.0, %v586
  %v588 = vpop.f32.mrb[0].mxu0
  %v589 = vadd.f32 0.0, %v588
  %590 = vmatprep.mubr.f32.mxu0 0.0
  %591 = vmatmul.mubr.f32.gmra.mrb[0].mxu0 %v142
  %v592 = vpop.f32.mrb[0].mxu0
  %v593 = vadd.f32 0.0, %v592
  %v594 = vpop.f32.mrb[0].mxu0
  %v595 = vadd.f32 0.0, %v594
  %596 = vmatprep.mubr.f32.mxu0 0.0
  %597 = vmatmul.mubr.f32.gmra.mrb[0].mxu0 %v145
  %v598 = vpop.f32.mrb[0].mxu0
  %v599 = vadd.f32 0.0, %v598
  %v600 = vpop.f32.mrb[0].mxu0
  %v601 = vadd.f32 0.0, %v600
  %602 = vmatprep.mubr.f32.mxu0 0.0
  %603 = vmatmul.mubr.f32.gmra.mrb[0].mxu0 %v148
  %v604 = vpop.f32.mrb[0].mxu0
  %v605 = vadd.f32 0.0, %v604
  %v606 = vpop.f32.mrb[0].mxu0
  %v607 = vadd.f32 0.0, %v606
  %608 = vmatprep.mubr.f32.mxu0 0.0
  %609 = vmatmul.mubr.f32.gmra.mrb[0].mxu0 %v151
  %v610 = vpop.f32.mrb[0].mxu0
  %v611 = vadd.f32 0.0, %v610
  %v612 = vpop.f32.mrb[0].mxu0
  %v613 = vadd.f32 0.0, %v612
  %614 = vmatprep.mubr.f32.mxu0 0.0
  %615 = vmatmul.mubr.f32.gmra.mrb[0].mxu0 %v154
  %v616 = vpop.f32.mrb[0].mxu0
  %v617 = vadd.f32 0.0, %v616
  %v618 = vpop.f32.mrb[0].mxu0
  %v619 = vadd.f32 0.0, %v618
  %620 = vmatprep.mubr.f32.mxu0 0.0
  %621 = vmatmul.mubr.f32.gmra.mrb[0].mxu0 %v157
  %v622 = vpop.f32.mrb[0].mxu0
  %v623 = vadd.f32 0.0, %v622
  %v624 = vpop.f32.mrb[0].mxu0
  %v625 = vadd.f32 0.0, %v624
  %626 = vmatprep.mubr.f32.mxu0 0.0
  %627 = vmatmul.mubr.f32.gmra.mrb[0].mxu0 %v160
  %v628 = vpop.f32.mrb[0].mxu0
  %v629 = vadd.f32 0.0, %v628
  %v630 = vpop.f32.mrb[0].mxu0
  %v631 = vadd.f32 0.0, %v630
  %632 = vmatprep.mubr.f32.mxu0 0.0
  %633 = vmatmul.mubr.f32.gmra.mrb[0].mxu0 %v163
  %v634 = vpop.f32.mrb[0].mxu0
  %v635 = vadd.f32 0.0, %v634
  %v636 = vpop.f32.mrb[0].mxu0
  %v637 = vadd.f32 0.0, %v636
  %638 = vmatprep.mubr.f32.mxu0 0.0
  %639 = vmatmul.mubr.f32.gmra.mrb[0].mxu0 %v166
  %v640 = vpop.f32.mrb[0].mxu0
  %v641 = vadd.f32 0.0, %v640
  %v642 = vpop.f32.mrb[0].mxu0
  %v643 = vadd.f32 0.0, %v642
  %644 = vmatprep.mubr.f32.mxu0 0.0
  %645 = vmatmul.mubr.f32.gmra.mrb[0].mxu0 %v169
  %v646 = vpop.f32.mrb[0].mxu0
  %v647 = vadd.f32 0.0, %v646
  %v648 = vpop.f32.mrb[0].mxu0
  %v649 = vadd.f32 0.0, %v648
  %650 = vmatprep.mubr.f32.mxu0 0.0
  %651 = vmatmul.mubr.f32.gmra.mrb[0].mxu0 %v172
  %v652 = vpop.f32.mrb[0].mxu0
  %v653 = vadd.f32 0.0, %v652
  %v654 = vpop.f32.mrb[0].mxu0
  %v655 = vadd.f32 0.0, %v654
  %656 = vdwg.mxu0
  %657 = vmatprep.subr.mxu0 %v68
  %658 = vmatpush1.msra.mxu0 %v67
  %659 = vmatprep.subr.mxu0 %v76
  %660 = vmatpush1.msra.mxu0 %v75
  %661 = vmatprep.subr.mxu0 %v84
  %662 = vmatpush1.msra.mxu0 %v83
  %663 = vmatprep.subr.mxu0 %v92
  %664 = vmatpush1.msra.mxu0 %v91
  %665 = vmatprep.subr.mxu0 %v100
  %666 = vmatpush1.msra.mxu0 %v99
  %667 = vmatprep.subr.mxu0 %v108
  %668 = vmatpush1.msra.mxu0 %v107
  %669 = vmatprep.subr.mxu0 %v116
  %670 = vmatpush1.msra.mxu0 %v115
  %671 = vmatprep.subr.mxu0 %v124
  %672 = vmatpush1.msra.mxu0 %v123
  %673 = vmatprep.subr.mxu0 0.0
  %674 = vmatpush1.msra.mxu0 0.0
  %675 = vmatprep.subr.mxu0 0.0
  %676 = vmatpush1.msra.mxu0 0.0
  %677 = vmatprep.subr.mxu0 0.0
  %678 = vmatpush1.msra.mxu0 0.0
  %679 = vmatprep.subr.mxu0 0.0
  %680 = vmatpush1.msra.mxu0 0.0
  %681 = vmatprep.subr.mxu0 0.0
  %682 = vmatpush1.msra.mxu0 0.0
  %683 = vmatprep.subr.mxu0 0.0
  %684 = vmatpush1.msra.mxu0 0.0
  %685 = vmatprep.subr.mxu0 0.0
  %686 = vmatpush1.msra.mxu0 0.0
  %687 = vmatprep.subr.mxu0 0.0
  %688 = vmatpush1.msra.mxu0 0.0
  %689 = vmatprep.subr.mxu0 0.0
  %690 = vmatpush1.msra.mxu0 0.0
  %691 = vmatprep.subr.mxu0 0.0
  %692 = vmatpush1.msra.mxu0 0.0
  %693 = vmatprep.subr.mxu0 0.0
  %694 = vmatpush1.msra.mxu0 0.0
  %695 = vmatprep.subr.mxu0 0.0
  %696 = vmatpush1.msra.mxu0 0.0
  %697 = vmatprep.subr.mxu0 0.0
  %698 = vmatpush1.msra.mxu0 0.0
  %699 = vmatprep.subr.mxu0 0.0
  %700 = vmatpush1.msra.mxu0 0.0
  %701 = vmatprep.subr.mxu0 0.0
  %702 = vmatpush1.msra.mxu0 0.0
  %703 = vmatprep.subr.mxu0 0.0
  %704 = vmatpush1.msra.mxu0 0.0
  %705 = vmatprep.subr.mxu0 0.0
  %706 = vmatpush1.msra.mxu0 0.0
  %707 = vmatprep.subr.mxu0 0.0
  %708 = vmatpush1.msra.mxu0 0.0
  %709 = vmatprep.subr.mxu0 0.0
  %710 = vmatpush1.msra.mxu0 0.0
  %711 = vmatprep.subr.mxu0 0.0
  %712 = vmatpush1.msra.mxu0 0.0
  %713 = vmatprep.subr.mxu0 0.0
  %714 = vmatpush1.msra.mxu0 0.0
  %715 = vmatprep.subr.mxu0 0.0
  %716 = vmatpush1.msra.mxu0 0.0
  %717 = vmatprep.subr.mxu0 0.0
  %718 = vmatpush1.msra.mxu0 0.0
  %719 = vmatprep.subr.mxu0 0.0
  %720 = vmatpush1.msra.mxu0 0.0
  %721 = vmatprep.mubr.f32.mxu0 0.0
  %722 = vmatmul.mubr.f32.gmra.mrb[0].mxu0 %v127
  %v723 = vpop.f32.mrb[0].mxu0
  %v724 = vadd.f32 0.0, %v723
  %v725 = vpop.f32.mrb[0].mxu0
  %v726 = vadd.f32 0.0, %v725
  %727 = vmatprep.mubr.f32.mxu0 0.0
  %728 = vmatmul.mubr.f32.gmra.mrb[0].mxu0 %v130
  %v729 = vpop.f32.mrb[0].mxu0
  %v730 = vadd.f32 0.0, %v729
  %v731 = vpop.f32.mrb[0].mxu0
  %v732 = vadd.f32 0.0, %v731
  %733 = vmatprep.mubr.f32.mxu0 0.0
  %734 = vmatmul.mubr.f32.gmra.mrb[0].mxu0 %v133
  %v735 = vpop.f32.mrb[0].mxu0
  %v736 = vadd.f32 0.0, %v735
  %v737 = vpop.f32.mrb[0].mxu0
  %v738 = vadd.f32 0.0, %v737
  %739 = vmatprep.mubr.f32.mxu0 0.0
  %740 = vmatmul.mubr.f32.gmra.mrb[0].mxu0 %v136
  %v741 = vpop.f32.mrb[0].mxu0
  %v742 = vadd.f32 0.0, %v741
  %v743 = vpop.f32.mrb[0].mxu0
  %v744 = vadd.f32 0.0, %v743
  %745 = vmatprep.mubr.f32.mxu0 0.0
  %746 = vmatmul.mubr.f32.gmra.mrb[0].mxu0 %v139
  %v747 = vpop.f32.mrb[0].mxu0
  %v748 = vadd.f32 0.0, %v747
  %v749 = vpop.f32.mrb[0].mxu0
  %v750 = vadd.f32 0.0, %v749
  %751 = vmatprep.mubr.f32.mxu0 0.0
  %752 = vmatmul.mubr.f32.gmra.mrb[0].mxu0 %v142
  %v753 = vpop.f32.mrb[0].mxu0
  %v754 = vadd.f32 0.0, %v753
  %v755 = vpop.f32.mrb[0].mxu0
  %v756 = vadd.f32 0.0, %v755
  %757 = vmatprep.mubr.f32.mxu0 0.0
  %758 = vmatmul.mubr.f32.gmra.mrb[0].mxu0 %v145
  %v759 = vpop.f32.mrb[0].mxu0
  %v760 = vadd.f32 0.0, %v759
  %v761 = vpop.f32.mrb[0].mxu0
  %v762 = vadd.f32 0.0, %v761
  %763 = vmatprep.mubr.f32.mxu0 0.0
  %764 = vmatmul.mubr.f32.gmra.mrb[0].mxu0 %v148
  %v765 = vpop.f32.mrb[0].mxu0
  %v766 = vadd.f32 0.0, %v765
  %v767 = vpop.f32.mrb[0].mxu0
  %v768 = vadd.f32 0.0, %v767
  %769 = vmatprep.mubr.f32.mxu0 0.0
  %770 = vmatmul.mubr.f32.gmra.mrb[0].mxu0 %v151
  %v771 = vpop.f32.mrb[0].mxu0
  %v772 = vadd.f32 0.0, %v771
  %v773 = vpop.f32.mrb[0].mxu0
  %v774 = vadd.f32 0.0, %v773
  %775 = vmatprep.mubr.f32.mxu0 0.0
  %776 = vmatmul.mubr.f32.gmra.mrb[0].mxu0 %v154
  %v777 = vpop.f32.mrb[0].mxu0
  %v778 = vadd.f32 0.0, %v777
  %v779 = vpop.f32.mrb[0].mxu0
  %v780 = vadd.f32 0.0, %v779
  %781 = vmatprep.mubr.f32.mxu0 0.0
  %782 = vmatmul.mubr.f32.gmra.mrb[0].mxu0 %v157
  %v783 = vpop.f32.mrb[0].mxu0
  %v784 = vadd.f32 0.0, %v783
  %v785 = vpop.f32.mrb[0].mxu0
  %v786 = vadd.f32 0.0, %v785
  %787 = vmatprep.mubr.f32.mxu0 0.0
  %788 = vmatmul.mubr.f32.gmra.mrb[0].mxu0 %v160
  %v789 = vpop.f32.mrb[0].mxu0
  %v790 = vadd.f32 0.0, %v789
  %v791 = vpop.f32.mrb[0].mxu0
  %v792 = vadd.f32 0.0, %v791
  %793 = vmatprep.mubr.f32.mxu0 0.0
  %794 = vmatmul.mubr.f32.gmra.mrb[0].mxu0 %v163
  %v795 = vpop.f32.mrb[0].mxu0
  %v796 = vadd.f32 0.0, %v795
  %v797 = vpop.f32.mrb[0].mxu0
  %v798 = vadd.f32 0.0, %v797
  %799 = vmatprep.mubr.f32.mxu0 0.0
  %800 = vmatmul.mubr.f32.gmra.mrb[0].mxu0 %v166
  %v801 = vpop.f32.mrb[0].mxu0
  %v802 = vadd.f32 0.0, %v801
  %v803 = vpop.f32.mrb[0].mxu0
  %v804 = vadd.f32 0.0, %v803
  %805 = vmatprep.mubr.f32.mxu0 0.0
  %806 = vmatmul.mubr.f32.gmra.mrb[0].mxu0 %v169
  %v807 = vpop.f32.mrb[0].mxu0
  %v808 = vadd.f32 0.0, %v807
  %v809 = vpop.f32.mrb[0].mxu0
  %v810 = vadd.f32 0.0, %v809
  %811 = vmatprep.mubr.f32.mxu0 0.0
  %812 = vmatmul.mubr.f32.gmra.mrb[0].mxu0 %v172
  %v813 = vpop.f32.mrb[0].mxu0
  %v814 = vadd.f32 0.0, %v813
  %v815 = vpop.f32.mrb[0].mxu0
  %v816 = vadd.f32 0.0, %v815
  %817 = vdwg.mxu0
  %v818 = vld [vmem:[%s4] sm:$0xff]
  %v819 = vld [vmem:[%s4 + $0x8] sm:$0xff]
  %v820 = vld [vmem:[%s4 + $0x10] sm:$0xff]
  %v821 = vld [vmem:[%s4 + $0x18] sm:$0xff]
  %v822 = vld [vmem:[%s4 + $0x20] sm:$0xff]
  %v823 = vld [vmem:[%s4 + $0x28] sm:$0xff]
  %v824 = vld [vmem:[%s4 + $0x30] sm:$0xff]
  %v825 = vld [vmem:[%s4 + $0x38] sm:$0xff]
  %v826 = vld [vmem:[%s4 + $0x40] sm:$0xff]
  %v827 = vld [vmem:[%s4 + $0x48] sm:$0xff]
  %v828 = vld [vmem:[%s4 + $0x50] sm:$0xff]
  %v829 = vld [vmem:[%s4 + $0x58] sm:$0xff]
  %v830 = vld [vmem:[%s4 + $0x60] sm:$0xff]
  %v831 = vld [vmem:[%s4 + $0x68] sm:$0xff]
  %v832 = vld [vmem:[%s4 + $0x70] sm:$0xff]
  %v833 = vld [vmem:[%s4 + $0x78] sm:$0xff]
  %v834 = vld [vmem:[%s4 + $0x80] sm:$0xff]
  %v835 = vld [vmem:[%s4 + $0x88] sm:$0xff]
  %v836 = vld [vmem:[%s4 + $0x90] sm:$0xff]
  %v837 = vld [vmem:[%s4 + $0x98] sm:$0xff]
  %v838 = vld [vmem:[%s4 + $0xa0] sm:$0xff]
  %v839 = vld [vmem:[%s4 + $0xa8] sm:$0xff]
  %v840 = vld [vmem:[%s4 + $0xb0] sm:$0xff]
  %v841 = vld [vmem:[%s4 + $0xb8] sm:$0xff]
  %v842 = vld [vmem:[%s4 + $0xc0] sm:$0xff]
  %v843 = vld [vmem:[%s4 + $0xc8] sm:$0xff]
  %v844 = vld [vmem:[%s4 + $0xd0] sm:$0xff]
  %v845 = vld [vmem:[%s4 + $0xd8] sm:$0xff]
  %v846 = vld [vmem:[%s4 + $0xe0] sm:$0xff]
  %v847 = vld [vmem:[%s4 + $0xe8] sm:$0xff]
  %v848 = vld [vmem:[%s4 + $0xf0] sm:$0xff]
  %v849 = vld [vmem:[%s4 + $0xf8] sm:$0xff]
  %v850 = vld [vmem:[%s4 + $0x100] sm:$0xff]
  %v851 = vld [vmem:[%s4 + $0x108] sm:$0xff]
  %v852 = vld [vmem:[%s4 + $0x110] sm:$0xff]
  %v853 = vld [vmem:[%s4 + $0x118] sm:$0xff]
  %v854 = vld [vmem:[%s4 + $0x120] sm:$0xff]
  %v855 = vld [vmem:[%s4 + $0x128] sm:$0xff]
  %v856 = vld [vmem:[%s4 + $0x130] sm:$0xff]
  %v857 = vld [vmem:[%s4 + $0x138] sm:$0xff]
  %v858 = vld [vmem:[%s4 + $0x140] sm:$0xff]
  %v859 = vld [vmem:[%s4 + $0x148] sm:$0xff]
  %v860 = vld [vmem:[%s4 + $0x150] sm:$0xff]
  %v861 = vld [vmem:[%s4 + $0x158] sm:$0xff]
  %v862 = vld [vmem:[%s4 + $0x160] sm:$0xff]
  %v863 = vld [vmem:[%s4 + $0x168] sm:$0xff]
  %v864 = vld [vmem:[%s4 + $0x170] sm:$0xff]
  %v865 = vld [vmem:[%s4 + $0x178] sm:$0xff]
  %v866 = vld [vmem:[%s4 + $0x180] sm:$0xff]
  %v867 = vld [vmem:[%s4 + $0x188] sm:$0xff]
  %v868 = vld [vmem:[%s4 + $0x190] sm:$0xff]
  %v869 = vld [vmem:[%s4 + $0x198] sm:$0xff]
  %v870 = vld [vmem:[%s4 + $0x1a0] sm:$0xff]
  %v871 = vld [vmem:[%s4 + $0x1a8] sm:$0xff]
  %v872 = vld [vmem:[%s4 + $0x1b0] sm:$0xff]
  %v873 = vld [vmem:[%s4 + $0x1b8] sm:$0xff]
  %v874 = vld [vmem:[%s4 + $0x1c0] sm:$0xff]
  %v875 = vld [vmem:[%s4 + $0x1c8] sm:$0xff]
  %v876 = vld [vmem:[%s4 + $0x1d0] sm:$0xff]
  %v877 = vld [vmem:[%s4 + $0x1d8] sm:$0xff]
  %v878 = vld [vmem:[%s4 + $0x1e0] sm:$0xff]
  %v879 = vld [vmem:[%s4 + $0x1e8] sm:$0xff]
  %v880 = vld [vmem:[%s4 + $0x1f0] sm:$0xff]
  %v881 = vld [vmem:[%s4 + $0x1f8] sm:$0xff]
  %v882 = vld [vmem:[%s4 + $0x200] sm:$0xff]
  %v883 = vld [vmem:[%s4 + $0x208] sm:$0xff]
  %v884 = vld [vmem:[%s4 + $0x210] sm:$0xff]
  %v885 = vld [vmem:[%s4 + $0x218] sm:$0xff]
  %v886 = vld [vmem:[%s4 + $0x220] sm:$0xff]
  %v887 = vld [vmem:[%s4 + $0x228] sm:$0xff]
  %v888 = vld [vmem:[%s4 + $0x230] sm:$0xff]
  %v889 = vld [vmem:[%s4 + $0x238] sm:$0xff]
  %v890 = vld [vmem:[%s4 + $0x240] sm:$0xff]
  %v891 = vld [vmem:[%s4 + $0x248] sm:$0xff]
  %v892 = vld [vmem:[%s4 + $0x250] sm:$0xff]
  %v893 = vld [vmem:[%s4 + $0x258] sm:$0xff]
  %v894 = vld [vmem:[%s4 + $0x260] sm:$0xff]
  %v895 = vld [vmem:[%s4 + $0x268] sm:$0xff]
  %v896 = vld [vmem:[%s4 + $0x270] sm:$0xff]
  %v897 = vld [vmem:[%s4 + $0x278] sm:$0xff]
  %v898 = vld [vmem:[%s4 + $0x280] sm:$0xff]
  %v899 = vld [vmem:[%s4 + $0x288] sm:$0xff]
  %v900 = vld [vmem:[%s4 + $0x290] sm:$0xff]
  %v901 = vld [vmem:[%s4 + $0x298] sm:$0xff]
  %v902 = vld [vmem:[%s4 + $0x2a0] sm:$0xff]
  %v903 = vld [vmem:[%s4 + $0x2a8] sm:$0xff]
  %v904 = vld [vmem:[%s4 + $0x2b0] sm:$0xff]
  %v905 = vld [vmem:[%s4 + $0x2b8] sm:$0xff]
  %v906 = vld [vmem:[%s4 + $0x2c0] sm:$0xff]
  %v907 = vld [vmem:[%s4 + $0x2c8] sm:$0xff]
  %v908 = vld [vmem:[%s4 + $0x2d0] sm:$0xff]
  %v909 = vld [vmem:[%s4 + $0x2d8] sm:$0xff]
  %v910 = vld [vmem:[%s4 + $0x2e0] sm:$0xff]
  %v911 = vld [vmem:[%s4 + $0x2e8] sm:$0xff]
  %v912 = vld [vmem:[%s4 + $0x2f0] sm:$0xff]
  %v913 = vld [vmem:[%s4 + $0x2f8] sm:$0xff]
  %v914 = vld [vmem:[%s4 + $0x300] sm:$0xff]
  %v915 = vld [vmem:[%s4 + $0x308] sm:$0xff]
  %v916 = vld [vmem:[%s4 + $0x310] sm:$0xff]
  %v917 = vld [vmem:[%s4 + $0x318] sm:$0xff]
  %v918 = vld [vmem:[%s4 + $0x320] sm:$0xff]
  %v919 = vld [vmem:[%s4 + $0x328] sm:$0xff]
  %v920 = vld [vmem:[%s4 + $0x330] sm:$0xff]
  %v921 = vld [vmem:[%s4 + $0x338] sm:$0xff]
  %v922 = vld [vmem:[%s4 + $0x340] sm:$0xff]
  %v923 = vld [vmem:[%s4 + $0x348] sm:$0xff]
  %v924 = vld [vmem:[%s4 + $0x350] sm:$0xff]
  %v925 = vld [vmem:[%s4 + $0x358] sm:$0xff]
  %v926 = vld [vmem:[%s4 + $0x360] sm:$0xff]
  %v927 = vld [vmem:[%s4 + $0x368] sm:$0xff]
  %v928 = vld [vmem:[%s4 + $0x370] sm:$0xff]
  %v929 = vld [vmem:[%s4 + $0x378] sm:$0xff]
  %v930 = vld [vmem:[%s4 + $0x380] sm:$0xff]
  %v931 = vld [vmem:[%s4 + $0x388] sm:$0xff]
  %v932 = vld [vmem:[%s4 + $0x390] sm:$0xff]
  %v933 = vld [vmem:[%s4 + $0x398] sm:$0xff]
  %v934 = vld [vmem:[%s4 + $0x3a0] sm:$0xff]
  %v935 = vld [vmem:[%s4 + $0x3a8] sm:$0xff]
  %v936 = vld [vmem:[%s4 + $0x3b0] sm:$0xff]
  %v937 = vld [vmem:[%s4 + $0x3b8] sm:$0xff]
  %v938 = vld [vmem:[%s4 + $0x3c0] sm:$0xff]
  %v939 = vld [vmem:[%s4 + $0x3c8] sm:$0xff]
  %v940 = vld [vmem:[%s4 + $0x3d0] sm:$0xff]
  %v941 = vld [vmem:[%s4 + $0x3d8] sm:$0xff]
  %v942 = vld [vmem:[%s4 + $0x3e0] sm:$0xff]
  %v943 = vld [vmem:[%s4 + $0x3e8] sm:$0xff]
  %v944 = vld [vmem:[%s4 + $0x3f0] sm:$0xff]
  %v945 = vld [vmem:[%s4 + $0x3f8] sm:$0xff]
  %v946 = vld [vmem:[%s3] sm:$0x1]
  %v947 = vld [vmem:[%s3 + $0x1] sm:$0x1]
  %v948 = vld [vmem:[%s3 + $0x2] sm:$0x1]
  %v949 = vld [vmem:[%s3 + $0x3] sm:$0x1]
  %v950 = vld [vmem:[%s3 + $0x4] sm:$0x1]
  %v951 = vld [vmem:[%s3 + $0x5] sm:$0x1]
  %v952 = vld [vmem:[%s3 + $0x6] sm:$0x1]
  %v953 = vld [vmem:[%s3 + $0x7] sm:$0x1]
  %955 = vset.pattern.permute.xlu0 0
  %956 = vperm.xlu0 %955, %v818
  %v957 = vpop.permute.xlu0 %956
  %960 = vset.pattern.permute.xlu0 0
  %961 = vperm.xlu0 %960, %v819
  %v962 = vpop.permute.xlu0 %961
  %965 = vset.pattern.permute.xlu0 0
  %966 = vperm.xlu0 %965, %v820
  %v967 = vpop.permute.xlu0 %966
  %970 = vset.pattern.permute.xlu0 0
  %971 = vperm.xlu0 %970, %v821
  %v972 = vpop.permute.xlu0 %971
  %975 = vset.pattern.permute.xlu0 0
  %976 = vperm.xlu0 %975, %v822
  %v977 = vpop.permute.xlu0 %976
  %980 = vset.pattern.permute.xlu0 0
  %981 = vperm.xlu0 %980, %v823
  %v982 = vpop.permute.xlu0 %981
  %985 = vset.pattern.permute.xlu0 0
  %986 = vperm.xlu0 %985, %v824
  %v987 = vpop.permute.xlu0 %986
  %990 = vset.pattern.permute.xlu0 0
  %991 = vperm.xlu0 %990, %v825
  %v992 = vpop.permute.xlu0 %991
  %995 = vset.pattern.permute.xlu0 0
  %996 = vperm.xlu0 %995, %v826
  %v997 = vpop.permute.xlu0 %996
  %1000 = vset.pattern.permute.xlu0 0
  %1001 = vperm.xlu0 %1000, %v827
  %v1002 = vpop.permute.xlu0 %1001
  %1005 = vset.pattern.permute.xlu0 0
  %1006 = vperm.xlu0 %1005, %v828
  %v1007 = vpop.permute.xlu0 %1006
  %1010 = vset.pattern.permute.xlu0 0
  %1011 = vperm.xlu0 %1010, %v829
  %v1012 = vpop.permute.xlu0 %1011
  %1015 = vset.pattern.permute.xlu0 0
  %1016 = vperm.xlu0 %1015, %v830
  %v1017 = vpop.permute.xlu0 %1016
  %1020 = vset.pattern.permute.xlu0 0
  %1021 = vperm.xlu0 %1020, %v831
  %v1022 = vpop.permute.xlu0 %1021
  %1025 = vset.pattern.permute.xlu0 0
  %1026 = vperm.xlu0 %1025, %v832
  %v1027 = vpop.permute.xlu0 %1026
  %1030 = vset.pattern.permute.xlu0 0
  %1031 = vperm.xlu0 %1030, %v833
  %v1032 = vpop.permute.xlu0 %1031
  %1035 = vset.pattern.permute.xlu0 0
  %1036 = vperm.xlu0 %1035, %v834
  %v1037 = vpop.permute.xlu0 %1036
  %1040 = vset.pattern.permute.xlu0 0
  %1041 = vperm.xlu0 %1040, %v835
  %v1042 = vpop.permute.xlu0 %1041
  %1045 = vset.pattern.permute.xlu0 0
  %1046 = vperm.xlu0 %1045, %v836
  %v1047 = vpop.permute.xlu0 %1046
  %1050 = vset.pattern.permute.xlu0 0
  %1051 = vperm.xlu0 %1050, %v837
  %v1052 = vpop.permute.xlu0 %1051
  %1055 = vset.pattern.permute.xlu0 0
  %1056 = vperm.xlu0 %1055, %v838
  %v1057 = vpop.permute.xlu0 %1056
  %1060 = vset.pattern.permute.xlu0 0
  %1061 = vperm.xlu0 %1060, %v839
  %v1062 = vpop.permute.xlu0 %1061
  %1065 = vset.pattern.permute.xlu0 0
  %1066 = vperm.xlu0 %1065, %v840
  %v1067 = vpop.permute.xlu0 %1066
  %1070 = vset.pattern.permute.xlu0 0
  %1071 = vperm.xlu0 %1070, %v841
  %v1072 = vpop.permute.xlu0 %1071
  %1075 = vset.pattern.permute.xlu0 0
  %1076 = vperm.xlu0 %1075, %v842
  %v1077 = vpop.permute.xlu0 %1076
  %1080 = vset.pattern.permute.xlu0 0
  %1081 = vperm.xlu0 %1080, %v843
  %v1082 = vpop.permute.xlu0 %1081
  %1085 = vset.pattern.permute.xlu0 0
  %1086 = vperm.xlu0 %1085, %v844
  %v1087 = vpop.permute.xlu0 %1086
  %1090 = vset.pattern.permute.xlu0 0
  %1091 = vperm.xlu0 %1090, %v845
  %v1092 = vpop.permute.xlu0 %1091
  %1095 = vset.pattern.permute.xlu0 0
  %1096 = vperm.xlu0 %1095, %v846
  %v1097 = vpop.permute.xlu0 %1096
  %1100 = vset.pattern.permute.xlu0 0
  %1101 = vperm.xlu0 %1100, %v847
  %v1102 = vpop.permute.xlu0 %1101
  %1105 = vset.pattern.permute.xlu0 0
  %1106 = vperm.xlu0 %1105, %v848
  %v1107 = vpop.permute.xlu0 %1106
  %1110 = vset.pattern.permute.xlu0 0
  %1111 = vperm.xlu0 %1110, %v849
  %v1112 = vpop.permute.xlu0 %1111
  %1115 = vset.pattern.permute.xlu0 0
  %1116 = vperm.xlu0 %1115, %v850
  %v1117 = vpop.permute.xlu0 %1116
  %1120 = vset.pattern.permute.xlu0 0
  %1121 = vperm.xlu0 %1120, %v851
  %v1122 = vpop.permute.xlu0 %1121
  %1125 = vset.pattern.permute.xlu0 0
  %1126 = vperm.xlu0 %1125, %v852
  %v1127 = vpop.permute.xlu0 %1126
  %1130 = vset.pattern.permute.xlu0 0
  %1131 = vperm.xlu0 %1130, %v853
  %v1132 = vpop.permute.xlu0 %1131
  %1135 = vset.pattern.permute.xlu0 0
  %1136 = vperm.xlu0 %1135, %v854
  %v1137 = vpop.permute.xlu0 %1136
  %1140 = vset.pattern.permute.xlu0 0
  %1141 = vperm.xlu0 %1140, %v855
  %v1142 = vpop.permute.xlu0 %1141
  %1145 = vset.pattern.permute.xlu0 0
  %1146 = vperm.xlu0 %1145, %v856
  %v1147 = vpop.permute.xlu0 %1146
  %1150 = vset.pattern.permute.xlu0 0
  %1151 = vperm.xlu0 %1150, %v857
  %v1152 = vpop.permute.xlu0 %1151
  %1155 = vset.pattern.permute.xlu0 0
  %1156 = vperm.xlu0 %1155, %v858
  %v1157 = vpop.permute.xlu0 %1156
  %1160 = vset.pattern.permute.xlu0 0
  %1161 = vperm.xlu0 %1160, %v859
  %v1162 = vpop.permute.xlu0 %1161
  %1165 = vset.pattern.permute.xlu0 0
  %1166 = vperm.xlu0 %1165, %v860
  %v1167 = vpop.permute.xlu0 %1166
  %1170 = vset.pattern.permute.xlu0 0
  %1171 = vperm.xlu0 %1170, %v861
  %v1172 = vpop.permute.xlu0 %1171
  %1175 = vset.pattern.permute.xlu0 0
  %1176 = vperm.xlu0 %1175, %v862
  %v1177 = vpop.permute.xlu0 %1176
  %1180 = vset.pattern.permute.xlu0 0
  %1181 = vperm.xlu0 %1180, %v863
  %v1182 = vpop.permute.xlu0 %1181
  %1185 = vset.pattern.permute.xlu0 0
  %1186 = vperm.xlu0 %1185, %v864
  %v1187 = vpop.permute.xlu0 %1186
  %1190 = vset.pattern.permute.xlu0 0
  %1191 = vperm.xlu0 %1190, %v865
  %v1192 = vpop.permute.xlu0 %1191
  %1195 = vset.pattern.permute.xlu0 0
  %1196 = vperm.xlu0 %1195, %v866
  %v1197 = vpop.permute.xlu0 %1196
  %1200 = vset.pattern.permute.xlu0 0
  %1201 = vperm.xlu0 %1200, %v867
  %v1202 = vpop.permute.xlu0 %1201
  %1205 = vset.pattern.permute.xlu0 0
  %1206 = vperm.xlu0 %1205, %v868
  %v1207 = vpop.permute.xlu0 %1206
  %1210 = vset.pattern.permute.xlu0 0
  %1211 = vperm.xlu0 %1210, %v869
  %v1212 = vpop.permute.xlu0 %1211
  %1215 = vset.pattern.permute.xlu0 0
  %1216 = vperm.xlu0 %1215, %v870
  %v1217 = vpop.permute.xlu0 %1216
  %1220 = vset.pattern.permute.xlu0 0
  %1221 = vperm.xlu0 %1220, %v871
  %v1222 = vpop.permute.xlu0 %1221
  %1225 = vset.pattern.permute.xlu0 0
  %1226 = vperm.xlu0 %1225, %v872
  %v1227 = vpop.permute.xlu0 %1226
  %1230 = vset.pattern.permute.xlu0 0
  %1231 = vperm.xlu0 %1230, %v873
  %v1232 = vpop.permute.xlu0 %1231
  %1235 = vset.pattern.permute.xlu0 0
  %1236 = vperm.xlu0 %1235, %v874
  %v1237 = vpop.permute.xlu0 %1236
  %1240 = vset.pattern.permute.xlu0 0
  %1241 = vperm.xlu0 %1240, %v875
  %v1242 = vpop.permute.xlu0 %1241
  %1245 = vset.pattern.permute.xlu0 0
  %1246 = vperm.xlu0 %1245, %v876
  %v1247 = vpop.permute.xlu0 %1246
  %1250 = vset.pattern.permute.xlu0 0
  %1251 = vperm.xlu0 %1250, %v877
  %v1252 = vpop.permute.xlu0 %1251
  %1255 = vset.pattern.permute.xlu0 0
  %1256 = vperm.xlu0 %1255, %v878
  %v1257 = vpop.permute.xlu0 %1256
  %1260 = vset.pattern.permute.xlu0 0
  %1261 = vperm.xlu0 %1260, %v879
  %v1262 = vpop.permute.xlu0 %1261
  %1265 = vset.pattern.permute.xlu0 0
  %1266 = vperm.xlu0 %1265, %v880
  %v1267 = vpop.permute.xlu0 %1266
  %1270 = vset.pattern.permute.xlu0 0
  %1271 = vperm.xlu0 %1270, %v881
  %v1272 = vpop.permute.xlu0 %1271
  %1275 = vset.pattern.permute.xlu0 0
  %1276 = vperm.xlu0 %1275, %v882
  %v1277 = vpop.permute.xlu0 %1276
  %1280 = vset.pattern.permute.xlu0 0
  %1281 = vperm.xlu0 %1280, %v883
  %v1282 = vpop.permute.xlu0 %1281
  %1285 = vset.pattern.permute.xlu0 0
  %1286 = vperm.xlu0 %1285, %v884
  %v1287 = vpop.permute.xlu0 %1286
  %1290 = vset.pattern.permute.xlu0 0
  %1291 = vperm.xlu0 %1290, %v885
  %v1292 = vpop.permute.xlu0 %1291
  %1295 = vset.pattern.permute.xlu0 0
  %1296 = vperm.xlu0 %1295, %v886
  %v1297 = vpop.permute.xlu0 %1296
  %1300 = vset.pattern.permute.xlu0 0
  %1301 = vperm.xlu0 %1300, %v887
  %v1302 = vpop.permute.xlu0 %1301
  %1305 = vset.pattern.permute.xlu0 0
  %1306 = vperm.xlu0 %1305, %v888
  %v1307 = vpop.permute.xlu0 %1306
  %1310 = vset.pattern.permute.xlu0 0
  %1311 = vperm.xlu0 %1310, %v889
  %v1312 = vpop.permute.xlu0 %1311
  %1315 = vset.pattern.permute.xlu0 0
  %1316 = vperm.xlu0 %1315, %v890
  %v1317 = vpop.permute.xlu0 %1316
  %1320 = vset.pattern.permute.xlu0 0
  %1321 = vperm.xlu0 %1320, %v891
  %v1322 = vpop.permute.xlu0 %1321
  %1325 = vset.pattern.permute.xlu0 0
  %1326 = vperm.xlu0 %1325, %v892
  %v1327 = vpop.permute.xlu0 %1326
  %1330 = vset.pattern.permute.xlu0 0
  %1331 = vperm.xlu0 %1330, %v893
  %v1332 = vpop.permute.xlu0 %1331
  %1335 = vset.pattern.permute.xlu0 0
  %1336 = vperm.xlu0 %1335, %v894
  %v1337 = vpop.permute.xlu0 %1336
  %1340 = vset.pattern.permute.xlu0 0
  %1341 = vperm.xlu0 %1340, %v895
  %v1342 = vpop.permute.xlu0 %1341
  %1345 = vset.pattern.permute.xlu0 0
  %1346 = vperm.xlu0 %1345, %v896
  %v1347 = vpop.permute.xlu0 %1346
  %1350 = vset.pattern.permute.xlu0 0
  %1351 = vperm.xlu0 %1350, %v897
  %v1352 = vpop.permute.xlu0 %1351
  %1355 = vset.pattern.permute.xlu0 0
  %1356 = vperm.xlu0 %1355, %v898
  %v1357 = vpop.permute.xlu0 %1356
  %1360 = vset.pattern.permute.xlu0 0
  %1361 = vperm.xlu0 %1360, %v899
  %v1362 = vpop.permute.xlu0 %1361
  %1365 = vset.pattern.permute.xlu0 0
  %1366 = vperm.xlu0 %1365, %v900
  %v1367 = vpop.permute.xlu0 %1366
  %1370 = vset.pattern.permute.xlu0 0
  %1371 = vperm.xlu0 %1370, %v901
  %v1372 = vpop.permute.xlu0 %1371
  %1375 = vset.pattern.permute.xlu0 0
  %1376 = vperm.xlu0 %1375, %v902
  %v1377 = vpop.permute.xlu0 %1376
  %1380 = vset.pattern.permute.xlu0 0
  %1381 = vperm.xlu0 %1380, %v903
  %v1382 = vpop.permute.xlu0 %1381
  %1385 = vset.pattern.permute.xlu0 0
  %1386 = vperm.xlu0 %1385, %v904
  %v1387 = vpop.permute.xlu0 %1386
  %1390 = vset.pattern.permute.xlu0 0
  %1391 = vperm.xlu0 %1390, %v905
  %v1392 = vpop.permute.xlu0 %1391
  %1395 = vset.pattern.permute.xlu0 0
  %1396 = vperm.xlu0 %1395, %v906
  %v1397 = vpop.permute.xlu0 %1396
  %1400 = vset.pattern.permute.xlu0 0
  %1401 = vperm.xlu0 %1400, %v907
  %v1402 = vpop.permute.xlu0 %1401
  %1405 = vset.pattern.permute.xlu0 0
  %1406 = vperm.xlu0 %1405, %v908
  %v1407 = vpop.permute.xlu0 %1406
  %1410 = vset.pattern.permute.xlu0 0
  %1411 = vperm.xlu0 %1410, %v909
  %v1412 = vpop.permute.xlu0 %1411
  %1415 = vset.pattern.permute.xlu0 0
  %1416 = vperm.xlu0 %1415, %v910
  %v1417 = vpop.permute.xlu0 %1416
  %1420 = vset.pattern.permute.xlu0 0
  %1421 = vperm.xlu0 %1420, %v911
  %v1422 = vpop.permute.xlu0 %1421
  %1425 = vset.pattern.permute.xlu0 0
  %1426 = vperm.xlu0 %1425, %v912
  %v1427 = vpop.permute.xlu0 %1426
  %1430 = vset.pattern.permute.xlu0 0
  %1431 = vperm.xlu0 %1430, %v913
  %v1432 = vpop.permute.xlu0 %1431
  %1435 = vset.pattern.permute.xlu0 0
  %1436 = vperm.xlu0 %1435, %v914
  %v1437 = vpop.permute.xlu0 %1436
  %1440 = vset.pattern.permute.xlu0 0
  %1441 = vperm.xlu0 %1440, %v915
  %v1442 = vpop.permute.xlu0 %1441
  %1445 = vset.pattern.permute.xlu0 0
  %1446 = vperm.xlu0 %1445, %v916
  %v1447 = vpop.permute.xlu0 %1446
  %1450 = vset.pattern.permute.xlu0 0
  %1451 = vperm.xlu0 %1450, %v917
  %v1452 = vpop.permute.xlu0 %1451
  %1455 = vset.pattern.permute.xlu0 0
  %1456 = vperm.xlu0 %1455, %v918
  %v1457 = vpop.permute.xlu0 %1456
  %1460 = vset.pattern.permute.xlu0 0
  %1461 = vperm.xlu0 %1460, %v919
  %v1462 = vpop.permute.xlu0 %1461
  %1465 = vset.pattern.permute.xlu0 0
  %1466 = vperm.xlu0 %1465, %v920
  %v1467 = vpop.permute.xlu0 %1466
  %1470 = vset.pattern.permute.xlu0 0
  %1471 = vperm.xlu0 %1470, %v921
  %v1472 = vpop.permute.xlu0 %1471
  %1475 = vset.pattern.permute.xlu0 0
  %1476 = vperm.xlu0 %1475, %v922
  %v1477 = vpop.permute.xlu0 %1476
  %1480 = vset.pattern.permute.xlu0 0
  %1481 = vperm.xlu0 %1480, %v923
  %v1482 = vpop.permute.xlu0 %1481
  %1485 = vset.pattern.permute.xlu0 0
  %1486 = vperm.xlu0 %1485, %v924
  %v1487 = vpop.permute.xlu0 %1486
  %1490 = vset.pattern.permute.xlu0 0
  %1491 = vperm.xlu0 %1490, %v925
  %v1492 = vpop.permute.xlu0 %1491
  %1495 = vset.pattern.permute.xlu0 0
  %1496 = vperm.xlu0 %1495, %v926
  %v1497 = vpop.permute.xlu0 %1496
  %1500 = vset.pattern.permute.xlu0 0
  %1501 = vperm.xlu0 %1500, %v927
  %v1502 = vpop.permute.xlu0 %1501
  %1505 = vset.pattern.permute.xlu0 0
  %1506 = vperm.xlu0 %1505, %v928
  %v1507 = vpop.permute.xlu0 %1506
  %1510 = vset.pattern.permute.xlu0 0
  %1511 = vperm.xlu0 %1510, %v929
  %v1512 = vpop.permute.xlu0 %1511
  %1515 = vset.pattern.permute.xlu0 0
  %1516 = vperm.xlu0 %1515, %v930
  %v1517 = vpop.permute.xlu0 %1516
  %1520 = vset.pattern.permute.xlu0 0
  %1521 = vperm.xlu0 %1520, %v931
  %v1522 = vpop.permute.xlu0 %1521
  %1525 = vset.pattern.permute.xlu0 0
  %1526 = vperm.xlu0 %1525, %v932
  %v1527 = vpop.permute.xlu0 %1526
  %1530 = vset.pattern.permute.xlu0 0
  %1531 = vperm.xlu0 %1530, %v933
  %v1532 = vpop.permute.xlu0 %1531
  %1535 = vset.pattern.permute.xlu0 0
  %1536 = vperm.xlu0 %1535, %v934
  %v1537 = vpop.permute.xlu0 %1536
  %1540 = vset.pattern.permute.xlu0 0
  %1541 = vperm.xlu0 %1540, %v935
  %v1542 = vpop.permute.xlu0 %1541
  %1545 = vset.pattern.permute.xlu0 0
  %1546 = vperm.xlu0 %1545, %v936
  %v1547 = vpop.permute.xlu0 %1546
  %1550 = vset.pattern.permute.xlu0 0
  %1551 = vperm.xlu0 %1550, %v937
  %v1552 = vpop.permute.xlu0 %1551
  %1555 = vset.pattern.permute.xlu0 0
  %1556 = vperm.xlu0 %1555, %v938
  %v1557 = vpop.permute.xlu0 %1556
  %1560 = vset.pattern.permute.xlu0 0
  %1561 = vperm.xlu0 %1560, %v939
  %v1562 = vpop.permute.xlu0 %1561
  %1565 = vset.pattern.permute.xlu0 0
  %1566 = vperm.xlu0 %1565, %v940
  %v1567 = vpop.permute.xlu0 %1566
  %1570 = vset.pattern.permute.xlu0 0
  %1571 = vperm.xlu0 %1570, %v941
  %v1572 = vpop.permute.xlu0 %1571
  %1575 = vset.pattern.permute.xlu0 0
  %1576 = vperm.xlu0 %1575, %v942
  %v1577 = vpop.permute.xlu0 %1576
  %1580 = vset.pattern.permute.xlu0 0
  %1581 = vperm.xlu0 %1580, %v943
  %v1582 = vpop.permute.xlu0 %1581
  %1585 = vset.pattern.permute.xlu0 0
  %1586 = vperm.xlu0 %1585, %v944
  %v1587 = vpop.permute.xlu0 %1586
  %1590 = vset.pattern.permute.xlu0 0
  %1591 = vperm.xlu0 %1590, %v945
  %v1592 = vpop.permute.xlu0 %1591
  %v1602 = vlaneseq
  %v1603 = vshrl.u32 %v1602, 7
  %v1604 = vsub.s32 0, %v1603
  %v1605 = vrot.slane %v946, %v1604
  %v1606 = vlaneseq
  %v1607 = vshrl.u32 %v1606, 7
  %v1608 = vsub.s32 0, %v1607
  %v1609 = vrot.slane %v947, %v1608
  %v1610 = vlaneseq
  %v1611 = vshrl.u32 %v1610, 7
  %v1612 = vsub.s32 0, %v1611
  %v1613 = vrot.slane %v948, %v1612
  %v1614 = vlaneseq
  %v1615 = vshrl.u32 %v1614, 7
  %v1616 = vsub.s32 0, %v1615
  %v1617 = vrot.slane %v949, %v1616
  %v1618 = vlaneseq
  %v1619 = vshrl.u32 %v1618, 7
  %v1620 = vsub.s32 0, %v1619
  %v1621 = vrot.slane %v950, %v1620
  %v1622 = vlaneseq
  %v1623 = vshrl.u32 %v1622, 7
  %v1624 = vsub.s32 0, %v1623
  %v1625 = vrot.slane %v951, %v1624
  %v1626 = vlaneseq
  %v1627 = vshrl.u32 %v1626, 7
  %v1628 = vsub.s32 0, %v1627
  %v1629 = vrot.slane %v952, %v1628
  %v1630 = vlaneseq
  %v1631 = vshrl.u32 %v1630, 7
  %v1632 = vsub.s32 0, %v1631
  %v1633 = vrot.slane %v953, %v1632
  %v1642 = vadd.f32 %v957, %v1605
  %v1643 = vadd.f32 %v962, %v1605
  %v1644 = vadd.f32 %v967, %v1605
  %v1645 = vadd.f32 %v972, %v1605
  %v1646 = vadd.f32 %v977, %v1605
  %v1647 = vadd.f32 %v982, %v1605
  %v1648 = vadd.f32 %v987, %v1605
  %v1649 = vadd.f32 %v992, %v1605
  %v1650 = vadd.f32 %v997, %v1605
  %v1651 = vadd.f32 %v1002, %v1605
  %v1652 = vadd.f32 %v1007, %v1605
  %v1653 = vadd.f32 %v1012, %v1605
  %v1654 = vadd.f32 %v1017, %v1605
  %v1655 = vadd.f32 %v1022, %v1605
  %v1656 = vadd.f32 %v1027, %v1605
  %v1657 = vadd.f32 %v1032, %v1605
  %v1658 = vadd.f32 %v1037, %v1609
  %v1659 = vadd.f32 %v1042, %v1609
  %v1660 = vadd.f32 %v1047, %v1609
  %v1661 = vadd.f32 %v1052, %v1609
  %v1662 = vadd.f32 %v1057, %v1609
  %v1663 = vadd.f32 %v1062, %v1609
  %v1664 = vadd.f32 %v1067, %v1609
  %v1665 = vadd.f32 %v1072, %v1609
  %v1666 = vadd.f32 %v1077, %v1609
  %v1667 = vadd.f32 %v1082, %v1609
  %v1668 = vadd.f32 %v1087, %v1609
  %v1669 = vadd.f32 %v1092, %v1609
  %v1670 = vadd.f32 %v1097, %v1609
  %v1671 = vadd.f32 %v1102, %v1609
  %v1672 = vadd.f32 %v1107, %v1609
  %v1673 = vadd.f32 %v1112, %v1609
  %v1674 = vadd.f32 %v1117, %v1613
  %v1675 = vadd.f32 %v1122, %v1613
  %v1676 = vadd.f32 %v1127, %v1613
  %v1677 = vadd.f32 %v1132, %v1613
  %v1678 = vadd.f32 %v1137, %v1613
  %v1679 = vadd.f32 %v1142, %v1613
  %v1680 = vadd.f32 %v1147, %v1613
  %v1681 = vadd.f32 %v1152, %v1613
  %v1682 = vadd.f32 %v1157, %v1613
  %v1683 = vadd.f32 %v1162, %v1613
  %v1684 = vadd.f32 %v1167, %v1613
  %v1685 = vadd.f32 %v1172, %v1613
  %v1686 = vadd.f32 %v1177, %v1613
  %v1687 = vadd.f32 %v1182, %v1613
  %v1688 = vadd.f32 %v1187, %v1613
  %v1689 = vadd.f32 %v1192, %v1613
  %v1690 = vadd.f32 %v1197, %v1617
  %v1691 = vadd.f32 %v1202, %v1617
  %v1692 = vadd.f32 %v1207, %v1617
  %v1693 = vadd.f32 %v1212, %v1617
  %v1694 = vadd.f32 %v1217, %v1617
  %v1695 = vadd.f32 %v1222, %v1617
  %v1696 = vadd.f32 %v1227, %v1617
  %v1697 = vadd.f32 %v1232, %v1617
  %v1698 = vadd.f32 %v1237, %v1617
  %v1699 = vadd.f32 %v1242, %v1617
  %v1700 = vadd.f32 %v1247, %v1617
  %v1701 = vadd.f32 %v1252, %v1617
  %v1702 = vadd.f32 %v1257, %v1617
  %v1703 = vadd.f32 %v1262, %v1617
  %v1704 = vadd.f32 %v1267, %v1617
  %v1705 = vadd.f32 %v1272, %v1617
  %v1706 = vadd.f32 %v1277, %v1621
  %v1707 = vadd.f32 %v1282, %v1621
  %v1708 = vadd.f32 %v1287, %v1621
  %v1709 = vadd.f32 %v1292, %v1621
  %v1710 = vadd.f32 %v1297, %v1621
  %v1711 = vadd.f32 %v1302, %v1621
  %v1712 = vadd.f32 %v1307, %v1621
  %v1713 = vadd.f32 %v1312, %v1621
  %v1714 = vadd.f32 %v1317, %v1621
  %v1715 = vadd.f32 %v1322, %v1621
  %v1716 = vadd.f32 %v1327, %v1621
  %v1717 = vadd.f32 %v1332, %v1621
  %v1718 = vadd.f32 %v1337, %v1621
  %v1719 = vadd.f32 %v1342, %v1621
  %v1720 = vadd.f32 %v1347, %v1621
  %v1721 = vadd.f32 %v1352, %v1621
  %v1722 = vadd.f32 %v1357, %v1625
  %v1723 = vadd.f32 %v1362, %v1625
  %v1724 = vadd.f32 %v1367, %v1625
  %v1725 = vadd.f32 %v1372, %v1625
  %v1726 = vadd.f32 %v1377, %v1625
  %v1727 = vadd.f32 %v1382, %v1625
  %v1728 = vadd.f32 %v1387, %v1625
  %v1729 = vadd.f32 %v1392, %v1625
  %v1730 = vadd.f32 %v1397, %v1625
  %v1731 = vadd.f32 %v1402, %v1625
  %v1732 = vadd.f32 %v1407, %v1625
  %v1733 = vadd.f32 %v1412, %v1625
  %v1734 = vadd.f32 %v1417, %v1625
  %v1735 = vadd.f32 %v1422, %v1625
  %v1736 = vadd.f32 %v1427, %v1625
  %v1737 = vadd.f32 %v1432, %v1625
  %v1738 = vadd.f32 %v1437, %v1629
  %v1739 = vadd.f32 %v1442, %v1629
  %v1740 = vadd.f32 %v1447, %v1629
  %v1741 = vadd.f32 %v1452, %v1629
  %v1742 = vadd.f32 %v1457, %v1629
  %v1743 = vadd.f32 %v1462, %v1629
  %v1744 = vadd.f32 %v1467, %v1629
  %v1745 = vadd.f32 %v1472, %v1629
  %v1746 = vadd.f32 %v1477, %v1629
  %v1747 = vadd.f32 %v1482, %v1629
  %v1748 = vadd.f32 %v1487, %v1629
  %v1749 = vadd.f32 %v1492, %v1629
  %v1750 = vadd.f32 %v1497, %v1629
  %v1751 = vadd.f32 %v1502, %v1629
  %v1752 = vadd.f32 %v1507, %v1629
  %v1753 = vadd.f32 %v1512, %v1629
  %v1754 = vadd.f32 %v1517, %v1633
  %v1755 = vadd.f32 %v1522, %v1633
  %v1756 = vadd.f32 %v1527, %v1633
  %v1757 = vadd.f32 %v1532, %v1633
  %v1758 = vadd.f32 %v1537, %v1633
  %v1759 = vadd.f32 %v1542, %v1633
  %v1760 = vadd.f32 %v1547, %v1633
  %v1761 = vadd.f32 %v1552, %v1633
  %v1762 = vadd.f32 %v1557, %v1633
  %v1763 = vadd.f32 %v1562, %v1633
  %v1764 = vadd.f32 %v1567, %v1633
  %v1765 = vadd.f32 %v1572, %v1633
  %v1766 = vadd.f32 %v1577, %v1633
  %v1767 = vadd.f32 %v1582, %v1633
  %v1768 = vadd.f32 %v1587, %v1633
  %v1769 = vadd.f32 %v1592, %v1633
  %vm1770 = vcmp.gt.f32.partialorder %v1642, 0.0
  %vm1771 = vcmp.gt.f32.partialorder %v1643, 0.0
  %vm1772 = vcmp.gt.f32.partialorder %v1644, 0.0
  %vm1773 = vcmp.gt.f32.partialorder %v1645, 0.0
  %vm1774 = vcmp.gt.f32.partialorder %v1646, 0.0
  %vm1775 = vcmp.gt.f32.partialorder %v1647, 0.0
  %vm1776 = vcmp.gt.f32.partialorder %v1648, 0.0
  %vm1777 = vcmp.gt.f32.partialorder %v1649, 0.0
  %vm1778 = vcmp.gt.f32.partialorder %v1650, 0.0
  %vm1779 = vcmp.gt.f32.partialorder %v1651, 0.0
  %vm1780 = vcmp.gt.f32.partialorder %v1652, 0.0
  %vm1781 = vcmp.gt.f32.partialorder %v1653, 0.0
  %vm1782 = vcmp.gt.f32.partialorder %v1654, 0.0
  %vm1783 = vcmp.gt.f32.partialorder %v1655, 0.0
  %vm1784 = vcmp.gt.f32.partialorder %v1656, 0.0
  %vm1785 = vcmp.gt.f32.partialorder %v1657, 0.0
  %vm1786 = vcmp.gt.f32.partialorder %v1658, 0.0
  %vm1787 = vcmp.gt.f32.partialorder %v1659, 0.0
  %vm1788 = vcmp.gt.f32.partialorder %v1660, 0.0
  %vm1789 = vcmp.gt.f32.partialorder %v1661, 0.0
  %vm1790 = vcmp.gt.f32.partialorder %v1662, 0.0
  %vm1791 = vcmp.gt.f32.partialorder %v1663, 0.0
  %vm1792 = vcmp.gt.f32.partialorder %v1664, 0.0
  %vm1793 = vcmp.gt.f32.partialorder %v1665, 0.0
  %vm1794 = vcmp.gt.f32.partialorder %v1666, 0.0
  %vm1795 = vcmp.gt.f32.partialorder %v1667, 0.0
  %vm1796 = vcmp.gt.f32.partialorder %v1668, 0.0
  %vm1797 = vcmp.gt.f32.partialorder %v1669, 0.0
  %vm1798 = vcmp.gt.f32.partialorder %v1670, 0.0
  %vm1799 = vcmp.gt.f32.partialorder %v1671, 0.0
  %vm1800 = vcmp.gt.f32.partialorder %v1672, 0.0
  %vm1801 = vcmp.gt.f32.partialorder %v1673, 0.0
  %vm1802 = vcmp.gt.f32.partialorder %v1674, 0.0
  %vm1803 = vcmp.gt.f32.partialorder %v1675, 0.0
  %vm1804 = vcmp.gt.f32.partialorder %v1676, 0.0
  %vm1805 = vcmp.gt.f32.partialorder %v1677, 0.0
  %vm1806 = vcmp.gt.f32.partialorder %v1678, 0.0
  %vm1807 = vcmp.gt.f32.partialorder %v1679, 0.0
  %vm1808 = vcmp.gt.f32.partialorder %v1680, 0.0
  %vm1809 = vcmp.gt.f32.partialorder %v1681, 0.0
  %vm1810 = vcmp.gt.f32.partialorder %v1682, 0.0
  %vm1811 = vcmp.gt.f32.partialorder %v1683, 0.0
  %vm1812 = vcmp.gt.f32.partialorder %v1684, 0.0
  %vm1813 = vcmp.gt.f32.partialorder %v1685, 0.0
  %vm1814 = vcmp.gt.f32.partialorder %v1686, 0.0
  %vm1815 = vcmp.gt.f32.partialorder %v1687, 0.0
  %vm1816 = vcmp.gt.f32.partialorder %v1688, 0.0
  %vm1817 = vcmp.gt.f32.partialorder %v1689, 0.0
  %vm1818 = vcmp.gt.f32.partialorder %v1690, 0.0
  %vm1819 = vcmp.gt.f32.partialorder %v1691, 0.0
  %vm1820 = vcmp.gt.f32.partialorder %v1692, 0.0
  %vm1821 = vcmp.gt.f32.partialorder %v1693, 0.0
  %vm1822 = vcmp.gt.f32.partialorder %v1694, 0.0
  %vm1823 = vcmp.gt.f32.partialorder %v1695, 0.0
  %vm1824 = vcmp.gt.f32.partialorder %v1696, 0.0
  %vm1825 = vcmp.gt.f32.partialorder %v1697, 0.0
  %vm1826 = vcmp.gt.f32.partialorder %v1698, 0.0
  %vm1827 = vcmp.gt.f32.partialorder %v1699, 0.0
  %vm1828 = vcmp.gt.f32.partialorder %v1700, 0.0
  %vm1829 = vcmp.gt.f32.partialorder %v1701, 0.0
  %vm1830 = vcmp.gt.f32.partialorder %v1702, 0.0
  %vm1831 = vcmp.gt.f32.partialorder %v1703, 0.0
  %vm1832 = vcmp.gt.f32.partialorder %v1704, 0.0
  %vm1833 = vcmp.gt.f32.partialorder %v1705, 0.0
  %vm1834 = vcmp.gt.f32.partialorder %v1706, 0.0
  %vm1835 = vcmp.gt.f32.partialorder %v1707, 0.0
  %vm1836 = vcmp.gt.f32.partialorder %v1708, 0.0
  %vm1837 = vcmp.gt.f32.partialorder %v1709, 0.0
  %vm1838 = vcmp.gt.f32.partialorder %v1710, 0.0
  %vm1839 = vcmp.gt.f32.partialorder %v1711, 0.0
  %vm1840 = vcmp.gt.f32.partialorder %v1712, 0.0
  %vm1841 = vcmp.gt.f32.partialorder %v1713, 0.0
  %vm1842 = vcmp.gt.f32.partialorder %v1714, 0.0
  %vm1843 = vcmp.gt.f32.partialorder %v1715, 0.0
  %vm1844 = vcmp.gt.f32.partialorder %v1716, 0.0
  %vm1845 = vcmp.gt.f32.partialorder %v1717, 0.0
  %vm1846 = vcmp.gt.f32.partialorder %v1718, 0.0
  %vm1847 = vcmp.gt.f32.partialorder %v1719, 0.0
  %vm1848 = vcmp.gt.f32.partialorder %v1720, 0.0
  %vm1849 = vcmp.gt.f32.partialorder %v1721, 0.0
  %vm1850 = vcmp.gt.f32.partialorder %v1722, 0.0
  %vm1851 = vcmp.gt.f32.partialorder %v1723, 0.0
  %vm1852 = vcmp.gt.f32.partialorder %v1724, 0.0
  %vm1853 = vcmp.gt.f32.partialorder %v1725, 0.0
  %vm1854 = vcmp.gt.f32.partialorder %v1726, 0.0
  %vm1855 = vcmp.gt.f32.partialorder %v1727, 0.0
  %vm1856 = vcmp.gt.f32.partialorder %v1728, 0.0
  %vm1857 = vcmp.gt.f32.partialorder %v1729, 0.0
  %vm1858 = vcmp.gt.f32.partialorder %v1730, 0.0
  %vm1859 = vcmp.gt.f32.partialorder %v1731, 0.0
  %vm1860 = vcmp.gt.f32.partialorder %v1732, 0.0
  %vm1861 = vcmp.gt.f32.partialorder %v1733, 0.0
  %vm1862 = vcmp.gt.f32.partialorder %v1734, 0.0
  %vm1863 = vcmp.gt.f32.partialorder %v1735, 0.0
  %vm1864 = vcmp.gt.f32.partialorder %v1736, 0.0
  %vm1865 = vcmp.gt.f32.partialorder %v1737, 0.0
  %vm1866 = vcmp.gt.f32.partialorder %v1738, 0.0
  %vm1867 = vcmp.gt.f32.partialorder %v1739, 0.0
  %vm1868 = vcmp.gt.f32.partialorder %v1740, 0.0
  %vm1869 = vcmp.gt.f32.partialorder %v1741, 0.0
  %vm1870 = vcmp.gt.f32.partialorder %v1742, 0.0
  %vm1871 = vcmp.gt.f32.partialorder %v1743, 0.0
  %vm1872 = vcmp.gt.f32.partialorder %v1744, 0.0
  %vm1873 = vcmp.gt.f32.partialorder %v1745, 0.0
  %vm1874 = vcmp.gt.f32.partialorder %v1746, 0.0
  %vm1875 = vcmp.gt.f32.partialorder %v1747, 0.0
  %vm1876 = vcmp.gt.f32.partialorder %v1748, 0.0
  %vm1877 = vcmp.gt.f32.partialorder %v1749, 0.0
  %vm1878 = vcmp.gt.f32.partialorder %v1750, 0.0
  %vm1879 = vcmp.gt.f32.partialorder %v1751, 0.0
  %vm1880 = vcmp.gt.f32.partialorder %v1752, 0.0
  %vm1881 = vcmp.gt.f32.partialorder %v1753, 0.0
  %vm1882 = vcmp.gt.f32.partialorder %v1754, 0.0
  %vm1883 = vcmp.gt.f32.partialorder %v1755, 0.0
  %vm1884 = vcmp.gt.f32.partialorder %v1756, 0.0
  %vm1885 = vcmp.gt.f32.partialorder %v1757, 0.0
  %vm1886 = vcmp.gt.f32.partialorder %v1758, 0.0
  %vm1887 = vcmp.gt.f32.partialorder %v1759, 0.0
  %vm1888 = vcmp.gt.f32.partialorder %v1760, 0.0
  %vm1889 = vcmp.gt.f32.partialorder %v1761, 0.0
  %vm1890 = vcmp.gt.f32.partialorder %v1762, 0.0
  %vm1891 = vcmp.gt.f32.partialorder %v1763, 0.0
  %vm1892 = vcmp.gt.f32.partialorder %v1764, 0.0
  %vm1893 = vcmp.gt.f32.partialorder %v1765, 0.0
  %vm1894 = vcmp.gt.f32.partialorder %v1766, 0.0
  %vm1895 = vcmp.gt.f32.partialorder %v1767, 0.0
  %vm1896 = vcmp.gt.f32.partialorder %v1768, 0.0
  %vm1897 = vcmp.gt.f32.partialorder %v1769, 0.0
  %v1898 = vmul.f32 %v1642, 0.2
  %v1899 = vmul.f32 %v1643, 0.2
  %v1900 = vmul.f32 %v1644, 0.2
  %v1901 = vmul.f32 %v1645, 0.2
  %v1902 = vmul.f32 %v1646, 0.2
  %v1903 = vmul.f32 %v1647, 0.2
  %v1904 = vmul.f32 %v1648, 0.2
  %v1905 = vmul.f32 %v1649, 0.2
  %v1906 = vmul.f32 %v1650, 0.2
  %v1907 = vmul.f32 %v1651, 0.2
  %v1908 = vmul.f32 %v1652, 0.2
  %v1909 = vmul.f32 %v1653, 0.2
  %v1910 = vmul.f32 %v1654, 0.2
  %v1911 = vmul.f32 %v1655, 0.2
  %v1912 = vmul.f32 %v1656, 0.2
  %v1913 = vmul.f32 %v1657, 0.2
  %v1914 = vmul.f32 %v1658, 0.2
  %v1915 = vmul.f32 %v1659, 0.2
  %v1916 = vmul.f32 %v1660, 0.2
  %v1917 = vmul.f32 %v1661, 0.2
  %v1918 = vmul.f32 %v1662, 0.2
  %v1919 = vmul.f32 %v1663, 0.2
  %v1920 = vmul.f32 %v1664, 0.2
  %v1921 = vmul.f32 %v1665, 0.2
  %v1922 = vmul.f32 %v1666, 0.2
  %v1923 = vmul.f32 %v1667, 0.2
  %v1924 = vmul.f32 %v1668, 0.2
  %v1925 = vmul.f32 %v1669, 0.2
  %v1926 = vmul.f32 %v1670, 0.2
  %v1927 = vmul.f32 %v1671, 0.2
  %v1928 = vmul.f32 %v1672, 0.2
  %v1929 = vmul.f32 %v1673, 0.2
  %v1930 = vmul.f32 %v1674, 0.2
  %v1931 = vmul.f32 %v1675, 0.2
  %v1932 = vmul.f32 %v1676, 0.2
  %v1933 = vmul.f32 %v1677, 0.2
  %v1934 = vmul.f32 %v1678, 0.2
  %v1935 = vmul.f32 %v1679, 0.2
  %v1936 = vmul.f32 %v1680, 0.2
  %v1937 = vmul.f32 %v1681, 0.2
  %v1938 = vmul.f32 %v1682, 0.2
  %v1939 = vmul.f32 %v1683, 0.2
  %v1940 = vmul.f32 %v1684, 0.2
  %v1941 = vmul.f32 %v1685, 0.2
  %v1942 = vmul.f32 %v1686, 0.2
  %v1943 = vmul.f32 %v1687, 0.2
  %v1944 = vmul.f32 %v1688, 0.2
  %v1945 = vmul.f32 %v1689, 0.2
  %v1946 = vmul.f32 %v1690, 0.2
  %v1947 = vmul.f32 %v1691, 0.2
  %v1948 = vmul.f32 %v1692, 0.2
  %v1949 = vmul.f32 %v1693, 0.2
  %v1950 = vmul.f32 %v1694, 0.2
  %v1951 = vmul.f32 %v1695, 0.2
  %v1952 = vmul.f32 %v1696, 0.2
  %v1953 = vmul.f32 %v1697, 0.2
  %v1954 = vmul.f32 %v1698, 0.2
  %v1955 = vmul.f32 %v1699, 0.2
  %v1956 = vmul.f32 %v1700, 0.2
  %v1957 = vmul.f32 %v1701, 0.2
  %v1958 = vmul.f32 %v1702, 0.2
  %v1959 = vmul.f32 %v1703, 0.2
  %v1960 = vmul.f32 %v1704, 0.2
  %v1961 = vmul.f32 %v1705, 0.2
  %v1962 = vmul.f32 %v1706, 0.2
  %v1963 = vmul.f32 %v1707, 0.2
  %v1964 = vmul.f32 %v1708, 0.2
  %v1965 = vmul.f32 %v1709, 0.2
  %v1966 = vmul.f32 %v1710, 0.2
  %v1967 = vmul.f32 %v1711, 0.2
  %v1968 = vmul.f32 %v1712, 0.2
  %v1969 = vmul.f32 %v1713, 0.2
  %v1970 = vmul.f32 %v1714, 0.2
  %v1971 = vmul.f32 %v1715, 0.2
  %v1972 = vmul.f32 %v1716, 0.2
  %v1973 = vmul.f32 %v1717, 0.2
  %v1974 = vmul.f32 %v1718, 0.2
  %v1975 = vmul.f32 %v1719, 0.2
  %v1976 = vmul.f32 %v1720, 0.2
  %v1977 = vmul.f32 %v1721, 0.2
  %v1978 = vmul.f32 %v1722, 0.2
  %v1979 = vmul.f32 %v1723, 0.2
  %v1980 = vmul.f32 %v1724, 0.2
  %v1981 = vmul.f32 %v1725, 0.2
  %v1982 = vmul.f32 %v1726, 0.2
  %v1983 = vmul.f32 %v1727, 0.2
  %v1984 = vmul.f32 %v1728, 0.2
  %v1985 = vmul.f32 %v1729, 0.2
  %v1986 = vmul.f32 %v1730, 0.2
  %v1987 = vmul.f32 %v1731, 0.2
  %v1988 = vmul.f32 %v1732, 0.2
  %v1989 = vmul.f32 %v1733, 0.2
  %v1990 = vmul.f32 %v1734, 0.2
  %v1991 = vmul.f32 %v1735, 0.2
  %v1992 = vmul.f32 %v1736, 0.2
  %v1993 = vmul.f32 %v1737, 0.2
  %v1994 = vmul.f32 %v1738, 0.2
  %v1995 = vmul.f32 %v1739, 0.2
  %v1996 = vmul.f32 %v1740, 0.2
  %v1997 = vmul.f32 %v1741, 0.2
  %v1998 = vmul.f32 %v1742, 0.2
  %v1999 = vmul.f32 %v1743, 0.2
  %v2000 = vmul.f32 %v1744, 0.2
  %v2001 = vmul.f32 %v1745, 0.2
  %v2002 = vmul.f32 %v1746, 0.2
  %v2003 = vmul.f32 %v1747, 0.2
  %v2004 = vmul.f32 %v1748, 0.2
  %v2005 = vmul.f32 %v1749, 0.2
  %v2006 = vmul.f32 %v1750, 0.2
  %v2007 = vmul.f32 %v1751, 0.2
  %v2008 = vmul.f32 %v1752, 0.2
  %v2009 = vmul.f32 %v1753, 0.2
  %v2010 = vmul.f32 %v1754, 0.2
  %v2011 = vmul.f32 %v1755, 0.2
  %v2012 = vmul.f32 %v1756, 0.2
  %v2013 = vmul.f32 %v1757, 0.2
  %v2014 = vmul.f32 %v1758, 0.2
  %v2015 = vmul.f32 %v1759, 0.2
  %v2016 = vmul.f32 %v1760, 0.2
  %v2017 = vmul.f32 %v1761, 0.2
  %v2018 = vmul.f32 %v1762, 0.2
  %v2019 = vmul.f32 %v1763, 0.2
  %v2020 = vmul.f32 %v1764, 0.2
  %v2021 = vmul.f32 %v1765, 0.2
  %v2022 = vmul.f32 %v1766, 0.2
  %v2023 = vmul.f32 %v1767, 0.2
  %v2024 = vmul.f32 %v1768, 0.2
  %v2025 = vmul.f32 %v1769, 0.2
  %v2026 = vsel %vm1770, %v1642, %v1898
  %v2027 = vsel %vm1771, %v1643, %v1899
  %v2028 = vsel %vm1772, %v1644, %v1900
  %v2029 = vsel %vm1773, %v1645, %v1901
  %v2030 = vsel %vm1774, %v1646, %v1902
  %v2031 = vsel %vm1775, %v1647, %v1903
  %v2032 = vsel %vm1776, %v1648, %v1904
  %v2033 = vsel %vm1777, %v1649, %v1905
  %v2034 = vsel %vm1778, %v1650, %v1906
  %v2035 = vsel %vm1779, %v1651, %v1907
  %v2036 = vsel %vm1780, %v1652, %v1908
  %v2037 = vsel %vm1781, %v1653, %v1909
  %v2038 = vsel %vm1782, %v1654, %v1910
  %v2039 = vsel %vm1783, %v1655, %v1911
  %v2040 = vsel %vm1784, %v1656, %v1912
  %v2041 = vsel %vm1785, %v1657, %v1913
  %v2042 = vsel %vm1786, %v1658, %v1914
  %v2043 = vsel %vm1787, %v1659, %v1915
  %v2044 = vsel %vm1788, %v1660, %v1916
  %v2045 = vsel %vm1789, %v1661, %v1917
  %v2046 = vsel %vm1790, %v1662, %v1918
  %v2047 = vsel %vm1791, %v1663, %v1919
  %v2048 = vsel %vm1792, %v1664, %v1920
  %v2049 = vsel %vm1793, %v1665, %v1921
  %v2050 = vsel %vm1794, %v1666, %v1922
  %v2051 = vsel %vm1795, %v1667, %v1923
  %v2052 = vsel %vm1796, %v1668, %v1924
  %v2053 = vsel %vm1797, %v1669, %v1925
  %v2054 = vsel %vm1798, %v1670, %v1926
  %v2055 = vsel %vm1799, %v1671, %v1927
  %v2056 = vsel %vm1800, %v1672, %v1928
  %v2057 = vsel %vm1801, %v1673, %v1929
  %v2058 = vsel %vm1802, %v1674, %v1930
  %v2059 = vsel %vm1803, %v1675, %v1931
  %v2060 = vsel %vm1804, %v1676, %v1932
  %v2061 = vsel %vm1805, %v1677, %v1933
  %v2062 = vsel %vm1806, %v1678, %v1934
  %v2063 = vsel %vm1807, %v1679, %v1935
  %v2064 = vsel %vm1808, %v1680, %v1936
  %v2065 = vsel %vm1809, %v1681, %v1937
  %v2066 = vsel %vm1810, %v1682, %v1938
  %v2067 = vsel %vm1811, %v1683, %v1939
  %v2068 = vsel %vm1812, %v1684, %v1940
  %v2069 = vsel %vm1813, %v1685, %v1941
  %v2070 = vsel %vm1814, %v1686, %v1942
  %v2071 = vsel %vm1815, %v1687, %v1943
  %v2072 = vsel %vm1816, %v1688, %v1944
  %v2073 = vsel %vm1817, %v1689, %v1945
  %v2074 = vsel %vm1818, %v1690, %v1946
  %v2075 = vsel %vm1819, %v1691, %v1947
  %v2076 = vsel %vm1820, %v1692, %v1948
  %v2077 = vsel %vm1821, %v1693, %v1949
  %v2078 = vsel %vm1822, %v1694, %v1950
  %v2079 = vsel %vm1823, %v1695, %v1951
  %v2080 = vsel %vm1824, %v1696, %v1952
  %v2081 = vsel %vm1825, %v1697, %v1953
  %v2082 = vsel %vm1826, %v1698, %v1954
  %v2083 = vsel %vm1827, %v1699, %v1955
  %v2084 = vsel %vm1828, %v1700, %v1956
  %v2085 = vsel %vm1829, %v1701, %v1957
  %v2086 = vsel %vm1830, %v1702, %v1958
  %v2087 = vsel %vm1831, %v1703, %v1959
  %v2088 = vsel %vm1832, %v1704, %v1960
  %v2089 = vsel %vm1833, %v1705, %v1961
  %v2090 = vsel %vm1834, %v1706, %v1962
  %v2091 = vsel %vm1835, %v1707, %v1963
  %v2092 = vsel %vm1836, %v1708, %v1964
  %v2093 = vsel %vm1837, %v1709, %v1965
  %v2094 = vsel %vm1838, %v1710, %v1966
  %v2095 = vsel %vm1839, %v1711, %v1967
  %v2096 = vsel %vm1840, %v1712, %v1968
  %v2097 = vsel %vm1841, %v1713, %v1969
  %v2098 = vsel %vm1842, %v1714, %v1970
  %v2099 = vsel %vm1843, %v1715, %v1971
  %v2100 = vsel %vm1844, %v1716, %v1972
  %v2101 = vsel %vm1845, %v1717, %v1973
  %v2102 = vsel %vm1846, %v1718, %v1974
  %v2103 = vsel %vm1847, %v1719, %v1975
  %v2104 = vsel %vm1848, %v1720, %v1976
  %v2105 = vsel %vm1849, %v1721, %v1977
  %v2106 = vsel %vm1850, %v1722, %v1978
  %v2107 = vsel %vm1851, %v1723, %v1979
  %v2108 = vsel %vm1852, %v1724, %v1980
  %v2109 = vsel %vm1853, %v1725, %v1981
  %v2110 = vsel %vm1854, %v1726, %v1982
  %v2111 = vsel %vm1855, %v1727, %v1983
  %v2112 = vsel %vm1856, %v1728, %v1984
  %v2113 = vsel %vm1857, %v1729, %v1985
  %v2114 = vsel %vm1858, %v1730, %v1986
  %v2115 = vsel %vm1859, %v1731, %v1987
  %v2116 = vsel %vm1860, %v1732, %v1988
  %v2117 = vsel %vm1861, %v1733, %v1989
  %v2118 = vsel %vm1862, %v1734, %v1990
  %v2119 = vsel %vm1863, %v1735, %v1991
  %v2120 = vsel %vm1864, %v1736, %v1992
  %v2121 = vsel %vm1865, %v1737, %v1993
  %v2122 = vsel %vm1866, %v1738, %v1994
  %v2123 = vsel %vm1867, %v1739, %v1995
  %v2124 = vsel %vm1868, %v1740, %v1996
  %v2125 = vsel %vm1869, %v1741, %v1997
  %v2126 = vsel %vm1870, %v1742, %v1998
  %v2127 = vsel %vm1871, %v1743, %v1999
  %v2128 = vsel %vm1872, %v1744, %v2000
  %v2129 = vsel %vm1873, %v1745, %v2001
  %v2130 = vsel %vm1874, %v1746, %v2002
  %v2131 = vsel %vm1875, %v1747, %v2003
  %v2132 = vsel %vm1876, %v1748, %v2004
  %v2133 = vsel %vm1877, %v1749, %v2005
  %v2134 = vsel %vm1878, %v1750, %v2006
  %v2135 = vsel %vm1879, %v1751, %v2007
  %v2136 = vsel %vm1880, %v1752, %v2008
  %v2137 = vsel %vm1881, %v1753, %v2009
  %v2138 = vsel %vm1882, %v1754, %v2010
  %v2139 = vsel %vm1883, %v1755, %v2011
  %v2140 = vsel %vm1884, %v1756, %v2012
  %v2141 = vsel %vm1885, %v1757, %v2013
  %v2142 = vsel %vm1886, %v1758, %v2014
  %v2143 = vsel %vm1887, %v1759, %v2015
  %v2144 = vsel %vm1888, %v1760, %v2016
  %v2145 = vsel %vm1889, %v1761, %v2017
  %v2146 = vsel %vm1890, %v1762, %v2018
  %v2147 = vsel %vm1891, %v1763, %v2019
  %v2148 = vsel %vm1892, %v1764, %v2020
  %v2149 = vsel %vm1893, %v1765, %v2021
  %v2150 = vsel %vm1894, %v1766, %v2022
  %v2151 = vsel %vm1895, %v1767, %v2023
  %v2152 = vsel %vm1896, %v1768, %v2024
  %v2153 = vsel %vm1897, %v1769, %v2025
  %v2154 = vadd.f32 %v2026, %v45
  %v2155 = vadd.f32 %v2027, %v46
  %v2156 = vadd.f32 %v2028, %v47
  %v2157 = vadd.f32 %v2029, %v48
  %v2158 = vadd.f32 %v2030, %v49
  %v2159 = vadd.f32 %v2031, %v50
  %v2160 = vadd.f32 %v2032, %v51
  %v2161 = vadd.f32 %v2033, %v52
  %v2162 = vadd.f32 %v2034, %v53
  %v2163 = vadd.f32 %v2035, %v54
  %v2164 = vadd.f32 %v2036, %v55
  %v2165 = vadd.f32 %v2037, %v56
  %v2166 = vadd.f32 %v2038, %v57
  %v2167 = vadd.f32 %v2039, %v58
  %v2168 = vadd.f32 %v2040, %v59
  %v2169 = vadd.f32 %v2041, %v60
  %v2170 = vadd.f32 %v2042, %v45
  %v2171 = vadd.f32 %v2043, %v46
  %v2172 = vadd.f32 %v2044, %v47
  %v2173 = vadd.f32 %v2045, %v48
  %v2174 = vadd.f32 %v2046, %v49
  %v2175 = vadd.f32 %v2047, %v50
  %v2176 = vadd.f32 %v2048, %v51
  %v2177 = vadd.f32 %v2049, %v52
  %v2178 = vadd.f32 %v2050, %v53
  %v2179 = vadd.f32 %v2051, %v54
  %v2180 = vadd.f32 %v2052, %v55
  %v2181 = vadd.f32 %v2053, %v56
  %v2182 = vadd.f32 %v2054, %v57
  %v2183 = vadd.f32 %v2055, %v58
  %v2184 = vadd.f32 %v2056, %v59
  %v2185 = vadd.f32 %v2057, %v60
  %v2186 = vadd.f32 %v2058, %v45
  %v2187 = vadd.f32 %v2059, %v46
  %v2188 = vadd.f32 %v2060, %v47
  %v2189 = vadd.f32 %v2061, %v48
  %v2190 = vadd.f32 %v2062, %v49
  %v2191 = vadd.f32 %v2063, %v50
  %v2192 = vadd.f32 %v2064, %v51
  %v2193 = vadd.f32 %v2065, %v52
  %v2194 = vadd.f32 %v2066, %v53
  %v2195 = vadd.f32 %v2067, %v54
  %v2196 = vadd.f32 %v2068, %v55
  %v2197 = vadd.f32 %v2069, %v56
  %v2198 = vadd.f32 %v2070, %v57
  %v2199 = vadd.f32 %v2071, %v58
  %v2200 = vadd.f32 %v2072, %v59
  %v2201 = vadd.f32 %v2073, %v60
  %v2202 = vadd.f32 %v2074, %v45
  %v2203 = vadd.f32 %v2075, %v46
  %v2204 = vadd.f32 %v2076, %v47
  %v2205 = vadd.f32 %v2077, %v48
  %v2206 = vadd.f32 %v2078, %v49
  %v2207 = vadd.f32 %v2079, %v50
  %v2208 = vadd.f32 %v2080, %v51
  %v2209 = vadd.f32 %v2081, %v52
  %v2210 = vadd.f32 %v2082, %v53
  %v2211 = vadd.f32 %v2083, %v54
  %v2212 = vadd.f32 %v2084, %v55
  %v2213 = vadd.f32 %v2085, %v56
  %v2214 = vadd.f32 %v2086, %v57
  %v2215 = vadd.f32 %v2087, %v58
  %v2216 = vadd.f32 %v2088, %v59
  %v2217 = vadd.f32 %v2089, %v60
  %v2218 = vadd.f32 %v2090, %v45
  %v2219 = vadd.f32 %v2091, %v46
  %v2220 = vadd.f32 %v2092, %v47
  %v2221 = vadd.f32 %v2093, %v48
  %v2222 = vadd.f32 %v2094, %v49
  %v2223 = vadd.f32 %v2095, %v50
  %v2224 = vadd.f32 %v2096, %v51
  %v2225 = vadd.f32 %v2097, %v52
  %v2226 = vadd.f32 %v2098, %v53
  %v2227 = vadd.f32 %v2099, %v54
  %v2228 = vadd.f32 %v2100, %v55
  %v2229 = vadd.f32 %v2101, %v56
  %v2230 = vadd.f32 %v2102, %v57
  %v2231 = vadd.f32 %v2103, %v58
  %v2232 = vadd.f32 %v2104, %v59
  %v2233 = vadd.f32 %v2105, %v60
  %v2234 = vadd.f32 %v2106, %v45
  %v2235 = vadd.f32 %v2107, %v46
  %v2236 = vadd.f32 %v2108, %v47
  %v2237 = vadd.f32 %v2109, %v48
  %v2238 = vadd.f32 %v2110, %v49
  %v2239 = vadd.f32 %v2111, %v50
  %v2240 = vadd.f32 %v2112, %v51
  %v2241 = vadd.f32 %v2113, %v52
  %v2242 = vadd.f32 %v2114, %v53
  %v2243 = vadd.f32 %v2115, %v54
  %v2244 = vadd.f32 %v2116, %v55
  %v2245 = vadd.f32 %v2117, %v56
  %v2246 = vadd.f32 %v2118, %v57
  %v2247 = vadd.f32 %v2119, %v58
  %v2248 = vadd.f32 %v2120, %v59
  %v2249 = vadd.f32 %v2121, %v60
  %v2250 = vadd.f32 %v2122, %v45
  %v2251 = vadd.f32 %v2123, %v46
  %v2252 = vadd.f32 %v2124, %v47
  %v2253 = vadd.f32 %v2125, %v48
  %v2254 = vadd.f32 %v2126, %v49
  %v2255 = vadd.f32 %v2127, %v50
  %v2256 = vadd.f32 %v2128, %v51
  %v2257 = vadd.f32 %v2129, %v52
  %v2258 = vadd.f32 %v2130, %v53
  %v2259 = vadd.f32 %v2131, %v54
  %v2260 = vadd.f32 %v2132, %v55
  %v2261 = vadd.f32 %v2133, %v56
  %v2262 = vadd.f32 %v2134, %v57
  %v2263 = vadd.f32 %v2135, %v58
  %v2264 = vadd.f32 %v2136, %v59
  %v2265 = vadd.f32 %v2137, %v60
  %v2266 = vadd.f32 %v2138, %v45
  %v2267 = vadd.f32 %v2139, %v46
  %v2268 = vadd.f32 %v2140, %v47
  %v2269 = vadd.f32 %v2141, %v48
  %v2270 = vadd.f32 %v2142, %v49
  %v2271 = vadd.f32 %v2143, %v50
  %v2272 = vadd.f32 %v2144, %v51
  %v2273 = vadd.f32 %v2145, %v52
  %v2274 = vadd.f32 %v2146, %v53
  %v2275 = vadd.f32 %v2147, %v54
  %v2276 = vadd.f32 %v2148, %v55
  %v2277 = vadd.f32 %v2149, %v56
  %v2278 = vadd.f32 %v2150, %v57
  %v2279 = vadd.f32 %v2151, %v58
  %v2280 = vadd.f32 %v2152, %v59
  %v2281 = vadd.f32 %v2153, %v60
  %2282 = vmax.xlane.f32.xlu0 %v2154
  %v2283 = vpop.xlane.xlu0 %2282
  %2284 = vmax.xlane.f32.xlu0 %v2155
  %v2285 = vpop.xlane.xlu0 %2284
  %2286 = vmax.xlane.f32.xlu0 %v2156
  %v2287 = vpop.xlane.xlu0 %2286
  %2288 = vmax.xlane.f32.xlu0 %v2157
  %v2289 = vpop.xlane.xlu0 %2288
  %2290 = vmax.xlane.f32.xlu0 %v2158
  %v2291 = vpop.xlane.xlu0 %2290
  %2292 = vmax.xlane.f32.xlu0 %v2159
  %v2293 = vpop.xlane.xlu0 %2292
  %2294 = vmax.xlane.f32.xlu0 %v2160
  %v2295 = vpop.xlane.xlu0 %2294
  %2296 = vmax.xlane.f32.xlu0 %v2161
  %v2297 = vpop.xlane.xlu0 %2296
  %2298 = vmax.xlane.f32.xlu0 %v2162
  %v2299 = vpop.xlane.xlu0 %2298
  %2300 = vmax.xlane.f32.xlu0 %v2163
  %v2301 = vpop.xlane.xlu0 %2300
  %2302 = vmax.xlane.f32.xlu0 %v2164
  %v2303 = vpop.xlane.xlu0 %2302
  %2304 = vmax.xlane.f32.xlu0 %v2165
  %v2305 = vpop.xlane.xlu0 %2304
  %2306 = vmax.xlane.f32.xlu0 %v2166
  %v2307 = vpop.xlane.xlu0 %2306
  %2308 = vmax.xlane.f32.xlu0 %v2167
  %v2309 = vpop.xlane.xlu0 %2308
  %2310 = vmax.xlane.f32.xlu0 %v2168
  %v2311 = vpop.xlane.xlu0 %2310
  %2312 = vmax.xlane.f32.xlu0 %v2169
  %v2313 = vpop.xlane.xlu0 %2312
  %2314 = vmax.xlane.f32.xlu0 %v2170
  %v2315 = vpop.xlane.xlu0 %2314
  %2316 = vmax.xlane.f32.xlu0 %v2171
  %v2317 = vpop.xlane.xlu0 %2316
  %2318 = vmax.xlane.f32.xlu0 %v2172
  %v2319 = vpop.xlane.xlu0 %2318
  %2320 = vmax.xlane.f32.xlu0 %v2173
  %v2321 = vpop.xlane.xlu0 %2320
  %2322 = vmax.xlane.f32.xlu0 %v2174
  %v2323 = vpop.xlane.xlu0 %2322
  %2324 = vmax.xlane.f32.xlu0 %v2175
  %v2325 = vpop.xlane.xlu0 %2324
  %2326 = vmax.xlane.f32.xlu0 %v2176
  %v2327 = vpop.xlane.xlu0 %2326
  %2328 = vmax.xlane.f32.xlu0 %v2177
  %v2329 = vpop.xlane.xlu0 %2328
  %2330 = vmax.xlane.f32.xlu0 %v2178
  %v2331 = vpop.xlane.xlu0 %2330
  %2332 = vmax.xlane.f32.xlu0 %v2179
  %v2333 = vpop.xlane.xlu0 %2332
  %2334 = vmax.xlane.f32.xlu0 %v2180
  %v2335 = vpop.xlane.xlu0 %2334
  %2336 = vmax.xlane.f32.xlu0 %v2181
  %v2337 = vpop.xlane.xlu0 %2336
  %2338 = vmax.xlane.f32.xlu0 %v2182
  %v2339 = vpop.xlane.xlu0 %2338
  %2340 = vmax.xlane.f32.xlu0 %v2183
  %v2341 = vpop.xlane.xlu0 %2340
  %2342 = vmax.xlane.f32.xlu0 %v2184
  %v2343 = vpop.xlane.xlu0 %2342
  %2344 = vmax.xlane.f32.xlu0 %v2185
  %v2345 = vpop.xlane.xlu0 %2344
  %2346 = vmax.xlane.f32.xlu0 %v2186
  %v2347 = vpop.xlane.xlu0 %2346
  %2348 = vmax.xlane.f32.xlu0 %v2187
  %v2349 = vpop.xlane.xlu0 %2348
  %2350 = vmax.xlane.f32.xlu0 %v2188
  %v2351 = vpop.xlane.xlu0 %2350
  %2352 = vmax.xlane.f32.xlu0 %v2189
  %v2353 = vpop.xlane.xlu0 %2352
  %2354 = vmax.xlane.f32.xlu0 %v2190
  %v2355 = vpop.xlane.xlu0 %2354
  %2356 = vmax.xlane.f32.xlu0 %v2191
  %v2357 = vpop.xlane.xlu0 %2356
  %2358 = vmax.xlane.f32.xlu0 %v2192
  %v2359 = vpop.xlane.xlu0 %2358
  %2360 = vmax.xlane.f32.xlu0 %v2193
  %v2361 = vpop.xlane.xlu0 %2360
  %2362 = vmax.xlane.f32.xlu0 %v2194
  %v2363 = vpop.xlane.xlu0 %2362
  %2364 = vmax.xlane.f32.xlu0 %v2195
  %v2365 = vpop.xlane.xlu0 %2364
  %2366 = vmax.xlane.f32.xlu0 %v2196
  %v2367 = vpop.xlane.xlu0 %2366
  %2368 = vmax.xlane.f32.xlu0 %v2197
  %v2369 = vpop.xlane.xlu0 %2368
  %2370 = vmax.xlane.f32.xlu0 %v2198
  %v2371 = vpop.xlane.xlu0 %2370
  %2372 = vmax.xlane.f32.xlu0 %v2199
  %v2373 = vpop.xlane.xlu0 %2372
  %2374 = vmax.xlane.f32.xlu0 %v2200
  %v2375 = vpop.xlane.xlu0 %2374
  %2376 = vmax.xlane.f32.xlu0 %v2201
  %v2377 = vpop.xlane.xlu0 %2376
  %2378 = vmax.xlane.f32.xlu0 %v2202
  %v2379 = vpop.xlane.xlu0 %2378
  %2380 = vmax.xlane.f32.xlu0 %v2203
  %v2381 = vpop.xlane.xlu0 %2380
  %2382 = vmax.xlane.f32.xlu0 %v2204
  %v2383 = vpop.xlane.xlu0 %2382
  %2384 = vmax.xlane.f32.xlu0 %v2205
  %v2385 = vpop.xlane.xlu0 %2384
  %2386 = vmax.xlane.f32.xlu0 %v2206
  %v2387 = vpop.xlane.xlu0 %2386
  %2388 = vmax.xlane.f32.xlu0 %v2207
  %v2389 = vpop.xlane.xlu0 %2388
  %2390 = vmax.xlane.f32.xlu0 %v2208
  %v2391 = vpop.xlane.xlu0 %2390
  %2392 = vmax.xlane.f32.xlu0 %v2209
  %v2393 = vpop.xlane.xlu0 %2392
  %2394 = vmax.xlane.f32.xlu0 %v2210
  %v2395 = vpop.xlane.xlu0 %2394
  %2396 = vmax.xlane.f32.xlu0 %v2211
  %v2397 = vpop.xlane.xlu0 %2396
  %2398 = vmax.xlane.f32.xlu0 %v2212
  %v2399 = vpop.xlane.xlu0 %2398
  %2400 = vmax.xlane.f32.xlu0 %v2213
  %v2401 = vpop.xlane.xlu0 %2400
  %2402 = vmax.xlane.f32.xlu0 %v2214
  %v2403 = vpop.xlane.xlu0 %2402
  %2404 = vmax.xlane.f32.xlu0 %v2215
  %v2405 = vpop.xlane.xlu0 %2404
  %2406 = vmax.xlane.f32.xlu0 %v2216
  %v2407 = vpop.xlane.xlu0 %2406
  %2408 = vmax.xlane.f32.xlu0 %v2217
  %v2409 = vpop.xlane.xlu0 %2408
  %2410 = vmax.xlane.f32.xlu0 %v2218
  %v2411 = vpop.xlane.xlu0 %2410
  %2412 = vmax.xlane.f32.xlu0 %v2219
  %v2413 = vpop.xlane.xlu0 %2412
  %2414 = vmax.xlane.f32.xlu0 %v2220
  %v2415 = vpop.xlane.xlu0 %2414
  %2416 = vmax.xlane.f32.xlu0 %v2221
  %v2417 = vpop.xlane.xlu0 %2416
  %2418 = vmax.xlane.f32.xlu0 %v2222
  %v2419 = vpop.xlane.xlu0 %2418
  %2420 = vmax.xlane.f32.xlu0 %v2223
  %v2421 = vpop.xlane.xlu0 %2420
  %2422 = vmax.xlane.f32.xlu0 %v2224
  %v2423 = vpop.xlane.xlu0 %2422
  %2424 = vmax.xlane.f32.xlu0 %v2225
  %v2425 = vpop.xlane.xlu0 %2424
  %2426 = vmax.xlane.f32.xlu0 %v2226
  %v2427 = vpop.xlane.xlu0 %2426
  %2428 = vmax.xlane.f32.xlu0 %v2227
  %v2429 = vpop.xlane.xlu0 %2428
  %2430 = vmax.xlane.f32.xlu0 %v2228
  %v2431 = vpop.xlane.xlu0 %2430
  %2432 = vmax.xlane.f32.xlu0 %v2229
  %v2433 = vpop.xlane.xlu0 %2432
  %2434 = vmax.xlane.f32.xlu0 %v2230
  %v2435 = vpop.xlane.xlu0 %2434
  %2436 = vmax.xlane.f32.xlu0 %v2231
  %v2437 = vpop.xlane.xlu0 %2436
  %2438 = vmax.xlane.f32.xlu0 %v2232
  %v2439 = vpop.xlane.xlu0 %2438
  %2440 = vmax.xlane.f32.xlu0 %v2233
  %v2441 = vpop.xlane.xlu0 %2440
  %2442 = vmax.xlane.f32.xlu0 %v2234
  %v2443 = vpop.xlane.xlu0 %2442
  %2444 = vmax.xlane.f32.xlu0 %v2235
  %v2445 = vpop.xlane.xlu0 %2444
  %2446 = vmax.xlane.f32.xlu0 %v2236
  %v2447 = vpop.xlane.xlu0 %2446
  %2448 = vmax.xlane.f32.xlu0 %v2237
  %v2449 = vpop.xlane.xlu0 %2448
  %2450 = vmax.xlane.f32.xlu0 %v2238
  %v2451 = vpop.xlane.xlu0 %2450
  %2452 = vmax.xlane.f32.xlu0 %v2239
  %v2453 = vpop.xlane.xlu0 %2452
  %2454 = vmax.xlane.f32.xlu0 %v2240
  %v2455 = vpop.xlane.xlu0 %2454
  %2456 = vmax.xlane.f32.xlu0 %v2241
  %v2457 = vpop.xlane.xlu0 %2456
  %2458 = vmax.xlane.f32.xlu0 %v2242
  %v2459 = vpop.xlane.xlu0 %2458
  %2460 = vmax.xlane.f32.xlu0 %v2243
  %v2461 = vpop.xlane.xlu0 %2460
  %2462 = vmax.xlane.f32.xlu0 %v2244
  %v2463 = vpop.xlane.xlu0 %2462
  %2464 = vmax.xlane.f32.xlu0 %v2245
  %v2465 = vpop.xlane.xlu0 %2464
  %2466 = vmax.xlane.f32.xlu0 %v2246
  %v2467 = vpop.xlane.xlu0 %2466
  %2468 = vmax.xlane.f32.xlu0 %v2247
  %v2469 = vpop.xlane.xlu0 %2468
  %2470 = vmax.xlane.f32.xlu0 %v2248
  %v2471 = vpop.xlane.xlu0 %2470
  %2472 = vmax.xlane.f32.xlu0 %v2249
  %v2473 = vpop.xlane.xlu0 %2472
  %2474 = vmax.xlane.f32.xlu0 %v2250
  %v2475 = vpop.xlane.xlu0 %2474
  %2476 = vmax.xlane.f32.xlu0 %v2251
  %v2477 = vpop.xlane.xlu0 %2476
  %2478 = vmax.xlane.f32.xlu0 %v2252
  %v2479 = vpop.xlane.xlu0 %2478
  %2480 = vmax.xlane.f32.xlu0 %v2253
  %v2481 = vpop.xlane.xlu0 %2480
  %2482 = vmax.xlane.f32.xlu0 %v2254
  %v2483 = vpop.xlane.xlu0 %2482
  %2484 = vmax.xlane.f32.xlu0 %v2255
  %v2485 = vpop.xlane.xlu0 %2484
  %2486 = vmax.xlane.f32.xlu0 %v2256
  %v2487 = vpop.xlane.xlu0 %2486
  %2488 = vmax.xlane.f32.xlu0 %v2257
  %v2489 = vpop.xlane.xlu0 %2488
  %2490 = vmax.xlane.f32.xlu0 %v2258
  %v2491 = vpop.xlane.xlu0 %2490
  %2492 = vmax.xlane.f32.xlu0 %v2259
  %v2493 = vpop.xlane.xlu0 %2492
  %2494 = vmax.xlane.f32.xlu0 %v2260
  %v2495 = vpop.xlane.xlu0 %2494
  %2496 = vmax.xlane.f32.xlu0 %v2261
  %v2497 = vpop.xlane.xlu0 %2496
  %2498 = vmax.xlane.f32.xlu0 %v2262
  %v2499 = vpop.xlane.xlu0 %2498
  %2500 = vmax.xlane.f32.xlu0 %v2263
  %v2501 = vpop.xlane.xlu0 %2500
  %2502 = vmax.xlane.f32.xlu0 %v2264
  %v2503 = vpop.xlane.xlu0 %2502
  %2504 = vmax.xlane.f32.xlu0 %v2265
  %v2505 = vpop.xlane.xlu0 %2504
  %2506 = vmax.xlane.f32.xlu0 %v2266
  %v2507 = vpop.xlane.xlu0 %2506
  %2508 = vmax.xlane.f32.xlu0 %v2267
  %v2509 = vpop.xlane.xlu0 %2508
  %2510 = vmax.xlane.f32.xlu0 %v2268
  %v2511 = vpop.xlane.xlu0 %2510
  %2512 = vmax.xlane.f32.xlu0 %v2269
  %v2513 = vpop.xlane.xlu0 %2512
  %2514 = vmax.xlane.f32.xlu0 %v2270
  %v2515 = vpop.xlane.xlu0 %2514
  %2516 = vmax.xlane.f32.xlu0 %v2271
  %v2517 = vpop.xlane.xlu0 %2516
  %2518 = vmax.xlane.f32.xlu0 %v2272
  %v2519 = vpop.xlane.xlu0 %2518
  %2520 = vmax.xlane.f32.xlu0 %v2273
  %v2521 = vpop.xlane.xlu0 %2520
  %2522 = vmax.xlane.f32.xlu0 %v2274
  %v2523 = vpop.xlane.xlu0 %2522
  %2524 = vmax.xlane.f32.xlu0 %v2275
  %v2525 = vpop.xlane.xlu0 %2524
  %2526 = vmax.xlane.f32.xlu0 %v2276
  %v2527 = vpop.xlane.xlu0 %2526
  %2528 = vmax.xlane.f32.xlu0 %v2277
  %v2529 = vpop.xlane.xlu0 %2528
  %2530 = vmax.xlane.f32.xlu0 %v2278
  %v2531 = vpop.xlane.xlu0 %2530
  %2532 = vmax.xlane.f32.xlu0 %v2279
  %v2533 = vpop.xlane.xlu0 %2532
  %2534 = vmax.xlane.f32.xlu0 %v2280
  %v2535 = vpop.xlane.xlu0 %2534
  %2536 = vmax.xlane.f32.xlu0 %v2281
  %v2537 = vpop.xlane.xlu0 %2536
  %v2538 = vsub.f32 %v2154, %v2283
  %v2539 = vsub.f32 %v2155, %v2285
  %v2540 = vsub.f32 %v2156, %v2287
  %v2541 = vsub.f32 %v2157, %v2289
  %v2542 = vsub.f32 %v2158, %v2291
  %v2543 = vsub.f32 %v2159, %v2293
  %v2544 = vsub.f32 %v2160, %v2295
  %v2545 = vsub.f32 %v2161, %v2297
  %v2546 = vsub.f32 %v2162, %v2299
  %v2547 = vsub.f32 %v2163, %v2301
  %v2548 = vsub.f32 %v2164, %v2303
  %v2549 = vsub.f32 %v2165, %v2305
  %v2550 = vsub.f32 %v2166, %v2307
  %v2551 = vsub.f32 %v2167, %v2309
  %v2552 = vsub.f32 %v2168, %v2311
  %v2553 = vsub.f32 %v2169, %v2313
  %v2554 = vsub.f32 %v2170, %v2315
  %v2555 = vsub.f32 %v2171, %v2317
  %v2556 = vsub.f32 %v2172, %v2319
  %v2557 = vsub.f32 %v2173, %v2321
  %v2558 = vsub.f32 %v2174, %v2323
  %v2559 = vsub.f32 %v2175, %v2325
  %v2560 = vsub.f32 %v2176, %v2327
  %v2561 = vsub.f32 %v2177, %v2329
  %v2562 = vsub.f32 %v2178, %v2331
  %v2563 = vsub.f32 %v2179, %v2333
  %v2564 = vsub.f32 %v2180, %v2335
  %v2565 = vsub.f32 %v2181, %v2337
  %v2566 = vsub.f32 %v2182, %v2339
  %v2567 = vsub.f32 %v2183, %v2341
  %v2568 = vsub.f32 %v2184, %v2343
  %v2569 = vsub.f32 %v2185, %v2345
  %v2570 = vsub.f32 %v2186, %v2347
  %v2571 = vsub.f32 %v2187, %v2349
  %v2572 = vsub.f32 %v2188, %v2351
  %v2573 = vsub.f32 %v2189, %v2353
  %v2574 = vsub.f32 %v2190, %v2355
  %v2575 = vsub.f32 %v2191, %v2357
  %v2576 = vsub.f32 %v2192, %v2359
  %v2577 = vsub.f32 %v2193, %v2361
  %v2578 = vsub.f32 %v2194, %v2363
  %v2579 = vsub.f32 %v2195, %v2365
  %v2580 = vsub.f32 %v2196, %v2367
  %v2581 = vsub.f32 %v2197, %v2369
  %v2582 = vsub.f32 %v2198, %v2371
  %v2583 = vsub.f32 %v2199, %v2373
  %v2584 = vsub.f32 %v2200, %v2375
  %v2585 = vsub.f32 %v2201, %v2377
  %v2586 = vsub.f32 %v2202, %v2379
  %v2587 = vsub.f32 %v2203, %v2381
  %v2588 = vsub.f32 %v2204, %v2383
  %v2589 = vsub.f32 %v2205, %v2385
  %v2590 = vsub.f32 %v2206, %v2387
  %v2591 = vsub.f32 %v2207, %v2389
  %v2592 = vsub.f32 %v2208, %v2391
  %v2593 = vsub.f32 %v2209, %v2393
  %v2594 = vsub.f32 %v2210, %v2395
  %v2595 = vsub.f32 %v2211, %v2397
  %v2596 = vsub.f32 %v2212, %v2399
  %v2597 = vsub.f32 %v2213, %v2401
  %v2598 = vsub.f32 %v2214, %v2403
  %v2599 = vsub.f32 %v2215, %v2405
  %v2600 = vsub.f32 %v2216, %v2407
  %v2601 = vsub.f32 %v2217, %v2409
  %v2602 = vsub.f32 %v2218, %v2411
  %v2603 = vsub.f32 %v2219, %v2413
  %v2604 = vsub.f32 %v2220, %v2415
  %v2605 = vsub.f32 %v2221, %v2417
  %v2606 = vsub.f32 %v2222, %v2419
  %v2607 = vsub.f32 %v2223, %v2421
  %v2608 = vsub.f32 %v2224, %v2423
  %v2609 = vsub.f32 %v2225, %v2425
  %v2610 = vsub.f32 %v2226, %v2427
  %v2611 = vsub.f32 %v2227, %v2429
  %v2612 = vsub.f32 %v2228, %v2431
  %v2613 = vsub.f32 %v2229, %v2433
  %v2614 = vsub.f32 %v2230, %v2435
  %v2615 = vsub.f32 %v2231, %v2437
  %v2616 = vsub.f32 %v2232, %v2439
  %v2617 = vsub.f32 %v2233, %v2441
  %v2618 = vsub.f32 %v2234, %v2443
  %v2619 = vsub.f32 %v2235, %v2445
  %v2620 = vsub.f32 %v2236, %v2447
  %v2621 = vsub.f32 %v2237, %v2449
  %v2622 = vsub.f32 %v2238, %v2451
  %v2623 = vsub.f32 %v2239, %v2453
  %v2624 = vsub.f32 %v2240, %v2455
  %v2625 = vsub.f32 %v2241, %v2457
  %v2626 = vsub.f32 %v2242, %v2459
  %v2627 = vsub.f32 %v2243, %v2461
  %v2628 = vsub.f32 %v2244, %v2463
  %v2629 = vsub.f32 %v2245, %v2465
  %v2630 = vsub.f32 %v2246, %v2467
  %v2631 = vsub.f32 %v2247, %v2469
  %v2632 = vsub.f32 %v2248, %v2471
  %v2633 = vsub.f32 %v2249, %v2473
  %v2634 = vsub.f32 %v2250, %v2475
  %v2635 = vsub.f32 %v2251, %v2477
  %v2636 = vsub.f32 %v2252, %v2479
  %v2637 = vsub.f32 %v2253, %v2481
  %v2638 = vsub.f32 %v2254, %v2483
  %v2639 = vsub.f32 %v2255, %v2485
  %v2640 = vsub.f32 %v2256, %v2487
  %v2641 = vsub.f32 %v2257, %v2489
  %v2642 = vsub.f32 %v2258, %v2491
  %v2643 = vsub.f32 %v2259, %v2493
  %v2644 = vsub.f32 %v2260, %v2495
  %v2645 = vsub.f32 %v2261, %v2497
  %v2646 = vsub.f32 %v2262, %v2499
  %v2647 = vsub.f32 %v2263, %v2501
  %v2648 = vsub.f32 %v2264, %v2503
  %v2649 = vsub.f32 %v2265, %v2505
  %v2650 = vsub.f32 %v2266, %v2507
  %v2651 = vsub.f32 %v2267, %v2509
  %v2652 = vsub.f32 %v2268, %v2511
  %v2653 = vsub.f32 %v2269, %v2513
  %v2654 = vsub.f32 %v2270, %v2515
  %v2655 = vsub.f32 %v2271, %v2517
  %v2656 = vsub.f32 %v2272, %v2519
  %v2657 = vsub.f32 %v2273, %v2521
  %v2658 = vsub.f32 %v2274, %v2523
  %v2659 = vsub.f32 %v2275, %v2525
  %v2660 = vsub.f32 %v2276, %v2527
  %v2661 = vsub.f32 %v2277, %v2529
  %v2662 = vsub.f32 %v2278, %v2531
  %v2663 = vsub.f32 %v2279, %v2533
  %v2664 = vsub.f32 %v2280, %v2535
  %v2665 = vsub.f32 %v2281, %v2537
  %v2666 = vmul.f32 %v2538, 1.442695
  %v2667 = vpow.pop %v2666
  %v2668 = vmul.f32 %v2539, 1.442695
  %v2669 = vpow.pop %v2668
  %v2670 = vmul.f32 %v2540, 1.442695
  %v2671 = vpow.pop %v2670
  %v2672 = vmul.f32 %v2541, 1.442695
  %v2673 = vpow.pop %v2672
  %v2674 = vmul.f32 %v2542, 1.442695
  %v2675 = vpow.pop %v2674
  %v2676 = vmul.f32 %v2543, 1.442695
  %v2677 = vpow.pop %v2676
  %v2678 = vmul.f32 %v2544, 1.442695
  %v2679 = vpow.pop %v2678
  %v2680 = vmul.f32 %v2545, 1.442695
  %v2681 = vpow.pop %v2680
  %v2682 = vmul.f32 %v2546, 1.442695
  %v2683 = vpow.pop %v2682
  %v2684 = vmul.f32 %v2547, 1.442695
  %v2685 = vpow.pop %v2684
  %v2686 = vmul.f32 %v2548, 1.442695
  %v2687 = vpow.pop %v2686
  %v2688 = vmul.f32 %v2549, 1.442695
  %v2689 = vpow.pop %v2688
  %v2690 = vmul.f32 %v2550, 1.442695
  %v2691 = vpow.pop %v2690
  %v2692 = vmul.f32 %v2551, 1.442695
  %v2693 = vpow.pop %v2692
  %v2694 = vmul.f32 %v2552, 1.442695
  %v2695 = vpow.pop %v2694
  %v2696 = vmul.f32 %v2553, 1.442695
  %v2697 = vpow.pop %v2696
  %v2698 = vmul.f32 %v2554, 1.442695
  %v2699 = vpow.pop %v2698
  %v2700 = vmul.f32 %v2555, 1.442695
  %v2701 = vpow.pop %v2700
  %v2702 = vmul.f32 %v2556, 1.442695
  %v2703 = vpow.pop %v2702
  %v2704 = vmul.f32 %v2557, 1.442695
  %v2705 = vpow.pop %v2704
  %v2706 = vmul.f32 %v2558, 1.442695
  %v2707 = vpow.pop %v2706
  %v2708 = vmul.f32 %v2559, 1.442695
  %v2709 = vpow.pop %v2708
  %v2710 = vmul.f32 %v2560, 1.442695
  %v2711 = vpow.pop %v2710
  %v2712 = vmul.f32 %v2561, 1.442695
  %v2713 = vpow.pop %v2712
  %v2714 = vmul.f32 %v2562, 1.442695
  %v2715 = vpow.pop %v2714
  %v2716 = vmul.f32 %v2563, 1.442695
  %v2717 = vpow.pop %v2716
  %v2718 = vmul.f32 %v2564, 1.442695
  %v2719 = vpow.pop %v2718
  %v2720 = vmul.f32 %v2565, 1.442695
  %v2721 = vpow.pop %v2720
  %v2722 = vmul.f32 %v2566, 1.442695
  %v2723 = vpow.pop %v2722
  %v2724 = vmul.f32 %v2567, 1.442695
  %v2725 = vpow.pop %v2724
  %v2726 = vmul.f32 %v2568, 1.442695
  %v2727 = vpow.pop %v2726
  %v2728 = vmul.f32 %v2569, 1.442695
  %v2729 = vpow.pop %v2728
  %v2730 = vmul.f32 %v2570, 1.442695
  %v2731 = vpow.pop %v2730
  %v2732 = vmul.f32 %v2571, 1.442695
  %v2733 = vpow.pop %v2732
  %v2734 = vmul.f32 %v2572, 1.442695
  %v2735 = vpow.pop %v2734
  %v2736 = vmul.f32 %v2573, 1.442695
  %v2737 = vpow.pop %v2736
  %v2738 = vmul.f32 %v2574, 1.442695
  %v2739 = vpow.pop %v2738
  %v2740 = vmul.f32 %v2575, 1.442695
  %v2741 = vpow.pop %v2740
  %v2742 = vmul.f32 %v2576, 1.442695
  %v2743 = vpow.pop %v2742
  %v2744 = vmul.f32 %v2577, 1.442695
  %v2745 = vpow.pop %v2744
  %v2746 = vmul.f32 %v2578, 1.442695
  %v2747 = vpow.pop %v2746
  %v2748 = vmul.f32 %v2579, 1.442695
  %v2749 = vpow.pop %v2748
  %v2750 = vmul.f32 %v2580, 1.442695
  %v2751 = vpow.pop %v2750
  %v2752 = vmul.f32 %v2581, 1.442695
  %v2753 = vpow.pop %v2752
  %v2754 = vmul.f32 %v2582, 1.442695
  %v2755 = vpow.pop %v2754
  %v2756 = vmul.f32 %v2583, 1.442695
  %v2757 = vpow.pop %v2756
  %v2758 = vmul.f32 %v2584, 1.442695
  %v2759 = vpow.pop %v2758
  %v2760 = vmul.f32 %v2585, 1.442695
  %v2761 = vpow.pop %v2760
  %v2762 = vmul.f32 %v2586, 1.442695
  %v2763 = vpow.pop %v2762
  %v2764 = vmul.f32 %v2587, 1.442695
  %v2765 = vpow.pop %v2764
  %v2766 = vmul.f32 %v2588, 1.442695
  %v2767 = vpow.pop %v2766
  %v2768 = vmul.f32 %v2589, 1.442695
  %v2769 = vpow.pop %v2768
  %v2770 = vmul.f32 %v2590, 1.442695
  %v2771 = vpow.pop %v2770
  %v2772 = vmul.f32 %v2591, 1.442695
  %v2773 = vpow.pop %v2772
  %v2774 = vmul.f32 %v2592, 1.442695
  %v2775 = vpow.pop %v2774
  %v2776 = vmul.f32 %v2593, 1.442695
  %v2777 = vpow.pop %v2776
  %v2778 = vmul.f32 %v2594, 1.442695
  %v2779 = vpow.pop %v2778
  %v2780 = vmul.f32 %v2595, 1.442695
  %v2781 = vpow.pop %v2780
  %v2782 = vmul.f32 %v2596, 1.442695
  %v2783 = vpow.pop %v2782
  %v2784 = vmul.f32 %v2597, 1.442695
  %v2785 = vpow.pop %v2784
  %v2786 = vmul.f32 %v2598, 1.442695
  %v2787 = vpow.pop %v2786
  %v2788 = vmul.f32 %v2599, 1.442695
  %v2789 = vpow.pop %v2788
  %v2790 = vmul.f32 %v2600, 1.442695
  %v2791 = vpow.pop %v2790
  %v2792 = vmul.f32 %v2601, 1.442695
  %v2793 = vpow.pop %v2792
  %v2794 = vmul.f32 %v2602, 1.442695
  %v2795 = vpow.pop %v2794
  %v2796 = vmul.f32 %v2603, 1.442695
  %v2797 = vpow.pop %v2796
  %v2798 = vmul.f32 %v2604, 1.442695
  %v2799 = vpow.pop %v2798
  %v2800 = vmul.f32 %v2605, 1.442695
  %v2801 = vpow.pop %v2800
  %v2802 = vmul.f32 %v2606, 1.442695
  %v2803 = vpow.pop %v2802
  %v2804 = vmul.f32 %v2607, 1.442695
  %v2805 = vpow.pop %v2804
  %v2806 = vmul.f32 %v2608, 1.442695
  %v2807 = vpow.pop %v2806
  %v2808 = vmul.f32 %v2609, 1.442695
  %v2809 = vpow.pop %v2808
  %v2810 = vmul.f32 %v2610, 1.442695
  %v2811 = vpow.pop %v2810
  %v2812 = vmul.f32 %v2611, 1.442695
  %v2813 = vpow.pop %v2812
  %v2814 = vmul.f32 %v2612, 1.442695
  %v2815 = vpow.pop %v2814
  %v2816 = vmul.f32 %v2613, 1.442695
  %v2817 = vpow.pop %v2816
  %v2818 = vmul.f32 %v2614, 1.442695
  %v2819 = vpow.pop %v2818
  %v2820 = vmul.f32 %v2615, 1.442695
  %v2821 = vpow.pop %v2820
  %v2822 = vmul.f32 %v2616, 1.442695
  %v2823 = vpow.pop %v2822
  %v2824 = vmul.f32 %v2617, 1.442695
  %v2825 = vpow.pop %v2824
  %v2826 = vmul.f32 %v2618, 1.442695
  %v2827 = vpow.pop %v2826
  %v2828 = vmul.f32 %v2619, 1.442695
  %v2829 = vpow.pop %v2828
  %v2830 = vmul.f32 %v2620, 1.442695
  %v2831 = vpow.pop %v2830
  %v2832 = vmul.f32 %v2621, 1.442695
  %v2833 = vpow.pop %v2832
  %v2834 = vmul.f32 %v2622, 1.442695
  %v2835 = vpow.pop %v2834
  %v2836 = vmul.f32 %v2623, 1.442695
  %v2837 = vpow.pop %v2836
  %v2838 = vmul.f32 %v2624, 1.442695
  %v2839 = vpow.pop %v2838
  %v2840 = vmul.f32 %v2625, 1.442695
  %v2841 = vpow.pop %v2840
  %v2842 = vmul.f32 %v2626, 1.442695
  %v2843 = vpow.pop %v2842
  %v2844 = vmul.f32 %v2627, 1.442695
  %v2845 = vpow.pop %v2844
  %v2846 = vmul.f32 %v2628, 1.442695
  %v2847 = vpow.pop %v2846
  %v2848 = vmul.f32 %v2629, 1.442695
  %v2849 = vpow.pop %v2848
  %v2850 = vmul.f32 %v2630, 1.442695
  %v2851 = vpow.pop %v2850
  %v2852 = vmul.f32 %v2631, 1.442695
  %v2853 = vpow.pop %v2852
  %v2854 = vmul.f32 %v2632, 1.442695
  %v2855 = vpow.pop %v2854
  %v2856 = vmul.f32 %v2633, 1.442695
  %v2857 = vpow.pop %v2856
  %v2858 = vmul.f32 %v2634, 1.442695
  %v2859 = vpow.pop %v2858
  %v2860 = vmul.f32 %v2635, 1.442695
  %v2861 = vpow.pop %v2860
  %v2862 = vmul.f32 %v2636, 1.442695
  %v2863 = vpow.pop %v2862
  %v2864 = vmul.f32 %v2637, 1.442695
  %v2865 = vpow.pop %v2864
  %v2866 = vmul.f32 %v2638, 1.442695
  %v2867 = vpow.pop %v2866
  %v2868 = vmul.f32 %v2639, 1.442695
  %v2869 = vpow.pop %v2868
  %v2870 = vmul.f32 %v2640, 1.442695
  %v2871 = vpow.pop %v2870
  %v2872 = vmul.f32 %v2641, 1.442695
  %v2873 = vpow.pop %v2872
  %v2874 = vmul.f32 %v2642, 1.442695
  %v2875 = vpow.pop %v2874
  %v2876 = vmul.f32 %v2643, 1.442695
  %v2877 = vpow.pop %v2876
  %v2878 = vmul.f32 %v2644, 1.442695
  %v2879 = vpow.pop %v2878
  %v2880 = vmul.f32 %v2645, 1.442695
  %v2881 = vpow.pop %v2880
  %v2882 = vmul.f32 %v2646, 1.442695
  %v2883 = vpow.pop %v2882
  %v2884 = vmul.f32 %v2647, 1.442695
  %v2885 = vpow.pop %v2884
  %v2886 = vmul.f32 %v2648, 1.442695
  %v2887 = vpow.pop %v2886
  %v2888 = vmul.f32 %v2649, 1.442695
  %v2889 = vpow.pop %v2888
  %v2890 = vmul.f32 %v2650, 1.442695
  %v2891 = vpow.pop %v2890
  %v2892 = vmul.f32 %v2651, 1.442695
  %v2893 = vpow.pop %v2892
  %v2894 = vmul.f32 %v2652, 1.442695
  %v2895 = vpow.pop %v2894
  %v2896 = vmul.f32 %v2653, 1.442695
  %v2897 = vpow.pop %v2896
  %v2898 = vmul.f32 %v2654, 1.442695
  %v2899 = vpow.pop %v2898
  %v2900 = vmul.f32 %v2655, 1.442695
  %v2901 = vpow.pop %v2900
  %v2902 = vmul.f32 %v2656, 1.442695
  %v2903 = vpow.pop %v2902
  %v2904 = vmul.f32 %v2657, 1.442695
  %v2905 = vpow.pop %v2904
  %v2906 = vmul.f32 %v2658, 1.442695
  %v2907 = vpow.pop %v2906
  %v2908 = vmul.f32 %v2659, 1.442695
  %v2909 = vpow.pop %v2908
  %v2910 = vmul.f32 %v2660, 1.442695
  %v2911 = vpow.pop %v2910
  %v2912 = vmul.f32 %v2661, 1.442695
  %v2913 = vpow.pop %v2912
  %v2914 = vmul.f32 %v2662, 1.442695
  %v2915 = vpow.pop %v2914
  %v2916 = vmul.f32 %v2663, 1.442695
  %v2917 = vpow.pop %v2916
  %v2918 = vmul.f32 %v2664, 1.442695
  %v2919 = vpow.pop %v2918
  %v2920 = vmul.f32 %v2665, 1.442695
  %v2921 = vpow.pop %v2920
  %2922 = vadd.xlane.f32.xlu0 %v2667
  %v2923 = vpop.xlane.xlu0 %2922
  %2924 = vadd.xlane.f32.xlu0 %v2669
  %v2925 = vpop.xlane.xlu0 %2924
  %2926 = vadd.xlane.f32.xlu0 %v2671
  %v2927 = vpop.xlane.xlu0 %2926
  %2928 = vadd.xlane.f32.xlu0 %v2673
  %v2929 = vpop.xlane.xlu0 %2928
  %2930 = vadd.xlane.f32.xlu0 %v2675
  %v2931 = vpop.xlane.xlu0 %2930
  %2932 = vadd.xlane.f32.xlu0 %v2677
  %v2933 = vpop.xlane.xlu0 %2932
  %2934 = vadd.xlane.f32.xlu0 %v2679
  %v2935 = vpop.xlane.xlu0 %2934
  %2936 = vadd.xlane.f32.xlu0 %v2681
  %v2937 = vpop.xlane.xlu0 %2936
  %2938 = vadd.xlane.f32.xlu0 %v2683
  %v2939 = vpop.xlane.xlu0 %2938
  %2940 = vadd.xlane.f32.xlu0 %v2685
  %v2941 = vpop.xlane.xlu0 %2940
  %2942 = vadd.xlane.f32.xlu0 %v2687
  %v2943 = vpop.xlane.xlu0 %2942
  %2944 = vadd.xlane.f32.xlu0 %v2689
  %v2945 = vpop.xlane.xlu0 %2944
  %2946 = vadd.xlane.f32.xlu0 %v2691
  %v2947 = vpop.xlane.xlu0 %2946
  %2948 = vadd.xlane.f32.xlu0 %v2693
  %v2949 = vpop.xlane.xlu0 %2948
  %2950 = vadd.xlane.f32.xlu0 %v2695
  %v2951 = vpop.xlane.xlu0 %2950
  %2952 = vadd.xlane.f32.xlu0 %v2697
  %v2953 = vpop.xlane.xlu0 %2952
  %2954 = vadd.xlane.f32.xlu0 %v2699
  %v2955 = vpop.xlane.xlu0 %2954
  %2956 = vadd.xlane.f32.xlu0 %v2701
  %v2957 = vpop.xlane.xlu0 %2956
  %2958 = vadd.xlane.f32.xlu0 %v2703
  %v2959 = vpop.xlane.xlu0 %2958
  %2960 = vadd.xlane.f32.xlu0 %v2705
  %v2961 = vpop.xlane.xlu0 %2960
  %2962 = vadd.xlane.f32.xlu0 %v2707
  %v2963 = vpop.xlane.xlu0 %2962
  %2964 = vadd.xlane.f32.xlu0 %v2709
  %v2965 = vpop.xlane.xlu0 %2964
  %2966 = vadd.xlane.f32.xlu0 %v2711
  %v2967 = vpop.xlane.xlu0 %2966
  %2968 = vadd.xlane.f32.xlu0 %v2713
  %v2969 = vpop.xlane.xlu0 %2968
  %2970 = vadd.xlane.f32.xlu0 %v2715
  %v2971 = vpop.xlane.xlu0 %2970
  %2972 = vadd.xlane.f32.xlu0 %v2717
  %v2973 = vpop.xlane.xlu0 %2972
  %2974 = vadd.xlane.f32.xlu0 %v2719
  %v2975 = vpop.xlane.xlu0 %2974
  %2976 = vadd.xlane.f32.xlu0 %v2721
  %v2977 = vpop.xlane.xlu0 %2976
  %2978 = vadd.xlane.f32.xlu0 %v2723
  %v2979 = vpop.xlane.xlu0 %2978
  %2980 = vadd.xlane.f32.xlu0 %v2725
  %v2981 = vpop.xlane.xlu0 %2980
  %2982 = vadd.xlane.f32.xlu0 %v2727
  %v2983 = vpop.xlane.xlu0 %2982
  %2984 = vadd.xlane.f32.xlu0 %v2729
  %v2985 = vpop.xlane.xlu0 %2984
  %2986 = vadd.xlane.f32.xlu0 %v2731
  %v2987 = vpop.xlane.xlu0 %2986
  %2988 = vadd.xlane.f32.xlu0 %v2733
  %v2989 = vpop.xlane.xlu0 %2988
  %2990 = vadd.xlane.f32.xlu0 %v2735
  %v2991 = vpop.xlane.xlu0 %2990
  %2992 = vadd.xlane.f32.xlu0 %v2737
  %v2993 = vpop.xlane.xlu0 %2992
  %2994 = vadd.xlane.f32.xlu0 %v2739
  %v2995 = vpop.xlane.xlu0 %2994
  %2996 = vadd.xlane.f32.xlu0 %v2741
  %v2997 = vpop.xlane.xlu0 %2996
  %2998 = vadd.xlane.f32.xlu0 %v2743
  %v2999 = vpop.xlane.xlu0 %2998
  %3000 = vadd.xlane.f32.xlu0 %v2745
  %v3001 = vpop.xlane.xlu0 %3000
  %3002 = vadd.xlane.f32.xlu0 %v2747
  %v3003 = vpop.xlane.xlu0 %3002
  %3004 = vadd.xlane.f32.xlu0 %v2749
  %v3005 = vpop.xlane.xlu0 %3004
  %3006 = vadd.xlane.f32.xlu0 %v2751
  %v3007 = vpop.xlane.xlu0 %3006
  %3008 = vadd.xlane.f32.xlu0 %v2753
  %v3009 = vpop.xlane.xlu0 %3008
  %3010 = vadd.xlane.f32.xlu0 %v2755
  %v3011 = vpop.xlane.xlu0 %3010
  %3012 = vadd.xlane.f32.xlu0 %v2757
  %v3013 = vpop.xlane.xlu0 %3012
  %3014 = vadd.xlane.f32.xlu0 %v2759
  %v3015 = vpop.xlane.xlu0 %3014
  %3016 = vadd.xlane.f32.xlu0 %v2761
  %v3017 = vpop.xlane.xlu0 %3016
  %3018 = vadd.xlane.f32.xlu0 %v2763
  %v3019 = vpop.xlane.xlu0 %3018
  %3020 = vadd.xlane.f32.xlu0 %v2765
  %v3021 = vpop.xlane.xlu0 %3020
  %3022 = vadd.xlane.f32.xlu0 %v2767
  %v3023 = vpop.xlane.xlu0 %3022
  %3024 = vadd.xlane.f32.xlu0 %v2769
  %v3025 = vpop.xlane.xlu0 %3024
  %3026 = vadd.xlane.f32.xlu0 %v2771
  %v3027 = vpop.xlane.xlu0 %3026
  %3028 = vadd.xlane.f32.xlu0 %v2773
  %v3029 = vpop.xlane.xlu0 %3028
  %3030 = vadd.xlane.f32.xlu0 %v2775
  %v3031 = vpop.xlane.xlu0 %3030
  %3032 = vadd.xlane.f32.xlu0 %v2777
  %v3033 = vpop.xlane.xlu0 %3032
  %3034 = vadd.xlane.f32.xlu0 %v2779
  %v3035 = vpop.xlane.xlu0 %3034
  %3036 = vadd.xlane.f32.xlu0 %v2781
  %v3037 = vpop.xlane.xlu0 %3036
  %3038 = vadd.xlane.f32.xlu0 %v2783
  %v3039 = vpop.xlane.xlu0 %3038
  %3040 = vadd.xlane.f32.xlu0 %v2785
  %v3041 = vpop.xlane.xlu0 %3040
  %3042 = vadd.xlane.f32.xlu0 %v2787
  %v3043 = vpop.xlane.xlu0 %3042
  %3044 = vadd.xlane.f32.xlu0 %v2789
  %v3045 = vpop.xlane.xlu0 %3044
  %3046 = vadd.xlane.f32.xlu0 %v2791
  %v3047 = vpop.xlane.xlu0 %3046
  %3048 = vadd.xlane.f32.xlu0 %v2793
  %v3049 = vpop.xlane.xlu0 %3048
  %3050 = vadd.xlane.f32.xlu0 %v2795
  %v3051 = vpop.xlane.xlu0 %3050
  %3052 = vadd.xlane.f32.xlu0 %v2797
  %v3053 = vpop.xlane.xlu0 %3052
  %3054 = vadd.xlane.f32.xlu0 %v2799
  %v3055 = vpop.xlane.xlu0 %3054
  %3056 = vadd.xlane.f32.xlu0 %v2801
  %v3057 = vpop.xlane.xlu0 %3056
  %3058 = vadd.xlane.f32.xlu0 %v2803
  %v3059 = vpop.xlane.xlu0 %3058
  %3060 = vadd.xlane.f32.xlu0 %v2805
  %v3061 = vpop.xlane.xlu0 %3060
  %3062 = vadd.xlane.f32.xlu0 %v2807
  %v3063 = vpop.xlane.xlu0 %3062
  %3064 = vadd.xlane.f32.xlu0 %v2809
  %v3065 = vpop.xlane.xlu0 %3064
  %3066 = vadd.xlane.f32.xlu0 %v2811
  %v3067 = vpop.xlane.xlu0 %3066
  %3068 = vadd.xlane.f32.xlu0 %v2813
  %v3069 = vpop.xlane.xlu0 %3068
  %3070 = vadd.xlane.f32.xlu0 %v2815
  %v3071 = vpop.xlane.xlu0 %3070
  %3072 = vadd.xlane.f32.xlu0 %v2817
  %v3073 = vpop.xlane.xlu0 %3072
  %3074 = vadd.xlane.f32.xlu0 %v2819
  %v3075 = vpop.xlane.xlu0 %3074
  %3076 = vadd.xlane.f32.xlu0 %v2821
  %v3077 = vpop.xlane.xlu0 %3076
  %3078 = vadd.xlane.f32.xlu0 %v2823
  %v3079 = vpop.xlane.xlu0 %3078
  %3080 = vadd.xlane.f32.xlu0 %v2825
  %v3081 = vpop.xlane.xlu0 %3080
  %3082 = vadd.xlane.f32.xlu0 %v2827
  %v3083 = vpop.xlane.xlu0 %3082
  %3084 = vadd.xlane.f32.xlu0 %v2829
  %v3085 = vpop.xlane.xlu0 %3084
  %3086 = vadd.xlane.f32.xlu0 %v2831
  %v3087 = vpop.xlane.xlu0 %3086
  %3088 = vadd.xlane.f32.xlu0 %v2833
  %v3089 = vpop.xlane.xlu0 %3088
  %3090 = vadd.xlane.f32.xlu0 %v2835
  %v3091 = vpop.xlane.xlu0 %3090
  %3092 = vadd.xlane.f32.xlu0 %v2837
  %v3093 = vpop.xlane.xlu0 %3092
  %3094 = vadd.xlane.f32.xlu0 %v2839
  %v3095 = vpop.xlane.xlu0 %3094
  %3096 = vadd.xlane.f32.xlu0 %v2841
  %v3097 = vpop.xlane.xlu0 %3096
  %3098 = vadd.xlane.f32.xlu0 %v2843
  %v3099 = vpop.xlane.xlu0 %3098
  %3100 = vadd.xlane.f32.xlu0 %v2845
  %v3101 = vpop.xlane.xlu0 %3100
  %3102 = vadd.xlane.f32.xlu0 %v2847
  %v3103 = vpop.xlane.xlu0 %3102
  %3104 = vadd.xlane.f32.xlu0 %v2849
  %v3105 = vpop.xlane.xlu0 %3104
  %3106 = vadd.xlane.f32.xlu0 %v2851
  %v3107 = vpop.xlane.xlu0 %3106
  %3108 = vadd.xlane.f32.xlu0 %v2853
  %v3109 = vpop.xlane.xlu0 %3108
  %3110 = vadd.xlane.f32.xlu0 %v2855
  %v3111 = vpop.xlane.xlu0 %3110
  %3112 = vadd.xlane.f32.xlu0 %v2857
  %v3113 = vpop.xlane.xlu0 %3112
  %3114 = vadd.xlane.f32.xlu0 %v2859
  %v3115 = vpop.xlane.xlu0 %3114
  %3116 = vadd.xlane.f32.xlu0 %v2861
  %v3117 = vpop.xlane.xlu0 %3116
  %3118 = vadd.xlane.f32.xlu0 %v2863
  %v3119 = vpop.xlane.xlu0 %3118
  %3120 = vadd.xlane.f32.xlu0 %v2865
  %v3121 = vpop.xlane.xlu0 %3120
  %3122 = vadd.xlane.f32.xlu0 %v2867
  %v3123 = vpop.xlane.xlu0 %3122
  %3124 = vadd.xlane.f32.xlu0 %v2869
  %v3125 = vpop.xlane.xlu0 %3124
  %3126 = vadd.xlane.f32.xlu0 %v2871
  %v3127 = vpop.xlane.xlu0 %3126
  %3128 = vadd.xlane.f32.xlu0 %v2873
  %v3129 = vpop.xlane.xlu0 %3128
  %3130 = vadd.xlane.f32.xlu0 %v2875
  %v3131 = vpop.xlane.xlu0 %3130
  %3132 = vadd.xlane.f32.xlu0 %v2877
  %v3133 = vpop.xlane.xlu0 %3132
  %3134 = vadd.xlane.f32.xlu0 %v2879
  %v3135 = vpop.xlane.xlu0 %3134
  %3136 = vadd.xlane.f32.xlu0 %v2881
  %v3137 = vpop.xlane.xlu0 %3136
  %3138 = vadd.xlane.f32.xlu0 %v2883
  %v3139 = vpop.xlane.xlu0 %3138
  %3140 = vadd.xlane.f32.xlu0 %v2885
  %v3141 = vpop.xlane.xlu0 %3140
  %3142 = vadd.xlane.f32.xlu0 %v2887
  %v3143 = vpop.xlane.xlu0 %3142
  %3144 = vadd.xlane.f32.xlu0 %v2889
  %v3145 = vpop.xlane.xlu0 %3144
  %3146 = vadd.xlane.f32.xlu0 %v2891
  %v3147 = vpop.xlane.xlu0 %3146
  %3148 = vadd.xlane.f32.xlu0 %v2893
  %v3149 = vpop.xlane.xlu0 %3148
  %3150 = vadd.xlane.f32.xlu0 %v2895
  %v3151 = vpop.xlane.xlu0 %3150
  %3152 = vadd.xlane.f32.xlu0 %v2897
  %v3153 = vpop.xlane.xlu0 %3152
  %3154 = vadd.xlane.f32.xlu0 %v2899
  %v3155 = vpop.xlane.xlu0 %3154
  %3156 = vadd.xlane.f32.xlu0 %v2901
  %v3157 = vpop.xlane.xlu0 %3156
  %3158 = vadd.xlane.f32.xlu0 %v2903
  %v3159 = vpop.xlane.xlu0 %3158
  %3160 = vadd.xlane.f32.xlu0 %v2905
  %v3161 = vpop.xlane.xlu0 %3160
  %3162 = vadd.xlane.f32.xlu0 %v2907
  %v3163 = vpop.xlane.xlu0 %3162
  %3164 = vadd.xlane.f32.xlu0 %v2909
  %v3165 = vpop.xlane.xlu0 %3164
  %3166 = vadd.xlane.f32.xlu0 %v2911
  %v3167 = vpop.xlane.xlu0 %3166
  %3168 = vadd.xlane.f32.xlu0 %v2913
  %v3169 = vpop.xlane.xlu0 %3168
  %3170 = vadd.xlane.f32.xlu0 %v2915
  %v3171 = vpop.xlane.xlu0 %3170
  %3172 = vadd.xlane.f32.xlu0 %v2917
  %v3173 = vpop.xlane.xlu0 %3172
  %3174 = vadd.xlane.f32.xlu0 %v2919
  %v3175 = vpop.xlane.xlu0 %3174
  %3176 = vadd.xlane.f32.xlu0 %v2921
  %v3177 = vpop.xlane.xlu0 %3176
  %v3178 = vrcp.pop %v2923
  %v3179 = vmul.f32 %v2667, %v3178
  %v3180 = vrcp.pop %v2925
  %v3181 = vmul.f32 %v2669, %v3180
  %v3182 = vrcp.pop %v2927
  %v3183 = vmul.f32 %v2671, %v3182
  %v3184 = vrcp.pop %v2929
  %v3185 = vmul.f32 %v2673, %v3184
  %v3186 = vrcp.pop %v2931
  %v3187 = vmul.f32 %v2675, %v3186
  %v3188 = vrcp.pop %v2933
  %v3189 = vmul.f32 %v2677, %v3188
  %v3190 = vrcp.pop %v2935
  %v3191 = vmul.f32 %v2679, %v3190
  %v3192 = vrcp.pop %v2937
  %v3193 = vmul.f32 %v2681, %v3192
  %v3194 = vrcp.pop %v2939
  %v3195 = vmul.f32 %v2683, %v3194
  %v3196 = vrcp.pop %v2941
  %v3197 = vmul.f32 %v2685, %v3196
  %v3198 = vrcp.pop %v2943
  %v3199 = vmul.f32 %v2687, %v3198
  %v3200 = vrcp.pop %v2945
  %v3201 = vmul.f32 %v2689, %v3200
  %v3202 = vrcp.pop %v2947
  %v3203 = vmul.f32 %v2691, %v3202
  %v3204 = vrcp.pop %v2949
  %v3205 = vmul.f32 %v2693, %v3204
  %v3206 = vrcp.pop %v2951
  %v3207 = vmul.f32 %v2695, %v3206
  %v3208 = vrcp.pop %v2953
  %v3209 = vmul.f32 %v2697, %v3208
  %v3210 = vrcp.pop %v2955
  %v3211 = vmul.f32 %v2699, %v3210
  %v3212 = vrcp.pop %v2957
  %v3213 = vmul.f32 %v2701, %v3212
  %v3214 = vrcp.pop %v2959
  %v3215 = vmul.f32 %v2703, %v3214
  %v3216 = vrcp.pop %v2961
  %v3217 = vmul.f32 %v2705, %v3216
  %v3218 = vrcp.pop %v2963
  %v3219 = vmul.f32 %v2707, %v3218
  %v3220 = vrcp.pop %v2965
  %v3221 = vmul.f32 %v2709, %v3220
  %v3222 = vrcp.pop %v2967
  %v3223 = vmul.f32 %v2711, %v3222
  %v3224 = vrcp.pop %v2969
  %v3225 = vmul.f32 %v2713, %v3224
  %v3226 = vrcp.pop %v2971
  %v3227 = vmul.f32 %v2715, %v3226
  %v3228 = vrcp.pop %v2973
  %v3229 = vmul.f32 %v2717, %v3228
  %v3230 = vrcp.pop %v2975
  %v3231 = vmul.f32 %v2719, %v3230
  %v3232 = vrcp.pop %v2977
  %v3233 = vmul.f32 %v2721, %v3232
  %v3234 = vrcp.pop %v2979
  %v3235 = vmul.f32 %v2723, %v3234
  %v3236 = vrcp.pop %v2981
  %v3237 = vmul.f32 %v2725, %v3236
  %v3238 = vrcp.pop %v2983
  %v3239 = vmul.f32 %v2727, %v3238
  %v3240 = vrcp.pop %v2985
  %v3241 = vmul.f32 %v2729, %v3240
  %v3242 = vrcp.pop %v2987
  %v3243 = vmul.f32 %v2731, %v3242
  %v3244 = vrcp.pop %v2989
  %v3245 = vmul.f32 %v2733, %v3244
  %v3246 = vrcp.pop %v2991
  %v3247 = vmul.f32 %v2735, %v3246
  %v3248 = vrcp.pop %v2993
  %v3249 = vmul.f32 %v2737, %v3248
  %v3250 = vrcp.pop %v2995
  %v3251 = vmul.f32 %v2739, %v3250
  %v3252 = vrcp.pop %v2997
  %v3253 = vmul.f32 %v2741, %v3252
  %v3254 = vrcp.pop %v2999
  %v3255 = vmul.f32 %v2743, %v3254
  %v3256 = vrcp.pop %v3001
  %v3257 = vmul.f32 %v2745, %v3256
  %v3258 = vrcp.pop %v3003
  %v3259 = vmul.f32 %v2747, %v3258
  %v3260 = vrcp.pop %v3005
  %v3261 = vmul.f32 %v2749, %v3260
  %v3262 = vrcp.pop %v3007
  %v3263 = vmul.f32 %v2751, %v3262
  %v3264 = vrcp.pop %v3009
  %v3265 = vmul.f32 %v2753, %v3264
  %v3266 = vrcp.pop %v3011
  %v3267 = vmul.f32 %v2755, %v3266
  %v3268 = vrcp.pop %v3013
  %v3269 = vmul.f32 %v2757, %v3268
  %v3270 = vrcp.pop %v3015
  %v3271 = vmul.f32 %v2759, %v3270
  %v3272 = vrcp.pop %v3017
  %v3273 = vmul.f32 %v2761, %v3272
  %v3274 = vrcp.pop %v3019
  %v3275 = vmul.f32 %v2763, %v3274
  %v3276 = vrcp.pop %v3021
  %v3277 = vmul.f32 %v2765, %v3276
  %v3278 = vrcp.pop %v3023
  %v3279 = vmul.f32 %v2767, %v3278
  %v3280 = vrcp.pop %v3025
  %v3281 = vmul.f32 %v2769, %v3280
  %v3282 = vrcp.pop %v3027
  %v3283 = vmul.f32 %v2771, %v3282
  %v3284 = vrcp.pop %v3029
  %v3285 = vmul.f32 %v2773, %v3284
  %v3286 = vrcp.pop %v3031
  %v3287 = vmul.f32 %v2775, %v3286
  %v3288 = vrcp.pop %v3033
  %v3289 = vmul.f32 %v2777, %v3288
  %v3290 = vrcp.pop %v3035
  %v3291 = vmul.f32 %v2779, %v3290
  %v3292 = vrcp.pop %v3037
  %v3293 = vmul.f32 %v2781, %v3292
  %v3294 = vrcp.pop %v3039
  %v3295 = vmul.f32 %v2783, %v3294
  %v3296 = vrcp.pop %v3041
  %v3297 = vmul.f32 %v2785, %v3296
  %v3298 = vrcp.pop %v3043
  %v3299 = vmul.f32 %v2787, %v3298
  %v3300 = vrcp.pop %v3045
  %v3301 = vmul.f32 %v2789, %v3300
  %v3302 = vrcp.pop %v3047
  %v3303 = vmul.f32 %v2791, %v3302
  %v3304 = vrcp.pop %v3049
  %v3305 = vmul.f32 %v2793, %v3304
  %v3306 = vrcp.pop %v3051
  %v3307 = vmul.f32 %v2795, %v3306
  %v3308 = vrcp.pop %v3053
  %v3309 = vmul.f32 %v2797, %v3308
  %v3310 = vrcp.pop %v3055
  %v3311 = vmul.f32 %v2799, %v3310
  %v3312 = vrcp.pop %v3057
  %v3313 = vmul.f32 %v2801, %v3312
  %v3314 = vrcp.pop %v3059
  %v3315 = vmul.f32 %v2803, %v3314
  %v3316 = vrcp.pop %v3061
  %v3317 = vmul.f32 %v2805, %v3316
  %v3318 = vrcp.pop %v3063
  %v3319 = vmul.f32 %v2807, %v3318
  %v3320 = vrcp.pop %v3065
  %v3321 = vmul.f32 %v2809, %v3320
  %v3322 = vrcp.pop %v3067
  %v3323 = vmul.f32 %v2811, %v3322
  %v3324 = vrcp.pop %v3069
  %v3325 = vmul.f32 %v2813, %v3324
  %v3326 = vrcp.pop %v3071
  %v3327 = vmul.f32 %v2815, %v3326
  %v3328 = vrcp.pop %v3073
  %v3329 = vmul.f32 %v2817, %v3328
  %v3330 = vrcp.pop %v3075
  %v3331 = vmul.f32 %v2819, %v3330
  %v3332 = vrcp.pop %v3077
  %v3333 = vmul.f32 %v2821, %v3332
  %v3334 = vrcp.pop %v3079
  %v3335 = vmul.f32 %v2823, %v3334
  %v3336 = vrcp.pop %v3081
  %v3337 = vmul.f32 %v2825, %v3336
  %v3338 = vrcp.pop %v3083
  %v3339 = vmul.f32 %v2827, %v3338
  %v3340 = vrcp.pop %v3085
  %v3341 = vmul.f32 %v2829, %v3340
  %v3342 = vrcp.pop %v3087
  %v3343 = vmul.f32 %v2831, %v3342
  %v3344 = vrcp.pop %v3089
  %v3345 = vmul.f32 %v2833, %v3344
  %v3346 = vrcp.pop %v3091
  %v3347 = vmul.f32 %v2835, %v3346
  %v3348 = vrcp.pop %v3093
  %v3349 = vmul.f32 %v2837, %v3348
  %v3350 = vrcp.pop %v3095
  %v3351 = vmul.f32 %v2839, %v3350
  %v3352 = vrcp.pop %v3097
  %v3353 = vmul.f32 %v2841, %v3352
  %v3354 = vrcp.pop %v3099
  %v3355 = vmul.f32 %v2843, %v3354
  %v3356 = vrcp.pop %v3101
  %v3357 = vmul.f32 %v2845, %v3356
  %v3358 = vrcp.pop %v3103
  %v3359 = vmul.f32 %v2847, %v3358
  %v3360 = vrcp.pop %v3105
  %v3361 = vmul.f32 %v2849, %v3360
  %v3362 = vrcp.pop %v3107
  %v3363 = vmul.f32 %v2851, %v3362
  %v3364 = vrcp.pop %v3109
  %v3365 = vmul.f32 %v2853, %v3364
  %v3366 = vrcp.pop %v3111
  %v3367 = vmul.f32 %v2855, %v3366
  %v3368 = vrcp.pop %v3113
  %v3369 = vmul.f32 %v2857, %v3368
  %v3370 = vrcp.pop %v3115
  %v3371 = vmul.f32 %v2859, %v3370
  %v3372 = vrcp.pop %v3117
  %v3373 = vmul.f32 %v2861, %v3372
  %v3374 = vrcp.pop %v3119
  %v3375 = vmul.f32 %v2863, %v3374
  %v3376 = vrcp.pop %v3121
  %v3377 = vmul.f32 %v2865, %v3376
  %v3378 = vrcp.pop %v3123
  %v3379 = vmul.f32 %v2867, %v3378
  %v3380 = vrcp.pop %v3125
  %v3381 = vmul.f32 %v2869, %v3380
  %v3382 = vrcp.pop %v3127
  %v3383 = vmul.f32 %v2871, %v3382
  %v3384 = vrcp.pop %v3129
  %v3385 = vmul.f32 %v2873, %v3384
  %v3386 = vrcp.pop %v3131
  %v3387 = vmul.f32 %v2875, %v3386
  %v3388 = vrcp.pop %v3133
  %v3389 = vmul.f32 %v2877, %v3388
  %v3390 = vrcp.pop %v3135
  %v3391 = vmul.f32 %v2879, %v3390
  %v3392 = vrcp.pop %v3137
  %v3393 = vmul.f32 %v2881, %v3392
  %v3394 = vrcp.pop %v3139
  %v3395 = vmul.f32 %v2883, %v3394
  %v3396 = vrcp.pop %v3141
  %v3397 = vmul.f32 %v2885, %v3396
  %v3398 = vrcp.pop %v3143
  %v3399 = vmul.f32 %v2887, %v3398
  %v3400 = vrcp.pop %v3145
  %v3401 = vmul.f32 %v2889, %v3400
  %v3402 = vrcp.pop %v3147
  %v3403 = vmul.f32 %v2891, %v3402
  %v3404 = vrcp.pop %v3149
  %v3405 = vmul.f32 %v2893, %v3404
  %v3406 = vrcp.pop %v3151
  %v3407 = vmul.f32 %v2895, %v3406
  %v3408 = vrcp.pop %v3153
  %v3409 = vmul.f32 %v2897, %v3408
  %v3410 = vrcp.pop %v3155
  %v3411 = vmul.f32 %v2899, %v3410
  %v3412 = vrcp.pop %v3157
  %v3413 = vmul.f32 %v2901, %v3412
  %v3414 = vrcp.pop %v3159
  %v3415 = vmul.f32 %v2903, %v3414
  %v3416 = vrcp.pop %v3161
  %v3417 = vmul.f32 %v2905, %v3416
  %v3418 = vrcp.pop %v3163
  %v3419 = vmul.f32 %v2907, %v3418
  %v3420 = vrcp.pop %v3165
  %v3421 = vmul.f32 %v2909, %v3420
  %v3422 = vrcp.pop %v3167
  %v3423 = vmul.f32 %v2911, %v3422
  %v3424 = vrcp.pop %v3169
  %v3425 = vmul.f32 %v2913, %v3424
  %v3426 = vrcp.pop %v3171
  %v3427 = vmul.f32 %v2915, %v3426
  %v3428 = vrcp.pop %v3173
  %v3429 = vmul.f32 %v2917, %v3428
  %v3430 = vrcp.pop %v3175
  %v3431 = vmul.f32 %v2919, %v3430
  %v3432 = vrcp.pop %v3177
  %v3433 = vmul.f32 %v2921, %v3432
  %3434 = vmatprep.subr.mxu0 0.0
  %3435 = vmatpush1.msra.mxu0 %v241
  %3436 = vmatprep.subr.mxu0 0.0
  %3437 = vmatpush1.msra.mxu0 %v247
  %3438 = vmatprep.subr.mxu0 0.0
  %3439 = vmatpush1.msra.mxu0 %v253
  %3440 = vmatprep.subr.mxu0 0.0
  %3441 = vmatpush1.msra.mxu0 %v259
  %3442 = vmatprep.subr.mxu0 0.0
  %3443 = vmatpush1.msra.mxu0 %v265
  %3444 = vmatprep.subr.mxu0 0.0
  %3445 = vmatpush1.msra.mxu0 %v271
  %3446 = vmatprep.subr.mxu0 0.0
  %3447 = vmatpush1.msra.mxu0 %v277
  %3448 = vmatprep.subr.mxu0 0.0
  %3449 = vmatpush1.msra.mxu0 %v283
  %3450 = vmatprep.subr.mxu0 0.0
  %3451 = vmatpush1.msra.mxu0 %v289
  %3452 = vmatprep.subr.mxu0 0.0
  %3453 = vmatpush1.msra.mxu0 %v295
  %3454 = vmatprep.subr.mxu0 0.0
  %3455 = vmatpush1.msra.mxu0 %v301
  %3456 = vmatprep.subr.mxu0 0.0
  %3457 = vmatpush1.msra.mxu0 %v307
  %3458 = vmatprep.subr.mxu0 0.0
  %3459 = vmatpush1.msra.mxu0 %v313
  %3460 = vmatprep.subr.mxu0 0.0
  %3461 = vmatpush1.msra.mxu0 %v319
  %3462 = vmatprep.subr.mxu0 0.0
  %3463 = vmatpush1.msra.mxu0 %v325
  %3464 = vmatprep.subr.mxu0 0.0
  %3465 = vmatpush1.msra.mxu0 %v331
  %3466 = vmatprep.subr.mxu0 0.0
  %3467 = vmatpush1.msra.mxu0 0.0
  %3468 = vmatprep.subr.mxu0 0.0
  %3469 = vmatpush1.msra.mxu0 0.0
  %3470 = vmatprep.subr.mxu0 0.0
  %3471 = vmatpush1.msra.mxu0 0.0
  %3472 = vmatprep.subr.mxu0 0.0
  %3473 = vmatpush1.msra.mxu0 0.0
  %3474 = vmatprep.subr.mxu0 0.0
  %3475 = vmatpush1.msra.mxu0 0.0
  %3476 = vmatprep.subr.mxu0 0.0
  %3477 = vmatpush1.msra.mxu0 0.0
  %3478 = vmatprep.subr.mxu0 0.0
  %3479 = vmatpush1.msra.mxu0 0.0
  %3480 = vmatprep.subr.mxu0 0.0
  %3481 = vmatpush1.msra.mxu0 0.0
  %3482 = vmatprep.subr.mxu0 0.0
  %3483 = vmatpush1.msra.mxu0 0.0
  %3484 = vmatprep.subr.mxu0 0.0
  %3485 = vmatpush1.msra.mxu0 0.0
  %3486 = vmatprep.subr.mxu0 0.0
  %3487 = vmatpush1.msra.mxu0 0.0
  %3488 = vmatprep.subr.mxu0 0.0
  %3489 = vmatpush1.msra.mxu0 0.0
  %3490 = vmatprep.subr.mxu0 0.0
  %3491 = vmatpush1.msra.mxu0 0.0
  %3492 = vmatprep.subr.mxu0 0.0
  %3493 = vmatpush1.msra.mxu0 0.0
  %3494 = vmatprep.subr.mxu0 0.0
  %3495 = vmatpush1.msra.mxu0 0.0
  %3496 = vmatprep.subr.mxu0 0.0
  %3497 = vmatpush1.msra.mxu0 0.0
  %3498 = vmatprep.mubr.f32.mxu0 0.0
  %3499 = vmatmul.mubr.f32.gmra.mrb[0].mxu0 %v3179
  %v3500 = vpop.f32.mrb[0].mxu0
  %v3501 = vadd.f32 0.0, %v3500
  %v3502 = vpop.f32.mrb[0].mxu0
  %3503 = vmatprep.mubr.f32.mxu0 0.0
  %3504 = vmatmul.mubr.f32.gmra.mrb[0].mxu0 %v3181
  %v3505 = vpop.f32.mrb[0].mxu0
  %v3506 = vadd.f32 0.0, %v3505
  %v3507 = vpop.f32.mrb[0].mxu0
  %3508 = vmatprep.mubr.f32.mxu0 0.0
  %3509 = vmatmul.mubr.f32.gmra.mrb[0].mxu0 %v3183
  %v3510 = vpop.f32.mrb[0].mxu0
  %v3511 = vadd.f32 0.0, %v3510
  %v3512 = vpop.f32.mrb[0].mxu0
  %3513 = vmatprep.mubr.f32.mxu0 0.0
  %3514 = vmatmul.mubr.f32.gmra.mrb[0].mxu0 %v3185
  %v3515 = vpop.f32.mrb[0].mxu0
  %v3516 = vadd.f32 0.0, %v3515
  %v3517 = vpop.f32.mrb[0].mxu0
  %3518 = vmatprep.mubr.f32.mxu0 0.0
  %3519 = vmatmul.mubr.f32.gmra.mrb[0].mxu0 %v3187
  %v3520 = vpop.f32.mrb[0].mxu0
  %v3521 = vadd.f32 0.0, %v3520
  %v3522 = vpop.f32.mrb[0].mxu0
  %3523 = vmatprep.mubr.f32.mxu0 0.0
  %3524 = vmatmul.mubr.f32.gmra.mrb[0].mxu0 %v3189
  %v3525 = vpop.f32.mrb[0].mxu0
  %v3526 = vadd.f32 0.0, %v3525
  %v3527 = vpop.f32.mrb[0].mxu0
  %3528 = vmatprep.mubr.f32.mxu0 0.0
  %3529 = vmatmul.mubr.f32.gmra.mrb[0].mxu0 %v3191
  %v3530 = vpop.f32.mrb[0].mxu0
  %v3531 = vadd.f32 0.0, %v3530
  %v3532 = vpop.f32.mrb[0].mxu0
  %3533 = vmatprep.mubr.f32.mxu0 0.0
  %3534 = vmatmul.mubr.f32.gmra.mrb[0].mxu0 %v3193
  %v3535 = vpop.f32.mrb[0].mxu0
  %v3536 = vadd.f32 0.0, %v3535
  %v3537 = vpop.f32.mrb[0].mxu0
  %3538 = vmatprep.mubr.f32.mxu0 0.0
  %3539 = vmatmul.mubr.f32.gmra.mrb[0].mxu0 %v3195
  %v3540 = vpop.f32.mrb[0].mxu0
  %v3541 = vadd.f32 0.0, %v3540
  %v3542 = vpop.f32.mrb[0].mxu0
  %3543 = vmatprep.mubr.f32.mxu0 0.0
  %3544 = vmatmul.mubr.f32.gmra.mrb[0].mxu0 %v3197
  %v3545 = vpop.f32.mrb[0].mxu0
  %v3546 = vadd.f32 0.0, %v3545
  %v3547 = vpop.f32.mrb[0].mxu0
  %3548 = vmatprep.mubr.f32.mxu0 0.0
  %3549 = vmatmul.mubr.f32.gmra.mrb[0].mxu0 %v3199
  %v3550 = vpop.f32.mrb[0].mxu0
  %v3551 = vadd.f32 0.0, %v3550
  %v3552 = vpop.f32.mrb[0].mxu0
  %3553 = vmatprep.mubr.f32.mxu0 0.0
  %3554 = vmatmul.mubr.f32.gmra.mrb[0].mxu0 %v3201
  %v3555 = vpop.f32.mrb[0].mxu0
  %v3556 = vadd.f32 0.0, %v3555
  %v3557 = vpop.f32.mrb[0].mxu0
  %3558 = vmatprep.mubr.f32.mxu0 0.0
  %3559 = vmatmul.mubr.f32.gmra.mrb[0].mxu0 %v3203
  %v3560 = vpop.f32.mrb[0].mxu0
  %v3561 = vadd.f32 0.0, %v3560
  %v3562 = vpop.f32.mrb[0].mxu0
  %3563 = vmatprep.mubr.f32.mxu0 0.0
  %3564 = vmatmul.mubr.f32.gmra.mrb[0].mxu0 %v3205
  %v3565 = vpop.f32.mrb[0].mxu0
  %v3566 = vadd.f32 0.0, %v3565
  %v3567 = vpop.f32.mrb[0].mxu0
  %3568 = vmatprep.mubr.f32.mxu0 0.0
  %3569 = vmatmul.mubr.f32.gmra.mrb[0].mxu0 %v3207
  %v3570 = vpop.f32.mrb[0].mxu0
  %v3571 = vadd.f32 0.0, %v3570
  %v3572 = vpop.f32.mrb[0].mxu0
  %3573 = vmatprep.mubr.f32.mxu0 0.0
  %3574 = vmatmul.mubr.f32.gmra.mrb[0].mxu0 %v3209
  %v3575 = vpop.f32.mrb[0].mxu0
  %v3576 = vadd.f32 0.0, %v3575
  %v3577 = vpop.f32.mrb[0].mxu0
  %3578 = vdwg.mxu0
  %3579 = vmatprep.subr.mxu0 0.0
  %3580 = vmatpush1.msra.mxu0 %v243
  %3581 = vmatprep.subr.mxu0 0.0
  %3582 = vmatpush1.msra.mxu0 %v249
  %3583 = vmatprep.subr.mxu0 0.0
  %3584 = vmatpush1.msra.mxu0 %v255
  %3585 = vmatprep.subr.mxu0 0.0
  %3586 = vmatpush1.msra.mxu0 %v261
  %3587 = vmatprep.subr.mxu0 0.0
  %3588 = vmatpush1.msra.mxu0 %v267
  %3589 = vmatprep.subr.mxu0 0.0
  %3590 = vmatpush1.msra.mxu0 %v273
  %3591 = vmatprep.subr.mxu0 0.0
  %3592 = vmatpush1.msra.mxu0 %v279
  %3593 = vmatprep.subr.mxu0 0.0
  %3594 = vmatpush1.msra.mxu0 %v285
  %3595 = vmatprep.subr.mxu0 0.0
  %3596 = vmatpush1.msra.mxu0 %v291
  %3597 = vmatprep.subr.mxu0 0.0
  %3598 = vmatpush1.msra.mxu0 %v297
  %3599 = vmatprep.subr.mxu0 0.0
  %3600 = vmatpush1.msra.mxu0 %v303
  %3601 = vmatprep.subr.mxu0 0.0
  %3602 = vmatpush1.msra.mxu0 %v309
  %3603 = vmatprep.subr.mxu0 0.0
  %3604 = vmatpush1.msra.mxu0 %v315
  %3605 = vmatprep.subr.mxu0 0.0
  %3606 = vmatpush1.msra.mxu0 %v321
  %3607 = vmatprep.subr.mxu0 0.0
  %3608 = vmatpush1.msra.mxu0 %v327
  %3609 = vmatprep.subr.mxu0 0.0
  %3610 = vmatpush1.msra.mxu0 %v333
  %3611 = vmatprep.subr.mxu0 0.0
  %3612 = vmatpush1.msra.mxu0 0.0
  %3613 = vmatprep.subr.mxu0 0.0
  %3614 = vmatpush1.msra.mxu0 0.0
  %3615 = vmatprep.subr.mxu0 0.0
  %3616 = vmatpush1.msra.mxu0 0.0
  %3617 = vmatprep.subr.mxu0 0.0
  %3618 = vmatpush1.msra.mxu0 0.0
  %3619 = vmatprep.subr.mxu0 0.0
  %3620 = vmatpush1.msra.mxu0 0.0
  %3621 = vmatprep.subr.mxu0 0.0
  %3622 = vmatpush1.msra.mxu0 0.0
  %3623 = vmatprep.subr.mxu0 0.0
  %3624 = vmatpush1.msra.mxu0 0.0
  %3625 = vmatprep.subr.mxu0 0.0
  %3626 = vmatpush1.msra.mxu0 0.0
  %3627 = vmatprep.subr.mxu0 0.0
  %3628 = vmatpush1.msra.mxu0 0.0
  %3629 = vmatprep.subr.mxu0 0.0
  %3630 = vmatpush1.msra.mxu0 0.0
  %3631 = vmatprep.subr.mxu0 0.0
  %3632 = vmatpush1.msra.mxu0 0.0
  %3633 = vmatprep.subr.mxu0 0.0
  %3634 = vmatpush1.msra.mxu0 0.0
  %3635 = vmatprep.subr.mxu0 0.0
  %3636 = vmatpush1.msra.mxu0 0.0
  %3637 = vmatprep.subr.mxu0 0.0
  %3638 = vmatpush1.msra.mxu0 0.0
  %3639 = vmatprep.subr.mxu0 0.0
  %3640 = vmatpush1.msra.mxu0 0.0
  %3641 = vmatprep.subr.mxu0 0.0
  %3642 = vmatpush1.msra.mxu0 0.0
  %3643 = vmatprep.mubr.f32.mxu0 0.0
  %3644 = vmatmul.mubr.f32.gmra.mrb[0].mxu0 %v3211
  %v3645 = vpop.f32.mrb[0].mxu0
  %v3646 = vadd.f32 0.0, %v3645
  %v3647 = vpop.f32.mrb[0].mxu0
  %3648 = vmatprep.mubr.f32.mxu0 0.0
  %3649 = vmatmul.mubr.f32.gmra.mrb[0].mxu0 %v3213
  %v3650 = vpop.f32.mrb[0].mxu0
  %v3651 = vadd.f32 0.0, %v3650
  %v3652 = vpop.f32.mrb[0].mxu0
  %3653 = vmatprep.mubr.f32.mxu0 0.0
  %3654 = vmatmul.mubr.f32.gmra.mrb[0].mxu0 %v3215
  %v3655 = vpop.f32.mrb[0].mxu0
  %v3656 = vadd.f32 0.0, %v3655
  %v3657 = vpop.f32.mrb[0].mxu0
  %3658 = vmatprep.mubr.f32.mxu0 0.0
  %3659 = vmatmul.mubr.f32.gmra.mrb[0].mxu0 %v3217
  %v3660 = vpop.f32.mrb[0].mxu0
  %v3661 = vadd.f32 0.0, %v3660
  %v3662 = vpop.f32.mrb[0].mxu0
  %3663 = vmatprep.mubr.f32.mxu0 0.0
  %3664 = vmatmul.mubr.f32.gmra.mrb[0].mxu0 %v3219
  %v3665 = vpop.f32.mrb[0].mxu0
  %v3666 = vadd.f32 0.0, %v3665
  %v3667 = vpop.f32.mrb[0].mxu0
  %3668 = vmatprep.mubr.f32.mxu0 0.0
  %3669 = vmatmul.mubr.f32.gmra.mrb[0].mxu0 %v3221
  %v3670 = vpop.f32.mrb[0].mxu0
  %v3671 = vadd.f32 0.0, %v3670
  %v3672 = vpop.f32.mrb[0].mxu0
  %3673 = vmatprep.mubr.f32.mxu0 0.0
  %3674 = vmatmul.mubr.f32.gmra.mrb[0].mxu0 %v3223
  %v3675 = vpop.f32.mrb[0].mxu0
  %v3676 = vadd.f32 0.0, %v3675
  %v3677 = vpop.f32.mrb[0].mxu0
  %3678 = vmatprep.mubr.f32.mxu0 0.0
  %3679 = vmatmul.mubr.f32.gmra.mrb[0].mxu0 %v3225
  %v3680 = vpop.f32.mrb[0].mxu0
  %v3681 = vadd.f32 0.0, %v3680
  %v3682 = vpop.f32.mrb[0].mxu0
  %3683 = vmatprep.mubr.f32.mxu0 0.0
  %3684 = vmatmul.mubr.f32.gmra.mrb[0].mxu0 %v3227
  %v3685 = vpop.f32.mrb[0].mxu0
  %v3686 = vadd.f32 0.0, %v3685
  %v3687 = vpop.f32.mrb[0].mxu0
  %3688 = vmatprep.mubr.f32.mxu0 0.0
  %3689 = vmatmul.mubr.f32.gmra.mrb[0].mxu0 %v3229
  %v3690 = vpop.f32.mrb[0].mxu0
  %v3691 = vadd.f32 0.0, %v3690
  %v3692 = vpop.f32.mrb[0].mxu0
  %3693 = vmatprep.mubr.f32.mxu0 0.0
  %3694 = vmatmul.mubr.f32.gmra.mrb[0].mxu0 %v3231
  %v3695 = vpop.f32.mrb[0].mxu0
  %v3696 = vadd.f32 0.0, %v3695
  %v3697 = vpop.f32.mrb[0].mxu0
  %3698 = vmatprep.mubr.f32.mxu0 0.0
  %3699 = vmatmul.mubr.f32.gmra.mrb[0].mxu0 %v3233
  %v3700 = vpop.f32.mrb[0].mxu0
  %v3701 = vadd.f32 0.0, %v3700
  %v3702 = vpop.f32.mrb[0].mxu0
  %3703 = vmatprep.mubr.f32.mxu0 0.0
  %3704 = vmatmul.mubr.f32.gmra.mrb[0].mxu0 %v3235
  %v3705 = vpop.f32.mrb[0].mxu0
  %v3706 = vadd.f32 0.0, %v3705
  %v3707 = vpop.f32.mrb[0].mxu0
  %3708 = vmatprep.mubr.f32.mxu0 0.0
  %3709 = vmatmul.mubr.f32.gmra.mrb[0].mxu0 %v3237
  %v3710 = vpop.f32.mrb[0].mxu0
  %v3711 = vadd.f32 0.0, %v3710
  %v3712 = vpop.f32.mrb[0].mxu0
  %3713 = vmatprep.mubr.f32.mxu0 0.0
  %3714 = vmatmul.mubr.f32.gmra.mrb[0].mxu0 %v3239
  %v3715 = vpop.f32.mrb[0].mxu0
  %v3716 = vadd.f32 0.0, %v3715
  %v3717 = vpop.f32.mrb[0].mxu0
  %3718 = vmatprep.mubr.f32.mxu0 0.0
  %3719 = vmatmul.mubr.f32.gmra.mrb[0].mxu0 %v3241
  %v3720 = vpop.f32.mrb[0].mxu0
  %v3721 = vadd.f32 0.0, %v3720
  %v3722 = vpop.f32.mrb[0].mxu0
  %3723 = vdwg.mxu0
  %3724 = vmatprep.subr.mxu0 0.0
  %3725 = vmatpush1.msra.mxu0 %v402
  %3726 = vmatprep.subr.mxu0 0.0
  %3727 = vmatpush1.msra.mxu0 %v408
  %3728 = vmatprep.subr.mxu0 0.0
  %3729 = vmatpush1.msra.mxu0 %v414
  %3730 = vmatprep.subr.mxu0 0.0
  %3731 = vmatpush1.msra.mxu0 %v420
  %3732 = vmatprep.subr.mxu0 0.0
  %3733 = vmatpush1.msra.mxu0 %v426
  %3734 = vmatprep.subr.mxu0 0.0
  %3735 = vmatpush1.msra.mxu0 %v432
  %3736 = vmatprep.subr.mxu0 0.0
  %3737 = vmatpush1.msra.mxu0 %v438
  %3738 = vmatprep.subr.mxu0 0.0
  %3739 = vmatpush1.msra.mxu0 %v444
  %3740 = vmatprep.subr.mxu0 0.0
  %3741 = vmatpush1.msra.mxu0 %v450
  %3742 = vmatprep.subr.mxu0 0.0
  %3743 = vmatpush1.msra.mxu0 %v456
  %3744 = vmatprep.subr.mxu0 0.0
  %3745 = vmatpush1.msra.mxu0 %v462
  %3746 = vmatprep.subr.mxu0 0.0
  %3747 = vmatpush1.msra.mxu0 %v468
  %3748 = vmatprep.subr.mxu0 0.0
  %3749 = vmatpush1.msra.mxu0 %v474
  %3750 = vmatprep.subr.mxu0 0.0
  %3751 = vmatpush1.msra.mxu0 %v480
  %3752 = vmatprep.subr.mxu0 0.0
  %3753 = vmatpush1.msra.mxu0 %v486
  %3754 = vmatprep.subr.mxu0 0.0
  %3755 = vmatpush1.msra.mxu0 %v492
  %3756 = vmatprep.subr.mxu0 0.0
  %3757 = vmatpush1.msra.mxu0 0.0
  %3758 = vmatprep.subr.mxu0 0.0
  %3759 = vmatpush1.msra.mxu0 0.0
  %3760 = vmatprep.subr.mxu0 0.0
  %3761 = vmatpush1.msra.mxu0 0.0
  %3762 = vmatprep.subr.mxu0 0.0
  %3763 = vmatpush1.msra.mxu0 0.0
  %3764 = vmatprep.subr.mxu0 0.0
  %3765 = vmatpush1.msra.mxu0 0.0
  %3766 = vmatprep.subr.mxu0 0.0
  %3767 = vmatpush1.msra.mxu0 0.0
  %3768 = vmatprep.subr.mxu0 0.0
  %3769 = vmatpush1.msra.mxu0 0.0
  %3770 = vmatprep.subr.mxu0 0.0
  %3771 = vmatpush1.msra.mxu0 0.0
  %3772 = vmatprep.subr.mxu0 0.0
  %3773 = vmatpush1.msra.mxu0 0.0
  %3774 = vmatprep.subr.mxu0 0.0
  %3775 = vmatpush1.msra.mxu0 0.0
  %3776 = vmatprep.subr.mxu0 0.0
  %3777 = vmatpush1.msra.mxu0 0.0
  %3778 = vmatprep.subr.mxu0 0.0
  %3779 = vmatpush1.msra.mxu0 0.0
  %3780 = vmatprep.subr.mxu0 0.0
  %3781 = vmatpush1.msra.mxu0 0.0
  %3782 = vmatprep.subr.mxu0 0.0
  %3783 = vmatpush1.msra.mxu0 0.0
  %3784 = vmatprep.subr.mxu0 0.0
  %3785 = vmatpush1.msra.mxu0 0.0
  %3786 = vmatprep.subr.mxu0 0.0
  %3787 = vmatpush1.msra.mxu0 0.0
  %3788 = vmatprep.mubr.f32.mxu0 0.0
  %3789 = vmatmul.mubr.f32.gmra.mrb[0].mxu0 %v3243
  %v3790 = vpop.f32.mrb[0].mxu0
  %v3791 = vadd.f32 0.0, %v3790
  %v3792 = vpop.f32.mrb[0].mxu0
  %3793 = vmatprep.mubr.f32.mxu0 0.0
  %3794 = vmatmul.mubr.f32.gmra.mrb[0].mxu0 %v3245
  %v3795 = vpop.f32.mrb[0].mxu0
  %v3796 = vadd.f32 0.0, %v3795
  %v3797 = vpop.f32.mrb[0].mxu0
  %3798 = vmatprep.mubr.f32.mxu0 0.0
  %3799 = vmatmul.mubr.f32.gmra.mrb[0].mxu0 %v3247
  %v3800 = vpop.f32.mrb[0].mxu0
  %v3801 = vadd.f32 0.0, %v3800
  %v3802 = vpop.f32.mrb[0].mxu0
  %3803 = vmatprep.mubr.f32.mxu0 0.0
  %3804 = vmatmul.mubr.f32.gmra.mrb[0].mxu0 %v3249
  %v3805 = vpop.f32.mrb[0].mxu0
  %v3806 = vadd.f32 0.0, %v3805
  %v3807 = vpop.f32.mrb[0].mxu0
  %3808 = vmatprep.mubr.f32.mxu0 0.0
  %3809 = vmatmul.mubr.f32.gmra.mrb[0].mxu0 %v3251
  %v3810 = vpop.f32.mrb[0].mxu0
  %v3811 = vadd.f32 0.0, %v3810
  %v3812 = vpop.f32.mrb[0].mxu0
  %3813 = vmatprep.mubr.f32.mxu0 0.0
  %3814 = vmatmul.mubr.f32.gmra.mrb[0].mxu0 %v3253
  %v3815 = vpop.f32.mrb[0].mxu0
  %v3816 = vadd.f32 0.0, %v3815
  %v3817 = vpop.f32.mrb[0].mxu0
  %3818 = vmatprep.mubr.f32.mxu0 0.0
  %3819 = vmatmul.mubr.f32.gmra.mrb[0].mxu0 %v3255
  %v3820 = vpop.f32.mrb[0].mxu0
  %v3821 = vadd.f32 0.0, %v3820
  %v3822 = vpop.f32.mrb[0].mxu0
  %3823 = vmatprep.mubr.f32.mxu0 0.0
  %3824 = vmatmul.mubr.f32.gmra.mrb[0].mxu0 %v3257
  %v3825 = vpop.f32.mrb[0].mxu0
  %v3826 = vadd.f32 0.0, %v3825
  %v3827 = vpop.f32.mrb[0].mxu0
  %3828 = vmatprep.mubr.f32.mxu0 0.0
  %3829 = vmatmul.mubr.f32.gmra.mrb[0].mxu0 %v3259
  %v3830 = vpop.f32.mrb[0].mxu0
  %v3831 = vadd.f32 0.0, %v3830
  %v3832 = vpop.f32.mrb[0].mxu0
  %3833 = vmatprep.mubr.f32.mxu0 0.0
  %3834 = vmatmul.mubr.f32.gmra.mrb[0].mxu0 %v3261
  %v3835 = vpop.f32.mrb[0].mxu0
  %v3836 = vadd.f32 0.0, %v3835
  %v3837 = vpop.f32.mrb[0].mxu0
  %3838 = vmatprep.mubr.f32.mxu0 0.0
  %3839 = vmatmul.mubr.f32.gmra.mrb[0].mxu0 %v3263
  %v3840 = vpop.f32.mrb[0].mxu0
  %v3841 = vadd.f32 0.0, %v3840
  %v3842 = vpop.f32.mrb[0].mxu0
  %3843 = vmatprep.mubr.f32.mxu0 0.0
  %3844 = vmatmul.mubr.f32.gmra.mrb[0].mxu0 %v3265
  %v3845 = vpop.f32.mrb[0].mxu0
  %v3846 = vadd.f32 0.0, %v3845
  %v3847 = vpop.f32.mrb[0].mxu0
  %3848 = vmatprep.mubr.f32.mxu0 0.0
  %3849 = vmatmul.mubr.f32.gmra.mrb[0].mxu0 %v3267
  %v3850 = vpop.f32.mrb[0].mxu0
  %v3851 = vadd.f32 0.0, %v3850
  %v3852 = vpop.f32.mrb[0].mxu0
  %3853 = vmatprep.mubr.f32.mxu0 0.0
  %3854 = vmatmul.mubr.f32.gmra.mrb[0].mxu0 %v3269
  %v3855 = vpop.f32.mrb[0].mxu0
  %v3856 = vadd.f32 0.0, %v3855
  %v3857 = vpop.f32.mrb[0].mxu0
  %3858 = vmatprep.mubr.f32.mxu0 0.0
  %3859 = vmatmul.mubr.f32.gmra.mrb[0].mxu0 %v3271
  %v3860 = vpop.f32.mrb[0].mxu0
  %v3861 = vadd.f32 0.0, %v3860
  %v3862 = vpop.f32.mrb[0].mxu0
  %3863 = vmatprep.mubr.f32.mxu0 0.0
  %3864 = vmatmul.mubr.f32.gmra.mrb[0].mxu0 %v3273
  %v3865 = vpop.f32.mrb[0].mxu0
  %v3866 = vadd.f32 0.0, %v3865
  %v3867 = vpop.f32.mrb[0].mxu0
  %3868 = vdwg.mxu0
  %3869 = vmatprep.subr.mxu0 0.0
  %3870 = vmatpush1.msra.mxu0 %v404
  %3871 = vmatprep.subr.mxu0 0.0
  %3872 = vmatpush1.msra.mxu0 %v410
  %3873 = vmatprep.subr.mxu0 0.0
  %3874 = vmatpush1.msra.mxu0 %v416
  %3875 = vmatprep.subr.mxu0 0.0
  %3876 = vmatpush1.msra.mxu0 %v422
  %3877 = vmatprep.subr.mxu0 0.0
  %3878 = vmatpush1.msra.mxu0 %v428
  %3879 = vmatprep.subr.mxu0 0.0
  %3880 = vmatpush1.msra.mxu0 %v434
  %3881 = vmatprep.subr.mxu0 0.0
  %3882 = vmatpush1.msra.mxu0 %v440
  %3883 = vmatprep.subr.mxu0 0.0
  %3884 = vmatpush1.msra.mxu0 %v446
  %3885 = vmatprep.subr.mxu0 0.0
  %3886 = vmatpush1.msra.mxu0 %v452
  %3887 = vmatprep.subr.mxu0 0.0
  %3888 = vmatpush1.msra.mxu0 %v458
  %3889 = vmatprep.subr.mxu0 0.0
  %3890 = vmatpush1.msra.mxu0 %v464
  %3891 = vmatprep.subr.mxu0 0.0
  %3892 = vmatpush1.msra.mxu0 %v470
  %3893 = vmatprep.subr.mxu0 0.0
  %3894 = vmatpush1.msra.mxu0 %v476
  %3895 = vmatprep.subr.mxu0 0.0
  %3896 = vmatpush1.msra.mxu0 %v482
  %3897 = vmatprep.subr.mxu0 0.0
  %3898 = vmatpush1.msra.mxu0 %v488
  %3899 = vmatprep.subr.mxu0 0.0
  %3900 = vmatpush1.msra.mxu0 %v494
  %3901 = vmatprep.subr.mxu0 0.0
  %3902 = vmatpush1.msra.mxu0 0.0
  %3903 = vmatprep.subr.mxu0 0.0
  %3904 = vmatpush1.msra.mxu0 0.0
  %3905 = vmatprep.subr.mxu0 0.0
  %3906 = vmatpush1.msra.mxu0 0.0
  %3907 = vmatprep.subr.mxu0 0.0
  %3908 = vmatpush1.msra.mxu0 0.0
  %3909 = vmatprep.subr.mxu0 0.0
  %3910 = vmatpush1.msra.mxu0 0.0
  %3911 = vmatprep.subr.mxu0 0.0
  %3912 = vmatpush1.msra.mxu0 0.0
  %3913 = vmatprep.subr.mxu0 0.0
  %3914 = vmatpush1.msra.mxu0 0.0
  %3915 = vmatprep.subr.mxu0 0.0
  %3916 = vmatpush1.msra.mxu0 0.0
  %3917 = vmatprep.subr.mxu0 0.0
  %3918 = vmatpush1.msra.mxu0 0.0
  %3919 = vmatprep.subr.mxu0 0.0
  %3920 = vmatpush1.msra.mxu0 0.0
  %3921 = vmatprep.subr.mxu0 0.0
  %3922 = vmatpush1.msra.mxu0 0.0
  %3923 = vmatprep.subr.mxu0 0.0
  %3924 = vmatpush1.msra.mxu0 0.0
  %3925 = vmatprep.subr.mxu0 0.0
  %3926 = vmatpush1.msra.mxu0 0.0
  %3927 = vmatprep.subr.mxu0 0.0
  %3928 = vmatpush1.msra.mxu0 0.0
  %3929 = vmatprep.subr.mxu0 0.0
  %3930 = vmatpush1.msra.mxu0 0.0
  %3931 = vmatprep.subr.mxu0 0.0
  %3932 = vmatpush1.msra.mxu0 0.0
  %3933 = vmatprep.mubr.f32.mxu0 0.0
  %3934 = vmatmul.mubr.f32.gmra.mrb[0].mxu0 %v3275
  %v3935 = vpop.f32.mrb[0].mxu0
  %v3936 = vadd.f32 0.0, %v3935
  %v3937 = vpop.f32.mrb[0].mxu0
  %3938 = vmatprep.mubr.f32.mxu0 0.0
  %3939 = vmatmul.mubr.f32.gmra.mrb[0].mxu0 %v3277
  %v3940 = vpop.f32.mrb[0].mxu0
  %v3941 = vadd.f32 0.0, %v3940
  %v3942 = vpop.f32.mrb[0].mxu0
  %3943 = vmatprep.mubr.f32.mxu0 0.0
  %3944 = vmatmul.mubr.f32.gmra.mrb[0].mxu0 %v3279
  %v3945 = vpop.f32.mrb[0].mxu0
  %v3946 = vadd.f32 0.0, %v3945
  %v3947 = vpop.f32.mrb[0].mxu0
  %3948 = vmatprep.mubr.f32.mxu0 0.0
  %3949 = vmatmul.mubr.f32.gmra.mrb[0].mxu0 %v3281
  %v3950 = vpop.f32.mrb[0].mxu0
  %v3951 = vadd.f32 0.0, %v3950
  %v3952 = vpop.f32.mrb[0].mxu0
  %3953 = vmatprep.mubr.f32.mxu0 0.0
  %3954 = vmatmul.mubr.f32.gmra.mrb[0].mxu0 %v3283
  %v3955 = vpop.f32.mrb[0].mxu0
  %v3956 = vadd.f32 0.0, %v3955
  %v3957 = vpop.f32.mrb[0].mxu0
  %3958 = vmatprep.mubr.f32.mxu0 0.0
  %3959 = vmatmul.mubr.f32.gmra.mrb[0].mxu0 %v3285
  %v3960 = vpop.f32.mrb[0].mxu0
  %v3961 = vadd.f32 0.0, %v3960
  %v3962 = vpop.f32.mrb[0].mxu0
  %3963 = vmatprep.mubr.f32.mxu0 0.0
  %3964 = vmatmul.mubr.f32.gmra.mrb[0].mxu0 %v3287
  %v3965 = vpop.f32.mrb[0].mxu0
  %v3966 = vadd.f32 0.0, %v3965
  %v3967 = vpop.f32.mrb[0].mxu0
  %3968 = vmatprep.mubr.f32.mxu0 0.0
  %3969 = vmatmul.mubr.f32.gmra.mrb[0].mxu0 %v3289
  %v3970 = vpop.f32.mrb[0].mxu0
  %v3971 = vadd.f32 0.0, %v3970
  %v3972 = vpop.f32.mrb[0].mxu0
  %3973 = vmatprep.mubr.f32.mxu0 0.0
  %3974 = vmatmul.mubr.f32.gmra.mrb[0].mxu0 %v3291
  %v3975 = vpop.f32.mrb[0].mxu0
  %v3976 = vadd.f32 0.0, %v3975
  %v3977 = vpop.f32.mrb[0].mxu0
  %3978 = vmatprep.mubr.f32.mxu0 0.0
  %3979 = vmatmul.mubr.f32.gmra.mrb[0].mxu0 %v3293
  %v3980 = vpop.f32.mrb[0].mxu0
  %v3981 = vadd.f32 0.0, %v3980
  %v3982 = vpop.f32.mrb[0].mxu0
  %3983 = vmatprep.mubr.f32.mxu0 0.0
  %3984 = vmatmul.mubr.f32.gmra.mrb[0].mxu0 %v3295
  %v3985 = vpop.f32.mrb[0].mxu0
  %v3986 = vadd.f32 0.0, %v3985
  %v3987 = vpop.f32.mrb[0].mxu0
  %3988 = vmatprep.mubr.f32.mxu0 0.0
  %3989 = vmatmul.mubr.f32.gmra.mrb[0].mxu0 %v3297
  %v3990 = vpop.f32.mrb[0].mxu0
  %v3991 = vadd.f32 0.0, %v3990
  %v3992 = vpop.f32.mrb[0].mxu0
  %3993 = vmatprep.mubr.f32.mxu0 0.0
  %3994 = vmatmul.mubr.f32.gmra.mrb[0].mxu0 %v3299
  %v3995 = vpop.f32.mrb[0].mxu0
  %v3996 = vadd.f32 0.0, %v3995
  %v3997 = vpop.f32.mrb[0].mxu0
  %3998 = vmatprep.mubr.f32.mxu0 0.0
  %3999 = vmatmul.mubr.f32.gmra.mrb[0].mxu0 %v3301
  %v4000 = vpop.f32.mrb[0].mxu0
  %v4001 = vadd.f32 0.0, %v4000
  %v4002 = vpop.f32.mrb[0].mxu0
  %4003 = vmatprep.mubr.f32.mxu0 0.0
  %4004 = vmatmul.mubr.f32.gmra.mrb[0].mxu0 %v3303
  %v4005 = vpop.f32.mrb[0].mxu0
  %v4006 = vadd.f32 0.0, %v4005
  %v4007 = vpop.f32.mrb[0].mxu0
  %4008 = vmatprep.mubr.f32.mxu0 0.0
  %4009 = vmatmul.mubr.f32.gmra.mrb[0].mxu0 %v3305
  %v4010 = vpop.f32.mrb[0].mxu0
  %v4011 = vadd.f32 0.0, %v4010
  %v4012 = vpop.f32.mrb[0].mxu0
  %4013 = vdwg.mxu0
  %4014 = vmatprep.subr.mxu0 0.0
  %4015 = vmatpush1.msra.mxu0 %v563
  %4016 = vmatprep.subr.mxu0 0.0
  %4017 = vmatpush1.msra.mxu0 %v569
  %4018 = vmatprep.subr.mxu0 0.0
  %4019 = vmatpush1.msra.mxu0 %v575
  %4020 = vmatprep.subr.mxu0 0.0
  %4021 = vmatpush1.msra.mxu0 %v581
  %4022 = vmatprep.subr.mxu0 0.0
  %4023 = vmatpush1.msra.mxu0 %v587
  %4024 = vmatprep.subr.mxu0 0.0
  %4025 = vmatpush1.msra.mxu0 %v593
  %4026 = vmatprep.subr.mxu0 0.0
  %4027 = vmatpush1.msra.mxu0 %v599
  %4028 = vmatprep.subr.mxu0 0.0
  %4029 = vmatpush1.msra.mxu0 %v605
  %4030 = vmatprep.subr.mxu0 0.0
  %4031 = vmatpush1.msra.mxu0 %v611
  %4032 = vmatprep.subr.mxu0 0.0
  %4033 = vmatpush1.msra.mxu0 %v617
  %4034 = vmatprep.subr.mxu0 0.0
  %4035 = vmatpush1.msra.mxu0 %v623
  %4036 = vmatprep.subr.mxu0 0.0
  %4037 = vmatpush1.msra.mxu0 %v629
  %4038 = vmatprep.subr.mxu0 0.0
  %4039 = vmatpush1.msra.mxu0 %v635
  %4040 = vmatprep.subr.mxu0 0.0
  %4041 = vmatpush1.msra.mxu0 %v641
  %4042 = vmatprep.subr.mxu0 0.0
  %4043 = vmatpush1.msra.mxu0 %v647
  %4044 = vmatprep.subr.mxu0 0.0
  %4045 = vmatpush1.msra.mxu0 %v653
  %4046 = vmatprep.subr.mxu0 0.0
  %4047 = vmatpush1.msra.mxu0 0.0
  %4048 = vmatprep.subr.mxu0 0.0
  %4049 = vmatpush1.msra.mxu0 0.0
  %4050 = vmatprep.subr.mxu0 0.0
  %4051 = vmatpush1.msra.mxu0 0.0
  %4052 = vmatprep.subr.mxu0 0.0
  %4053 = vmatpush1.msra.mxu0 0.0
  %4054 = vmatprep.subr.mxu0 0.0
  %4055 = vmatpush1.msra.mxu0 0.0
  %4056 = vmatprep.subr.mxu0 0.0
  %4057 = vmatpush1.msra.mxu0 0.0
  %4058 = vmatprep.subr.mxu0 0.0
  %4059 = vmatpush1.msra.mxu0 0.0
  %4060 = vmatprep.subr.mxu0 0.0
  %4061 = vmatpush1.msra.mxu0 0.0
  %4062 = vmatprep.subr.mxu0 0.0
  %4063 = vmatpush1.msra.mxu0 0.0
  %4064 = vmatprep.subr.mxu0 0.0
  %4065 = vmatpush1.msra.mxu0 0.0
  %4066 = vmatprep.subr.mxu0 0.0
  %4067 = vmatpush1.msra.mxu0 0.0
  %4068 = vmatprep.subr.mxu0 0.0
  %4069 = vmatpush1.msra.mxu0 0.0
  %4070 = vmatprep.subr.mxu0 0.0
  %4071 = vmatpush1.msra.mxu0 0.0
  %4072 = vmatprep.subr.mxu0 0.0
  %4073 = vmatpush1.msra.mxu0 0.0
  %4074 = vmatprep.subr.mxu0 0.0
  %4075 = vmatpush1.msra.mxu0 0.0
  %4076 = vmatprep.subr.mxu0 0.0
  %4077 = vmatpush1.msra.mxu0 0.0
  %4078 = vmatprep.mubr.f32.mxu0 0.0
  %4079 = vmatmul.mubr.f32.gmra.mrb[0].mxu0 %v3307
  %v4080 = vpop.f32.mrb[0].mxu0
  %v4081 = vadd.f32 0.0, %v4080
  %v4082 = vpop.f32.mrb[0].mxu0
  %4083 = vmatprep.mubr.f32.mxu0 0.0
  %4084 = vmatmul.mubr.f32.gmra.mrb[0].mxu0 %v3309
  %v4085 = vpop.f32.mrb[0].mxu0
  %v4086 = vadd.f32 0.0, %v4085
  %v4087 = vpop.f32.mrb[0].mxu0
  %4088 = vmatprep.mubr.f32.mxu0 0.0
  %4089 = vmatmul.mubr.f32.gmra.mrb[0].mxu0 %v3311
  %v4090 = vpop.f32.mrb[0].mxu0
  %v4091 = vadd.f32 0.0, %v4090
  %v4092 = vpop.f32.mrb[0].mxu0
  %4093 = vmatprep.mubr.f32.mxu0 0.0
  %4094 = vmatmul.mubr.f32.gmra.mrb[0].mxu0 %v3313
  %v4095 = vpop.f32.mrb[0].mxu0
  %v4096 = vadd.f32 0.0, %v4095
  %v4097 = vpop.f32.mrb[0].mxu0
  %4098 = vmatprep.mubr.f32.mxu0 0.0
  %4099 = vmatmul.mubr.f32.gmra.mrb[0].mxu0 %v3315
  %v4100 = vpop.f32.mrb[0].mxu0
  %v4101 = vadd.f32 0.0, %v4100
  %v4102 = vpop.f32.mrb[0].mxu0
  %4103 = vmatprep.mubr.f32.mxu0 0.0
  %4104 = vmatmul.mubr.f32.gmra.mrb[0].mxu0 %v3317
  %v4105 = vpop.f32.mrb[0].mxu0
  %v4106 = vadd.f32 0.0, %v4105
  %v4107 = vpop.f32.mrb[0].mxu0
  %4108 = vmatprep.mubr.f32.mxu0 0.0
  %4109 = vmatmul.mubr.f32.gmra.mrb[0].mxu0 %v3319
  %v4110 = vpop.f32.mrb[0].mxu0
  %v4111 = vadd.f32 0.0, %v4110
  %v4112 = vpop.f32.mrb[0].mxu0
  %4113 = vmatprep.mubr.f32.mxu0 0.0
  %4114 = vmatmul.mubr.f32.gmra.mrb[0].mxu0 %v3321
  %v4115 = vpop.f32.mrb[0].mxu0
  %v4116 = vadd.f32 0.0, %v4115
  %v4117 = vpop.f32.mrb[0].mxu0
  %4118 = vmatprep.mubr.f32.mxu0 0.0
  %4119 = vmatmul.mubr.f32.gmra.mrb[0].mxu0 %v3323
  %v4120 = vpop.f32.mrb[0].mxu0
  %v4121 = vadd.f32 0.0, %v4120
  %v4122 = vpop.f32.mrb[0].mxu0
  %4123 = vmatprep.mubr.f32.mxu0 0.0
  %4124 = vmatmul.mubr.f32.gmra.mrb[0].mxu0 %v3325
  %v4125 = vpop.f32.mrb[0].mxu0
  %v4126 = vadd.f32 0.0, %v4125
  %v4127 = vpop.f32.mrb[0].mxu0
  %4128 = vmatprep.mubr.f32.mxu0 0.0
  %4129 = vmatmul.mubr.f32.gmra.mrb[0].mxu0 %v3327
  %v4130 = vpop.f32.mrb[0].mxu0
  %v4131 = vadd.f32 0.0, %v4130
  %v4132 = vpop.f32.mrb[0].mxu0
  %4133 = vmatprep.mubr.f32.mxu0 0.0
  %4134 = vmatmul.mubr.f32.gmra.mrb[0].mxu0 %v3329
  %v4135 = vpop.f32.mrb[0].mxu0
  %v4136 = vadd.f32 0.0, %v4135
  %v4137 = vpop.f32.mrb[0].mxu0
  %4138 = vmatprep.mubr.f32.mxu0 0.0
  %4139 = vmatmul.mubr.f32.gmra.mrb[0].mxu0 %v3331
  %v4140 = vpop.f32.mrb[0].mxu0
  %v4141 = vadd.f32 0.0, %v4140
  %v4142 = vpop.f32.mrb[0].mxu0
  %4143 = vmatprep.mubr.f32.mxu0 0.0
  %4144 = vmatmul.mubr.f32.gmra.mrb[0].mxu0 %v3333
  %v4145 = vpop.f32.mrb[0].mxu0
  %v4146 = vadd.f32 0.0, %v4145
  %v4147 = vpop.f32.mrb[0].mxu0
  %4148 = vmatprep.mubr.f32.mxu0 0.0
  %4149 = vmatmul.mubr.f32.gmra.mrb[0].mxu0 %v3335
  %v4150 = vpop.f32.mrb[0].mxu0
  %v4151 = vadd.f32 0.0, %v4150
  %v4152 = vpop.f32.mrb[0].mxu0
  %4153 = vmatprep.mubr.f32.mxu0 0.0
  %4154 = vmatmul.mubr.f32.gmra.mrb[0].mxu0 %v3337
  %v4155 = vpop.f32.mrb[0].mxu0
  %v4156 = vadd.f32 0.0, %v4155
  %v4157 = vpop.f32.mrb[0].mxu0
  %4158 = vdwg.mxu0
  %4159 = vmatprep.subr.mxu0 0.0
  %4160 = vmatpush1.msra.mxu0 %v565
  %4161 = vmatprep.subr.mxu0 0.0
  %4162 = vmatpush1.msra.mxu0 %v571
  %4163 = vmatprep.subr.mxu0 0.0
  %4164 = vmatpush1.msra.mxu0 %v577
  %4165 = vmatprep.subr.mxu0 0.0
  %4166 = vmatpush1.msra.mxu0 %v583
  %4167 = vmatprep.subr.mxu0 0.0
  %4168 = vmatpush1.msra.mxu0 %v589
  %4169 = vmatprep.subr.mxu0 0.0
  %4170 = vmatpush1.msra.mxu0 %v595
  %4171 = vmatprep.subr.mxu0 0.0
  %4172 = vmatpush1.msra.mxu0 %v601
  %4173 = vmatprep.subr.mxu0 0.0
  %4174 = vmatpush1.msra.mxu0 %v607
  %4175 = vmatprep.subr.mxu0 0.0
  %4176 = vmatpush1.msra.mxu0 %v613
  %4177 = vmatprep.subr.mxu0 0.0
  %4178 = vmatpush1.msra.mxu0 %v619
  %4179 = vmatprep.subr.mxu0 0.0
  %4180 = vmatpush1.msra.mxu0 %v625
  %4181 = vmatprep.subr.mxu0 0.0
  %4182 = vmatpush1.msra.mxu0 %v631
  %4183 = vmatprep.subr.mxu0 0.0
  %4184 = vmatpush1.msra.mxu0 %v637
  %4185 = vmatprep.subr.mxu0 0.0
  %4186 = vmatpush1.msra.mxu0 %v643
  %4187 = vmatprep.subr.mxu0 0.0
  %4188 = vmatpush1.msra.mxu0 %v649
  %4189 = vmatprep.subr.mxu0 0.0
  %4190 = vmatpush1.msra.mxu0 %v655
  %4191 = vmatprep.subr.mxu0 0.0
  %4192 = vmatpush1.msra.mxu0 0.0
  %4193 = vmatprep.subr.mxu0 0.0
  %4194 = vmatpush1.msra.mxu0 0.0
  %4195 = vmatprep.subr.mxu0 0.0
  %4196 = vmatpush1.msra.mxu0 0.0
  %4197 = vmatprep.subr.mxu0 0.0
  %4198 = vmatpush1.msra.mxu0 0.0
  %4199 = vmatprep.subr.mxu0 0.0
  %4200 = vmatpush1.msra.mxu0 0.0
  %4201 = vmatprep.subr.mxu0 0.0
  %4202 = vmatpush1.msra.mxu0 0.0
  %4203 = vmatprep.subr.mxu0 0.0
  %4204 = vmatpush1.msra.mxu0 0.0
  %4205 = vmatprep.subr.mxu0 0.0
  %4206 = vmatpush1.msra.mxu0 0.0
  %4207 = vmatprep.subr.mxu0 0.0
  %4208 = vmatpush1.msra.mxu0 0.0
  %4209 = vmatprep.subr.mxu0 0.0
  %4210 = vmatpush1.msra.mxu0 0.0
  %4211 = vmatprep.subr.mxu0 0.0
  %4212 = vmatpush1.msra.mxu0 0.0
  %4213 = vmatprep.subr.mxu0 0.0
  %4214 = vmatpush1.msra.mxu0 0.0
  %4215 = vmatprep.subr.mxu0 0.0
  %4216 = vmatpush1.msra.mxu0 0.0
  %4217 = vmatprep.subr.mxu0 0.0
  %4218 = vmatpush1.msra.mxu0 0.0
  %4219 = vmatprep.subr.mxu0 0.0
  %4220 = vmatpush1.msra.mxu0 0.0
  %4221 = vmatprep.subr.mxu0 0.0
  %4222 = vmatpush1.msra.mxu0 0.0
  %4223 = vmatprep.mubr.f32.mxu0 0.0
  %4224 = vmatmul.mubr.f32.gmra.mrb[0].mxu0 %v3339
  %v4225 = vpop.f32.mrb[0].mxu0
  %v4226 = vadd.f32 0.0, %v4225
  %v4227 = vpop.f32.mrb[0].mxu0
  %4228 = vmatprep.mubr.f32.mxu0 0.0
  %4229 = vmatmul.mubr.f32.gmra.mrb[0].mxu0 %v3341
  %v4230 = vpop.f32.mrb[0].mxu0
  %v4231 = vadd.f32 0.0, %v4230
  %v4232 = vpop.f32.mrb[0].mxu0
  %4233 = vmatprep.mubr.f32.mxu0 0.0
  %4234 = vmatmul.mubr.f32.gmra.mrb[0].mxu0 %v3343
  %v4235 = vpop.f32.mrb[0].mxu0
  %v4236 = vadd.f32 0.0, %v4235
  %v4237 = vpop.f32.mrb[0].mxu0
  %4238 = vmatprep.mubr.f32.mxu0 0.0
  %4239 = vmatmul.mubr.f32.gmra.mrb[0].mxu0 %v3345
  %v4240 = vpop.f32.mrb[0].mxu0
  %v4241 = vadd.f32 0.0, %v4240
  %v4242 = vpop.f32.mrb[0].mxu0
  %4243 = vmatprep.mubr.f32.mxu0 0.0
  %4244 = vmatmul.mubr.f32.gmra.mrb[0].mxu0 %v3347
  %v4245 = vpop.f32.mrb[0].mxu0
  %v4246 = vadd.f32 0.0, %v4245
  %v4247 = vpop.f32.mrb[0].mxu0
  %4248 = vmatprep.mubr.f32.mxu0 0.0
  %4249 = vmatmul.mubr.f32.gmra.mrb[0].mxu0 %v3349
  %v4250 = vpop.f32.mrb[0].mxu0
  %v4251 = vadd.f32 0.0, %v4250
  %v4252 = vpop.f32.mrb[0].mxu0
  %4253 = vmatprep.mubr.f32.mxu0 0.0
  %4254 = vmatmul.mubr.f32.gmra.mrb[0].mxu0 %v3351
  %v4255 = vpop.f32.mrb[0].mxu0
  %v4256 = vadd.f32 0.0, %v4255
  %v4257 = vpop.f32.mrb[0].mxu0
  %4258 = vmatprep.mubr.f32.mxu0 0.0
  %4259 = vmatmul.mubr.f32.gmra.mrb[0].mxu0 %v3353
  %v4260 = vpop.f32.mrb[0].mxu0
  %v4261 = vadd.f32 0.0, %v4260
  %v4262 = vpop.f32.mrb[0].mxu0
  %4263 = vmatprep.mubr.f32.mxu0 0.0
  %4264 = vmatmul.mubr.f32.gmra.mrb[0].mxu0 %v3355
  %v4265 = vpop.f32.mrb[0].mxu0
  %v4266 = vadd.f32 0.0, %v4265
  %v4267 = vpop.f32.mrb[0].mxu0
  %4268 = vmatprep.mubr.f32.mxu0 0.0
  %4269 = vmatmul.mubr.f32.gmra.mrb[0].mxu0 %v3357
  %v4270 = vpop.f32.mrb[0].mxu0
  %v4271 = vadd.f32 0.0, %v4270
  %v4272 = vpop.f32.mrb[0].mxu0
  %4273 = vmatprep.mubr.f32.mxu0 0.0
  %4274 = vmatmul.mubr.f32.gmra.mrb[0].mxu0 %v3359
  %v4275 = vpop.f32.mrb[0].mxu0
  %v4276 = vadd.f32 0.0, %v4275
  %v4277 = vpop.f32.mrb[0].mxu0
  %4278 = vmatprep.mubr.f32.mxu0 0.0
  %4279 = vmatmul.mubr.f32.gmra.mrb[0].mxu0 %v3361
  %v4280 = vpop.f32.mrb[0].mxu0
  %v4281 = vadd.f32 0.0, %v4280
  %v4282 = vpop.f32.mrb[0].mxu0
  %4283 = vmatprep.mubr.f32.mxu0 0.0
  %4284 = vmatmul.mubr.f32.gmra.mrb[0].mxu0 %v3363
  %v4285 = vpop.f32.mrb[0].mxu0
  %v4286 = vadd.f32 0.0, %v4285
  %v4287 = vpop.f32.mrb[0].mxu0
  %4288 = vmatprep.mubr.f32.mxu0 0.0
  %4289 = vmatmul.mubr.f32.gmra.mrb[0].mxu0 %v3365
  %v4290 = vpop.f32.mrb[0].mxu0
  %v4291 = vadd.f32 0.0, %v4290
  %v4292 = vpop.f32.mrb[0].mxu0
  %4293 = vmatprep.mubr.f32.mxu0 0.0
  %4294 = vmatmul.mubr.f32.gmra.mrb[0].mxu0 %v3367
  %v4295 = vpop.f32.mrb[0].mxu0
  %v4296 = vadd.f32 0.0, %v4295
  %v4297 = vpop.f32.mrb[0].mxu0
  %4298 = vmatprep.mubr.f32.mxu0 0.0
  %4299 = vmatmul.mubr.f32.gmra.mrb[0].mxu0 %v3369
  %v4300 = vpop.f32.mrb[0].mxu0
  %v4301 = vadd.f32 0.0, %v4300
  %v4302 = vpop.f32.mrb[0].mxu0
  %4303 = vdwg.mxu0
  %4304 = vmatprep.subr.mxu0 0.0
  %4305 = vmatpush1.msra.mxu0 %v724
  %4306 = vmatprep.subr.mxu0 0.0
  %4307 = vmatpush1.msra.mxu0 %v730
  %4308 = vmatprep.subr.mxu0 0.0
  %4309 = vmatpush1.msra.mxu0 %v736
  %4310 = vmatprep.subr.mxu0 0.0
  %4311 = vmatpush1.msra.mxu0 %v742
  %4312 = vmatprep.subr.mxu0 0.0
  %4313 = vmatpush1.msra.mxu0 %v748
  %4314 = vmatprep.subr.mxu0 0.0
  %4315 = vmatpush1.msra.mxu0 %v754
  %4316 = vmatprep.subr.mxu0 0.0
  %4317 = vmatpush1.msra.mxu0 %v760
  %4318 = vmatprep.subr.mxu0 0.0
  %4319 = vmatpush1.msra.mxu0 %v766
  %4320 = vmatprep.subr.mxu0 0.0
  %4321 = vmatpush1.msra.mxu0 %v772
  %4322 = vmatprep.subr.mxu0 0.0
  %4323 = vmatpush1.msra.mxu0 %v778
  %4324 = vmatprep.subr.mxu0 0.0
  %4325 = vmatpush1.msra.mxu0 %v784
  %4326 = vmatprep.subr.mxu0 0.0
  %4327 = vmatpush1.msra.mxu0 %v790
  %4328 = vmatprep.subr.mxu0 0.0
  %4329 = vmatpush1.msra.mxu0 %v796
  %4330 = vmatprep.subr.mxu0 0.0
  %4331 = vmatpush1.msra.mxu0 %v802
  %4332 = vmatprep.subr.mxu0 0.0
  %4333 = vmatpush1.msra.mxu0 %v808
  %4334 = vmatprep.subr.mxu0 0.0
  %4335 = vmatpush1.msra.mxu0 %v814
  %4336 = vmatprep.subr.mxu0 0.0
  %4337 = vmatpush1.msra.mxu0 0.0
  %4338 = vmatprep.subr.mxu0 0.0
  %4339 = vmatpush1.msra.mxu0 0.0
  %4340 = vmatprep.subr.mxu0 0.0
  %4341 = vmatpush1.msra.mxu0 0.0
  %4342 = vmatprep.subr.mxu0 0.0
  %4343 = vmatpush1.msra.mxu0 0.0
  %4344 = vmatprep.subr.mxu0 0.0
  %4345 = vmatpush1.msra.mxu0 0.0
  %4346 = vmatprep.subr.mxu0 0.0
  %4347 = vmatpush1.msra.mxu0 0.0
  %4348 = vmatprep.subr.mxu0 0.0
  %4349 = vmatpush1.msra.mxu0 0.0
  %4350 = vmatprep.subr.mxu0 0.0
  %4351 = vmatpush1.msra.mxu0 0.0
  %4352 = vmatprep.subr.mxu0 0.0
  %4353 = vmatpush1.msra.mxu0 0.0
  %4354 = vmatprep.subr.mxu0 0.0
  %4355 = vmatpush1.msra.mxu0 0.0
  %4356 = vmatprep.subr.mxu0 0.0
  %4357 = vmatpush1.msra.mxu0 0.0
  %4358 = vmatprep.subr.mxu0 0.0
  %4359 = vmatpush1.msra.mxu0 0.0
  %4360 = vmatprep.subr.mxu0 0.0
  %4361 = vmatpush1.msra.mxu0 0.0
  %4362 = vmatprep.subr.mxu0 0.0
  %4363 = vmatpush1.msra.mxu0 0.0
  %4364 = vmatprep.subr.mxu0 0.0
  %4365 = vmatpush1.msra.mxu0 0.0
  %4366 = vmatprep.subr.mxu0 0.0
  %4367 = vmatpush1.msra.mxu0 0.0
  %4368 = vmatprep.mubr.f32.mxu0 0.0
  %4369 = vmatmul.mubr.f32.gmra.mrb[0].mxu0 %v3371
  %v4370 = vpop.f32.mrb[0].mxu0
  %v4371 = vadd.f32 0.0, %v4370
  %v4372 = vpop.f32.mrb[0].mxu0
  %4373 = vmatprep.mubr.f32.mxu0 0.0
  %4374 = vmatmul.mubr.f32.gmra.mrb[0].mxu0 %v3373
  %v4375 = vpop.f32.mrb[0].mxu0
  %v4376 = vadd.f32 0.0, %v4375
  %v4377 = vpop.f32.mrb[0].mxu0
  %4378 = vmatprep.mubr.f32.mxu0 0.0
  %4379 = vmatmul.mubr.f32.gmra.mrb[0].mxu0 %v3375
  %v4380 = vpop.f32.mrb[0].mxu0
  %v4381 = vadd.f32 0.0, %v4380
  %v4382 = vpop.f32.mrb[0].mxu0
  %4383 = vmatprep.mubr.f32.mxu0 0.0
  %4384 = vmatmul.mubr.f32.gmra.mrb[0].mxu0 %v3377
  %v4385 = vpop.f32.mrb[0].mxu0
  %v4386 = vadd.f32 0.0, %v4385
  %v4387 = vpop.f32.mrb[0].mxu0
  %4388 = vmatprep.mubr.f32.mxu0 0.0
  %4389 = vmatmul.mubr.f32.gmra.mrb[0].mxu0 %v3379
  %v4390 = vpop.f32.mrb[0].mxu0
  %v4391 = vadd.f32 0.0, %v4390
  %v4392 = vpop.f32.mrb[0].mxu0
  %4393 = vmatprep.mubr.f32.mxu0 0.0
  %4394 = vmatmul.mubr.f32.gmra.mrb[0].mxu0 %v3381
  %v4395 = vpop.f32.mrb[0].mxu0
  %v4396 = vadd.f32 0.0, %v4395
  %v4397 = vpop.f32.mrb[0].mxu0
  %4398 = vmatprep.mubr.f32.mxu0 0.0
  %4399 = vmatmul.mubr.f32.gmra.mrb[0].mxu0 %v3383
  %v4400 = vpop.f32.mrb[0].mxu0
  %v4401 = vadd.f32 0.0, %v4400
  %v4402 = vpop.f32.mrb[0].mxu0
  %4403 = vmatprep.mubr.f32.mxu0 0.0
  %4404 = vmatmul.mubr.f32.gmra.mrb[0].mxu0 %v3385
  %v4405 = vpop.f32.mrb[0].mxu0
  %v4406 = vadd.f32 0.0, %v4405
  %v4407 = vpop.f32.mrb[0].mxu0
  %4408 = vmatprep.mubr.f32.mxu0 0.0
  %4409 = vmatmul.mubr.f32.gmra.mrb[0].mxu0 %v3387
  %v4410 = vpop.f32.mrb[0].mxu0
  %v4411 = vadd.f32 0.0, %v4410
  %v4412 = vpop.f32.mrb[0].mxu0
  %4413 = vmatprep.mubr.f32.mxu0 0.0
  %4414 = vmatmul.mubr.f32.gmra.mrb[0].mxu0 %v3389
  %v4415 = vpop.f32.mrb[0].mxu0
  %v4416 = vadd.f32 0.0, %v4415
  %v4417 = vpop.f32.mrb[0].mxu0
  %4418 = vmatprep.mubr.f32.mxu0 0.0
  %4419 = vmatmul.mubr.f32.gmra.mrb[0].mxu0 %v3391
  %v4420 = vpop.f32.mrb[0].mxu0
  %v4421 = vadd.f32 0.0, %v4420
  %v4422 = vpop.f32.mrb[0].mxu0
  %4423 = vmatprep.mubr.f32.mxu0 0.0
  %4424 = vmatmul.mubr.f32.gmra.mrb[0].mxu0 %v3393
  %v4425 = vpop.f32.mrb[0].mxu0
  %v4426 = vadd.f32 0.0, %v4425
  %v4427 = vpop.f32.mrb[0].mxu0
  %4428 = vmatprep.mubr.f32.mxu0 0.0
  %4429 = vmatmul.mubr.f32.gmra.mrb[0].mxu0 %v3395
  %v4430 = vpop.f32.mrb[0].mxu0
  %v4431 = vadd.f32 0.0, %v4430
  %v4432 = vpop.f32.mrb[0].mxu0
  %4433 = vmatprep.mubr.f32.mxu0 0.0
  %4434 = vmatmul.mubr.f32.gmra.mrb[0].mxu0 %v3397
  %v4435 = vpop.f32.mrb[0].mxu0
  %v4436 = vadd.f32 0.0, %v4435
  %v4437 = vpop.f32.mrb[0].mxu0
  %4438 = vmatprep.mubr.f32.mxu0 0.0
  %4439 = vmatmul.mubr.f32.gmra.mrb[0].mxu0 %v3399
  %v4440 = vpop.f32.mrb[0].mxu0
  %v4441 = vadd.f32 0.0, %v4440
  %v4442 = vpop.f32.mrb[0].mxu0
  %4443 = vmatprep.mubr.f32.mxu0 0.0
  %4444 = vmatmul.mubr.f32.gmra.mrb[0].mxu0 %v3401
  %v4445 = vpop.f32.mrb[0].mxu0
  %v4446 = vadd.f32 0.0, %v4445
  %v4447 = vpop.f32.mrb[0].mxu0
  %4448 = vdwg.mxu0
  %4449 = vmatprep.subr.mxu0 0.0
  %4450 = vmatpush1.msra.mxu0 %v726
  %4451 = vmatprep.subr.mxu0 0.0
  %4452 = vmatpush1.msra.mxu0 %v732
  %4453 = vmatprep.subr.mxu0 0.0
  %4454 = vmatpush1.msra.mxu0 %v738
  %4455 = vmatprep.subr.mxu0 0.0
  %4456 = vmatpush1.msra.mxu0 %v744
  %4457 = vmatprep.subr.mxu0 0.0
  %4458 = vmatpush1.msra.mxu0 %v750
  %4459 = vmatprep.subr.mxu0 0.0
  %4460 = vmatpush1.msra.mxu0 %v756
  %4461 = vmatprep.subr.mxu0 0.0
  %4462 = vmatpush1.msra.mxu0 %v762
  %4463 = vmatprep.subr.mxu0 0.0
  %4464 = vmatpush1.msra.mxu0 %v768
  %4465 = vmatprep.subr.mxu0 0.0
  %4466 = vmatpush1.msra.mxu0 %v774
  %4467 = vmatprep.subr.mxu0 0.0
  %4468 = vmatpush1.msra.mxu0 %v780
  %4469 = vmatprep.subr.mxu0 0.0
  %4470 = vmatpush1.msra.mxu0 %v786
  %4471 = vmatprep.subr.mxu0 0.0
  %4472 = vmatpush1.msra.mxu0 %v792
  %4473 = vmatprep.subr.mxu0 0.0
  %4474 = vmatpush1.msra.mxu0 %v798
  %4475 = vmatprep.subr.mxu0 0.0
  %4476 = vmatpush1.msra.mxu0 %v804
  %4477 = vmatprep.subr.mxu0 0.0
  %4478 = vmatpush1.msra.mxu0 %v810
  %4479 = vmatprep.subr.mxu0 0.0
  %4480 = vmatpush1.msra.mxu0 %v816
  %4481 = vmatprep.subr.mxu0 0.0
  %4482 = vmatpush1.msra.mxu0 0.0
  %4483 = vmatprep.subr.mxu0 0.0
  %4484 = vmatpush1.msra.mxu0 0.0
  %4485 = vmatprep.subr.mxu0 0.0
  %4486 = vmatpush1.msra.mxu0 0.0
  %4487 = vmatprep.subr.mxu0 0.0
  %4488 = vmatpush1.msra.mxu0 0.0
  %4489 = vmatprep.subr.mxu0 0.0
  %4490 = vmatpush1.msra.mxu0 0.0
  %4491 = vmatprep.subr.mxu0 0.0
  %4492 = vmatpush1.msra.mxu0 0.0
  %4493 = vmatprep.subr.mxu0 0.0
  %4494 = vmatpush1.msra.mxu0 0.0
  %4495 = vmatprep.subr.mxu0 0.0
  %4496 = vmatpush1.msra.mxu0 0.0
  %4497 = vmatprep.subr.mxu0 0.0
  %4498 = vmatpush1.msra.mxu0 0.0
  %4499 = vmatprep.subr.mxu0 0.0
  %4500 = vmatpush1.msra.mxu0 0.0
  %4501 = vmatprep.subr.mxu0 0.0
  %4502 = vmatpush1.msra.mxu0 0.0
  %4503 = vmatprep.subr.mxu0 0.0
  %4504 = vmatpush1.msra.mxu0 0.0
  %4505 = vmatprep.subr.mxu0 0.0
  %4506 = vmatpush1.msra.mxu0 0.0
  %4507 = vmatprep.subr.mxu0 0.0
  %4508 = vmatpush1.msra.mxu0 0.0
  %4509 = vmatprep.subr.mxu0 0.0
  %4510 = vmatpush1.msra.mxu0 0.0
  %4511 = vmatprep.subr.mxu0 0.0
  %4512 = vmatpush1.msra.mxu0 0.0
  %4513 = vmatprep.mubr.f32.mxu0 0.0
  %4514 = vmatmul.mubr.f32.gmra.mrb[0].mxu0 %v3403
  %v4515 = vpop.f32.mrb[0].mxu0
  %v4516 = vadd.f32 0.0, %v4515
  %v4517 = vpop.f32.mrb[0].mxu0
  %4518 = vmatprep.mubr.f32.mxu0 0.0
  %4519 = vmatmul.mubr.f32.gmra.mrb[0].mxu0 %v3405
  %v4520 = vpop.f32.mrb[0].mxu0
  %v4521 = vadd.f32 0.0, %v4520
  %v4522 = vpop.f32.mrb[0].mxu0
  %4523 = vmatprep.mubr.f32.mxu0 0.0
  %4524 = vmatmul.mubr.f32.gmra.mrb[0].mxu0 %v3407
  %v4525 = vpop.f32.mrb[0].mxu0
  %v4526 = vadd.f32 0.0, %v4525
  %v4527 = vpop.f32.mrb[0].mxu0
  %4528 = vmatprep.mubr.f32.mxu0 0.0
  %4529 = vmatmul.mubr.f32.gmra.mrb[0].mxu0 %v3409
  %v4530 = vpop.f32.mrb[0].mxu0
  %v4531 = vadd.f32 0.0, %v4530
  %v4532 = vpop.f32.mrb[0].mxu0
  %4533 = vmatprep.mubr.f32.mxu0 0.0
  %4534 = vmatmul.mubr.f32.gmra.mrb[0].mxu0 %v3411
  %v4535 = vpop.f32.mrb[0].mxu0
  %v4536 = vadd.f32 0.0, %v4535
  %v4537 = vpop.f32.mrb[0].mxu0
  %4538 = vmatprep.mubr.f32.mxu0 0.0
  %4539 = vmatmul.mubr.f32.gmra.mrb[0].mxu0 %v3413
  %v4540 = vpop.f32.mrb[0].mxu0
  %v4541 = vadd.f32 0.0, %v4540
  %v4542 = vpop.f32.mrb[0].mxu0
  %4543 = vmatprep.mubr.f32.mxu0 0.0
  %4544 = vmatmul.mubr.f32.gmra.mrb[0].mxu0 %v3415
  %v4545 = vpop.f32.mrb[0].mxu0
  %v4546 = vadd.f32 0.0, %v4545
  %v4547 = vpop.f32.mrb[0].mxu0
  %4548 = vmatprep.mubr.f32.mxu0 0.0
  %4549 = vmatmul.mubr.f32.gmra.mrb[0].mxu0 %v3417
  %v4550 = vpop.f32.mrb[0].mxu0
  %v4551 = vadd.f32 0.0, %v4550
  %v4552 = vpop.f32.mrb[0].mxu0
  %4553 = vmatprep.mubr.f32.mxu0 0.0
  %4554 = vmatmul.mubr.f32.gmra.mrb[0].mxu0 %v3419
  %v4555 = vpop.f32.mrb[0].mxu0
  %v4556 = vadd.f32 0.0, %v4555
  %v4557 = vpop.f32.mrb[0].mxu0
  %4558 = vmatprep.mubr.f32.mxu0 0.0
  %4559 = vmatmul.mubr.f32.gmra.mrb[0].mxu0 %v3421
  %v4560 = vpop.f32.mrb[0].mxu0
  %v4561 = vadd.f32 0.0, %v4560
  %v4562 = vpop.f32.mrb[0].mxu0
  %4563 = vmatprep.mubr.f32.mxu0 0.0
  %4564 = vmatmul.mubr.f32.gmra.mrb[0].mxu0 %v3423
  %v4565 = vpop.f32.mrb[0].mxu0
  %v4566 = vadd.f32 0.0, %v4565
  %v4567 = vpop.f32.mrb[0].mxu0
  %4568 = vmatprep.mubr.f32.mxu0 0.0
  %4569 = vmatmul.mubr.f32.gmra.mrb[0].mxu0 %v3425
  %v4570 = vpop.f32.mrb[0].mxu0
  %v4571 = vadd.f32 0.0, %v4570
  %v4572 = vpop.f32.mrb[0].mxu0
  %4573 = vmatprep.mubr.f32.mxu0 0.0
  %4574 = vmatmul.mubr.f32.gmra.mrb[0].mxu0 %v3427
  %v4575 = vpop.f32.mrb[0].mxu0
  %v4576 = vadd.f32 0.0, %v4575
  %v4577 = vpop.f32.mrb[0].mxu0
  %4578 = vmatprep.mubr.f32.mxu0 0.0
  %4579 = vmatmul.mubr.f32.gmra.mrb[0].mxu0 %v3429
  %v4580 = vpop.f32.mrb[0].mxu0
  %v4581 = vadd.f32 0.0, %v4580
  %v4582 = vpop.f32.mrb[0].mxu0
  %4583 = vmatprep.mubr.f32.mxu0 0.0
  %4584 = vmatmul.mubr.f32.gmra.mrb[0].mxu0 %v3431
  %v4585 = vpop.f32.mrb[0].mxu0
  %v4586 = vadd.f32 0.0, %v4585
  %v4587 = vpop.f32.mrb[0].mxu0
  %4588 = vmatprep.mubr.f32.mxu0 0.0
  %4589 = vmatmul.mubr.f32.gmra.mrb[0].mxu0 %v3433
  %v4590 = vpop.f32.mrb[0].mxu0
  %v4591 = vadd.f32 0.0, %v4590
  %v4592 = vpop.f32.mrb[0].mxu0
  %4593 = vdwg.mxu0
  %v4594 = vld [vmem:[%s5] sm:$0xff]
  %v4596 = vlaneseq
  %v4597 = vshrl.u32 %v4596, 7
  %v4598 = vsub.s32 0, %v4597
  %v4599 = vrot.slane %v4594, %v4598
  %v4600 = vlaneseq
  %v4601 = vshrl.u32 %v4600, 7
  %v4602 = vsub.s32 1, %v4601
  %v4603 = vrot.slane %v4594, %v4602
  %v4604 = vlaneseq
  %v4605 = vshrl.u32 %v4604, 7
  %v4606 = vsub.s32 2, %v4605
  %v4607 = vrot.slane %v4594, %v4606
  %v4608 = vlaneseq
  %v4609 = vshrl.u32 %v4608, 7
  %v4610 = vsub.s32 3, %v4609
  %v4611 = vrot.slane %v4594, %v4610
  %v4612 = vlaneseq
  %v4613 = vshrl.u32 %v4612, 7
  %v4614 = vsub.s32 4, %v4613
  %v4615 = vrot.slane %v4594, %v4614
  %v4616 = vlaneseq
  %v4617 = vshrl.u32 %v4616, 7
  %v4618 = vsub.s32 5, %v4617
  %v4619 = vrot.slane %v4594, %v4618
  %v4620 = vlaneseq
  %v4621 = vshrl.u32 %v4620, 7
  %v4622 = vsub.s32 6, %v4621
  %v4623 = vrot.slane %v4594, %v4622
  %v4624 = vlaneseq
  %v4625 = vshrl.u32 %v4624, 7
  %v4626 = vsub.s32 7, %v4625
  %v4627 = vrot.slane %v4594, %v4626
  %v4636 = vadd.f32 %v3501, %v4599
  %v4637 = vadd.f32 %v3646, %v4603
  %v4638 = vadd.f32 %v3791, %v4607
  %v4639 = vadd.f32 %v3936, %v4611
  %v4640 = vadd.f32 %v4081, %v4615
  %v4641 = vadd.f32 %v4226, %v4619
  %v4642 = vadd.f32 %v4371, %v4623
  %v4643 = vadd.f32 %v4516, %v4627
  %v4644 = vadd.f32 %v3506, %v4599
  %v4645 = vadd.f32 %v3651, %v4603
  %v4646 = vadd.f32 %v3796, %v4607
  %v4647 = vadd.f32 %v3941, %v4611
  %v4648 = vadd.f32 %v4086, %v4615
  %v4649 = vadd.f32 %v4231, %v4619
  %v4650 = vadd.f32 %v4376, %v4623
  %v4651 = vadd.f32 %v4521, %v4627
  %v4652 = vadd.f32 %v3511, %v4599
  %v4653 = vadd.f32 %v3656, %v4603
  %v4654 = vadd.f32 %v3801, %v4607
  %v4655 = vadd.f32 %v3946, %v4611
  %v4656 = vadd.f32 %v4091, %v4615
  %v4657 = vadd.f32 %v4236, %v4619
  %v4658 = vadd.f32 %v4381, %v4623
  %v4659 = vadd.f32 %v4526, %v4627
  %v4660 = vadd.f32 %v3516, %v4599
  %v4661 = vadd.f32 %v3661, %v4603
  %v4662 = vadd.f32 %v3806, %v4607
  %v4663 = vadd.f32 %v3951, %v4611
  %v4664 = vadd.f32 %v4096, %v4615
  %v4665 = vadd.f32 %v4241, %v4619
  %v4666 = vadd.f32 %v4386, %v4623
  %v4667 = vadd.f32 %v4531, %v4627
  %v4668 = vadd.f32 %v3521, %v4599
  %v4669 = vadd.f32 %v3666, %v4603
  %v4670 = vadd.f32 %v3811, %v4607
  %v4671 = vadd.f32 %v3956, %v4611
  %v4672 = vadd.f32 %v4101, %v4615
  %v4673 = vadd.f32 %v4246, %v4619
  %v4674 = vadd.f32 %v4391, %v4623
  %v4675 = vadd.f32 %v4536, %v4627
  %v4676 = vadd.f32 %v3526, %v4599
  %v4677 = vadd.f32 %v3671, %v4603
  %v4678 = vadd.f32 %v3816, %v4607
  %v4679 = vadd.f32 %v3961, %v4611
  %v4680 = vadd.f32 %v4106, %v4615
  %v4681 = vadd.f32 %v4251, %v4619
  %v4682 = vadd.f32 %v4396, %v4623
  %v4683 = vadd.f32 %v4541, %v4627
  %v4684 = vadd.f32 %v3531, %v4599
  %v4685 = vadd.f32 %v3676, %v4603
  %v4686 = vadd.f32 %v3821, %v4607
  %v4687 = vadd.f32 %v3966, %v4611
  %v4688 = vadd.f32 %v4111, %v4615
  %v4689 = vadd.f32 %v4256, %v4619
  %v4690 = vadd.f32 %v4401, %v4623
  %v4691 = vadd.f32 %v4546, %v4627
  %v4692 = vadd.f32 %v3536, %v4599
  %v4693 = vadd.f32 %v3681, %v4603
  %v4694 = vadd.f32 %v3826, %v4607
  %v4695 = vadd.f32 %v3971, %v4611
  %v4696 = vadd.f32 %v4116, %v4615
  %v4697 = vadd.f32 %v4261, %v4619
  %v4698 = vadd.f32 %v4406, %v4623
  %v4699 = vadd.f32 %v4551, %v4627
  %v4700 = vadd.f32 %v3541, %v4599
  %v4701 = vadd.f32 %v3686, %v4603
  %v4702 = vadd.f32 %v3831, %v4607
  %v4703 = vadd.f32 %v3976, %v4611
  %v4704 = vadd.f32 %v4121, %v4615
  %v4705 = vadd.f32 %v4266, %v4619
  %v4706 = vadd.f32 %v4411, %v4623
  %v4707 = vadd.f32 %v4556, %v4627
  %v4708 = vadd.f32 %v3546, %v4599
  %v4709 = vadd.f32 %v3691, %v4603
  %v4710 = vadd.f32 %v3836, %v4607
  %v4711 = vadd.f32 %v3981, %v4611
  %v4712 = vadd.f32 %v4126, %v4615
  %v4713 = vadd.f32 %v4271, %v4619
  %v4714 = vadd.f32 %v4416, %v4623
  %v4715 = vadd.f32 %v4561, %v4627
  %v4716 = vadd.f32 %v3551, %v4599
  %v4717 = vadd.f32 %v3696, %v4603
  %v4718 = vadd.f32 %v3841, %v4607
  %v4719 = vadd.f32 %v3986, %v4611
  %v4720 = vadd.f32 %v4131, %v4615
  %v4721 = vadd.f32 %v4276, %v4619
  %v4722 = vadd.f32 %v4421, %v4623
  %v4723 = vadd.f32 %v4566, %v4627
  %v4724 = vadd.f32 %v3556, %v4599
  %v4725 = vadd.f32 %v3701, %v4603
  %v4726 = vadd.f32 %v3846, %v4607
  %v4727 = vadd.f32 %v3991, %v4611
  %v4728 = vadd.f32 %v4136, %v4615
  %v4729 = vadd.f32 %v4281, %v4619
  %v4730 = vadd.f32 %v4426, %v4623
  %v4731 = vadd.f32 %v4571, %v4627
  %v4732 = vadd.f32 %v3561, %v4599
  %v4733 = vadd.f32 %v3706, %v4603
  %v4734 = vadd.f32 %v3851, %v4607
  %v4735 = vadd.f32 %v3996, %v4611
  %v4736 = vadd.f32 %v4141, %v4615
  %v4737 = vadd.f32 %v4286, %v4619
  %v4738 = vadd.f32 %v4431, %v4623
  %v4739 = vadd.f32 %v4576, %v4627
  %v4740 = vadd.f32 %v3566, %v4599
  %v4741 = vadd.f32 %v3711, %v4603
  %v4742 = vadd.f32 %v3856, %v4607
  %v4743 = vadd.f32 %v4001, %v4611
  %v4744 = vadd.f32 %v4146, %v4615
  %v4745 = vadd.f32 %v4291, %v4619
  %v4746 = vadd.f32 %v4436, %v4623
  %v4747 = vadd.f32 %v4581, %v4627
  %v4748 = vadd.f32 %v3571, %v4599
  %v4749 = vadd.f32 %v3716, %v4603
  %v4750 = vadd.f32 %v3861, %v4607
  %v4751 = vadd.f32 %v4006, %v4611
  %v4752 = vadd.f32 %v4151, %v4615
  %v4753 = vadd.f32 %v4296, %v4619
  %v4754 = vadd.f32 %v4441, %v4623
  %v4755 = vadd.f32 %v4586, %v4627
  %v4756 = vadd.f32 %v3576, %v4599
  %v4757 = vadd.f32 %v3721, %v4603
  %v4758 = vadd.f32 %v3866, %v4607
  %v4759 = vadd.f32 %v4011, %v4611
  %v4760 = vadd.f32 %v4156, %v4615
  %v4761 = vadd.f32 %v4301, %v4619
  %v4762 = vadd.f32 %v4446, %v4623
  %v4763 = vadd.f32 %v4591, %v4627
  %vm4764 = vcmp.gt.f32.partialorder %v4636, 0.0
  %vm4765 = vcmp.gt.f32.partialorder %v4637, 0.0
  %vm4766 = vcmp.gt.f32.partialorder %v4638, 0.0
  %vm4767 = vcmp.gt.f32.partialorder %v4639, 0.0
  %vm4768 = vcmp.gt.f32.partialorder %v4640, 0.0
  %vm4769 = vcmp.gt.f32.partialorder %v4641, 0.0
  %vm4770 = vcmp.gt.f32.partialorder %v4642, 0.0
  %vm4771 = vcmp.gt.f32.partialorder %v4643, 0.0
  %vm4772 = vcmp.gt.f32.partialorder %v4644, 0.0
  %vm4773 = vcmp.gt.f32.partialorder %v4645, 0.0
  %vm4774 = vcmp.gt.f32.partialorder %v4646, 0.0
  %vm4775 = vcmp.gt.f32.partialorder %v4647, 0.0
  %vm4776 = vcmp.gt.f32.partialorder %v4648, 0.0
  %vm4777 = vcmp.gt.f32.partialorder %v4649, 0.0
  %vm4778 = vcmp.gt.f32.partialorder %v4650, 0.0
  %vm4779 = vcmp.gt.f32.partialorder %v4651, 0.0
  %vm4780 = vcmp.gt.f32.partialorder %v4652, 0.0
  %vm4781 = vcmp.gt.f32.partialorder %v4653, 0.0
  %vm4782 = vcmp.gt.f32.partialorder %v4654, 0.0
  %vm4783 = vcmp.gt.f32.partialorder %v4655, 0.0
  %vm4784 = vcmp.gt.f32.partialorder %v4656, 0.0
  %vm4785 = vcmp.gt.f32.partialorder %v4657, 0.0
  %vm4786 = vcmp.gt.f32.partialorder %v4658, 0.0
  %vm4787 = vcmp.gt.f32.partialorder %v4659, 0.0
  %vm4788 = vcmp.gt.f32.partialorder %v4660, 0.0
  %vm4789 = vcmp.gt.f32.partialorder %v4661, 0.0
  %vm4790 = vcmp.gt.f32.partialorder %v4662, 0.0
  %vm4791 = vcmp.gt.f32.partialorder %v4663, 0.0
  %vm4792 = vcmp.gt.f32.partialorder %v4664, 0.0
  %vm4793 = vcmp.gt.f32.partialorder %v4665, 0.0
  %vm4794 = vcmp.gt.f32.partialorder %v4666, 0.0
  %vm4795 = vcmp.gt.f32.partialorder %v4667, 0.0
  %vm4796 = vcmp.gt.f32.partialorder %v4668, 0.0
  %vm4797 = vcmp.gt.f32.partialorder %v4669, 0.0
  %vm4798 = vcmp.gt.f32.partialorder %v4670, 0.0
  %vm4799 = vcmp.gt.f32.partialorder %v4671, 0.0
  %vm4800 = vcmp.gt.f32.partialorder %v4672, 0.0
  %vm4801 = vcmp.gt.f32.partialorder %v4673, 0.0
  %vm4802 = vcmp.gt.f32.partialorder %v4674, 0.0
  %vm4803 = vcmp.gt.f32.partialorder %v4675, 0.0
  %vm4804 = vcmp.gt.f32.partialorder %v4676, 0.0
  %vm4805 = vcmp.gt.f32.partialorder %v4677, 0.0
  %vm4806 = vcmp.gt.f32.partialorder %v4678, 0.0
  %vm4807 = vcmp.gt.f32.partialorder %v4679, 0.0
  %vm4808 = vcmp.gt.f32.partialorder %v4680, 0.0
  %vm4809 = vcmp.gt.f32.partialorder %v4681, 0.0
  %vm4810 = vcmp.gt.f32.partialorder %v4682, 0.0
  %vm4811 = vcmp.gt.f32.partialorder %v4683, 0.0
  %vm4812 = vcmp.gt.f32.partialorder %v4684, 0.0
  %vm4813 = vcmp.gt.f32.partialorder %v4685, 0.0
  %vm4814 = vcmp.gt.f32.partialorder %v4686, 0.0
  %vm4815 = vcmp.gt.f32.partialorder %v4687, 0.0
  %vm4816 = vcmp.gt.f32.partialorder %v4688, 0.0
  %vm4817 = vcmp.gt.f32.partialorder %v4689, 0.0
  %vm4818 = vcmp.gt.f32.partialorder %v4690, 0.0
  %vm4819 = vcmp.gt.f32.partialorder %v4691, 0.0
  %vm4820 = vcmp.gt.f32.partialorder %v4692, 0.0
  %vm4821 = vcmp.gt.f32.partialorder %v4693, 0.0
  %vm4822 = vcmp.gt.f32.partialorder %v4694, 0.0
  %vm4823 = vcmp.gt.f32.partialorder %v4695, 0.0
  %vm4824 = vcmp.gt.f32.partialorder %v4696, 0.0
  %vm4825 = vcmp.gt.f32.partialorder %v4697, 0.0
  %vm4826 = vcmp.gt.f32.partialorder %v4698, 0.0
  %vm4827 = vcmp.gt.f32.partialorder %v4699, 0.0
  %vm4828 = vcmp.gt.f32.partialorder %v4700, 0.0
  %vm4829 = vcmp.gt.f32.partialorder %v4701, 0.0
  %vm4830 = vcmp.gt.f32.partialorder %v4702, 0.0
  %vm4831 = vcmp.gt.f32.partialorder %v4703, 0.0
  %vm4832 = vcmp.gt.f32.partialorder %v4704, 0.0
  %vm4833 = vcmp.gt.f32.partialorder %v4705, 0.0
  %vm4834 = vcmp.gt.f32.partialorder %v4706, 0.0
  %vm4835 = vcmp.gt.f32.partialorder %v4707, 0.0
  %vm4836 = vcmp.gt.f32.partialorder %v4708, 0.0
  %vm4837 = vcmp.gt.f32.partialorder %v4709, 0.0
  %vm4838 = vcmp.gt.f32.partialorder %v4710, 0.0
  %vm4839 = vcmp.gt.f32.partialorder %v4711, 0.0
  %vm4840 = vcmp.gt.f32.partialorder %v4712, 0.0
  %vm4841 = vcmp.gt.f32.partialorder %v4713, 0.0
  %vm4842 = vcmp.gt.f32.partialorder %v4714, 0.0
  %vm4843 = vcmp.gt.f32.partialorder %v4715, 0.0
  %vm4844 = vcmp.gt.f32.partialorder %v4716, 0.0
  %vm4845 = vcmp.gt.f32.partialorder %v4717, 0.0
  %vm4846 = vcmp.gt.f32.partialorder %v4718, 0.0
  %vm4847 = vcmp.gt.f32.partialorder %v4719, 0.0
  %vm4848 = vcmp.gt.f32.partialorder %v4720, 0.0
  %vm4849 = vcmp.gt.f32.partialorder %v4721, 0.0
  %vm4850 = vcmp.gt.f32.partialorder %v4722, 0.0
  %vm4851 = vcmp.gt.f32.partialorder %v4723, 0.0
  %vm4852 = vcmp.gt.f32.partialorder %v4724, 0.0
  %vm4853 = vcmp.gt.f32.partialorder %v4725, 0.0
  %vm4854 = vcmp.gt.f32.partialorder %v4726, 0.0
  %vm4855 = vcmp.gt.f32.partialorder %v4727, 0.0
  %vm4856 = vcmp.gt.f32.partialorder %v4728, 0.0
  %vm4857 = vcmp.gt.f32.partialorder %v4729, 0.0
  %vm4858 = vcmp.gt.f32.partialorder %v4730, 0.0
  %vm4859 = vcmp.gt.f32.partialorder %v4731, 0.0
  %vm4860 = vcmp.gt.f32.partialorder %v4732, 0.0
  %vm4861 = vcmp.gt.f32.partialorder %v4733, 0.0
  %vm4862 = vcmp.gt.f32.partialorder %v4734, 0.0
  %vm4863 = vcmp.gt.f32.partialorder %v4735, 0.0
  %vm4864 = vcmp.gt.f32.partialorder %v4736, 0.0
  %vm4865 = vcmp.gt.f32.partialorder %v4737, 0.0
  %vm4866 = vcmp.gt.f32.partialorder %v4738, 0.0
  %vm4867 = vcmp.gt.f32.partialorder %v4739, 0.0
  %vm4868 = vcmp.gt.f32.partialorder %v4740, 0.0
  %vm4869 = vcmp.gt.f32.partialorder %v4741, 0.0
  %vm4870 = vcmp.gt.f32.partialorder %v4742, 0.0
  %vm4871 = vcmp.gt.f32.partialorder %v4743, 0.0
  %vm4872 = vcmp.gt.f32.partialorder %v4744, 0.0
  %vm4873 = vcmp.gt.f32.partialorder %v4745, 0.0
  %vm4874 = vcmp.gt.f32.partialorder %v4746, 0.0
  %vm4875 = vcmp.gt.f32.partialorder %v4747, 0.0
  %vm4876 = vcmp.gt.f32.partialorder %v4748, 0.0
  %vm4877 = vcmp.gt.f32.partialorder %v4749, 0.0
  %vm4878 = vcmp.gt.f32.partialorder %v4750, 0.0
  %vm4879 = vcmp.gt.f32.partialorder %v4751, 0.0
  %vm4880 = vcmp.gt.f32.partialorder %v4752, 0.0
  %vm4881 = vcmp.gt.f32.partialorder %v4753, 0.0
  %vm4882 = vcmp.gt.f32.partialorder %v4754, 0.0
  %vm4883 = vcmp.gt.f32.partialorder %v4755, 0.0
  %vm4884 = vcmp.gt.f32.partialorder %v4756, 0.0
  %vm4885 = vcmp.gt.f32.partialorder %v4757, 0.0
  %vm4886 = vcmp.gt.f32.partialorder %v4758, 0.0
  %vm4887 = vcmp.gt.f32.partialorder %v4759, 0.0
  %vm4888 = vcmp.gt.f32.partialorder %v4760, 0.0
  %vm4889 = vcmp.gt.f32.partialorder %v4761, 0.0
  %vm4890 = vcmp.gt.f32.partialorder %v4762, 0.0
  %vm4891 = vcmp.gt.f32.partialorder %v4763, 0.0
  %v4892 = vmin.f32 %v4636, 0.0
  %v4893 = vmin.f32 %v4637, 0.0
  %v4894 = vmin.f32 %v4638, 0.0
  %v4895 = vmin.f32 %v4639, 0.0
  %v4896 = vmin.f32 %v4640, 0.0
  %v4897 = vmin.f32 %v4641, 0.0
  %v4898 = vmin.f32 %v4642, 0.0
  %v4899 = vmin.f32 %v4643, 0.0
  %v4900 = vmin.f32 %v4644, 0.0
  %v4901 = vmin.f32 %v4645, 0.0
  %v4902 = vmin.f32 %v4646, 0.0
  %v4903 = vmin.f32 %v4647, 0.0
  %v4904 = vmin.f32 %v4648, 0.0
  %v4905 = vmin.f32 %v4649, 0.0
  %v4906 = vmin.f32 %v4650, 0.0
  %v4907 = vmin.f32 %v4651, 0.0
  %v4908 = vmin.f32 %v4652, 0.0
  %v4909 = vmin.f32 %v4653, 0.0
  %v4910 = vmin.f32 %v4654, 0.0
  %v4911 = vmin.f32 %v4655, 0.0
  %v4912 = vmin.f32 %v4656, 0.0
  %v4913 = vmin.f32 %v4657, 0.0
  %v4914 = vmin.f32 %v4658, 0.0
  %v4915 = vmin.f32 %v4659, 0.0
  %v4916 = vmin.f32 %v4660, 0.0
  %v4917 = vmin.f32 %v4661, 0.0
  %v4918 = vmin.f32 %v4662, 0.0
  %v4919 = vmin.f32 %v4663, 0.0
  %v4920 = vmin.f32 %v4664, 0.0
  %v4921 = vmin.f32 %v4665, 0.0
  %v4922 = vmin.f32 %v4666, 0.0
  %v4923 = vmin.f32 %v4667, 0.0
  %v4924 = vmin.f32 %v4668, 0.0
  %v4925 = vmin.f32 %v4669, 0.0
  %v4926 = vmin.f32 %v4670, 0.0
  %v4927 = vmin.f32 %v4671, 0.0
  %v4928 = vmin.f32 %v4672, 0.0
  %v4929 = vmin.f32 %v4673, 0.0
  %v4930 = vmin.f32 %v4674, 0.0
  %v4931 = vmin.f32 %v4675, 0.0
  %v4932 = vmin.f32 %v4676, 0.0
  %v4933 = vmin.f32 %v4677, 0.0
  %v4934 = vmin.f32 %v4678, 0.0
  %v4935 = vmin.f32 %v4679, 0.0
  %v4936 = vmin.f32 %v4680, 0.0
  %v4937 = vmin.f32 %v4681, 0.0
  %v4938 = vmin.f32 %v4682, 0.0
  %v4939 = vmin.f32 %v4683, 0.0
  %v4940 = vmin.f32 %v4684, 0.0
  %v4941 = vmin.f32 %v4685, 0.0
  %v4942 = vmin.f32 %v4686, 0.0
  %v4943 = vmin.f32 %v4687, 0.0
  %v4944 = vmin.f32 %v4688, 0.0
  %v4945 = vmin.f32 %v4689, 0.0
  %v4946 = vmin.f32 %v4690, 0.0
  %v4947 = vmin.f32 %v4691, 0.0
  %v4948 = vmin.f32 %v4692, 0.0
  %v4949 = vmin.f32 %v4693, 0.0
  %v4950 = vmin.f32 %v4694, 0.0
  %v4951 = vmin.f32 %v4695, 0.0
  %v4952 = vmin.f32 %v4696, 0.0
  %v4953 = vmin.f32 %v4697, 0.0
  %v4954 = vmin.f32 %v4698, 0.0
  %v4955 = vmin.f32 %v4699, 0.0
  %v4956 = vmin.f32 %v4700, 0.0
  %v4957 = vmin.f32 %v4701, 0.0
  %v4958 = vmin.f32 %v4702, 0.0
  %v4959 = vmin.f32 %v4703, 0.0
  %v4960 = vmin.f32 %v4704, 0.0
  %v4961 = vmin.f32 %v4705, 0.0
  %v4962 = vmin.f32 %v4706, 0.0
  %v4963 = vmin.f32 %v4707, 0.0
  %v4964 = vmin.f32 %v4708, 0.0
  %v4965 = vmin.f32 %v4709, 0.0
  %v4966 = vmin.f32 %v4710, 0.0
  %v4967 = vmin.f32 %v4711, 0.0
  %v4968 = vmin.f32 %v4712, 0.0
  %v4969 = vmin.f32 %v4713, 0.0
  %v4970 = vmin.f32 %v4714, 0.0
  %v4971 = vmin.f32 %v4715, 0.0
  %v4972 = vmin.f32 %v4716, 0.0
  %v4973 = vmin.f32 %v4717, 0.0
  %v4974 = vmin.f32 %v4718, 0.0
  %v4975 = vmin.f32 %v4719, 0.0
  %v4976 = vmin.f32 %v4720, 0.0
  %v4977 = vmin.f32 %v4721, 0.0
  %v4978 = vmin.f32 %v4722, 0.0
  %v4979 = vmin.f32 %v4723, 0.0
  %v4980 = vmin.f32 %v4724, 0.0
  %v4981 = vmin.f32 %v4725, 0.0
  %v4982 = vmin.f32 %v4726, 0.0
  %v4983 = vmin.f32 %v4727, 0.0
  %v4984 = vmin.f32 %v4728, 0.0
  %v4985 = vmin.f32 %v4729, 0.0
  %v4986 = vmin.f32 %v4730, 0.0
  %v4987 = vmin.f32 %v4731, 0.0
  %v4988 = vmin.f32 %v4732, 0.0
  %v4989 = vmin.f32 %v4733, 0.0
  %v4990 = vmin.f32 %v4734, 0.0
  %v4991 = vmin.f32 %v4735, 0.0
  %v4992 = vmin.f32 %v4736, 0.0
  %v4993 = vmin.f32 %v4737, 0.0
  %v4994 = vmin.f32 %v4738, 0.0
  %v4995 = vmin.f32 %v4739, 0.0
  %v4996 = vmin.f32 %v4740, 0.0
  %v4997 = vmin.f32 %v4741, 0.0
  %v4998 = vmin.f32 %v4742, 0.0
  %v4999 = vmin.f32 %v4743, 0.0
  %v5000 = vmin.f32 %v4744, 0.0
  %v5001 = vmin.f32 %v4745, 0.0
  %v5002 = vmin.f32 %v4746, 0.0
  %v5003 = vmin.f32 %v4747, 0.0
  %v5004 = vmin.f32 %v4748, 0.0
  %v5005 = vmin.f32 %v4749, 0.0
  %v5006 = vmin.f32 %v4750, 0.0
  %v5007 = vmin.f32 %v4751, 0.0
  %v5008 = vmin.f32 %v4752, 0.0
  %v5009 = vmin.f32 %v4753, 0.0
  %v5010 = vmin.f32 %v4754, 0.0
  %v5011 = vmin.f32 %v4755, 0.0
  %v5012 = vmin.f32 %v4756, 0.0
  %v5013 = vmin.f32 %v4757, 0.0
  %v5014 = vmin.f32 %v4758, 0.0
  %v5015 = vmin.f32 %v4759, 0.0
  %v5016 = vmin.f32 %v4760, 0.0
  %v5017 = vmin.f32 %v4761, 0.0
  %v5018 = vmin.f32 %v4762, 0.0
  %v5019 = vmin.f32 %v4763, 0.0
  %v5020 = vmul.f32 %v4892, 1.442695
  %v5021 = vpow.pop %v5020
  %v5022 = vmul.f32 %v4893, 1.442695
  %v5023 = vpow.pop %v5022
  %v5024 = vmul.f32 %v4894, 1.442695
  %v5025 = vpow.pop %v5024
  %v5026 = vmul.f32 %v4895, 1.442695
  %v5027 = vpow.pop %v5026
  %v5028 = vmul.f32 %v4896, 1.442695
  %v5029 = vpow.pop %v5028
  %v5030 = vmul.f32 %v4897, 1.442695
  %v5031 = vpow.pop %v5030
  %v5032 = vmul.f32 %v4898, 1.442695
  %v5033 = vpow.pop %v5032
  %v5034 = vmul.f32 %v4899, 1.442695
  %v5035 = vpow.pop %v5034
  %v5036 = vmul.f32 %v4900, 1.442695
  %v5037 = vpow.pop %v5036
  %v5038 = vmul.f32 %v4901, 1.442695
  %v5039 = vpow.pop %v5038
  %v5040 = vmul.f32 %v4902, 1.442695
  %v5041 = vpow.pop %v5040
  %v5042 = vmul.f32 %v4903, 1.442695
  %v5043 = vpow.pop %v5042
  %v5044 = vmul.f32 %v4904, 1.442695
  %v5045 = vpow.pop %v5044
  %v5046 = vmul.f32 %v4905, 1.442695
  %v5047 = vpow.pop %v5046
  %v5048 = vmul.f32 %v4906, 1.442695
  %v5049 = vpow.pop %v5048
  %v5050 = vmul.f32 %v4907, 1.442695
  %v5051 = vpow.pop %v5050
  %v5052 = vmul.f32 %v4908, 1.442695
  %v5053 = vpow.pop %v5052
  %v5054 = vmul.f32 %v4909, 1.442695
  %v5055 = vpow.pop %v5054
  %v5056 = vmul.f32 %v4910, 1.442695
  %v5057 = vpow.pop %v5056
  %v5058 = vmul.f32 %v4911, 1.442695
  %v5059 = vpow.pop %v5058
  %v5060 = vmul.f32 %v4912, 1.442695
  %v5061 = vpow.pop %v5060
  %v5062 = vmul.f32 %v4913, 1.442695
  %v5063 = vpow.pop %v5062
  %v5064 = vmul.f32 %v4914, 1.442695
  %v5065 = vpow.pop %v5064
  %v5066 = vmul.f32 %v4915, 1.442695
  %v5067 = vpow.pop %v5066
  %v5068 = vmul.f32 %v4916, 1.442695
  %v5069 = vpow.pop %v5068
  %v5070 = vmul.f32 %v4917, 1.442695
  %v5071 = vpow.pop %v5070
  %v5072 = vmul.f32 %v4918, 1.442695
  %v5073 = vpow.pop %v5072
  %v5074 = vmul.f32 %v4919, 1.442695
  %v5075 = vpow.pop %v5074
  %v5076 = vmul.f32 %v4920, 1.442695
  %v5077 = vpow.pop %v5076
  %v5078 = vmul.f32 %v4921, 1.442695
  %v5079 = vpow.pop %v5078
  %v5080 = vmul.f32 %v4922, 1.442695
  %v5081 = vpow.pop %v5080
  %v5082 = vmul.f32 %v4923, 1.442695
  %v5083 = vpow.pop %v5082
  %v5084 = vmul.f32 %v4924, 1.442695
  %v5085 = vpow.pop %v5084
  %v5086 = vmul.f32 %v4925, 1.442695
  %v5087 = vpow.pop %v5086
  %v5088 = vmul.f32 %v4926, 1.442695
  %v5089 = vpow.pop %v5088
  %v5090 = vmul.f32 %v4927, 1.442695
  %v5091 = vpow.pop %v5090
  %v5092 = vmul.f32 %v4928, 1.442695
  %v5093 = vpow.pop %v5092
  %v5094 = vmul.f32 %v4929, 1.442695
  %v5095 = vpow.pop %v5094
  %v5096 = vmul.f32 %v4930, 1.442695
  %v5097 = vpow.pop %v5096
  %v5098 = vmul.f32 %v4931, 1.442695
  %v5099 = vpow.pop %v5098
  %v5100 = vmul.f32 %v4932, 1.442695
  %v5101 = vpow.pop %v5100
  %v5102 = vmul.f32 %v4933, 1.442695
  %v5103 = vpow.pop %v5102
  %v5104 = vmul.f32 %v4934, 1.442695
  %v5105 = vpow.pop %v5104
  %v5106 = vmul.f32 %v4935, 1.442695
  %v5107 = vpow.pop %v5106
  %v5108 = vmul.f32 %v4936, 1.442695
  %v5109 = vpow.pop %v5108
  %v5110 = vmul.f32 %v4937, 1.442695
  %v5111 = vpow.pop %v5110
  %v5112 = vmul.f32 %v4938, 1.442695
  %v5113 = vpow.pop %v5112
  %v5114 = vmul.f32 %v4939, 1.442695
  %v5115 = vpow.pop %v5114
  %v5116 = vmul.f32 %v4940, 1.442695
  %v5117 = vpow.pop %v5116
  %v5118 = vmul.f32 %v4941, 1.442695
  %v5119 = vpow.pop %v5118
  %v5120 = vmul.f32 %v4942, 1.442695
  %v5121 = vpow.pop %v5120
  %v5122 = vmul.f32 %v4943, 1.442695
  %v5123 = vpow.pop %v5122
  %v5124 = vmul.f32 %v4944, 1.442695
  %v5125 = vpow.pop %v5124
  %v5126 = vmul.f32 %v4945, 1.442695
  %v5127 = vpow.pop %v5126
  %v5128 = vmul.f32 %v4946, 1.442695
  %v5129 = vpow.pop %v5128
  %v5130 = vmul.f32 %v4947, 1.442695
  %v5131 = vpow.pop %v5130
  %v5132 = vmul.f32 %v4948, 1.442695
  %v5133 = vpow.pop %v5132
  %v5134 = vmul.f32 %v4949, 1.442695
  %v5135 = vpow.pop %v5134
  %v5136 = vmul.f32 %v4950, 1.442695
  %v5137 = vpow.pop %v5136
  %v5138 = vmul.f32 %v4951, 1.442695
  %v5139 = vpow.pop %v5138
  %v5140 = vmul.f32 %v4952, 1.442695
  %v5141 = vpow.pop %v5140
  %v5142 = vmul.f32 %v4953, 1.442695
  %v5143 = vpow.pop %v5142
  %v5144 = vmul.f32 %v4954, 1.442695
  %v5145 = vpow.pop %v5144
  %v5146 = vmul.f32 %v4955, 1.442695
  %v5147 = vpow.pop %v5146
  %v5148 = vmul.f32 %v4956, 1.442695
  %v5149 = vpow.pop %v5148
  %v5150 = vmul.f32 %v4957, 1.442695
  %v5151 = vpow.pop %v5150
  %v5152 = vmul.f32 %v4958, 1.442695
  %v5153 = vpow.pop %v5152
  %v5154 = vmul.f32 %v4959, 1.442695
  %v5155 = vpow.pop %v5154
  %v5156 = vmul.f32 %v4960, 1.442695
  %v5157 = vpow.pop %v5156
  %v5158 = vmul.f32 %v4961, 1.442695
  %v5159 = vpow.pop %v5158
  %v5160 = vmul.f32 %v4962, 1.442695
  %v5161 = vpow.pop %v5160
  %v5162 = vmul.f32 %v4963, 1.442695
  %v5163 = vpow.pop %v5162
  %v5164 = vmul.f32 %v4964, 1.442695
  %v5165 = vpow.pop %v5164
  %v5166 = vmul.f32 %v4965, 1.442695
  %v5167 = vpow.pop %v5166
  %v5168 = vmul.f32 %v4966, 1.442695
  %v5169 = vpow.pop %v5168
  %v5170 = vmul.f32 %v4967, 1.442695
  %v5171 = vpow.pop %v5170
  %v5172 = vmul.f32 %v4968, 1.442695
  %v5173 = vpow.pop %v5172
  %v5174 = vmul.f32 %v4969, 1.442695
  %v5175 = vpow.pop %v5174
  %v5176 = vmul.f32 %v4970, 1.442695
  %v5177 = vpow.pop %v5176
  %v5178 = vmul.f32 %v4971, 1.442695
  %v5179 = vpow.pop %v5178
  %v5180 = vmul.f32 %v4972, 1.442695
  %v5181 = vpow.pop %v5180
  %v5182 = vmul.f32 %v4973, 1.442695
  %v5183 = vpow.pop %v5182
  %v5184 = vmul.f32 %v4974, 1.442695
  %v5185 = vpow.pop %v5184
  %v5186 = vmul.f32 %v4975, 1.442695
  %v5187 = vpow.pop %v5186
  %v5188 = vmul.f32 %v4976, 1.442695
  %v5189 = vpow.pop %v5188
  %v5190 = vmul.f32 %v4977, 1.442695
  %v5191 = vpow.pop %v5190
  %v5192 = vmul.f32 %v4978, 1.442695
  %v5193 = vpow.pop %v5192
  %v5194 = vmul.f32 %v4979, 1.442695
  %v5195 = vpow.pop %v5194
  %v5196 = vmul.f32 %v4980, 1.442695
  %v5197 = vpow.pop %v5196
  %v5198 = vmul.f32 %v4981, 1.442695
  %v5199 = vpow.pop %v5198
  %v5200 = vmul.f32 %v4982, 1.442695
  %v5201 = vpow.pop %v5200
  %v5202 = vmul.f32 %v4983, 1.442695
  %v5203 = vpow.pop %v5202
  %v5204 = vmul.f32 %v4984, 1.442695
  %v5205 = vpow.pop %v5204
  %v5206 = vmul.f32 %v4985, 1.442695
  %v5207 = vpow.pop %v5206
  %v5208 = vmul.f32 %v4986, 1.442695
  %v5209 = vpow.pop %v5208
  %v5210 = vmul.f32 %v4987, 1.442695
  %v5211 = vpow.pop %v5210
  %v5212 = vmul.f32 %v4988, 1.442695
  %v5213 = vpow.pop %v5212
  %v5214 = vmul.f32 %v4989, 1.442695
  %v5215 = vpow.pop %v5214
  %v5216 = vmul.f32 %v4990, 1.442695
  %v5217 = vpow.pop %v5216
  %v5218 = vmul.f32 %v4991, 1.442695
  %v5219 = vpow.pop %v5218
  %v5220 = vmul.f32 %v4992, 1.442695
  %v5221 = vpow.pop %v5220
  %v5222 = vmul.f32 %v4993, 1.442695
  %v5223 = vpow.pop %v5222
  %v5224 = vmul.f32 %v4994, 1.442695
  %v5225 = vpow.pop %v5224
  %v5226 = vmul.f32 %v4995, 1.442695
  %v5227 = vpow.pop %v5226
  %v5228 = vmul.f32 %v4996, 1.442695
  %v5229 = vpow.pop %v5228
  %v5230 = vmul.f32 %v4997, 1.442695
  %v5231 = vpow.pop %v5230
  %v5232 = vmul.f32 %v4998, 1.442695
  %v5233 = vpow.pop %v5232
  %v5234 = vmul.f32 %v4999, 1.442695
  %v5235 = vpow.pop %v5234
  %v5236 = vmul.f32 %v5000, 1.442695
  %v5237 = vpow.pop %v5236
  %v5238 = vmul.f32 %v5001, 1.442695
  %v5239 = vpow.pop %v5238
  %v5240 = vmul.f32 %v5002, 1.442695
  %v5241 = vpow.pop %v5240
  %v5242 = vmul.f32 %v5003, 1.442695
  %v5243 = vpow.pop %v5242
  %v5244 = vmul.f32 %v5004, 1.442695
  %v5245 = vpow.pop %v5244
  %v5246 = vmul.f32 %v5005, 1.442695
  %v5247 = vpow.pop %v5246
  %v5248 = vmul.f32 %v5006, 1.442695
  %v5249 = vpow.pop %v5248
  %v5250 = vmul.f32 %v5007, 1.442695
  %v5251 = vpow.pop %v5250
  %v5252 = vmul.f32 %v5008, 1.442695
  %v5253 = vpow.pop %v5252
  %v5254 = vmul.f32 %v5009, 1.442695
  %v5255 = vpow.pop %v5254
  %v5256 = vmul.f32 %v5010, 1.442695
  %v5257 = vpow.pop %v5256
  %v5258 = vmul.f32 %v5011, 1.442695
  %v5259 = vpow.pop %v5258
  %v5260 = vmul.f32 %v5012, 1.442695
  %v5261 = vpow.pop %v5260
  %v5262 = vmul.f32 %v5013, 1.442695
  %v5263 = vpow.pop %v5262
  %v5264 = vmul.f32 %v5014, 1.442695
  %v5265 = vpow.pop %v5264
  %v5266 = vmul.f32 %v5015, 1.442695
  %v5267 = vpow.pop %v5266
  %v5268 = vmul.f32 %v5016, 1.442695
  %v5269 = vpow.pop %v5268
  %v5270 = vmul.f32 %v5017, 1.442695
  %v5271 = vpow.pop %v5270
  %v5272 = vmul.f32 %v5018, 1.442695
  %v5273 = vpow.pop %v5272
  %v5274 = vmul.f32 %v5019, 1.442695
  %v5275 = vpow.pop %v5274
  %v5276 = vsub.f32 %v5021, 1.0
  %v5277 = vsub.f32 %v5023, 1.0
  %v5278 = vsub.f32 %v5025, 1.0
  %v5279 = vsub.f32 %v5027, 1.0
  %v5280 = vsub.f32 %v5029, 1.0
  %v5281 = vsub.f32 %v5031, 1.0
  %v5282 = vsub.f32 %v5033, 1.0
  %v5283 = vsub.f32 %v5035, 1.0
  %v5284 = vsub.f32 %v5037, 1.0
  %v5285 = vsub.f32 %v5039, 1.0
  %v5286 = vsub.f32 %v5041, 1.0
  %v5287 = vsub.f32 %v5043, 1.0
  %v5288 = vsub.f32 %v5045, 1.0
  %v5289 = vsub.f32 %v5047, 1.0
  %v5290 = vsub.f32 %v5049, 1.0
  %v5291 = vsub.f32 %v5051, 1.0
  %v5292 = vsub.f32 %v5053, 1.0
  %v5293 = vsub.f32 %v5055, 1.0
  %v5294 = vsub.f32 %v5057, 1.0
  %v5295 = vsub.f32 %v5059, 1.0
  %v5296 = vsub.f32 %v5061, 1.0
  %v5297 = vsub.f32 %v5063, 1.0
  %v5298 = vsub.f32 %v5065, 1.0
  %v5299 = vsub.f32 %v5067, 1.0
  %v5300 = vsub.f32 %v5069, 1.0
  %v5301 = vsub.f32 %v5071, 1.0
  %v5302 = vsub.f32 %v5073, 1.0
  %v5303 = vsub.f32 %v5075, 1.0
  %v5304 = vsub.f32 %v5077, 1.0
  %v5305 = vsub.f32 %v5079, 1.0
  %v5306 = vsub.f32 %v5081, 1.0
  %v5307 = vsub.f32 %v5083, 1.0
  %v5308 = vsub.f32 %v5085, 1.0
  %v5309 = vsub.f32 %v5087, 1.0
  %v5310 = vsub.f32 %v5089, 1.0
  %v5311 = vsub.f32 %v5091, 1.0
  %v5312 = vsub.f32 %v5093, 1.0
  %v5313 = vsub.f32 %v5095, 1.0
  %v5314 = vsub.f32 %v5097, 1.0
  %v5315 = vsub.f32 %v5099, 1.0
  %v5316 = vsub.f32 %v5101, 1.0
  %v5317 = vsub.f32 %v5103, 1.0
  %v5318 = vsub.f32 %v5105, 1.0
  %v5319 = vsub.f32 %v5107, 1.0
  %v5320 = vsub.f32 %v5109, 1.0
  %v5321 = vsub.f32 %v5111, 1.0
  %v5322 = vsub.f32 %v5113, 1.0
  %v5323 = vsub.f32 %v5115, 1.0
  %v5324 = vsub.f32 %v5117, 1.0
  %v5325 = vsub.f32 %v5119, 1.0
  %v5326 = vsub.f32 %v5121, 1.0
  %v5327 = vsub.f32 %v5123, 1.0
  %v5328 = vsub.f32 %v5125, 1.0
  %v5329 = vsub.f32 %v5127, 1.0
  %v5330 = vsub.f32 %v5129, 1.0
  %v5331 = vsub.f32 %v5131, 1.0
  %v5332 = vsub.f32 %v5133, 1.0
  %v5333 = vsub.f32 %v5135, 1.0
  %v5334 = vsub.f32 %v5137, 1.0
  %v5335 = vsub.f32 %v5139, 1.0
  %v5336 = vsub.f32 %v5141, 1.0
  %v5337 = vsub.f32 %v5143, 1.0
  %v5338 = vsub.f32 %v5145, 1.0
  %v5339 = vsub.f32 %v5147, 1.0
  %v5340 = vsub.f32 %v5149, 1.0
  %v5341 = vsub.f32 %v5151, 1.0
  %v5342 = vsub.f32 %v5153, 1.0
  %v5343 = vsub.f32 %v5155, 1.0
  %v5344 = vsub.f32 %v5157, 1.0
  %v5345 = vsub.f32 %v5159, 1.0
  %v5346 = vsub.f32 %v5161, 1.0
  %v5347 = vsub.f32 %v5163, 1.0
  %v5348 = vsub.f32 %v5165, 1.0
  %v5349 = vsub.f32 %v5167, 1.0
  %v5350 = vsub.f32 %v5169, 1.0
  %v5351 = vsub.f32 %v5171, 1.0
  %v5352 = vsub.f32 %v5173, 1.0
  %v5353 = vsub.f32 %v5175, 1.0
  %v5354 = vsub.f32 %v5177, 1.0
  %v5355 = vsub.f32 %v5179, 1.0
  %v5356 = vsub.f32 %v5181, 1.0
  %v5357 = vsub.f32 %v5183, 1.0
  %v5358 = vsub.f32 %v5185, 1.0
  %v5359 = vsub.f32 %v5187, 1.0
  %v5360 = vsub.f32 %v5189, 1.0
  %v5361 = vsub.f32 %v5191, 1.0
  %v5362 = vsub.f32 %v5193, 1.0
  %v5363 = vsub.f32 %v5195, 1.0
  %v5364 = vsub.f32 %v5197, 1.0
  %v5365 = vsub.f32 %v5199, 1.0
  %v5366 = vsub.f32 %v5201, 1.0
  %v5367 = vsub.f32 %v5203, 1.0
  %v5368 = vsub.f32 %v5205, 1.0
  %v5369 = vsub.f32 %v5207, 1.0
  %v5370 = vsub.f32 %v5209, 1.0
  %v5371 = vsub.f32 %v5211, 1.0
  %v5372 = vsub.f32 %v5213, 1.0
  %v5373 = vsub.f32 %v5215, 1.0
  %v5374 = vsub.f32 %v5217, 1.0
  %v5375 = vsub.f32 %v5219, 1.0
  %v5376 = vsub.f32 %v5221, 1.0
  %v5377 = vsub.f32 %v5223, 1.0
  %v5378 = vsub.f32 %v5225, 1.0
  %v5379 = vsub.f32 %v5227, 1.0
  %v5380 = vsub.f32 %v5229, 1.0
  %v5381 = vsub.f32 %v5231, 1.0
  %v5382 = vsub.f32 %v5233, 1.0
  %v5383 = vsub.f32 %v5235, 1.0
  %v5384 = vsub.f32 %v5237, 1.0
  %v5385 = vsub.f32 %v5239, 1.0
  %v5386 = vsub.f32 %v5241, 1.0
  %v5387 = vsub.f32 %v5243, 1.0
  %v5388 = vsub.f32 %v5245, 1.0
  %v5389 = vsub.f32 %v5247, 1.0
  %v5390 = vsub.f32 %v5249, 1.0
  %v5391 = vsub.f32 %v5251, 1.0
  %v5392 = vsub.f32 %v5253, 1.0
  %v5393 = vsub.f32 %v5255, 1.0
  %v5394 = vsub.f32 %v5257, 1.0
  %v5395 = vsub.f32 %v5259, 1.0
  %v5396 = vsub.f32 %v5261, 1.0
  %v5397 = vsub.f32 %v5263, 1.0
  %v5398 = vsub.f32 %v5265, 1.0
  %v5399 = vsub.f32 %v5267, 1.0
  %v5400 = vsub.f32 %v5269, 1.0
  %v5401 = vsub.f32 %v5271, 1.0
  %v5402 = vsub.f32 %v5273, 1.0
  %v5403 = vsub.f32 %v5275, 1.0
  %v5404 = vsel %vm4764, %v4636, %v5276
  %v5405 = vsel %vm4765, %v4637, %v5277
  %v5406 = vsel %vm4766, %v4638, %v5278
  %v5407 = vsel %vm4767, %v4639, %v5279
  %v5408 = vsel %vm4768, %v4640, %v5280
  %v5409 = vsel %vm4769, %v4641, %v5281
  %v5410 = vsel %vm4770, %v4642, %v5282
  %v5411 = vsel %vm4771, %v4643, %v5283
  %v5412 = vsel %vm4772, %v4644, %v5284
  %v5413 = vsel %vm4773, %v4645, %v5285
  %v5414 = vsel %vm4774, %v4646, %v5286
  %v5415 = vsel %vm4775, %v4647, %v5287
  %v5416 = vsel %vm4776, %v4648, %v5288
  %v5417 = vsel %vm4777, %v4649, %v5289
  %v5418 = vsel %vm4778, %v4650, %v5290
  %v5419 = vsel %vm4779, %v4651, %v5291
  %v5420 = vsel %vm4780, %v4652, %v5292
  %v5421 = vsel %vm4781, %v4653, %v5293
  %v5422 = vsel %vm4782, %v4654, %v5294
  %v5423 = vsel %vm4783, %v4655, %v5295
  %v5424 = vsel %vm4784, %v4656, %v5296
  %v5425 = vsel %vm4785, %v4657, %v5297
  %v5426 = vsel %vm4786, %v4658, %v5298
  %v5427 = vsel %vm4787, %v4659, %v5299
  %v5428 = vsel %vm4788, %v4660, %v5300
  %v5429 = vsel %vm4789, %v4661, %v5301
  %v5430 = vsel %vm4790, %v4662, %v5302
  %v5431 = vsel %vm4791, %v4663, %v5303
  %v5432 = vsel %vm4792, %v4664, %v5304
  %v5433 = vsel %vm4793, %v4665, %v5305
  %v5434 = vsel %vm4794, %v4666, %v5306
  %v5435 = vsel %vm4795, %v4667, %v5307
  %v5436 = vsel %vm4796, %v4668, %v5308
  %v5437 = vsel %vm4797, %v4669, %v5309
  %v5438 = vsel %vm4798, %v4670, %v5310
  %v5439 = vsel %vm4799, %v4671, %v5311
  %v5440 = vsel %vm4800, %v4672, %v5312
  %v5441 = vsel %vm4801, %v4673, %v5313
  %v5442 = vsel %vm4802, %v4674, %v5314
  %v5443 = vsel %vm4803, %v4675, %v5315
  %v5444 = vsel %vm4804, %v4676, %v5316
  %v5445 = vsel %vm4805, %v4677, %v5317
  %v5446 = vsel %vm4806, %v4678, %v5318
  %v5447 = vsel %vm4807, %v4679, %v5319
  %v5448 = vsel %vm4808, %v4680, %v5320
  %v5449 = vsel %vm4809, %v4681, %v5321
  %v5450 = vsel %vm4810, %v4682, %v5322
  %v5451 = vsel %vm4811, %v4683, %v5323
  %v5452 = vsel %vm4812, %v4684, %v5324
  %v5453 = vsel %vm4813, %v4685, %v5325
  %v5454 = vsel %vm4814, %v4686, %v5326
  %v5455 = vsel %vm4815, %v4687, %v5327
  %v5456 = vsel %vm4816, %v4688, %v5328
  %v5457 = vsel %vm4817, %v4689, %v5329
  %v5458 = vsel %vm4818, %v4690, %v5330
  %v5459 = vsel %vm4819, %v4691, %v5331
  %v5460 = vsel %vm4820, %v4692, %v5332
  %v5461 = vsel %vm4821, %v4693, %v5333
  %v5462 = vsel %vm4822, %v4694, %v5334
  %v5463 = vsel %vm4823, %v4695, %v5335
  %v5464 = vsel %vm4824, %v4696, %v5336
  %v5465 = vsel %vm4825, %v4697, %v5337
  %v5466 = vsel %vm4826, %v4698, %v5338
  %v5467 = vsel %vm4827, %v4699, %v5339
  %v5468 = vsel %vm4828, %v4700, %v5340
  %v5469 = vsel %vm4829, %v4701, %v5341
  %v5470 = vsel %vm4830, %v4702, %v5342
  %v5471 = vsel %vm4831, %v4703, %v5343
  %v5472 = vsel %vm4832, %v4704, %v5344
  %v5473 = vsel %vm4833, %v4705, %v5345
  %v5474 = vsel %vm4834, %v4706, %v5346
  %v5475 = vsel %vm4835, %v4707, %v5347
  %v5476 = vsel %vm4836, %v4708, %v5348
  %v5477 = vsel %vm4837, %v4709, %v5349
  %v5478 = vsel %vm4838, %v4710, %v5350
  %v5479 = vsel %vm4839, %v4711, %v5351
  %v5480 = vsel %vm4840, %v4712, %v5352
  %v5481 = vsel %vm4841, %v4713, %v5353
  %v5482 = vsel %vm4842, %v4714, %v5354
  %v5483 = vsel %vm4843, %v4715, %v5355
  %v5484 = vsel %vm4844, %v4716, %v5356
  %v5485 = vsel %vm4845, %v4717, %v5357
  %v5486 = vsel %vm4846, %v4718, %v5358
  %v5487 = vsel %vm4847, %v4719, %v5359
  %v5488 = vsel %vm4848, %v4720, %v5360
  %v5489 = vsel %vm4849, %v4721, %v5361
  %v5490 = vsel %vm4850, %v4722, %v5362
  %v5491 = vsel %vm4851, %v4723, %v5363
  %v5492 = vsel %vm4852, %v4724, %v5364
  %v5493 = vsel %vm4853, %v4725, %v5365
  %v5494 = vsel %vm4854, %v4726, %v5366
  %v5495 = vsel %vm4855, %v4727, %v5367
  %v5496 = vsel %vm4856, %v4728, %v5368
  %v5497 = vsel %vm4857, %v4729, %v5369
  %v5498 = vsel %vm4858, %v4730, %v5370
  %v5499 = vsel %vm4859, %v4731, %v5371
  %v5500 = vsel %vm4860, %v4732, %v5372
  %v5501 = vsel %vm4861, %v4733, %v5373
  %v5502 = vsel %vm4862, %v4734, %v5374
  %v5503 = vsel %vm4863, %v4735, %v5375
  %v5504 = vsel %vm4864, %v4736, %v5376
  %v5505 = vsel %vm4865, %v4737, %v5377
  %v5506 = vsel %vm4866, %v4738, %v5378
  %v5507 = vsel %vm4867, %v4739, %v5379
  %v5508 = vsel %vm4868, %v4740, %v5380
  %v5509 = vsel %vm4869, %v4741, %v5381
  %v5510 = vsel %vm4870, %v4742, %v5382
  %v5511 = vsel %vm4871, %v4743, %v5383
  %v5512 = vsel %vm4872, %v4744, %v5384
  %v5513 = vsel %vm4873, %v4745, %v5385
  %v5514 = vsel %vm4874, %v4746, %v5386
  %v5515 = vsel %vm4875, %v4747, %v5387
  %v5516 = vsel %vm4876, %v4748, %v5388
  %v5517 = vsel %vm4877, %v4749, %v5389
  %v5518 = vsel %vm4878, %v4750, %v5390
  %v5519 = vsel %vm4879, %v4751, %v5391
  %v5520 = vsel %vm4880, %v4752, %v5392
  %v5521 = vsel %vm4881, %v4753, %v5393
  %v5522 = vsel %vm4882, %v4754, %v5394
  %v5523 = vsel %vm4883, %v4755, %v5395
  %v5524 = vsel %vm4884, %v4756, %v5396
  %v5525 = vsel %vm4885, %v4757, %v5397
  %v5526 = vsel %vm4886, %v4758, %v5398
  %v5527 = vsel %vm4887, %v4759, %v5399
  %v5528 = vsel %vm4888, %v4760, %v5400
  %v5529 = vsel %vm4889, %v4761, %v5401
  %v5530 = vsel %vm4890, %v4762, %v5402
  %v5531 = vsel %vm4891, %v4763, %v5403
  %v5532 = vld [vmem:[%s6] sm:$0xff]
  %v5533 = vld [vmem:[%s6 + $0x8] sm:$0xff]
  %v5534 = vld [vmem:[%s6 + $0x10] sm:$0xff]
  %v5535 = vld [vmem:[%s6 + $0x18] sm:$0xff]
  %v5536 = vld [vmem:[%s6 + $0x20] sm:$0xff]
  %v5537 = vld [vmem:[%s6 + $0x28] sm:$0xff]
  %v5538 = vld [vmem:[%s6 + $0x30] sm:$0xff]
  %v5539 = vld [vmem:[%s6 + $0x38] sm:$0xff]
  %v5540 = vld [vmem:[%s6 + $0x40] sm:$0xff]
  %v5541 = vld [vmem:[%s6 + $0x48] sm:$0xff]
  %v5542 = vld [vmem:[%s6 + $0x50] sm:$0xff]
  %v5543 = vld [vmem:[%s6 + $0x58] sm:$0xff]
  %v5544 = vld [vmem:[%s6 + $0x60] sm:$0xff]
  %v5545 = vld [vmem:[%s6 + $0x68] sm:$0xff]
  %v5546 = vld [vmem:[%s6 + $0x70] sm:$0xff]
  %v5547 = vld [vmem:[%s6 + $0x78] sm:$0xff]
  %v5548 = vld [vmem:[%s6 + $0x80] sm:$0xff]
  %v5549 = vld [vmem:[%s6 + $0x88] sm:$0xff]
  %v5550 = vld [vmem:[%s6 + $0x90] sm:$0xff]
  %v5551 = vld [vmem:[%s6 + $0x98] sm:$0xff]
  %v5552 = vld [vmem:[%s6 + $0xa0] sm:$0xff]
  %v5553 = vld [vmem:[%s6 + $0xa8] sm:$0xff]
  %v5554 = vld [vmem:[%s6 + $0xb0] sm:$0xff]
  %v5555 = vld [vmem:[%s6 + $0xb8] sm:$0xff]
  %v5556 = vld [vmem:[%s6 + $0xc0] sm:$0xff]
  %v5557 = vld [vmem:[%s6 + $0xc8] sm:$0xff]
  %v5558 = vld [vmem:[%s6 + $0xd0] sm:$0xff]
  %v5559 = vld [vmem:[%s6 + $0xd8] sm:$0xff]
  %v5560 = vld [vmem:[%s6 + $0xe0] sm:$0xff]
  %v5561 = vld [vmem:[%s6 + $0xe8] sm:$0xff]
  %v5562 = vld [vmem:[%s6 + $0xf0] sm:$0xff]
  %v5563 = vld [vmem:[%s6 + $0xf8] sm:$0xff]
  %v5564 = vld [vmem:[%s6 + $0x100] sm:$0xff]
  %v5565 = vld [vmem:[%s6 + $0x108] sm:$0xff]
  %v5566 = vld [vmem:[%s6 + $0x110] sm:$0xff]
  %v5567 = vld [vmem:[%s6 + $0x118] sm:$0xff]
  %v5568 = vld [vmem:[%s6 + $0x120] sm:$0xff]
  %v5569 = vld [vmem:[%s6 + $0x128] sm:$0xff]
  %v5570 = vld [vmem:[%s6 + $0x130] sm:$0xff]
  %v5571 = vld [vmem:[%s6 + $0x138] sm:$0xff]
  %v5572 = vld [vmem:[%s6 + $0x140] sm:$0xff]
  %v5573 = vld [vmem:[%s6 + $0x148] sm:$0xff]
  %v5574 = vld [vmem:[%s6 + $0x150] sm:$0xff]
  %v5575 = vld [vmem:[%s6 + $0x158] sm:$0xff]
  %v5576 = vld [vmem:[%s6 + $0x160] sm:$0xff]
  %v5577 = vld [vmem:[%s6 + $0x168] sm:$0xff]
  %v5578 = vld [vmem:[%s6 + $0x170] sm:$0xff]
  %v5579 = vld [vmem:[%s6 + $0x178] sm:$0xff]
  %v5580 = vld [vmem:[%s6 + $0x180] sm:$0xff]
  %v5581 = vld [vmem:[%s6 + $0x188] sm:$0xff]
  %v5582 = vld [vmem:[%s6 + $0x190] sm:$0xff]
  %v5583 = vld [vmem:[%s6 + $0x198] sm:$0xff]
  %v5584 = vld [vmem:[%s6 + $0x1a0] sm:$0xff]
  %v5585 = vld [vmem:[%s6 + $0x1a8] sm:$0xff]
  %v5586 = vld [vmem:[%s6 + $0x1b0] sm:$0xff]
  %v5587 = vld [vmem:[%s6 + $0x1b8] sm:$0xff]
  %v5588 = vld [vmem:[%s6 + $0x1c0] sm:$0xff]
  %v5589 = vld [vmem:[%s6 + $0x1c8] sm:$0xff]
  %v5590 = vld [vmem:[%s6 + $0x1d0] sm:$0xff]
  %v5591 = vld [vmem:[%s6 + $0x1d8] sm:$0xff]
  %v5592 = vld [vmem:[%s6 + $0x1e0] sm:$0xff]
  %v5593 = vld [vmem:[%s6 + $0x1e8] sm:$0xff]
  %v5594 = vld [vmem:[%s6 + $0x1f0] sm:$0xff]
  %v5595 = vld [vmem:[%s6 + $0x1f8] sm:$0xff]
  %v5596 = vld [vmem:[%s6 + $0x200] sm:$0xff]
  %v5597 = vld [vmem:[%s6 + $0x208] sm:$0xff]
  %v5598 = vld [vmem:[%s6 + $0x210] sm:$0xff]
  %v5599 = vld [vmem:[%s6 + $0x218] sm:$0xff]
  %v5600 = vld [vmem:[%s6 + $0x220] sm:$0xff]
  %v5601 = vld [vmem:[%s6 + $0x228] sm:$0xff]
  %v5602 = vld [vmem:[%s6 + $0x230] sm:$0xff]
  %v5603 = vld [vmem:[%s6 + $0x238] sm:$0xff]
  %v5604 = vld [vmem:[%s6 + $0x240] sm:$0xff]
  %v5605 = vld [vmem:[%s6 + $0x248] sm:$0xff]
  %v5606 = vld [vmem:[%s6 + $0x250] sm:$0xff]
  %v5607 = vld [vmem:[%s6 + $0x258] sm:$0xff]
  %v5608 = vld [vmem:[%s6 + $0x260] sm:$0xff]
  %v5609 = vld [vmem:[%s6 + $0x268] sm:$0xff]
  %v5610 = vld [vmem:[%s6 + $0x270] sm:$0xff]
  %v5611 = vld [vmem:[%s6 + $0x278] sm:$0xff]
  %v5612 = vld [vmem:[%s6 + $0x280] sm:$0xff]
  %v5613 = vld [vmem:[%s6 + $0x288] sm:$0xff]
  %v5614 = vld [vmem:[%s6 + $0x290] sm:$0xff]
  %v5615 = vld [vmem:[%s6 + $0x298] sm:$0xff]
  %v5616 = vld [vmem:[%s6 + $0x2a0] sm:$0xff]
  %v5617 = vld [vmem:[%s6 + $0x2a8] sm:$0xff]
  %v5618 = vld [vmem:[%s6 + $0x2b0] sm:$0xff]
  %v5619 = vld [vmem:[%s6 + $0x2b8] sm:$0xff]
  %v5620 = vld [vmem:[%s6 + $0x2c0] sm:$0xff]
  %v5621 = vld [vmem:[%s6 + $0x2c8] sm:$0xff]
  %v5622 = vld [vmem:[%s6 + $0x2d0] sm:$0xff]
  %v5623 = vld [vmem:[%s6 + $0x2d8] sm:$0xff]
  %v5624 = vld [vmem:[%s6 + $0x2e0] sm:$0xff]
  %v5625 = vld [vmem:[%s6 + $0x2e8] sm:$0xff]
  %v5626 = vld [vmem:[%s6 + $0x2f0] sm:$0xff]
  %v5627 = vld [vmem:[%s6 + $0x2f8] sm:$0xff]
  %v5628 = vld [vmem:[%s6 + $0x300] sm:$0xff]
  %v5629 = vld [vmem:[%s6 + $0x308] sm:$0xff]
  %v5630 = vld [vmem:[%s6 + $0x310] sm:$0xff]
  %v5631 = vld [vmem:[%s6 + $0x318] sm:$0xff]
  %v5632 = vld [vmem:[%s6 + $0x320] sm:$0xff]
  %v5633 = vld [vmem:[%s6 + $0x328] sm:$0xff]
  %v5634 = vld [vmem:[%s6 + $0x330] sm:$0xff]
  %v5635 = vld [vmem:[%s6 + $0x338] sm:$0xff]
  %v5636 = vld [vmem:[%s6 + $0x340] sm:$0xff]
  %v5637 = vld [vmem:[%s6 + $0x348] sm:$0xff]
  %v5638 = vld [vmem:[%s6 + $0x350] sm:$0xff]
  %v5639 = vld [vmem:[%s6 + $0x358] sm:$0xff]
  %v5640 = vld [vmem:[%s6 + $0x360] sm:$0xff]
  %v5641 = vld [vmem:[%s6 + $0x368] sm:$0xff]
  %v5642 = vld [vmem:[%s6 + $0x370] sm:$0xff]
  %v5643 = vld [vmem:[%s6 + $0x378] sm:$0xff]
  %v5644 = vld [vmem:[%s6 + $0x380] sm:$0xff]
  %v5645 = vld [vmem:[%s6 + $0x388] sm:$0xff]
  %v5646 = vld [vmem:[%s6 + $0x390] sm:$0xff]
  %v5647 = vld [vmem:[%s6 + $0x398] sm:$0xff]
  %v5648 = vld [vmem:[%s6 + $0x3a0] sm:$0xff]
  %v5649 = vld [vmem:[%s6 + $0x3a8] sm:$0xff]
  %v5650 = vld [vmem:[%s6 + $0x3b0] sm:$0xff]
  %v5651 = vld [vmem:[%s6 + $0x3b8] sm:$0xff]
  %v5652 = vld [vmem:[%s6 + $0x3c0] sm:$0xff]
  %v5653 = vld [vmem:[%s6 + $0x3c8] sm:$0xff]
  %v5654 = vld [vmem:[%s6 + $0x3d0] sm:$0xff]
  %v5655 = vld [vmem:[%s6 + $0x3d8] sm:$0xff]
  %v5656 = vld [vmem:[%s6 + $0x3e0] sm:$0xff]
  %v5657 = vld [vmem:[%s6 + $0x3e8] sm:$0xff]
  %v5658 = vld [vmem:[%s6 + $0x3f0] sm:$0xff]
  %v5659 = vld [vmem:[%s6 + $0x3f8] sm:$0xff]
  %v5660 = vld [vmem:[%s6 + $0x400] sm:$0xff]
  %v5661 = vld [vmem:[%s6 + $0x408] sm:$0xff]
  %v5662 = vld [vmem:[%s6 + $0x410] sm:$0xff]
  %v5663 = vld [vmem:[%s6 + $0x418] sm:$0xff]
  %v5664 = vld [vmem:[%s6 + $0x420] sm:$0xff]
  %v5665 = vld [vmem:[%s6 + $0x428] sm:$0xff]
  %v5666 = vld [vmem:[%s6 + $0x430] sm:$0xff]
  %v5667 = vld [vmem:[%s6 + $0x438] sm:$0xff]
  %v5668 = vld [vmem:[%s6 + $0x440] sm:$0xff]
  %v5669 = vld [vmem:[%s6 + $0x448] sm:$0xff]
  %v5670 = vld [vmem:[%s6 + $0x450] sm:$0xff]
  %v5671 = vld [vmem:[%s6 + $0x458] sm:$0xff]
  %v5672 = vld [vmem:[%s6 + $0x460] sm:$0xff]
  %v5673 = vld [vmem:[%s6 + $0x468] sm:$0xff]
  %v5674 = vld [vmem:[%s6 + $0x470] sm:$0xff]
  %v5675 = vld [vmem:[%s6 + $0x478] sm:$0xff]
  %v5676 = vld [vmem:[%s6 + $0x480] sm:$0xff]
  %v5677 = vld [vmem:[%s6 + $0x488] sm:$0xff]
  %v5678 = vld [vmem:[%s6 + $0x490] sm:$0xff]
  %v5679 = vld [vmem:[%s6 + $0x498] sm:$0xff]
  %v5680 = vld [vmem:[%s6 + $0x4a0] sm:$0xff]
  %v5681 = vld [vmem:[%s6 + $0x4a8] sm:$0xff]
  %v5682 = vld [vmem:[%s6 + $0x4b0] sm:$0xff]
  %v5683 = vld [vmem:[%s6 + $0x4b8] sm:$0xff]
  %v5684 = vld [vmem:[%s6 + $0x4c0] sm:$0xff]
  %v5685 = vld [vmem:[%s6 + $0x4c8] sm:$0xff]
  %v5686 = vld [vmem:[%s6 + $0x4d0] sm:$0xff]
  %v5687 = vld [vmem:[%s6 + $0x4d8] sm:$0xff]
  %v5688 = vld [vmem:[%s6 + $0x4e0] sm:$0xff]
  %v5689 = vld [vmem:[%s6 + $0x4e8] sm:$0xff]
  %v5690 = vld [vmem:[%s6 + $0x4f0] sm:$0xff]
  %v5691 = vld [vmem:[%s6 + $0x4f8] sm:$0xff]
  %v5692 = vld [vmem:[%s6 + $0x500] sm:$0xff]
  %v5693 = vld [vmem:[%s6 + $0x508] sm:$0xff]
  %v5694 = vld [vmem:[%s6 + $0x510] sm:$0xff]
  %v5695 = vld [vmem:[%s6 + $0x518] sm:$0xff]
  %v5696 = vld [vmem:[%s6 + $0x520] sm:$0xff]
  %v5697 = vld [vmem:[%s6 + $0x528] sm:$0xff]
  %v5698 = vld [vmem:[%s6 + $0x530] sm:$0xff]
  %v5699 = vld [vmem:[%s6 + $0x538] sm:$0xff]
  %v5700 = vld [vmem:[%s6 + $0x540] sm:$0xff]
  %v5701 = vld [vmem:[%s6 + $0x548] sm:$0xff]
  %v5702 = vld [vmem:[%s6 + $0x550] sm:$0xff]
  %v5703 = vld [vmem:[%s6 + $0x558] sm:$0xff]
  %v5704 = vld [vmem:[%s6 + $0x560] sm:$0xff]
  %v5705 = vld [vmem:[%s6 + $0x568] sm:$0xff]
  %v5706 = vld [vmem:[%s6 + $0x570] sm:$0xff]
  %v5707 = vld [vmem:[%s6 + $0x578] sm:$0xff]
  %v5708 = vld [vmem:[%s6 + $0x580] sm:$0xff]
  %v5709 = vld [vmem:[%s6 + $0x588] sm:$0xff]
  %v5710 = vld [vmem:[%s6 + $0x590] sm:$0xff]
  %v5711 = vld [vmem:[%s6 + $0x598] sm:$0xff]
  %v5712 = vld [vmem:[%s6 + $0x5a0] sm:$0xff]
  %v5713 = vld [vmem:[%s6 + $0x5a8] sm:$0xff]
  %v5714 = vld [vmem:[%s6 + $0x5b0] sm:$0xff]
  %v5715 = vld [vmem:[%s6 + $0x5b8] sm:$0xff]
  %v5716 = vld [vmem:[%s6 + $0x5c0] sm:$0xff]
  %v5717 = vld [vmem:[%s6 + $0x5c8] sm:$0xff]
  %v5718 = vld [vmem:[%s6 + $0x5d0] sm:$0xff]
  %v5719 = vld [vmem:[%s6 + $0x5d8] sm:$0xff]
  %v5720 = vld [vmem:[%s6 + $0x5e0] sm:$0xff]
  %v5721 = vld [vmem:[%s6 + $0x5e8] sm:$0xff]
  %v5722 = vld [vmem:[%s6 + $0x5f0] sm:$0xff]
  %v5723 = vld [vmem:[%s6 + $0x5f8] sm:$0xff]
  %v5724 = vld [vmem:[%s6 + $0x600] sm:$0xff]
  %v5725 = vld [vmem:[%s6 + $0x608] sm:$0xff]
  %v5726 = vld [vmem:[%s6 + $0x610] sm:$0xff]
  %v5727 = vld [vmem:[%s6 + $0x618] sm:$0xff]
  %v5728 = vld [vmem:[%s6 + $0x620] sm:$0xff]
  %v5729 = vld [vmem:[%s6 + $0x628] sm:$0xff]
  %v5730 = vld [vmem:[%s6 + $0x630] sm:$0xff]
  %v5731 = vld [vmem:[%s6 + $0x638] sm:$0xff]
  %v5732 = vld [vmem:[%s6 + $0x640] sm:$0xff]
  %v5733 = vld [vmem:[%s6 + $0x648] sm:$0xff]
  %v5734 = vld [vmem:[%s6 + $0x650] sm:$0xff]
  %v5735 = vld [vmem:[%s6 + $0x658] sm:$0xff]
  %v5736 = vld [vmem:[%s6 + $0x660] sm:$0xff]
  %v5737 = vld [vmem:[%s6 + $0x668] sm:$0xff]
  %v5738 = vld [vmem:[%s6 + $0x670] sm:$0xff]
  %v5739 = vld [vmem:[%s6 + $0x678] sm:$0xff]
  %v5740 = vld [vmem:[%s6 + $0x680] sm:$0xff]
  %v5741 = vld [vmem:[%s6 + $0x688] sm:$0xff]
  %v5742 = vld [vmem:[%s6 + $0x690] sm:$0xff]
  %v5743 = vld [vmem:[%s6 + $0x698] sm:$0xff]
  %v5744 = vld [vmem:[%s6 + $0x6a0] sm:$0xff]
  %v5745 = vld [vmem:[%s6 + $0x6a8] sm:$0xff]
  %v5746 = vld [vmem:[%s6 + $0x6b0] sm:$0xff]
  %v5747 = vld [vmem:[%s6 + $0x6b8] sm:$0xff]
  %v5748 = vld [vmem:[%s6 + $0x6c0] sm:$0xff]
  %v5749 = vld [vmem:[%s6 + $0x6c8] sm:$0xff]
  %v5750 = vld [vmem:[%s6 + $0x6d0] sm:$0xff]
  %v5751 = vld [vmem:[%s6 + $0x6d8] sm:$0xff]
  %v5752 = vld [vmem:[%s6 + $0x6e0] sm:$0xff]
  %v5753 = vld [vmem:[%s6 + $0x6e8] sm:$0xff]
  %v5754 = vld [vmem:[%s6 + $0x6f0] sm:$0xff]
  %v5755 = vld [vmem:[%s6 + $0x6f8] sm:$0xff]
  %v5756 = vld [vmem:[%s6 + $0x700] sm:$0xff]
  %v5757 = vld [vmem:[%s6 + $0x708] sm:$0xff]
  %v5758 = vld [vmem:[%s6 + $0x710] sm:$0xff]
  %v5759 = vld [vmem:[%s6 + $0x718] sm:$0xff]
  %v5760 = vld [vmem:[%s6 + $0x720] sm:$0xff]
  %v5761 = vld [vmem:[%s6 + $0x728] sm:$0xff]
  %v5762 = vld [vmem:[%s6 + $0x730] sm:$0xff]
  %v5763 = vld [vmem:[%s6 + $0x738] sm:$0xff]
  %v5764 = vld [vmem:[%s6 + $0x740] sm:$0xff]
  %v5765 = vld [vmem:[%s6 + $0x748] sm:$0xff]
  %v5766 = vld [vmem:[%s6 + $0x750] sm:$0xff]
  %v5767 = vld [vmem:[%s6 + $0x758] sm:$0xff]
  %v5768 = vld [vmem:[%s6 + $0x760] sm:$0xff]
  %v5769 = vld [vmem:[%s6 + $0x768] sm:$0xff]
  %v5770 = vld [vmem:[%s6 + $0x770] sm:$0xff]
  %v5771 = vld [vmem:[%s6 + $0x778] sm:$0xff]
  %v5772 = vld [vmem:[%s6 + $0x780] sm:$0xff]
  %v5773 = vld [vmem:[%s6 + $0x788] sm:$0xff]
  %v5774 = vld [vmem:[%s6 + $0x790] sm:$0xff]
  %v5775 = vld [vmem:[%s6 + $0x798] sm:$0xff]
  %v5776 = vld [vmem:[%s6 + $0x7a0] sm:$0xff]
  %v5777 = vld [vmem:[%s6 + $0x7a8] sm:$0xff]
  %v5778 = vld [vmem:[%s6 + $0x7b0] sm:$0xff]
  %v5779 = vld [vmem:[%s6 + $0x7b8] sm:$0xff]
  %v5780 = vld [vmem:[%s6 + $0x7c0] sm:$0xff]
  %v5781 = vld [vmem:[%s6 + $0x7c8] sm:$0xff]
  %v5782 = vld [vmem:[%s6 + $0x7d0] sm:$0xff]
  %v5783 = vld [vmem:[%s6 + $0x7d8] sm:$0xff]
  %v5784 = vld [vmem:[%s6 + $0x7e0] sm:$0xff]
  %v5785 = vld [vmem:[%s6 + $0x7e8] sm:$0xff]
  %v5786 = vld [vmem:[%s6 + $0x7f0] sm:$0xff]
  %v5787 = vld [vmem:[%s6 + $0x7f8] sm:$0xff]
  %5788 = vmatprep.subr.mxu0 %v5533
  %5789 = vmatpush1.msra.mxu0 %v5532
  %5790 = vmatprep.subr.mxu0 %v5535
  %5791 = vmatpush1.msra.mxu0 %v5534
  %5792 = vmatprep.subr.mxu0 %v5537
  %5793 = vmatpush1.msra.mxu0 %v5536
  %5794 = vmatprep.subr.mxu0 %v5539
  %5795 = vmatpush1.msra.mxu0 %v5538
  %5796 = vmatprep.subr.mxu0 %v5541
  %5797 = vmatpush1.msra.mxu0 %v5540
  %5798 = vmatprep.subr.mxu0 %v5543
  %5799 = vmatpush1.msra.mxu0 %v5542
  %5800 = vmatprep.subr.mxu0 %v5545
  %5801 = vmatpush1.msra.mxu0 %v5544
  %5802 = vmatprep.subr.mxu0 %v5547
  %5803 = vmatpush1.msra.mxu0 %v5546
  %5804 = vmatprep.subr.mxu0 %v5549
  %5805 = vmatpush1.msra.mxu0 %v5548
  %5806 = vmatprep.subr.mxu0 %v5551
  %5807 = vmatpush1.msra.mxu0 %v5550
  %5808 = vmatprep.subr.mxu0 %v5553
  %5809 = vmatpush1.msra.mxu0 %v5552
  %5810 = vmatprep.subr.mxu0 %v5555
  %5811 = vmatpush1.msra.mxu0 %v5554
  %5812 = vmatprep.subr.mxu0 %v5557
  %5813 = vmatpush1.msra.mxu0 %v5556
  %5814 = vmatprep.subr.mxu0 %v5559
  %5815 = vmatpush1.msra.mxu0 %v5558
  %5816 = vmatprep.subr.mxu0 %v5561
  %5817 = vmatpush1.msra.mxu0 %v5560
  %5818 = vmatprep.subr.mxu0 %v5563
  %5819 = vmatpush1.msra.mxu0 %v5562
  %5820 = vmatprep.subr.mxu0 %v5565
  %5821 = vmatpush1.msra.mxu0 %v5564
  %5822 = vmatprep.subr.mxu0 %v5567
  %5823 = vmatpush1.msra.mxu0 %v5566
  %5824 = vmatprep.subr.mxu0 %v5569
  %5825 = vmatpush1.msra.mxu0 %v5568
  %5826 = vmatprep.subr.mxu0 %v5571
  %5827 = vmatpush1.msra.mxu0 %v5570
  %5828 = vmatprep.subr.mxu0 %v5573
  %5829 = vmatpush1.msra.mxu0 %v5572
  %5830 = vmatprep.subr.mxu0 %v5575
  %5831 = vmatpush1.msra.mxu0 %v5574
  %5832 = vmatprep.subr.mxu0 %v5577
  %5833 = vmatpush1.msra.mxu0 %v5576
  %5834 = vmatprep.subr.mxu0 %v5579
  %5835 = vmatpush1.msra.mxu0 %v5578
  %5836 = vmatprep.subr.mxu0 %v5581
  %5837 = vmatpush1.msra.mxu0 %v5580
  %5838 = vmatprep.subr.mxu0 %v5583
  %5839 = vmatpush1.msra.mxu0 %v5582
  %5840 = vmatprep.subr.mxu0 %v5585
  %5841 = vmatpush1.msra.mxu0 %v5584
  %5842 = vmatprep.subr.mxu0 %v5587
  %5843 = vmatpush1.msra.mxu0 %v5586
  %5844 = vmatprep.subr.mxu0 %v5589
  %5845 = vmatpush1.msra.mxu0 %v5588
  %5846 = vmatprep.subr.mxu0 %v5591
  %5847 = vmatpush1.msra.mxu0 %v5590
  %5848 = vmatprep.subr.mxu0 %v5593
  %5849 = vmatpush1.msra.mxu0 %v5592
  %5850 = vmatprep.subr.mxu0 %v5595
  %5851 = vmatpush1.msra.mxu0 %v5594
  %5852 = vmatprep.mubr.f32.mxu0 %v5405
  %5853 = vmatmul.mubr.f32.gmra.mrb[0].mxu0 %v5404
  %v5854 = vpop.f32.mrb[0].mxu0
  %v5855 = vadd.f32 0.0, %v5854
  %v5856 = vpop.f32.mrb[0].mxu0
  %v5857 = vadd.f32 0.0, %v5856
  %5858 = vmatprep.mubr.f32.mxu0 %v5413
  %5859 = vmatmul.mubr.f32.gmra.mrb[0].mxu0 %v5412
  %v5860 = vpop.f32.mrb[0].mxu0
  %v5861 = vadd.f32 0.0, %v5860
  %v5862 = vpop.f32.mrb[0].mxu0
  %v5863 = vadd.f32 0.0, %v5862
  %5864 = vmatprep.mubr.f32.mxu0 %v5421
  %5865 = vmatmul.mubr.f32.gmra.mrb[0].mxu0 %v5420
  %v5866 = vpop.f32.mrb[0].mxu0
  %v5867 = vadd.f32 0.0, %v5866
  %v5868 = vpop.f32.mrb[0].mxu0
  %v5869 = vadd.f32 0.0, %v5868
  %5870 = vmatprep.mubr.f32.mxu0 %v5429
  %5871 = vmatmul.mubr.f32.gmra.mrb[0].mxu0 %v5428
  %v5872 = vpop.f32.mrb[0].mxu0
  %v5873 = vadd.f32 0.0, %v5872
  %v5874 = vpop.f32.mrb[0].mxu0
  %v5875 = vadd.f32 0.0, %v5874
  %5876 = vmatprep.mubr.f32.mxu0 %v5437
  %5877 = vmatmul.mubr.f32.gmra.mrb[0].mxu0 %v5436
  %v5878 = vpop.f32.mrb[0].mxu0
  %v5879 = vadd.f32 0.0, %v5878
  %v5880 = vpop.f32.mrb[0].mxu0
  %v5881 = vadd.f32 0.0, %v5880
  %5882 = vmatprep.mubr.f32.mxu0 %v5445
  %5883 = vmatmul.mubr.f32.gmra.mrb[0].mxu0 %v5444
  %v5884 = vpop.f32.mrb[0].mxu0
  %v5885 = vadd.f32 0.0, %v5884
  %v5886 = vpop.f32.mrb[0].mxu0
  %v5887 = vadd.f32 0.0, %v5886
  %5888 = vmatprep.mubr.f32.mxu0 %v5453
  %5889 = vmatmul.mubr.f32.gmra.mrb[0].mxu0 %v5452
  %v5890 = vpop.f32.mrb[0].mxu0
  %v5891 = vadd.f32 0.0, %v5890
  %v5892 = vpop.f32.mrb[0].mxu0
  %v5893 = vadd.f32 0.0, %v5892
  %5894 = vmatprep.mubr.f32.mxu0 %v5461
  %5895 = vmatmul.mubr.f32.gmra.mrb[0].mxu0 %v5460
  %v5896 = vpop.f32.mrb[0].mxu0
  %v5897 = vadd.f32 0.0, %v5896
  %v5898 = vpop.f32.mrb[0].mxu0
  %v5899 = vadd.f32 0.0, %v5898
  %5900 = vmatprep.mubr.f32.mxu0 %v5469
  %5901 = vmatmul.mubr.f32.gmra.mrb[0].mxu0 %v5468
  %v5902 = vpop.f32.mrb[0].mxu0
  %v5903 = vadd.f32 0.0, %v5902
  %v5904 = vpop.f32.mrb[0].mxu0
  %v5905 = vadd.f32 0.0, %v5904
  %5906 = vmatprep.mubr.f32.mxu0 %v5477
  %5907 = vmatmul.mubr.f32.gmra.mrb[0].mxu0 %v5476
  %v5908 = vpop.f32.mrb[0].mxu0
  %v5909 = vadd.f32 0.0, %v5908
  %v5910 = vpop.f32.mrb[0].mxu0
  %v5911 = vadd.f32 0.0, %v5910
  %5912 = vmatprep.mubr.f32.mxu0 %v5485
  %5913 = vmatmul.mubr.f32.gmra.mrb[0].mxu0 %v5484
  %v5914 = vpop.f32.mrb[0].mxu0
  %v5915 = vadd.f32 0.0, %v5914
  %v5916 = vpop.f32.mrb[0].mxu0
  %v5917 = vadd.f32 0.0, %v5916
  %5918 = vmatprep.mubr.f32.mxu0 %v5493
  %5919 = vmatmul.mubr.f32.gmra.mrb[0].mxu0 %v5492
  %v5920 = vpop.f32.mrb[0].mxu0
  %v5921 = vadd.f32 0.0, %v5920
  %v5922 = vpop.f32.mrb[0].mxu0
  %v5923 = vadd.f32 0.0, %v5922
  %5924 = vmatprep.mubr.f32.mxu0 %v5501
  %5925 = vmatmul.mubr.f32.gmra.mrb[0].mxu0 %v5500
  %v5926 = vpop.f32.mrb[0].mxu0
  %v5927 = vadd.f32 0.0, %v5926
  %v5928 = vpop.f32.mrb[0].mxu0
  %v5929 = vadd.f32 0.0, %v5928
  %5930 = vmatprep.mubr.f32.mxu0 %v5509
  %5931 = vmatmul.mubr.f32.gmra.mrb[0].mxu0 %v5508
  %v5932 = vpop.f32.mrb[0].mxu0
  %v5933 = vadd.f32 0.0, %v5932
  %v5934 = vpop.f32.mrb[0].mxu0
  %v5935 = vadd.f32 0.0, %v5934
  %5936 = vmatprep.mubr.f32.mxu0 %v5517
  %5937 = vmatmul.mubr.f32.gmra.mrb[0].mxu0 %v5516
  %v5938 = vpop.f32.mrb[0].mxu0
  %v5939 = vadd.f32 0.0, %v5938
  %v5940 = vpop.f32.mrb[0].mxu0
  %v5941 = vadd.f32 0.0, %v5940
  %5942 = vmatprep.mubr.f32.mxu0 %v5525
  %5943 = vmatmul.mubr.f32.gmra.mrb[0].mxu0 %v5524
  %v5944 = vpop.f32.mrb[0].mxu0
  %v5945 = vadd.f32 0.0, %v5944
  %v5946 = vpop.f32.mrb[0].mxu0
  %v5947 = vadd.f32 0.0, %v5946
  %5948 = vdwg.mxu0
  %5949 = vmatprep.subr.mxu0 %v5597
  %5950 = vmatpush1.msra.mxu0 %v5596
  %5951 = vmatprep.subr.mxu0 %v5599
  %5952 = vmatpush1.msra.mxu0 %v5598
  %5953 = vmatprep.subr.mxu0 %v5601
  %5954 = vmatpush1.msra.mxu0 %v5600
  %5955 = vmatprep.subr.mxu0 %v5603
  %5956 = vmatpush1.msra.mxu0 %v5602
  %5957 = vmatprep.subr.mxu0 %v5605
  %5958 = vmatpush1.msra.mxu0 %v5604
  %5959 = vmatprep.subr.mxu0 %v5607
  %5960 = vmatpush1.msra.mxu0 %v5606
  %5961 = vmatprep.subr.mxu0 %v5609
  %5962 = vmatpush1.msra.mxu0 %v5608
  %5963 = vmatprep.subr.mxu0 %v5611
  %5964 = vmatpush1.msra.mxu0 %v5610
  %5965 = vmatprep.subr.mxu0 %v5613
  %5966 = vmatpush1.msra.mxu0 %v5612
  %5967 = vmatprep.subr.mxu0 %v5615
  %5968 = vmatpush1.msra.mxu0 %v5614
  %5969 = vmatprep.subr.mxu0 %v5617
  %5970 = vmatpush1.msra.mxu0 %v5616
  %5971 = vmatprep.subr.mxu0 %v5619
  %5972 = vmatpush1.msra.mxu0 %v5618
  %5973 = vmatprep.subr.mxu0 %v5621
  %5974 = vmatpush1.msra.mxu0 %v5620
  %5975 = vmatprep.subr.mxu0 %v5623
  %5976 = vmatpush1.msra.mxu0 %v5622
  %5977 = vmatprep.subr.mxu0 %v5625
  %5978 = vmatpush1.msra.mxu0 %v5624
  %5979 = vmatprep.subr.mxu0 %v5627
  %5980 = vmatpush1.msra.mxu0 %v5626
  %5981 = vmatprep.subr.mxu0 %v5629
  %5982 = vmatpush1.msra.mxu0 %v5628
  %5983 = vmatprep.subr.mxu0 %v5631
  %5984 = vmatpush1.msra.mxu0 %v5630
  %5985 = vmatprep.subr.mxu0 %v5633
  %5986 = vmatpush1.msra.mxu0 %v5632
  %5987 = vmatprep.subr.mxu0 %v5635
  %5988 = vmatpush1.msra.mxu0 %v5634
  %5989 = vmatprep.subr.mxu0 %v5637
  %5990 = vmatpush1.msra.mxu0 %v5636
  %5991 = vmatprep.subr.mxu0 %v5639
  %5992 = vmatpush1.msra.mxu0 %v5638
  %5993 = vmatprep.subr.mxu0 %v5641
  %5994 = vmatpush1.msra.mxu0 %v5640
  %5995 = vmatprep.subr.mxu0 %v5643
  %5996 = vmatpush1.msra.mxu0 %v5642
  %5997 = vmatprep.subr.mxu0 %v5645
  %5998 = vmatpush1.msra.mxu0 %v5644
  %5999 = vmatprep.subr.mxu0 %v5647
  %6000 = vmatpush1.msra.mxu0 %v5646
  %6001 = vmatprep.subr.mxu0 %v5649
  %6002 = vmatpush1.msra.mxu0 %v5648
  %6003 = vmatprep.subr.mxu0 %v5651
  %6004 = vmatpush1.msra.mxu0 %v5650
  %6005 = vmatprep.subr.mxu0 %v5653
  %6006 = vmatpush1.msra.mxu0 %v5652
  %6007 = vmatprep.subr.mxu0 %v5655
  %6008 = vmatpush1.msra.mxu0 %v5654
  %6009 = vmatprep.subr.mxu0 %v5657
  %6010 = vmatpush1.msra.mxu0 %v5656
  %6011 = vmatprep.subr.mxu0 %v5659
  %6012 = vmatpush1.msra.mxu0 %v5658
  %6013 = vmatprep.mubr.f32.mxu0 %v5407
  %6014 = vmatmul.mubr.f32.gmra.mrb[0].mxu0 %v5406
  %v6015 = vpop.f32.mrb[0].mxu0
  %v6016 = vadd.f32 %v5855, %v6015
  %v6017 = vpop.f32.mrb[0].mxu0
  %v6018 = vadd.f32 %v5857, %v6017
  %6019 = vmatprep.mubr.f32.mxu0 %v5415
  %6020 = vmatmul.mubr.f32.gmra.mrb[0].mxu0 %v5414
  %v6021 = vpop.f32.mrb[0].mxu0
  %v6022 = vadd.f32 %v5861, %v6021
  %v6023 = vpop.f32.mrb[0].mxu0
  %v6024 = vadd.f32 %v5863, %v6023
  %6025 = vmatprep.mubr.f32.mxu0 %v5423
  %6026 = vmatmul.mubr.f32.gmra.mrb[0].mxu0 %v5422
  %v6027 = vpop.f32.mrb[0].mxu0
  %v6028 = vadd.f32 %v5867, %v6027
  %v6029 = vpop.f32.mrb[0].mxu0
  %v6030 = vadd.f32 %v5869, %v6029
  %6031 = vmatprep.mubr.f32.mxu0 %v5431
  %6032 = vmatmul.mubr.f32.gmra.mrb[0].mxu0 %v5430
  %v6033 = vpop.f32.mrb[0].mxu0
  %v6034 = vadd.f32 %v5873, %v6033
  %v6035 = vpop.f32.mrb[0].mxu0
  %v6036 = vadd.f32 %v5875, %v6035
  %6037 = vmatprep.mubr.f32.mxu0 %v5439
  %6038 = vmatmul.mubr.f32.gmra.mrb[0].mxu0 %v5438
  %v6039 = vpop.f32.mrb[0].mxu0
  %v6040 = vadd.f32 %v5879, %v6039
  %v6041 = vpop.f32.mrb[0].mxu0
  %v6042 = vadd.f32 %v5881, %v6041
  %6043 = vmatprep.mubr.f32.mxu0 %v5447
  %6044 = vmatmul.mubr.f32.gmra.mrb[0].mxu0 %v5446
  %v6045 = vpop.f32.mrb[0].mxu0
  %v6046 = vadd.f32 %v5885, %v6045
  %v6047 = vpop.f32.mrb[0].mxu0
  %v6048 = vadd.f32 %v5887, %v6047
  %6049 = vmatprep.mubr.f32.mxu0 %v5455
  %6050 = vmatmul.mubr.f32.gmra.mrb[0].mxu0 %v5454
  %v6051 = vpop.f32.mrb[0].mxu0
  %v6052 = vadd.f32 %v5891, %v6051
  %v6053 = vpop.f32.mrb[0].mxu0
  %v6054 = vadd.f32 %v5893, %v6053
  %6055 = vmatprep.mubr.f32.mxu0 %v5463
  %6056 = vmatmul.mubr.f32.gmra.mrb[0].mxu0 %v5462
  %v6057 = vpop.f32.mrb[0].mxu0
  %v6058 = vadd.f32 %v5897, %v6057
  %v6059 = vpop.f32.mrb[0].mxu0
  %v6060 = vadd.f32 %v5899, %v6059
  %6061 = vmatprep.mubr.f32.mxu0 %v5471
  %6062 = vmatmul.mubr.f32.gmra.mrb[0].mxu0 %v5470
  %v6063 = vpop.f32.mrb[0].mxu0
  %v6064 = vadd.f32 %v5903, %v6063
  %v6065 = vpop.f32.mrb[0].mxu0
  %v6066 = vadd.f32 %v5905, %v6065
  %6067 = vmatprep.mubr.f32.mxu0 %v5479
  %6068 = vmatmul.mubr.f32.gmra.mrb[0].mxu0 %v5478
  %v6069 = vpop.f32.mrb[0].mxu0
  %v6070 = vadd.f32 %v5909, %v6069
  %v6071 = vpop.f32.mrb[0].mxu0
  %v6072 = vadd.f32 %v5911, %v6071
  %6073 = vmatprep.mubr.f32.mxu0 %v5487
  %6074 = vmatmul.mubr.f32.gmra.mrb[0].mxu0 %v5486
  %v6075 = vpop.f32.mrb[0].mxu0
  %v6076 = vadd.f32 %v5915, %v6075
  %v6077 = vpop.f32.mrb[0].mxu0
  %v6078 = vadd.f32 %v5917, %v6077
  %6079 = vmatprep.mubr.f32.mxu0 %v5495
  %6080 = vmatmul.mubr.f32.gmra.mrb[0].mxu0 %v5494
  %v6081 = vpop.f32.mrb[0].mxu0
  %v6082 = vadd.f32 %v5921, %v6081
  %v6083 = vpop.f32.mrb[0].mxu0
  %v6084 = vadd.f32 %v5923, %v6083
  %6085 = vmatprep.mubr.f32.mxu0 %v5503
  %6086 = vmatmul.mubr.f32.gmra.mrb[0].mxu0 %v5502
  %v6087 = vpop.f32.mrb[0].mxu0
  %v6088 = vadd.f32 %v5927, %v6087
  %v6089 = vpop.f32.mrb[0].mxu0
  %v6090 = vadd.f32 %v5929, %v6089
  %6091 = vmatprep.mubr.f32.mxu0 %v5511
  %6092 = vmatmul.mubr.f32.gmra.mrb[0].mxu0 %v5510
  %v6093 = vpop.f32.mrb[0].mxu0
  %v6094 = vadd.f32 %v5933, %v6093
  %v6095 = vpop.f32.mrb[0].mxu0
  %v6096 = vadd.f32 %v5935, %v6095
  %6097 = vmatprep.mubr.f32.mxu0 %v5519
  %6098 = vmatmul.mubr.f32.gmra.mrb[0].mxu0 %v5518
  %v6099 = vpop.f32.mrb[0].mxu0
  %v6100 = vadd.f32 %v5939, %v6099
  %v6101 = vpop.f32.mrb[0].mxu0
  %v6102 = vadd.f32 %v5941, %v6101
  %6103 = vmatprep.mubr.f32.mxu0 %v5527
  %6104 = vmatmul.mubr.f32.gmra.mrb[0].mxu0 %v5526
  %v6105 = vpop.f32.mrb[0].mxu0
  %v6106 = vadd.f32 %v5945, %v6105
  %v6107 = vpop.f32.mrb[0].mxu0
  %v6108 = vadd.f32 %v5947, %v6107
  %6109 = vdwg.mxu0
  %6110 = vmatprep.subr.mxu0 %v5661
  %6111 = vmatpush1.msra.mxu0 %v5660
  %6112 = vmatprep.subr.mxu0 %v5663
  %6113 = vmatpush1.msra.mxu0 %v5662
  %6114 = vmatprep.subr.mxu0 %v5665
  %6115 = vmatpush1.msra.mxu0 %v5664
  %6116 = vmatprep.subr.mxu0 %v5667
  %6117 = vmatpush1.msra.mxu0 %v5666
  %6118 = vmatprep.subr.mxu0 %v5669
  %6119 = vmatpush1.msra.mxu0 %v5668
  %6120 = vmatprep.subr.mxu0 %v5671
  %6121 = vmatpush1.msra.mxu0 %v5670
  %6122 = vmatprep.subr.mxu0 %v5673
  %6123 = vmatpush1.msra.mxu0 %v5672
  %6124 = vmatprep.subr.mxu0 %v5675
  %6125 = vmatpush1.msra.mxu0 %v5674
  %6126 = vmatprep.subr.mxu0 %v5677
  %6127 = vmatpush1.msra.mxu0 %v5676
  %6128 = vmatprep.subr.mxu0 %v5679
  %6129 = vmatpush1.msra.mxu0 %v5678
  %6130 = vmatprep.subr.mxu0 %v5681
  %6131 = vmatpush1.msra.mxu0 %v5680
  %6132 = vmatprep.subr.mxu0 %v5683
  %6133 = vmatpush1.msra.mxu0 %v5682
  %6134 = vmatprep.subr.mxu0 %v5685
  %6135 = vmatpush1.msra.mxu0 %v5684
  %6136 = vmatprep.subr.mxu0 %v5687
  %6137 = vmatpush1.msra.mxu0 %v5686
  %6138 = vmatprep.subr.mxu0 %v5689
  %6139 = vmatpush1.msra.mxu0 %v5688
  %6140 = vmatprep.subr.mxu0 %v5691
  %6141 = vmatpush1.msra.mxu0 %v5690
  %6142 = vmatprep.subr.mxu0 %v5693
  %6143 = vmatpush1.msra.mxu0 %v5692
  %6144 = vmatprep.subr.mxu0 %v5695
  %6145 = vmatpush1.msra.mxu0 %v5694
  %6146 = vmatprep.subr.mxu0 %v5697
  %6147 = vmatpush1.msra.mxu0 %v5696
  %6148 = vmatprep.subr.mxu0 %v5699
  %6149 = vmatpush1.msra.mxu0 %v5698
  %6150 = vmatprep.subr.mxu0 %v5701
  %6151 = vmatpush1.msra.mxu0 %v5700
  %6152 = vmatprep.subr.mxu0 %v5703
  %6153 = vmatpush1.msra.mxu0 %v5702
  %6154 = vmatprep.subr.mxu0 %v5705
  %6155 = vmatpush1.msra.mxu0 %v5704
  %6156 = vmatprep.subr.mxu0 %v5707
  %6157 = vmatpush1.msra.mxu0 %v5706
  %6158 = vmatprep.subr.mxu0 %v5709
  %6159 = vmatpush1.msra.mxu0 %v5708
  %6160 = vmatprep.subr.mxu0 %v5711
  %6161 = vmatpush1.msra.mxu0 %v5710
  %6162 = vmatprep.subr.mxu0 %v5713
  %6163 = vmatpush1.msra.mxu0 %v5712
  %6164 = vmatprep.subr.mxu0 %v5715
  %6165 = vmatpush1.msra.mxu0 %v5714
  %6166 = vmatprep.subr.mxu0 %v5717
  %6167 = vmatpush1.msra.mxu0 %v5716
  %6168 = vmatprep.subr.mxu0 %v5719
  %6169 = vmatpush1.msra.mxu0 %v5718
  %6170 = vmatprep.subr.mxu0 %v5721
  %6171 = vmatpush1.msra.mxu0 %v5720
  %6172 = vmatprep.subr.mxu0 %v5723
  %6173 = vmatpush1.msra.mxu0 %v5722
  %6174 = vmatprep.mubr.f32.mxu0 %v5409
  %6175 = vmatmul.mubr.f32.gmra.mrb[0].mxu0 %v5408
  %v6176 = vpop.f32.mrb[0].mxu0
  %v6177 = vadd.f32 %v6016, %v6176
  %v6178 = vpop.f32.mrb[0].mxu0
  %v6179 = vadd.f32 %v6018, %v6178
  %6180 = vmatprep.mubr.f32.mxu0 %v5417
  %6181 = vmatmul.mubr.f32.gmra.mrb[0].mxu0 %v5416
  %v6182 = vpop.f32.mrb[0].mxu0
  %v6183 = vadd.f32 %v6022, %v6182
  %v6184 = vpop.f32.mrb[0].mxu0
  %v6185 = vadd.f32 %v6024, %v6184
  %6186 = vmatprep.mubr.f32.mxu0 %v5425
  %6187 = vmatmul.mubr.f32.gmra.mrb[0].mxu0 %v5424
  %v6188 = vpop.f32.mrb[0].mxu0
  %v6189 = vadd.f32 %v6028, %v6188
  %v6190 = vpop.f32.mrb[0].mxu0
  %v6191 = vadd.f32 %v6030, %v6190
  %6192 = vmatprep.mubr.f32.mxu0 %v5433
  %6193 = vmatmul.mubr.f32.gmra.mrb[0].mxu0 %v5432
  %v6194 = vpop.f32.mrb[0].mxu0
  %v6195 = vadd.f32 %v6034, %v6194
  %v6196 = vpop.f32.mrb[0].mxu0
  %v6197 = vadd.f32 %v6036, %v6196
  %6198 = vmatprep.mubr.f32.mxu0 %v5441
  %6199 = vmatmul.mubr.f32.gmra.mrb[0].mxu0 %v5440
  %v6200 = vpop.f32.mrb[0].mxu0
  %v6201 = vadd.f32 %v6040, %v6200
  %v6202 = vpop.f32.mrb[0].mxu0
  %v6203 = vadd.f32 %v6042, %v6202
  %6204 = vmatprep.mubr.f32.mxu0 %v5449
  %6205 = vmatmul.mubr.f32.gmra.mrb[0].mxu0 %v5448
  %v6206 = vpop.f32.mrb[0].mxu0
  %v6207 = vadd.f32 %v6046, %v6206
  %v6208 = vpop.f32.mrb[0].mxu0
  %v6209 = vadd.f32 %v6048, %v6208
  %6210 = vmatprep.mubr.f32.mxu0 %v5457
  %6211 = vmatmul.mubr.f32.gmra.mrb[0].mxu0 %v5456
  %v6212 = vpop.f32.mrb[0].mxu0
  %v6213 = vadd.f32 %v6052, %v6212
  %v6214 = vpop.f32.mrb[0].mxu0
  %v6215 = vadd.f32 %v6054, %v6214
  %6216 = vmatprep.mubr.f32.mxu0 %v5465
  %6217 = vmatmul.mubr.f32.gmra.mrb[0].mxu0 %v5464
  %v6218 = vpop.f32.mrb[0].mxu0
  %v6219 = vadd.f32 %v6058, %v6218
  %v6220 = vpop.f32.mrb[0].mxu0
  %v6221 = vadd.f32 %v6060, %v6220
  %6222 = vmatprep.mubr.f32.mxu0 %v5473
  %6223 = vmatmul.mubr.f32.gmra.mrb[0].mxu0 %v5472
  %v6224 = vpop.f32.mrb[0].mxu0
  %v6225 = vadd.f32 %v6064, %v6224
  %v6226 = vpop.f32.mrb[0].mxu0
  %v6227 = vadd.f32 %v6066, %v6226
  %6228 = vmatprep.mubr.f32.mxu0 %v5481
  %6229 = vmatmul.mubr.f32.gmra.mrb[0].mxu0 %v5480
  %v6230 = vpop.f32.mrb[0].mxu0
  %v6231 = vadd.f32 %v6070, %v6230
  %v6232 = vpop.f32.mrb[0].mxu0
  %v6233 = vadd.f32 %v6072, %v6232
  %6234 = vmatprep.mubr.f32.mxu0 %v5489
  %6235 = vmatmul.mubr.f32.gmra.mrb[0].mxu0 %v5488
  %v6236 = vpop.f32.mrb[0].mxu0
  %v6237 = vadd.f32 %v6076, %v6236
  %v6238 = vpop.f32.mrb[0].mxu0
  %v6239 = vadd.f32 %v6078, %v6238
  %6240 = vmatprep.mubr.f32.mxu0 %v5497
  %6241 = vmatmul.mubr.f32.gmra.mrb[0].mxu0 %v5496
  %v6242 = vpop.f32.mrb[0].mxu0
  %v6243 = vadd.f32 %v6082, %v6242
  %v6244 = vpop.f32.mrb[0].mxu0
  %v6245 = vadd.f32 %v6084, %v6244
  %6246 = vmatprep.mubr.f32.mxu0 %v5505
  %6247 = vmatmul.mubr.f32.gmra.mrb[0].mxu0 %v5504
  %v6248 = vpop.f32.mrb[0].mxu0
  %v6249 = vadd.f32 %v6088, %v6248
  %v6250 = vpop.f32.mrb[0].mxu0
  %v6251 = vadd.f32 %v6090, %v6250
  %6252 = vmatprep.mubr.f32.mxu0 %v5513
  %6253 = vmatmul.mubr.f32.gmra.mrb[0].mxu0 %v5512
  %v6254 = vpop.f32.mrb[0].mxu0
  %v6255 = vadd.f32 %v6094, %v6254
  %v6256 = vpop.f32.mrb[0].mxu0
  %v6257 = vadd.f32 %v6096, %v6256
  %6258 = vmatprep.mubr.f32.mxu0 %v5521
  %6259 = vmatmul.mubr.f32.gmra.mrb[0].mxu0 %v5520
  %v6260 = vpop.f32.mrb[0].mxu0
  %v6261 = vadd.f32 %v6100, %v6260
  %v6262 = vpop.f32.mrb[0].mxu0
  %v6263 = vadd.f32 %v6102, %v6262
  %6264 = vmatprep.mubr.f32.mxu0 %v5529
  %6265 = vmatmul.mubr.f32.gmra.mrb[0].mxu0 %v5528
  %v6266 = vpop.f32.mrb[0].mxu0
  %v6267 = vadd.f32 %v6106, %v6266
  %v6268 = vpop.f32.mrb[0].mxu0
  %v6269 = vadd.f32 %v6108, %v6268
  %6270 = vdwg.mxu0
  %6271 = vmatprep.subr.mxu0 %v5725
  %6272 = vmatpush1.msra.mxu0 %v5724
  %6273 = vmatprep.subr.mxu0 %v5727
  %6274 = vmatpush1.msra.mxu0 %v5726
  %6275 = vmatprep.subr.mxu0 %v5729
  %6276 = vmatpush1.msra.mxu0 %v5728
  %6277 = vmatprep.subr.mxu0 %v5731
  %6278 = vmatpush1.msra.mxu0 %v5730
  %6279 = vmatprep.subr.mxu0 %v5733
  %6280 = vmatpush1.msra.mxu0 %v5732
  %6281 = vmatprep.subr.mxu0 %v5735
  %6282 = vmatpush1.msra.mxu0 %v5734
  %6283 = vmatprep.subr.mxu0 %v5737
  %6284 = vmatpush1.msra.mxu0 %v5736
  %6285 = vmatprep.subr.mxu0 %v5739
  %6286 = vmatpush1.msra.mxu0 %v5738
  %6287 = vmatprep.subr.mxu0 %v5741
  %6288 = vmatpush1.msra.mxu0 %v5740
  %6289 = vmatprep.subr.mxu0 %v5743
  %6290 = vmatpush1.msra.mxu0 %v5742
  %6291 = vmatprep.subr.mxu0 %v5745
  %6292 = vmatpush1.msra.mxu0 %v5744
  %6293 = vmatprep.subr.mxu0 %v5747
  %6294 = vmatpush1.msra.mxu0 %v5746
  %6295 = vmatprep.subr.mxu0 %v5749
  %6296 = vmatpush1.msra.mxu0 %v5748
  %6297 = vmatprep.subr.mxu0 %v5751
  %6298 = vmatpush1.msra.mxu0 %v5750
  %6299 = vmatprep.subr.mxu0 %v5753
  %6300 = vmatpush1.msra.mxu0 %v5752
  %6301 = vmatprep.subr.mxu0 %v5755
  %6302 = vmatpush1.msra.mxu0 %v5754
  %6303 = vmatprep.subr.mxu0 %v5757
  %6304 = vmatpush1.msra.mxu0 %v5756
  %6305 = vmatprep.subr.mxu0 %v5759
  %6306 = vmatpush1.msra.mxu0 %v5758
  %6307 = vmatprep.subr.mxu0 %v5761
  %6308 = vmatpush1.msra.mxu0 %v5760
  %6309 = vmatprep.subr.mxu0 %v5763
  %6310 = vmatpush1.msra.mxu0 %v5762
  %6311 = vmatprep.subr.mxu0 %v5765
  %6312 = vmatpush1.msra.mxu0 %v5764
  %6313 = vmatprep.subr.mxu0 %v5767
  %6314 = vmatpush1.msra.mxu0 %v5766
  %6315 = vmatprep.subr.mxu0 %v5769
  %6316 = vmatpush1.msra.mxu0 %v5768
  %6317 = vmatprep.subr.mxu0 %v5771
  %6318 = vmatpush1.msra.mxu0 %v5770
  %6319 = vmatprep.subr.mxu0 %v5773
  %6320 = vmatpush1.msra.mxu0 %v5772
  %6321 = vmatprep.subr.mxu0 %v5775
  %6322 = vmatpush1.msra.mxu0 %v5774
  %6323 = vmatprep.subr.mxu0 %v5777
  %6324 = vmatpush1.msra.mxu0 %v5776
  %6325 = vmatprep.subr.mxu0 %v5779
  %6326 = vmatpush1.msra.mxu0 %v5778
  %6327 = vmatprep.subr.mxu0 %v5781
  %6328 = vmatpush1.msra.mxu0 %v5780
  %6329 = vmatprep.subr.mxu0 %v5783
  %6330 = vmatpush1.msra.mxu0 %v5782
  %6331 = vmatprep.subr.mxu0 %v5785
  %6332 = vmatpush1.msra.mxu0 %v5784
  %6333 = vmatprep.subr.mxu0 %v5787
  %6334 = vmatpush1.msra.mxu0 %v5786
  %6335 = vmatprep.mubr.f32.mxu0 %v5411
  %6336 = vmatmul.mubr.f32.gmra.mrb[0].mxu0 %v5410
  %v6337 = vpop.f32.mrb[0].mxu0
  %v6338 = vadd.f32 %v6177, %v6337
  %v6339 = vpop.f32.mrb[0].mxu0
  %v6340 = vadd.f32 %v6179, %v6339
  %6341 = vmatprep.mubr.f32.mxu0 %v5419
  %6342 = vmatmul.mubr.f32.gmra.mrb[0].mxu0 %v5418
  %v6343 = vpop.f32.mrb[0].mxu0
  %v6344 = vadd.f32 %v6183, %v6343
  %v6345 = vpop.f32.mrb[0].mxu0
  %v6346 = vadd.f32 %v6185, %v6345
  %6347 = vmatprep.mubr.f32.mxu0 %v5427
  %6348 = vmatmul.mubr.f32.gmra.mrb[0].mxu0 %v5426
  %v6349 = vpop.f32.mrb[0].mxu0
  %v6350 = vadd.f32 %v6189, %v6349
  %v6351 = vpop.f32.mrb[0].mxu0
  %v6352 = vadd.f32 %v6191, %v6351
  %6353 = vmatprep.mubr.f32.mxu0 %v5435
  %6354 = vmatmul.mubr.f32.gmra.mrb[0].mxu0 %v5434
  %v6355 = vpop.f32.mrb[0].mxu0
  %v6356 = vadd.f32 %v6195, %v6355
  %v6357 = vpop.f32.mrb[0].mxu0
  %v6358 = vadd.f32 %v6197, %v6357
  %6359 = vmatprep.mubr.f32.mxu0 %v5443
  %6360 = vmatmul.mubr.f32.gmra.mrb[0].mxu0 %v5442
  %v6361 = vpop.f32.mrb[0].mxu0
  %v6362 = vadd.f32 %v6201, %v6361
  %v6363 = vpop.f32.mrb[0].mxu0
  %v6364 = vadd.f32 %v6203, %v6363
  %6365 = vmatprep.mubr.f32.mxu0 %v5451
  %6366 = vmatmul.mubr.f32.gmra.mrb[0].mxu0 %v5450
  %v6367 = vpop.f32.mrb[0].mxu0
  %v6368 = vadd.f32 %v6207, %v6367
  %v6369 = vpop.f32.mrb[0].mxu0
  %v6370 = vadd.f32 %v6209, %v6369
  %6371 = vmatprep.mubr.f32.mxu0 %v5459
  %6372 = vmatmul.mubr.f32.gmra.mrb[0].mxu0 %v5458
  %v6373 = vpop.f32.mrb[0].mxu0
  %v6374 = vadd.f32 %v6213, %v6373
  %v6375 = vpop.f32.mrb[0].mxu0
  %v6376 = vadd.f32 %v6215, %v6375
  %6377 = vmatprep.mubr.f32.mxu0 %v5467
  %6378 = vmatmul.mubr.f32.gmra.mrb[0].mxu0 %v5466
  %v6379 = vpop.f32.mrb[0].mxu0
  %v6380 = vadd.f32 %v6219, %v6379
  %v6381 = vpop.f32.mrb[0].mxu0
  %v6382 = vadd.f32 %v6221, %v6381
  %6383 = vmatprep.mubr.f32.mxu0 %v5475
  %6384 = vmatmul.mubr.f32.gmra.mrb[0].mxu0 %v5474
  %v6385 = vpop.f32.mrb[0].mxu0
  %v6386 = vadd.f32 %v6225, %v6385
  %v6387 = vpop.f32.mrb[0].mxu0
  %v6388 = vadd.f32 %v6227, %v6387
  %6389 = vmatprep.mubr.f32.mxu0 %v5483
  %6390 = vmatmul.mubr.f32.gmra.mrb[0].mxu0 %v5482
  %v6391 = vpop.f32.mrb[0].mxu0
  %v6392 = vadd.f32 %v6231, %v6391
  %v6393 = vpop.f32.mrb[0].mxu0
  %v6394 = vadd.f32 %v6233, %v6393
  %6395 = vmatprep.mubr.f32.mxu0 %v5491
  %6396 = vmatmul.mubr.f32.gmra.mrb[0].mxu0 %v5490
  %v6397 = vpop.f32.mrb[0].mxu0
  %v6398 = vadd.f32 %v6237, %v6397
  %v6399 = vpop.f32.mrb[0].mxu0
  %v6400 = vadd.f32 %v6239, %v6399
  %6401 = vmatprep.mubr.f32.mxu0 %v5499
  %6402 = vmatmul.mubr.f32.gmra.mrb[0].mxu0 %v5498
  %v6403 = vpop.f32.mrb[0].mxu0
  %v6404 = vadd.f32 %v6243, %v6403
  %v6405 = vpop.f32.mrb[0].mxu0
  %v6406 = vadd.f32 %v6245, %v6405
  %6407 = vmatprep.mubr.f32.mxu0 %v5507
  %6408 = vmatmul.mubr.f32.gmra.mrb[0].mxu0 %v5506
  %v6409 = vpop.f32.mrb[0].mxu0
  %v6410 = vadd.f32 %v6249, %v6409
  %v6411 = vpop.f32.mrb[0].mxu0
  %v6412 = vadd.f32 %v6251, %v6411
  %6413 = vmatprep.mubr.f32.mxu0 %v5515
  %6414 = vmatmul.mubr.f32.gmra.mrb[0].mxu0 %v5514
  %v6415 = vpop.f32.mrb[0].mxu0
  %v6416 = vadd.f32 %v6255, %v6415
  %v6417 = vpop.f32.mrb[0].mxu0
  %v6418 = vadd.f32 %v6257, %v6417
  %6419 = vmatprep.mubr.f32.mxu0 %v5523
  %6420 = vmatmul.mubr.f32.gmra.mrb[0].mxu0 %v5522
  %v6421 = vpop.f32.mrb[0].mxu0
  %v6422 = vadd.f32 %v6261, %v6421
  %v6423 = vpop.f32.mrb[0].mxu0
  %v6424 = vadd.f32 %v6263, %v6423
  %6425 = vmatprep.mubr.f32.mxu0 %v5531
  %6426 = vmatmul.mubr.f32.gmra.mrb[0].mxu0 %v5530
  %v6427 = vpop.f32.mrb[0].mxu0
  %v6428 = vadd.f32 %v6267, %v6427
  %v6429 = vpop.f32.mrb[0].mxu0
  %v6430 = vadd.f32 %v6269, %v6429
  %6431 = vdwg.mxu0
  %6432 = vxpose.xlu0.b32.start [1/16] %v6340, 128
  %6433 = vxpose.xlu0.b32.cont [2/16] %v6346, 128
  %6434 = vxpose.xlu0.b32.cont [3/16] %v6352, 128
  %6435 = vxpose.xlu0.b32.cont [4/16] %v6358, 128
  %6436 = vxpose.xlu0.b32.cont [5/16] %v6364, 128
  %6437 = vxpose.xlu0.b32.cont [6/16] %v6370, 128
  %6438 = vxpose.xlu0.b32.cont [7/16] %v6376, 128
  %6439 = vxpose.xlu0.b32.cont [8/16] %v6382, 128
  %6440 = vxpose.xlu0.b32.cont [9/16] %v6388, 128
  %6441 = vxpose.xlu0.b32.cont [10/16] %v6394, 128
  %6442 = vxpose.xlu0.b32.cont [11/16] %v6400, 128
  %6443 = vxpose.xlu0.b32.cont [12/16] %v6406, 128
  %6444 = vxpose.xlu0.b32.cont [13/16] %v6412, 128
  %6445 = vxpose.xlu0.b32.cont [14/16] %v6418, 128
  %6446 = vxpose.xlu0.b32.cont [15/16] %v6424, 128
  %6447 = vxpose.xlu0.b32.end [16/16] %v6430, 128
  %v6448 = vpop.trf.xlu0
  %v6449 = vpop.trf.xlu0
  %v6450 = vpop.trf.xlu0
  %v6451 = vpop.trf.xlu0
  %v6452 = vpop.trf.xlu0
  %v6453 = vpop.trf.xlu0
  %v6454 = vpop.trf.xlu0
  %v6455 = vpop.trf.xlu0
  %v6456 = vpop.trf.xlu0
  %v6457 = vpop.trf.xlu0
  %v6458 = vpop.trf.xlu0
  %v6459 = vpop.trf.xlu0
  %v6460 = vpop.trf.xlu0
  %v6461 = vpop.trf.xlu0
  %v6462 = vpop.trf.xlu0
  %v6463 = vpop.trf.xlu0
  %6465 = vset.pattern.permute.xlu0 0
  %6466 = vperm.xlu0 %6465, %v6340
  %v6467 = vpop.permute.xlu0 %6466
  %6470 = vset.pattern.permute.xlu0 0
  %6471 = vperm.xlu0 %6470, %v6346
  %v6472 = vpop.permute.xlu0 %6471
  %6475 = vset.pattern.permute.xlu0 0
  %6476 = vperm.xlu0 %6475, %v6352
  %v6477 = vpop.permute.xlu0 %6476
  %6480 = vset.pattern.permute.xlu0 0
  %6481 = vperm.xlu0 %6480, %v6358
  %v6482 = vpop.permute.xlu0 %6481
  %6485 = vset.pattern.permute.xlu0 0
  %6486 = vperm.xlu0 %6485, %v6364
  %v6487 = vpop.permute.xlu0 %6486
  %6490 = vset.pattern.permute.xlu0 0
  %6491 = vperm.xlu0 %6490, %v6370
  %v6492 = vpop.permute.xlu0 %6491
  %6495 = vset.pattern.permute.xlu0 0
  %6496 = vperm.xlu0 %6495, %v6376
  %v6497 = vpop.permute.xlu0 %6496
  %6500 = vset.pattern.permute.xlu0 0
  %6501 = vperm.xlu0 %6500, %v6382
  %v6502 = vpop.permute.xlu0 %6501
  %6505 = vset.pattern.permute.xlu0 0
  %6506 = vperm.xlu0 %6505, %v6388
  %v6507 = vpop.permute.xlu0 %6506
  %6510 = vset.pattern.permute.xlu0 0
  %6511 = vperm.xlu0 %6510, %v6394
  %v6512 = vpop.permute.xlu0 %6511
  %6515 = vset.pattern.permute.xlu0 0
  %6516 = vperm.xlu0 %6515, %v6400
  %v6517 = vpop.permute.xlu0 %6516
  %6520 = vset.pattern.permute.xlu0 0
  %6521 = vperm.xlu0 %6520, %v6406
  %v6522 = vpop.permute.xlu0 %6521
  %6525 = vset.pattern.permute.xlu0 0
  %6526 = vperm.xlu0 %6525, %v6412
  %v6527 = vpop.permute.xlu0 %6526
  %6530 = vset.pattern.permute.xlu0 0
  %6531 = vperm.xlu0 %6530, %v6418
  %v6532 = vpop.permute.xlu0 %6531
  %6535 = vset.pattern.permute.xlu0 0
  %6536 = vperm.xlu0 %6535, %v6424
  %v6537 = vpop.permute.xlu0 %6536
  %6540 = vset.pattern.permute.xlu0 0
  %6541 = vperm.xlu0 %6540, %v6430
  %v6542 = vpop.permute.xlu0 %6541
  %v6544 = vlaneseq
  %v6545 = vshrl.u32 %v6544, 7
  %v6546 = vsub.s32 1, %v6545
  %v6547 = vrot.slane %v6448, %v6546
  %v6548 = vadd.f32 %v6467, %v6547
  %v6549 = vadd.f32 %v6472, %v6547
  %v6550 = vadd.f32 %v6477, %v6547
  %v6551 = vadd.f32 %v6482, %v6547
  %v6552 = vadd.f32 %v6487, %v6547
  %v6553 = vadd.f32 %v6492, %v6547
  %v6554 = vadd.f32 %v6497, %v6547
  %v6555 = vadd.f32 %v6502, %v6547
  %v6556 = vadd.f32 %v6507, %v6547
  %v6557 = vadd.f32 %v6512, %v6547
  %v6558 = vadd.f32 %v6517, %v6547
  %v6559 = vadd.f32 %v6522, %v6547
  %v6560 = vadd.f32 %v6527, %v6547
  %v6561 = vadd.f32 %v6532, %v6547
  %v6562 = vadd.f32 %v6537, %v6547
  %v6563 = vadd.f32 %v6542, %v6547
  %vm6564 = vcmp.gt.f32.partialorder %v6548, 0.0
  %vm6565 = vcmp.gt.f32.partialorder %v6549, 0.0
  %vm6566 = vcmp.gt.f32.partialorder %v6550, 0.0
  %vm6567 = vcmp.gt.f32.partialorder %v6551, 0.0
  %vm6568 = vcmp.gt.f32.partialorder %v6552, 0.0
  %vm6569 = vcmp.gt.f32.partialorder %v6553, 0.0
  %vm6570 = vcmp.gt.f32.partialorder %v6554, 0.0
  %vm6571 = vcmp.gt.f32.partialorder %v6555, 0.0
  %vm6572 = vcmp.gt.f32.partialorder %v6556, 0.0
  %vm6573 = vcmp.gt.f32.partialorder %v6557, 0.0
  %vm6574 = vcmp.gt.f32.partialorder %v6558, 0.0
  %vm6575 = vcmp.gt.f32.partialorder %v6559, 0.0
  %vm6576 = vcmp.gt.f32.partialorder %v6560, 0.0
  %vm6577 = vcmp.gt.f32.partialorder %v6561, 0.0
  %vm6578 = vcmp.gt.f32.partialorder %v6562, 0.0
  %vm6579 = vcmp.gt.f32.partialorder %v6563, 0.0
  %v6580 = vmul.f32 %v6548, 0.2
  %v6581 = vmul.f32 %v6549, 0.2
  %v6582 = vmul.f32 %v6550, 0.2
  %v6583 = vmul.f32 %v6551, 0.2
  %v6584 = vmul.f32 %v6552, 0.2
  %v6585 = vmul.f32 %v6553, 0.2
  %v6586 = vmul.f32 %v6554, 0.2
  %v6587 = vmul.f32 %v6555, 0.2
  %v6588 = vmul.f32 %v6556, 0.2
  %v6589 = vmul.f32 %v6557, 0.2
  %v6590 = vmul.f32 %v6558, 0.2
  %v6591 = vmul.f32 %v6559, 0.2
  %v6592 = vmul.f32 %v6560, 0.2
  %v6593 = vmul.f32 %v6561, 0.2
  %v6594 = vmul.f32 %v6562, 0.2
  %v6595 = vmul.f32 %v6563, 0.2
  %v6596 = vsel %vm6564, %v6548, %v6580
  %v6597 = vsel %vm6565, %v6549, %v6581
  %v6598 = vsel %vm6566, %v6550, %v6582
  %v6599 = vsel %vm6567, %v6551, %v6583
  %v6600 = vsel %vm6568, %v6552, %v6584
  %v6601 = vsel %vm6569, %v6553, %v6585
  %v6602 = vsel %vm6570, %v6554, %v6586
  %v6603 = vsel %vm6571, %v6555, %v6587
  %v6604 = vsel %vm6572, %v6556, %v6588
  %v6605 = vsel %vm6573, %v6557, %v6589
  %v6606 = vsel %vm6574, %v6558, %v6590
  %v6607 = vsel %vm6575, %v6559, %v6591
  %v6608 = vsel %vm6576, %v6560, %v6592
  %v6609 = vsel %vm6577, %v6561, %v6593
  %v6610 = vsel %vm6578, %v6562, %v6594
  %v6611 = vsel %vm6579, %v6563, %v6595
  %v6612 = vadd.f32 %v6596, %v45
  %v6613 = vadd.f32 %v6597, %v46
  %v6614 = vadd.f32 %v6598, %v47
  %v6615 = vadd.f32 %v6599, %v48
  %v6616 = vadd.f32 %v6600, %v49
  %v6617 = vadd.f32 %v6601, %v50
  %v6618 = vadd.f32 %v6602, %v51
  %v6619 = vadd.f32 %v6603, %v52
  %v6620 = vadd.f32 %v6604, %v53
  %v6621 = vadd.f32 %v6605, %v54
  %v6622 = vadd.f32 %v6606, %v55
  %v6623 = vadd.f32 %v6607, %v56
  %v6624 = vadd.f32 %v6608, %v57
  %v6625 = vadd.f32 %v6609, %v58
  %v6626 = vadd.f32 %v6610, %v59
  %v6627 = vadd.f32 %v6611, %v60
  %6628 = vmax.xlane.f32.xlu0 %v6612
  %v6629 = vpop.xlane.xlu0 %6628
  %6630 = vmax.xlane.f32.xlu0 %v6613
  %v6631 = vpop.xlane.xlu0 %6630
  %6632 = vmax.xlane.f32.xlu0 %v6614
  %v6633 = vpop.xlane.xlu0 %6632
  %6634 = vmax.xlane.f32.xlu0 %v6615
  %v6635 = vpop.xlane.xlu0 %6634
  %6636 = vmax.xlane.f32.xlu0 %v6616
  %v6637 = vpop.xlane.xlu0 %6636
  %6638 = vmax.xlane.f32.xlu0 %v6617
  %v6639 = vpop.xlane.xlu0 %6638
  %6640 = vmax.xlane.f32.xlu0 %v6618
  %v6641 = vpop.xlane.xlu0 %6640
  %6642 = vmax.xlane.f32.xlu0 %v6619
  %v6643 = vpop.xlane.xlu0 %6642
  %6644 = vmax.xlane.f32.xlu0 %v6620
  %v6645 = vpop.xlane.xlu0 %6644
  %6646 = vmax.xlane.f32.xlu0 %v6621
  %v6647 = vpop.xlane.xlu0 %6646
  %6648 = vmax.xlane.f32.xlu0 %v6622
  %v6649 = vpop.xlane.xlu0 %6648
  %6650 = vmax.xlane.f32.xlu0 %v6623
  %v6651 = vpop.xlane.xlu0 %6650
  %6652 = vmax.xlane.f32.xlu0 %v6624
  %v6653 = vpop.xlane.xlu0 %6652
  %6654 = vmax.xlane.f32.xlu0 %v6625
  %v6655 = vpop.xlane.xlu0 %6654
  %6656 = vmax.xlane.f32.xlu0 %v6626
  %v6657 = vpop.xlane.xlu0 %6656
  %6658 = vmax.xlane.f32.xlu0 %v6627
  %v6659 = vpop.xlane.xlu0 %6658
  %v6660 = vsub.f32 %v6612, %v6629
  %v6661 = vsub.f32 %v6613, %v6631
  %v6662 = vsub.f32 %v6614, %v6633
  %v6663 = vsub.f32 %v6615, %v6635
  %v6664 = vsub.f32 %v6616, %v6637
  %v6665 = vsub.f32 %v6617, %v6639
  %v6666 = vsub.f32 %v6618, %v6641
  %v6667 = vsub.f32 %v6619, %v6643
  %v6668 = vsub.f32 %v6620, %v6645
  %v6669 = vsub.f32 %v6621, %v6647
  %v6670 = vsub.f32 %v6622, %v6649
  %v6671 = vsub.f32 %v6623, %v6651
  %v6672 = vsub.f32 %v6624, %v6653
  %v6673 = vsub.f32 %v6625, %v6655
  %v6674 = vsub.f32 %v6626, %v6657
  %v6675 = vsub.f32 %v6627, %v6659
  %v6676 = vmul.f32 %v6660, 1.442695
  %v6677 = vpow.pop %v6676
  %v6678 = vmul.f32 %v6661, 1.442695
  %v6679 = vpow.pop %v6678
  %v6680 = vmul.f32 %v6662, 1.442695
  %v6681 = vpow.pop %v6680
  %v6682 = vmul.f32 %v6663, 1.442695
  %v6683 = vpow.pop %v6682
  %v6684 = vmul.f32 %v6664, 1.442695
  %v6685 = vpow.pop %v6684
  %v6686 = vmul.f32 %v6665, 1.442695
  %v6687 = vpow.pop %v6686
  %v6688 = vmul.f32 %v6666, 1.442695
  %v6689 = vpow.pop %v6688
  %v6690 = vmul.f32 %v6667, 1.442695
  %v6691 = vpow.pop %v6690
  %v6692 = vmul.f32 %v6668, 1.442695
  %v6693 = vpow.pop %v6692
  %v6694 = vmul.f32 %v6669, 1.442695
  %v6695 = vpow.pop %v6694
  %v6696 = vmul.f32 %v6670, 1.442695
  %v6697 = vpow.pop %v6696
  %v6698 = vmul.f32 %v6671, 1.442695
  %v6699 = vpow.pop %v6698
  %v6700 = vmul.f32 %v6672, 1.442695
  %v6701 = vpow.pop %v6700
  %v6702 = vmul.f32 %v6673, 1.442695
  %v6703 = vpow.pop %v6702
  %v6704 = vmul.f32 %v6674, 1.442695
  %v6705 = vpow.pop %v6704
  %v6706 = vmul.f32 %v6675, 1.442695
  %v6707 = vpow.pop %v6706
  %6708 = vadd.xlane.f32.xlu0 %v6677
  %v6709 = vpop.xlane.xlu0 %6708
  %6710 = vadd.xlane.f32.xlu0 %v6679
  %v6711 = vpop.xlane.xlu0 %6710
  %6712 = vadd.xlane.f32.xlu0 %v6681
  %v6713 = vpop.xlane.xlu0 %6712
  %6714 = vadd.xlane.f32.xlu0 %v6683
  %v6715 = vpop.xlane.xlu0 %6714
  %6716 = vadd.xlane.f32.xlu0 %v6685
  %v6717 = vpop.xlane.xlu0 %6716
  %6718 = vadd.xlane.f32.xlu0 %v6687
  %v6719 = vpop.xlane.xlu0 %6718
  %6720 = vadd.xlane.f32.xlu0 %v6689
  %v6721 = vpop.xlane.xlu0 %6720
  %6722 = vadd.xlane.f32.xlu0 %v6691
  %v6723 = vpop.xlane.xlu0 %6722
  %6724 = vadd.xlane.f32.xlu0 %v6693
  %v6725 = vpop.xlane.xlu0 %6724
  %6726 = vadd.xlane.f32.xlu0 %v6695
  %v6727 = vpop.xlane.xlu0 %6726
  %6728 = vadd.xlane.f32.xlu0 %v6697
  %v6729 = vpop.xlane.xlu0 %6728
  %6730 = vadd.xlane.f32.xlu0 %v6699
  %v6731 = vpop.xlane.xlu0 %6730
  %6732 = vadd.xlane.f32.xlu0 %v6701
  %v6733 = vpop.xlane.xlu0 %6732
  %6734 = vadd.xlane.f32.xlu0 %v6703
  %v6735 = vpop.xlane.xlu0 %6734
  %6736 = vadd.xlane.f32.xlu0 %v6705
  %v6737 = vpop.xlane.xlu0 %6736
  %6738 = vadd.xlane.f32.xlu0 %v6707
  %v6739 = vpop.xlane.xlu0 %6738
  %v6740 = vrcp.pop %v6709
  %v6741 = vmul.f32 %v6677, %v6740
  %v6742 = vrcp.pop %v6711
  %v6743 = vmul.f32 %v6679, %v6742
  %v6744 = vrcp.pop %v6713
  %v6745 = vmul.f32 %v6681, %v6744
  %v6746 = vrcp.pop %v6715
  %v6747 = vmul.f32 %v6683, %v6746
  %v6748 = vrcp.pop %v6717
  %v6749 = vmul.f32 %v6685, %v6748
  %v6750 = vrcp.pop %v6719
  %v6751 = vmul.f32 %v6687, %v6750
  %v6752 = vrcp.pop %v6721
  %v6753 = vmul.f32 %v6689, %v6752
  %v6754 = vrcp.pop %v6723
  %v6755 = vmul.f32 %v6691, %v6754
  %v6756 = vrcp.pop %v6725
  %v6757 = vmul.f32 %v6693, %v6756
  %v6758 = vrcp.pop %v6727
  %v6759 = vmul.f32 %v6695, %v6758
  %v6760 = vrcp.pop %v6729
  %v6761 = vmul.f32 %v6697, %v6760
  %v6762 = vrcp.pop %v6731
  %v6763 = vmul.f32 %v6699, %v6762
  %v6764 = vrcp.pop %v6733
  %v6765 = vmul.f32 %v6701, %v6764
  %v6766 = vrcp.pop %v6735
  %v6767 = vmul.f32 %v6703, %v6766
  %v6768 = vrcp.pop %v6737
  %v6769 = vmul.f32 %v6705, %v6768
  %v6770 = vrcp.pop %v6739
  %v6771 = vmul.f32 %v6707, %v6770
  %v6772 = vld [vmem:[%s7] sm:$0x1]
  %v6774 = vlaneseq
  %v6775 = vshrl.u32 %v6774, 7
  %v6776 = vsub.s32 0, %v6775
  %v6777 = vrot.slane %v6772, %v6776
  %6779 = vmatprep.subr.mxu0 0.0
  %6780 = vmatpush1.msra.mxu0 %v6338
  %6781 = vmatprep.subr.mxu0 0.0
  %6782 = vmatpush1.msra.mxu0 %v6344
  %6783 = vmatprep.subr.mxu0 0.0
  %6784 = vmatpush1.msra.mxu0 %v6350
  %6785 = vmatprep.subr.mxu0 0.0
  %6786 = vmatpush1.msra.mxu0 %v6356
  %6787 = vmatprep.subr.mxu0 0.0
  %6788 = vmatpush1.msra.mxu0 %v6362
  %6789 = vmatprep.subr.mxu0 0.0
  %6790 = vmatpush1.msra.mxu0 %v6368
  %6791 = vmatprep.subr.mxu0 0.0
  %6792 = vmatpush1.msra.mxu0 %v6374
  %6793 = vmatprep.subr.mxu0 0.0
  %6794 = vmatpush1.msra.mxu0 %v6380
  %6795 = vmatprep.subr.mxu0 0.0
  %6796 = vmatpush1.msra.mxu0 %v6386
  %6797 = vmatprep.subr.mxu0 0.0
  %6798 = vmatpush1.msra.mxu0 %v6392
  %6799 = vmatprep.subr.mxu0 0.0
  %6800 = vmatpush1.msra.mxu0 %v6398
  %6801 = vmatprep.subr.mxu0 0.0
  %6802 = vmatpush1.msra.mxu0 %v6404
  %6803 = vmatprep.subr.mxu0 0.0
  %6804 = vmatpush1.msra.mxu0 %v6410
  %6805 = vmatprep.subr.mxu0 0.0
  %6806 = vmatpush1.msra.mxu0 %v6416
  %6807 = vmatprep.subr.mxu0 0.0
  %6808 = vmatpush1.msra.mxu0 %v6422
  %6809 = vmatprep.subr.mxu0 0.0
  %6810 = vmatpush1.msra.mxu0 %v6428
  %6811 = vmatprep.subr.mxu0 0.0
  %6812 = vmatpush1.msra.mxu0 0.0
  %6813 = vmatprep.subr.mxu0 0.0
  %6814 = vmatpush1.msra.mxu0 0.0
  %6815 = vmatprep.subr.mxu0 0.0
  %6816 = vmatpush1.msra.mxu0 0.0
  %6817 = vmatprep.subr.mxu0 0.0
  %6818 = vmatpush1.msra.mxu0 0.0
  %6819 = vmatprep.subr.mxu0 0.0
  %6820 = vmatpush1.msra.mxu0 0.0
  %6821 = vmatprep.subr.mxu0 0.0
  %6822 = vmatpush1.msra.mxu0 0.0
  %6823 = vmatprep.subr.mxu0 0.0
  %6824 = vmatpush1.msra.mxu0 0.0
  %6825 = vmatprep.subr.mxu0 0.0
  %6826 = vmatpush1.msra.mxu0 0.0
  %6827 = vmatprep.subr.mxu0 0.0
  %6828 = vmatpush1.msra.mxu0 0.0
  %6829 = vmatprep.subr.mxu0 0.0
  %6830 = vmatpush1.msra.mxu0 0.0
  %6831 = vmatprep.subr.mxu0 0.0
  %6832 = vmatpush1.msra.mxu0 0.0
  %6833 = vmatprep.subr.mxu0 0.0
  %6834 = vmatpush1.msra.mxu0 0.0
  %6835 = vmatprep.subr.mxu0 0.0
  %6836 = vmatpush1.msra.mxu0 0.0
  %6837 = vmatprep.subr.mxu0 0.0
  %6838 = vmatpush1.msra.mxu0 0.0
  %6839 = vmatprep.subr.mxu0 0.0
  %6840 = vmatpush1.msra.mxu0 0.0
  %6841 = vmatprep.subr.mxu0 0.0
  %6842 = vmatpush1.msra.mxu0 0.0
  %6843 = vmatprep.mubr.f32.mxu0 0.0
  %6844 = vmatmul.mubr.f32.gmra.mrb[0].mxu0 %v6741
  %v6845 = vpop.f32.mrb[0].mxu0
  %v6846 = vadd.f32 %v6777, %v6845
  %v6847 = vpop.f32.mrb[0].mxu0
  %6848 = vmatprep.mubr.f32.mxu0 0.0
  %6849 = vmatmul.mubr.f32.gmra.mrb[0].mxu0 %v6743
  %v6850 = vpop.f32.mrb[0].mxu0
  %v6851 = vadd.f32 %v6777, %v6850
  %v6852 = vpop.f32.mrb[0].mxu0
  %6853 = vmatprep.mubr.f32.mxu0 0.0
  %6854 = vmatmul.mubr.f32.gmra.mrb[0].mxu0 %v6745
  %v6855 = vpop.f32.mrb[0].mxu0
  %v6856 = vadd.f32 %v6777, %v6855
  %v6857 = vpop.f32.mrb[0].mxu0
  %6858 = vmatprep.mubr.f32.mxu0 0.0
  %6859 = vmatmul.mubr.f32.gmra.mrb[0].mxu0 %v6747
  %v6860 = vpop.f32.mrb[0].mxu0
  %v6861 = vadd.f32 %v6777, %v6860
  %v6862 = vpop.f32.mrb[0].mxu0
  %6863 = vmatprep.mubr.f32.mxu0 0.0
  %6864 = vmatmul.mubr.f32.gmra.mrb[0].mxu0 %v6749
  %v6865 = vpop.f32.mrb[0].mxu0
  %v6866 = vadd.f32 %v6777, %v6865
  %v6867 = vpop.f32.mrb[0].mxu0
  %6868 = vmatprep.mubr.f32.mxu0 0.0
  %6869 = vmatmul.mubr.f32.gmra.mrb[0].mxu0 %v6751
  %v6870 = vpop.f32.mrb[0].mxu0
  %v6871 = vadd.f32 %v6777, %v6870
  %v6872 = vpop.f32.mrb[0].mxu0
  %6873 = vmatprep.mubr.f32.mxu0 0.0
  %6874 = vmatmul.mubr.f32.gmra.mrb[0].mxu0 %v6753
  %v6875 = vpop.f32.mrb[0].mxu0
  %v6876 = vadd.f32 %v6777, %v6875
  %v6877 = vpop.f32.mrb[0].mxu0
  %6878 = vmatprep.mubr.f32.mxu0 0.0
  %6879 = vmatmul.mubr.f32.gmra.mrb[0].mxu0 %v6755
  %v6880 = vpop.f32.mrb[0].mxu0
  %v6881 = vadd.f32 %v6777, %v6880
  %v6882 = vpop.f32.mrb[0].mxu0
  %6883 = vmatprep.mubr.f32.mxu0 0.0
  %6884 = vmatmul.mubr.f32.gmra.mrb[0].mxu0 %v6757
  %v6885 = vpop.f32.mrb[0].mxu0
  %v6886 = vadd.f32 %v6777, %v6885
  %v6887 = vpop.f32.mrb[0].mxu0
  %6888 = vmatprep.mubr.f32.mxu0 0.0
  %6889 = vmatmul.mubr.f32.gmra.mrb[0].mxu0 %v6759
  %v6890 = vpop.f32.mrb[0].mxu0
  %v6891 = vadd.f32 %v6777, %v6890
  %v6892 = vpop.f32.mrb[0].mxu0
  %6893 = vmatprep.mubr.f32.mxu0 0.0
  %6894 = vmatmul.mubr.f32.gmra.mrb[0].mxu0 %v6761
  %v6895 = vpop.f32.mrb[0].mxu0
  %v6896 = vadd.f32 %v6777, %v6895
  %v6897 = vpop.f32.mrb[0].mxu0
  %6898 = vmatprep.mubr.f32.mxu0 0.0
  %6899 = vmatmul.mubr.f32.gmra.mrb[0].mxu0 %v6763
  %v6900 = vpop.f32.mrb[0].mxu0
  %v6901 = vadd.f32 %v6777, %v6900
  %v6902 = vpop.f32.mrb[0].mxu0
  %6903 = vmatprep.mubr.f32.mxu0 0.0
  %6904 = vmatmul.mubr.f32.gmra.mrb[0].mxu0 %v6765
  %v6905 = vpop.f32.mrb[0].mxu0
  %v6906 = vadd.f32 %v6777, %v6905
  %v6907 = vpop.f32.mrb[0].mxu0
  %6908 = vmatprep.mubr.f32.mxu0 0.0
  %6909 = vmatmul.mubr.f32.gmra.mrb[0].mxu0 %v6767
  %v6910 = vpop.f32.mrb[0].mxu0
  %v6911 = vadd.f32 %v6777, %v6910
  %v6912 = vpop.f32.mrb[0].mxu0
  %6913 = vmatprep.mubr.f32.mxu0 0.0
  %6914 = vmatmul.mubr.f32.gmra.mrb[0].mxu0 %v6769
  %v6915 = vpop.f32.mrb[0].mxu0
  %v6916 = vadd.f32 %v6777, %v6915
  %v6917 = vpop.f32.mrb[0].mxu0
  %6918 = vmatprep.mubr.f32.mxu0 0.0
  %6919 = vmatmul.mubr.f32.gmra.mrb[0].mxu0 %v6771
  %v6920 = vpop.f32.mrb[0].mxu0
  %v6921 = vadd.f32 %v6777, %v6920
  %v6922 = vpop.f32.mrb[0].mxu0
  %6923 = vdwg.mxu0
  %6924 = vmax.xlane.f32.xlu0 %v6846
  %v6925 = vpop.xlane.xlu0 %6924
  %6926 = vmax.xlane.f32.xlu0 %v6851
  %v6927 = vpop.xlane.xlu0 %6926
  %6928 = vmax.xlane.f32.xlu0 %v6856
  %v6929 = vpop.xlane.xlu0 %6928
  %6930 = vmax.xlane.f32.xlu0 %v6861
  %v6931 = vpop.xlane.xlu0 %6930
  %6932 = vmax.xlane.f32.xlu0 %v6866
  %v6933 = vpop.xlane.xlu0 %6932
  %6934 = vmax.xlane.f32.xlu0 %v6871
  %v6935 = vpop.xlane.xlu0 %6934
  %6936 = vmax.xlane.f32.xlu0 %v6876
  %v6937 = vpop.xlane.xlu0 %6936
  %6938 = vmax.xlane.f32.xlu0 %v6881
  %v6939 = vpop.xlane.xlu0 %6938
  %6940 = vmax.xlane.f32.xlu0 %v6886
  %v6941 = vpop.xlane.xlu0 %6940
  %6942 = vmax.xlane.f32.xlu0 %v6891
  %v6943 = vpop.xlane.xlu0 %6942
  %6944 = vmax.xlane.f32.xlu0 %v6896
  %v6945 = vpop.xlane.xlu0 %6944
  %6946 = vmax.xlane.f32.xlu0 %v6901
  %v6947 = vpop.xlane.xlu0 %6946
  %6948 = vmax.xlane.f32.xlu0 %v6906
  %v6949 = vpop.xlane.xlu0 %6948
  %6950 = vmax.xlane.f32.xlu0 %v6911
  %v6951 = vpop.xlane.xlu0 %6950
  %6952 = vmax.xlane.f32.xlu0 %v6916
  %v6953 = vpop.xlane.xlu0 %6952
  %6954 = vmax.xlane.f32.xlu0 %v6921
  %v6955 = vpop.xlane.xlu0 %6954
  %v6956 = vsub.f32 %v6846, %v6925
  %v6957 = vsub.f32 %v6851, %v6927
  %v6958 = vsub.f32 %v6856, %v6929
  %v6959 = vsub.f32 %v6861, %v6931
  %v6960 = vsub.f32 %v6866, %v6933
  %v6961 = vsub.f32 %v6871, %v6935
  %v6962 = vsub.f32 %v6876, %v6937
  %v6963 = vsub.f32 %v6881, %v6939
  %v6964 = vsub.f32 %v6886, %v6941
  %v6965 = vsub.f32 %v6891, %v6943
  %v6966 = vsub.f32 %v6896, %v6945
  %v6967 = vsub.f32 %v6901, %v6947
  %v6968 = vsub.f32 %v6906, %v6949
  %v6969 = vsub.f32 %v6911, %v6951
  %v6970 = vsub.f32 %v6916, %v6953
  %v6971 = vsub.f32 %v6921, %v6955
  %v6972 = vmul.f32 %v6956, 1.442695
  %v6973 = vpow.pop %v6972
  %v6974 = vmul.f32 %v6957, 1.442695
  %v6975 = vpow.pop %v6974
  %v6976 = vmul.f32 %v6958, 1.442695
  %v6977 = vpow.pop %v6976
  %v6978 = vmul.f32 %v6959, 1.442695
  %v6979 = vpow.pop %v6978
  %v6980 = vmul.f32 %v6960, 1.442695
  %v6981 = vpow.pop %v6980
  %v6982 = vmul.f32 %v6961, 1.442695
  %v6983 = vpow.pop %v6982
  %v6984 = vmul.f32 %v6962, 1.442695
  %v6985 = vpow.pop %v6984
  %v6986 = vmul.f32 %v6963, 1.442695
  %v6987 = vpow.pop %v6986
  %v6988 = vmul.f32 %v6964, 1.442695
  %v6989 = vpow.pop %v6988
  %v6990 = vmul.f32 %v6965, 1.442695
  %v6991 = vpow.pop %v6990
  %v6992 = vmul.f32 %v6966, 1.442695
  %v6993 = vpow.pop %v6992
  %v6994 = vmul.f32 %v6967, 1.442695
  %v6995 = vpow.pop %v6994
  %v6996 = vmul.f32 %v6968, 1.442695
  %v6997 = vpow.pop %v6996
  %v6998 = vmul.f32 %v6969, 1.442695
  %v6999 = vpow.pop %v6998
  %v7000 = vmul.f32 %v6970, 1.442695
  %v7001 = vpow.pop %v7000
  %v7002 = vmul.f32 %v6971, 1.442695
  %v7003 = vpow.pop %v7002
  %7004 = vadd.xlane.f32.xlu0 %v6973
  %v7005 = vpop.xlane.xlu0 %7004
  %7006 = vadd.xlane.f32.xlu0 %v6975
  %v7007 = vpop.xlane.xlu0 %7006
  %7008 = vadd.xlane.f32.xlu0 %v6977
  %v7009 = vpop.xlane.xlu0 %7008
  %7010 = vadd.xlane.f32.xlu0 %v6979
  %v7011 = vpop.xlane.xlu0 %7010
  %7012 = vadd.xlane.f32.xlu0 %v6981
  %v7013 = vpop.xlane.xlu0 %7012
  %7014 = vadd.xlane.f32.xlu0 %v6983
  %v7015 = vpop.xlane.xlu0 %7014
  %7016 = vadd.xlane.f32.xlu0 %v6985
  %v7017 = vpop.xlane.xlu0 %7016
  %7018 = vadd.xlane.f32.xlu0 %v6987
  %v7019 = vpop.xlane.xlu0 %7018
  %7020 = vadd.xlane.f32.xlu0 %v6989
  %v7021 = vpop.xlane.xlu0 %7020
  %7022 = vadd.xlane.f32.xlu0 %v6991
  %v7023 = vpop.xlane.xlu0 %7022
  %7024 = vadd.xlane.f32.xlu0 %v6993
  %v7025 = vpop.xlane.xlu0 %7024
  %7026 = vadd.xlane.f32.xlu0 %v6995
  %v7027 = vpop.xlane.xlu0 %7026
  %7028 = vadd.xlane.f32.xlu0 %v6997
  %v7029 = vpop.xlane.xlu0 %7028
  %7030 = vadd.xlane.f32.xlu0 %v6999
  %v7031 = vpop.xlane.xlu0 %7030
  %7032 = vadd.xlane.f32.xlu0 %v7001
  %v7033 = vpop.xlane.xlu0 %7032
  %7034 = vadd.xlane.f32.xlu0 %v7003
  %v7035 = vpop.xlane.xlu0 %7034
  %v7036 = vlog2.pop %v7005
  %v7037 = vmul.f32 %v7036, 0.6931472
  %v7038 = vlog2.pop %v7007
  %v7039 = vmul.f32 %v7038, 0.6931472
  %v7040 = vlog2.pop %v7009
  %v7041 = vmul.f32 %v7040, 0.6931472
  %v7042 = vlog2.pop %v7011
  %v7043 = vmul.f32 %v7042, 0.6931472
  %v7044 = vlog2.pop %v7013
  %v7045 = vmul.f32 %v7044, 0.6931472
  %v7046 = vlog2.pop %v7015
  %v7047 = vmul.f32 %v7046, 0.6931472
  %v7048 = vlog2.pop %v7017
  %v7049 = vmul.f32 %v7048, 0.6931472
  %v7050 = vlog2.pop %v7019
  %v7051 = vmul.f32 %v7050, 0.6931472
  %v7052 = vlog2.pop %v7021
  %v7053 = vmul.f32 %v7052, 0.6931472
  %v7054 = vlog2.pop %v7023
  %v7055 = vmul.f32 %v7054, 0.6931472
  %v7056 = vlog2.pop %v7025
  %v7057 = vmul.f32 %v7056, 0.6931472
  %v7058 = vlog2.pop %v7027
  %v7059 = vmul.f32 %v7058, 0.6931472
  %v7060 = vlog2.pop %v7029
  %v7061 = vmul.f32 %v7060, 0.6931472
  %v7062 = vlog2.pop %v7031
  %v7063 = vmul.f32 %v7062, 0.6931472
  %v7064 = vlog2.pop %v7033
  %v7065 = vmul.f32 %v7064, 0.6931472
  %v7066 = vlog2.pop %v7035
  %v7067 = vmul.f32 %v7066, 0.6931472
  %v7068 = vsub.f32 %v6956, %v7037
  %v7069 = vsub.f32 %v6957, %v7039
  %v7070 = vsub.f32 %v6958, %v7041
  %v7071 = vsub.f32 %v6959, %v7043
  %v7072 = vsub.f32 %v6960, %v7045
  %v7073 = vsub.f32 %v6961, %v7047
  %v7074 = vsub.f32 %v6962, %v7049
  %v7075 = vsub.f32 %v6963, %v7051
  %v7076 = vsub.f32 %v6964, %v7053
  %v7077 = vsub.f32 %v6965, %v7055
  %v7078 = vsub.f32 %v6966, %v7057
  %v7079 = vsub.f32 %v6967, %v7059
  %v7080 = vsub.f32 %v6968, %v7061
  %v7081 = vsub.f32 %v6969, %v7063
  %v7082 = vsub.f32 %v6970, %v7065
  %v7083 = vsub.f32 %v6971, %v7067
  %7084 = vst [vmem:[%s8] sm:$0xff] %v7068
  %7085 = vst [vmem:[%s8 + $0x8] sm:$0xff] %v7069
  %7086 = vst [vmem:[%s8 + $0x10] sm:$0xff] %v7070
  %7087 = vst [vmem:[%s8 + $0x18] sm:$0xff] %v7071
  %7088 = vst [vmem:[%s8 + $0x20] sm:$0xff] %v7072
  %7089 = vst [vmem:[%s8 + $0x28] sm:$0xff] %v7073
  %7090 = vst [vmem:[%s8 + $0x30] sm:$0xff] %v7074
  %7091 = vst [vmem:[%s8 + $0x38] sm:$0xff] %v7075
  %7092 = vst [vmem:[%s8 + $0x40] sm:$0xff] %v7076
  %7093 = vst [vmem:[%s8 + $0x48] sm:$0xff] %v7077
  %7094 = vst [vmem:[%s8 + $0x50] sm:$0xff] %v7078
  %7095 = vst [vmem:[%s8 + $0x58] sm:$0xff] %v7079
  %7096 = vst [vmem:[%s8 + $0x60] sm:$0xff] %v7080
  %7097 = vst [vmem:[%s8 + $0x68] sm:$0xff] %v7081
  %7098 = vst [vmem:[%s8 + $0x70] sm:$0xff] %v7082
  %7099 = vst [vmem:[%s8 + $0x78] sm:$0xff] %v7083
  // Predicated region
  $region34: #{net_forward.1} parent=0 // pred_check
    _
  $region35: #{net_forward.1} parent=0 // pred_check_branch
    %7101 = sbr.rel (0) target = $region37
  $region36: #{net_forward.1} parent=0 // pred_region
    _
  $region37: #{net_forward.1} parent=0 // pred_fallthru
    _
  // Predicated region
  $region38: #{net_forward.1} parent=0 // pred_check
    _
  $region39: #{net_forward.1} parent=0 // pred_check_branch
    %7103 = sbr.rel (0) target = $region41
  $region40: #{net_forward.1} parent=0 // pred_region
    _
  $region41: #{net_forward.1} parent=0 // pred_fallthru
    _

</llo_original>
